<compile_context>
chip_gen: v7x
topology: tpu7x:2x2x1
jax: 0.10.0
libtpu: 0.0.40
codegen_flags: <defaults>
</compile_context>

<pallas_src>
import jax
import jax.numpy as jnp
from jax.experimental import pallas as pl
from jax.experimental.pallas import tpu as pltpu

EPS = 1e-5
LANE = 128


def _rup(x, m):
    return ((x + m - 1) // m) * m


def _cparams():
    return pltpu.CompilerParams(
        dimension_semantics=("parallel",),
        vmem_limit_bytes=32 * 1024 * 1024,   # fits v5e/v6e/v7x; blocks are small
    )


# ----------------------------- Pallas kernels ------------------------------

def _shifted_conv_acc(load_tap, w_ref, ho, wo):
    """k x k conv as k*k shifted [ho*wo, Cin] @ [Cin, Cout] MXU dots (f32 acc).

    load_tap(di, dj) must return the [ho, wo, Cin] bf16 window for tap (di, dj).
    """
    kk = w_ref.shape[0]
    k = int(round(kk ** 0.5))
    cout = w_ref.shape[2]
    acc = jnp.zeros((ho * wo, cout), jnp.float32)
    t = 0
    for di in range(k):
        for dj in range(k):
            xs = load_tap(di, dj).reshape(ho * wo, -1)
            acc = acc + jnp.dot(xs, w_ref[t], preferred_element_type=jnp.float32)
            t += 1
    return acc


def _store_z_stats(acc, z_ref, stats_ref, ho, wo):
    """Store bf16 pre-BN activations + per-sample (sum, centered M2) stats."""
    z_ref[0] = acc.reshape(ho, wo, acc.shape[-1]).astype(z_ref.dtype)
    ssum = jnp.sum(acc, axis=0, keepdims=True)                 # [1, C]
    mean = ssum / float(ho * wo)
    m2 = jnp.sum((acc - mean) ** 2, axis=0, keepdims=True)     # centered (Chan)
    stats_ref[0, 0:1, :] = ssum
    stats_ref[0, 1:2, :] = m2


def conv1_kernel(xp_ref, w_ref, b_ref, z_ref, stats_ref):
    """conv1: k x k conv (+bias) over the padded input block -> bf16 z1 + stats."""
    _, ho, wo, _ = z_ref.shape
    acc = _shifted_conv_acc(
        lambda di, dj: xp_ref[0, di:di + ho, dj:dj + wo, :], w_ref, ho, wo)
    acc = acc + b_ref[...]
    _store_z_stats(acc, z_ref, stats_ref, ho, wo)


def bn1_conv2_kernel(z1_ref, sc_ref, sh_ref, w_ref, b_ref, z_ref, stats_ref,
                     ypad_ref):
    """Fused: BN1+ReLU on the incoming z1 tile, zero-pad into VMEM scratch,
    k x k conv2 (+bias) via shifted dots -> bf16 z2 + per-sample stats."""
    _, ho, wo, cout = z_ref.shape
    pad = (ypad_ref.shape[0] - ho) // 2
    sc = sc_ref[...].reshape(1, 1, cout)
    sh = sh_ref[...].reshape(1, 1, cout)
    y1 = jnp.maximum(z1_ref[0].astype(jnp.float32) * sc + sh, 0.0)
    # Zero the halo ring every step (cheap; safe under megacore grid splitting).
    ypad_ref[...] = jnp.zeros_like(ypad_ref)
    ypad_ref[pad:pad + ho, pad:pad + wo, :] = y1.astype(ypad_ref.dtype)
    acc = _shifted_conv_acc(
        lambda di, dj: ypad_ref[di:di + ho, dj:dj + wo, :], w_ref, ho, wo)
    acc = acc + b_ref[...]
    _store_z_stats(acc, z_ref, stats_ref, ho, wo)


def bn2_shortcut_kernel(z2_ref, sc_ref, sh_ref, xp_ref, ws_ref, bs_ref, o_ref):
    """Fused: BN2+ReLU on z2 + 1x1 shortcut GEMM (+bias) + residual add."""
    _, ho, wo, cout = z2_ref.shape
    pad = (xp_ref.shape[1] - ho) // 2     # interior of the conv1-padded input
    sc2 = sc_ref[...].reshape(1, 1, cout)
    sh2 = sh_ref[...].reshape(1, 1, cout)
    y2 = jnp.maximum(z2_ref[0].astype(jnp.float32) * sc2 + sh2, 0.0)
    xin = xp_ref[0, pad:pad + ho, pad:pad + wo, :]             # [ho, wo, Cin_p]
    scut = jnp.dot(xin.reshape(ho * wo, -1), ws_ref[...],
                   preferred_element_type=jnp.float32).reshape(ho, wo, cout)
    o_ref[0] = (y2 + scut + bs_ref[...].reshape(1, 1, cout)).astype(o_ref.dtype)


# ----------------------------- pallas_call wrappers -------------------------

def conv1_call(xp, w, b, n, ho, wo, cp):
    _, hp, wp, cinp = xp.shape
    kk = w.shape[0]
    return pl.pallas_call(
        conv1_kernel,
        out_shape=(jax.ShapeDtypeStruct((n, ho, wo, cp), jnp.bfloat16),
                   jax.ShapeDtypeStruct((n, 2, cp), jnp.float32)),
        grid=(n,),
        in_specs=[
            pl.BlockSpec((1, hp, wp, cinp), lambda i: (i, 0, 0, 0)),
            pl.BlockSpec((kk, cinp, cp), lambda i: (0, 0, 0)),   # VMEM-resident
            pl.BlockSpec((1, cp), lambda i: (0, 0)),
        ],
        out_specs=(pl.BlockSpec((1, ho, wo, cp), lambda i: (i, 0, 0, 0)),
                   pl.BlockSpec((1, 2, cp), lambda i: (i, 0, 0))),
        compiler_params=_cparams(),
    )(xp, w, b)


def bn1_conv2_call(z1, sc, sh, w, b, n, ho, wo, cp, pad):
    kk = w.shape[0]
    return pl.pallas_call(
        bn1_conv2_kernel,
        out_shape=(jax.ShapeDtypeStruct((n, ho, wo, cp), jnp.bfloat16),
                   jax.ShapeDtypeStruct((n, 2, cp), jnp.float32)),
        grid=(n,),
        in_specs=[
            pl.BlockSpec((1, ho, wo, cp), lambda i: (i, 0, 0, 0)),
            pl.BlockSpec((1, cp), lambda i: (0, 0)),
            pl.BlockSpec((1, cp), lambda i: (0, 0)),
            pl.BlockSpec((kk, cp, cp), lambda i: (0, 0, 0)),     # VMEM-resident
            pl.BlockSpec((1, cp), lambda i: (0, 0)),
        ],
        out_specs=(pl.BlockSpec((1, ho, wo, cp), lambda i: (i, 0, 0, 0)),
                   pl.BlockSpec((1, 2, cp), lambda i: (i, 0, 0))),
        scratch_shapes=[pltpu.VMEM((ho + 2 * pad, wo + 2 * pad, cp),
                                   jnp.bfloat16)],
        compiler_params=_cparams(),
    )(z1, sc, sh, w, b)


def bn2_shortcut_call(z2, sc, sh, xp, ws, bs, n, ho, wo, cp):
    _, hp, wp, cinp = xp.shape
    return pl.pallas_call(
        bn2_shortcut_kernel,
        out_shape=jax.ShapeDtypeStruct((n, ho, wo, cp), jnp.float32),
        grid=(n,),
        in_specs=[
            pl.BlockSpec((1, ho, wo, cp), lambda i: (i, 0, 0, 0)),
            pl.BlockSpec((1, cp), lambda i: (0, 0)),
            pl.BlockSpec((1, cp), lambda i: (0, 0)),
            pl.BlockSpec((1, hp, wp, cinp), lambda i: (i, 0, 0, 0)),
            pl.BlockSpec((cinp, cp), lambda i: (0, 0)),          # VMEM-resident
            pl.BlockSpec((1, cp), lambda i: (0, 0)),
        ],
        out_specs=pl.BlockSpec((1, ho, wo, cp), lambda i: (i, 0, 0, 0)),
        compiler_params=_cparams(),
    )(z2, sc, sh, xp, ws, bs)


# ------------------------------ JAX glue ------------------------------------

def _tap_weights(w_oihw, cin_p, cout_p):
    """torch [Cout, Cin, kh, kw] -> [kh*kw, Cin_p, Cout_p] bf16 per-tap GEMM weights."""
    cout, cin, kh, kw = w_oihw.shape
    w = jnp.transpose(w_oihw, (2, 3, 1, 0)).reshape(kh * kw, cin, cout)
    w = jnp.pad(w, ((0, 0), (0, cin_p - cin), (0, cout_p - cout)))
    return w.astype(jnp.bfloat16)


def _pad_vec(v, cp):
    return jnp.pad(v, (0, cp - v.shape[0]))[None, :].astype(jnp.float32)


def bn_affine(stats, n_per, gamma, beta, cp):
    """Per-sample (sum, centered M2) [N,2,cp] -> BN scale/shift [1,cp] (train mode)."""
    sums, m2s = stats[:, 0, :], stats[:, 1, :]
    total = stats.shape[0] * n_per
    mean = jnp.sum(sums, axis=0) / total
    mean_i = sums / n_per
    m2 = jnp.sum(m2s, axis=0) + n_per * jnp.sum((mean_i - mean[None, :]) ** 2, axis=0)
    var = jnp.maximum(m2 / total, 0.0)
    inv = jax.lax.rsqrt(var + EPS)
    g = jnp.pad(gamma, (0, cp - gamma.shape[0]))
    b = jnp.pad(beta, (0, cp - beta.shape[0]))
    scale = g * inv
    shift = b - mean * scale
    return scale[None, :].astype(jnp.float32), shift[None, :].astype(jnp.float32)


def res_block_forward(x_nchw, params, stride=1, padding=1, kernel_size=3):
    """ResBlock forward. x_nchw: [N, Cin, H, W] -> [N, Cout, Ho, Wo]."""
    # TODO(synk): stride > 1 needs strided shifted-dot loads; module default is 1.
    assert stride == 1, "stride > 1 not implemented in the Pallas path"
    n, cin, h, w = x_nchw.shape
    cout = params["w1"].shape[0]
    k = kernel_size
    cinp = _rup(cin, LANE)
    cp = _rup(cout, LANE)

    ho = h + 2 * padding - k + 1
    wo = w + 2 * padding - k + 1

    # NHWC, channels lane-padded to 128, spatially padded once (shared by
    # conv1 and the shortcut, which reads the interior in-kernel).
    x = jnp.transpose(x_nchw, (0, 2, 3, 1))
    xp = jnp.pad(x, ((0, 0), (padding, padding), (padding, padding),
                     (0, cinp - cin))).astype(jnp.bfloat16)

    w1 = _tap_weights(params["w1"], cinp, cp)
    w2 = _tap_weights(params["w2"], cp, cp)
    ws = _tap_weights(params["ws"], cinp, cp)[0]            # [cinp, cp]
    b1 = _pad_vec(params["b1"], cp)
    b2 = _pad_vec(params["b2"], cp)
    bs = _pad_vec(params["bs"], cp)

    # conv1 -> bf16 z1 + per-sample stats; BN1 affine is a tiny XLA reduction.
    z1, st1 = conv1_call(xp, w1, b1, n, ho, wo, cp)
    sc1, sh1 = bn_affine(st1, ho * wo, params["g1"], params["beta1"], cp)

    # BN1+ReLU fused into conv2's input path -> bf16 z2 + per-sample stats.
    z2, st2 = bn1_conv2_call(z1, sc1, sh1, w2, b2, n, ho, wo, cp, padding)
    sc2, sh2 = bn_affine(st2, ho * wo, params["g2"], params["beta2"], cp)

    # BN2+ReLU + 1x1 shortcut GEMM + bias + residual add, fused.
    y = bn2_shortcut_call(z2, sc2, sh2, xp, ws, bs, n, ho, wo, cp)
    return jnp.transpose(y[..., :cout], (0, 3, 1, 2))       # back to NCHW


# ------------------------------ Reference -----------------------------------
# The reference mirrors the deliberate bf16 quantization of the MXU inputs and
# of the stored pre-BN activations (accumulation in f32), so it validates the
# kernel logic rather than the dtype choice.

def _conv_ref(x_nhwc, w_oihw, b, stride, pad):
    out = jax.lax.conv_general_dilated(
        x_nhwc.astype(jnp.bfloat16),
        jnp.transpose(w_oihw, (2, 3, 1, 0)).astype(jnp.bfloat16),
        window_strides=(stride, stride), padding=[(pad, pad), (pad, pad)],
        dimension_numbers=('NHWC', 'HWIO', 'NHWC'),
        preferred_element_type=jnp.float32)
    return out + b


def _bn_relu_ref(z, g, beta):
    z = z.astype(jnp.bfloat16).astype(jnp.float32)   # mirror kernel's bf16 z store
    mean = jnp.mean(z, axis=(0, 1, 2), keepdims=True)
    var = jnp.mean((z - mean) ** 2, axis=(0, 1, 2), keepdims=True)
    return jnp.maximum((z - mean) * jax.lax.rsqrt(var + EPS) * g + beta, 0.0)


def res_block_ref(x_nchw, params, stride=1, padding=1):
    x = jnp.transpose(x_nchw, (0, 2, 3, 1)).astype(jnp.float32)
    y1 = _bn_relu_ref(_conv_ref(x, params["w1"], params["b1"], stride, padding),
                      params["g1"], params["beta1"])
    y2 = _bn_relu_ref(_conv_ref(y1, params["w2"], params["b2"], 1, padding),
                      params["g2"], params["beta2"])
    sc = _conv_ref(x, params["ws"], params["bs"], stride, 0)
    return jnp.transpose(y2 + sc, (0, 3, 1, 2))


# --------------------------------- Main --------------------------------------

if __name__ == "__main__":
    key = jax.random.PRNGKey(0)
    N, Cin, H, W = 2, 4, 16, 16
    Cout, K, stride, pad = 8, 3, 1, 1

    ks = jax.random.split(key, 8)
    x = jax.random.normal(ks[0], (N, Cin, H, W), jnp.float32)

    params = {
        # conv1 (3x3, Cin->Cout) + BN
        "w1": 0.1 * jax.random.normal(ks[1], (Cout, Cin, K, K), jnp.float32),
        "b1": 0.1 * jax.random.normal(ks[2], (Cout,), jnp.float32),
        "g1": jnp.ones((Cout,), jnp.float32),
        "beta1": jnp.zeros((Cout,), jnp.float32),
        # conv2 (3x3, Cout->Cout) + BN
        "w2": 0.1 * jax.random.normal(ks[3], (Cout, Cout, K, K), jnp.float32),
        "b2": 0.1 * jax.random.normal(ks[4], (Cout,), jnp.float32),
        "g2": jnp.ones((Cout,), jnp.float32),
        "beta2": jnp.zeros((Cout,), jnp.float32),
        # shortcut (1x1, Cin->Cout)
        "ws": 0.1 * jax.random.normal(ks[5], (Cout, Cin, 1, 1), jnp.float32),
        "bs": 0.1 * jax.random.normal(ks[6], (Cout,), jnp.float32),
    }

    fwd = jax.jit(lambda xx, pp: res_block_forward(
        xx, pp, stride=stride, padding=pad, kernel_size=K))
    out = jax.block_until_ready(fwd(x, params))
    ref = jax.block_until_ready(res_block_ref(x, params, stride=stride,
                                              padding=pad))

    assert out.shape == (N, Cout, H, W), out.shape
    max_err = float(jnp.max(jnp.abs(out - ref)))
    assert jnp.allclose(out, ref, atol=1e-2, rtol=1e-2), max_err
    print("KERNEL_OK")
</pallas_src>

<mosaic_0001>
module attributes {stable_mosaic.version = 11 : i64} {
  func.func @conv1_kernel(%arg0: i32, %arg1: memref<1x18x18x128xbf16, #tpu.memory_space<vmem>>, %arg2: memref<9x128x128xbf16, #tpu.memory_space<vmem>>, %arg3: memref<1x128xf32, #tpu.memory_space<vmem>>, %arg4: memref<1x16x16x128xbf16, #tpu.memory_space<vmem>>, %arg5: memref<1x2x128xf32, #tpu.memory_space<vmem>>) attributes {dimension_semantics = [#tpu.dimension_semantics<parallel>], iteration_bounds = array<i64: 2>, scalar_prefetch = 0 : i64, scratch_operands = 0 : i64, tpu.core_type = #tpu.core_type<tc>, window_params = [{transform_indices = @transform_0, window_bounds = array<i64: 1, 18, 18, 128>}, {pipeline_mode = #tpu.pipeline_mode<synchronous>, transform_indices = @transform_1, window_bounds = array<i64: 9, 128, 128>}, {pipeline_mode = #tpu.pipeline_mode<synchronous>, transform_indices = @transform_2, window_bounds = array<i64: 1, 128>}, {transform_indices = @transform_3, window_bounds = array<i64: 1, 16, 16, 128>}, {transform_indices = @transform_4, window_bounds = array<i64: 1, 2, 128>}]} {
    %cst = arith.constant 0.000000e+00 : f32
    %0 = vector.broadcast %cst : f32 to vector<256x128xf32>
    %c0 = arith.constant 0 : index
    %c0_0 = arith.constant 0 : index
    %c0_1 = arith.constant 0 : index
    %c0_2 = arith.constant 0 : index
    %1 = vector.load %arg1[%c0, %c0_0, %c0_1, %c0_2] : memref<1x18x18x128xbf16, #tpu.memory_space<vmem>>, vector<1x16x16x128xbf16>
    %2 = vector.shape_cast %1 : vector<1x16x16x128xbf16> to vector<16x16x128xbf16>
    %3 = vector.shape_cast %2 : vector<16x16x128xbf16> to vector<256x128xbf16>
    %c0_3 = arith.constant 0 : index
    %c0_4 = arith.constant 0 : index
    %c0_5 = arith.constant 0 : index
    %4 = vector.load %arg2[%c0_3, %c0_4, %c0_5] : memref<9x128x128xbf16, #tpu.memory_space<vmem>>, vector<1x128x128xbf16>
    %5 = vector.shape_cast %4 : vector<1x128x128xbf16> to vector<128x128xbf16>
    %cst_6 = arith.constant dense<0.000000e+00> : vector<256x128xf32>
    %6 = tpu.matmul %3, %5, %cst_6 {dimension_numbers = #tpu.dot_dimension_numbers<[1], [0], [0], [1], [0, 0, 1, 1], [], []>} : vector<256x128xbf16>, vector<128x128xbf16>, vector<256x128xf32> -> vector<256x128xf32>
    %7 = arith.addf %0, %6 : vector<256x128xf32>
    %c0_7 = arith.constant 0 : index
    %c0_8 = arith.constant 0 : index
    %c1 = arith.constant 1 : index
    %c0_9 = arith.constant 0 : index
    %8 = vector.load %arg1[%c0_7, %c0_8, %c1, %c0_9] : memref<1x18x18x128xbf16, #tpu.memory_space<vmem>>, vector<1x16x16x128xbf16>
    %9 = vector.shape_cast %8 : vector<1x16x16x128xbf16> to vector<16x16x128xbf16>
    %10 = vector.shape_cast %9 : vector<16x16x128xbf16> to vector<256x128xbf16>
    %c1_10 = arith.constant 1 : index
    %c0_11 = arith.constant 0 : index
    %c0_12 = arith.constant 0 : index
    %11 = vector.load %arg2[%c1_10, %c0_11, %c0_12] : memref<9x128x128xbf16, #tpu.memory_space<vmem>>, vector<1x128x128xbf16>
    %12 = vector.shape_cast %11 : vector<1x128x128xbf16> to vector<128x128xbf16>
    %cst_13 = arith.constant dense<0.000000e+00> : vector<256x128xf32>
    %13 = tpu.matmul %10, %12, %cst_13 {dimension_numbers = #tpu.dot_dimension_numbers<[1], [0], [0], [1], [0, 0, 1, 1], [], []>} : vector<256x128xbf16>, vector<128x128xbf16>, vector<256x128xf32> -> vector<256x128xf32>
    %14 = arith.addf %7, %13 : vector<256x128xf32>
    %c0_14 = arith.constant 0 : index
    %c0_15 = arith.constant 0 : index
    %c2 = arith.constant 2 : index
    %c0_16 = arith.constant 0 : index
    %15 = vector.load %arg1[%c0_14, %c0_15, %c2, %c0_16] : memref<1x18x18x128xbf16, #tpu.memory_space<vmem>>, vector<1x16x16x128xbf16>
    %16 = vector.shape_cast %15 : vector<1x16x16x128xbf16> to vector<16x16x128xbf16>
    %17 = vector.shape_cast %16 : vector<16x16x128xbf16> to vector<256x128xbf16>
    %c2_17 = arith.constant 2 : index
    %c0_18 = arith.constant 0 : index
    %c0_19 = arith.constant 0 : index
    %18 = vector.load %arg2[%c2_17, %c0_18, %c0_19] : memref<9x128x128xbf16, #tpu.memory_space<vmem>>, vector<1x128x128xbf16>
    %19 = vector.shape_cast %18 : vector<1x128x128xbf16> to vector<128x128xbf16>
    %cst_20 = arith.constant dense<0.000000e+00> : vector<256x128xf32>
    %20 = tpu.matmul %17, %19, %cst_20 {dimension_numbers = #tpu.dot_dimension_numbers<[1], [0], [0], [1], [0, 0, 1, 1], [], []>} : vector<256x128xbf16>, vector<128x128xbf16>, vector<256x128xf32> -> vector<256x128xf32>
    %21 = arith.addf %14, %20 : vector<256x128xf32>
    %c0_21 = arith.constant 0 : index
    %c1_22 = arith.constant 1 : index
    %c0_23 = arith.constant 0 : index
    %c0_24 = arith.constant 0 : index
    %22 = vector.load %arg1[%c0_21, %c1_22, %c0_23, %c0_24] : memref<1x18x18x128xbf16, #tpu.memory_space<vmem>>, vector<1x16x16x128xbf16>
    %23 = vector.shape_cast %22 : vector<1x16x16x128xbf16> to vector<16x16x128xbf16>
    %24 = vector.shape_cast %23 : vector<16x16x128xbf16> to vector<256x128xbf16>
    %c3 = arith.constant 3 : index
    %c0_25 = arith.constant 0 : index
    %c0_26 = arith.constant 0 : index
    %25 = vector.load %arg2[%c3, %c0_25, %c0_26] : memref<9x128x128xbf16, #tpu.memory_space<vmem>>, vector<1x128x128xbf16>
    %26 = vector.shape_cast %25 : vector<1x128x128xbf16> to vector<128x128xbf16>
    %cst_27 = arith.constant dense<0.000000e+00> : vector<256x128xf32>
    %27 = tpu.matmul %24, %26, %cst_27 {dimension_numbers = #tpu.dot_dimension_numbers<[1], [0], [0], [1], [0, 0, 1, 1], [], []>} : vector<256x128xbf16>, vector<128x128xbf16>, vector<256x128xf32> -> vector<256x128xf32>
    %28 = arith.addf %21, %27 : vector<256x128xf32>
    %c0_28 = arith.constant 0 : index
    %c1_29 = arith.constant 1 : index
    %c1_30 = arith.constant 1 : index
    %c0_31 = arith.constant 0 : index
    %29 = vector.load %arg1[%c0_28, %c1_29, %c1_30, %c0_31] : memref<1x18x18x128xbf16, #tpu.memory_space<vmem>>, vector<1x16x16x128xbf16>
    %30 = vector.shape_cast %29 : vector<1x16x16x128xbf16> to vector<16x16x128xbf16>
    %31 = vector.shape_cast %30 : vector<16x16x128xbf16> to vector<256x128xbf16>
    %c4 = arith.constant 4 : index
    %c0_32 = arith.constant 0 : index
    %c0_33 = arith.constant 0 : index
    %32 = vector.load %arg2[%c4, %c0_32, %c0_33] : memref<9x128x128xbf16, #tpu.memory_space<vmem>>, vector<1x128x128xbf16>
    %33 = vector.shape_cast %32 : vector<1x128x128xbf16> to vector<128x128xbf16>
    %cst_34 = arith.constant dense<0.000000e+00> : vector<256x128xf32>
    %34 = tpu.matmul %31, %33, %cst_34 {dimension_numbers = #tpu.dot_dimension_numbers<[1], [0], [0], [1], [0, 0, 1, 1], [], []>} : vector<256x128xbf16>, vector<128x128xbf16>, vector<256x128xf32> -> vector<256x128xf32>
    %35 = arith.addf %28, %34 : vector<256x128xf32>
    %c0_35 = arith.constant 0 : index
    %c1_36 = arith.constant 1 : index
    %c2_37 = arith.constant 2 : index
    %c0_38 = arith.constant 0 : index
    %36 = vector.load %arg1[%c0_35, %c1_36, %c2_37, %c0_38] : memref<1x18x18x128xbf16, #tpu.memory_space<vmem>>, vector<1x16x16x128xbf16>
    %37 = vector.shape_cast %36 : vector<1x16x16x128xbf16> to vector<16x16x128xbf16>
    %38 = vector.shape_cast %37 : vector<16x16x128xbf16> to vector<256x128xbf16>
    %c5 = arith.constant 5 : index
    %c0_39 = arith.constant 0 : index
    %c0_40 = arith.constant 0 : index
    %39 = vector.load %arg2[%c5, %c0_39, %c0_40] : memref<9x128x128xbf16, #tpu.memory_space<vmem>>, vector<1x128x128xbf16>
    %40 = vector.shape_cast %39 : vector<1x128x128xbf16> to vector<128x128xbf16>
    %cst_41 = arith.constant dense<0.000000e+00> : vector<256x128xf32>
    %41 = tpu.matmul %38, %40, %cst_41 {dimension_numbers = #tpu.dot_dimension_numbers<[1], [0], [0], [1], [0, 0, 1, 1], [], []>} : vector<256x128xbf16>, vector<128x128xbf16>, vector<256x128xf32> -> vector<256x128xf32>
    %42 = arith.addf %35, %41 : vector<256x128xf32>
    %c0_42 = arith.constant 0 : index
    %c2_43 = arith.constant 2 : index
    %c0_44 = arith.constant 0 : index
    %c0_45 = arith.constant 0 : index
    %43 = vector.load %arg1[%c0_42, %c2_43, %c0_44, %c0_45] : memref<1x18x18x128xbf16, #tpu.memory_space<vmem>>, vector<1x16x16x128xbf16>
    %44 = vector.shape_cast %43 : vector<1x16x16x128xbf16> to vector<16x16x128xbf16>
    %45 = vector.shape_cast %44 : vector<16x16x128xbf16> to vector<256x128xbf16>
    %c6 = arith.constant 6 : index
    %c0_46 = arith.constant 0 : index
    %c0_47 = arith.constant 0 : index
    %46 = vector.load %arg2[%c6, %c0_46, %c0_47] : memref<9x128x128xbf16, #tpu.memory_space<vmem>>, vector<1x128x128xbf16>
    %47 = vector.shape_cast %46 : vector<1x128x128xbf16> to vector<128x128xbf16>
    %cst_48 = arith.constant dense<0.000000e+00> : vector<256x128xf32>
    %48 = tpu.matmul %45, %47, %cst_48 {dimension_numbers = #tpu.dot_dimension_numbers<[1], [0], [0], [1], [0, 0, 1, 1], [], []>} : vector<256x128xbf16>, vector<128x128xbf16>, vector<256x128xf32> -> vector<256x128xf32>
    %49 = arith.addf %42, %48 : vector<256x128xf32>
    %c0_49 = arith.constant 0 : index
    %c2_50 = arith.constant 2 : index
    %c1_51 = arith.constant 1 : index
    %c0_52 = arith.constant 0 : index
    %50 = vector.load %arg1[%c0_49, %c2_50, %c1_51, %c0_52] : memref<1x18x18x128xbf16, #tpu.memory_space<vmem>>, vector<1x16x16x128xbf16>
    %51 = vector.shape_cast %50 : vector<1x16x16x128xbf16> to vector<16x16x128xbf16>
    %52 = vector.shape_cast %51 : vector<16x16x128xbf16> to vector<256x128xbf16>
    %c7 = arith.constant 7 : index
    %c0_53 = arith.constant 0 : index
    %c0_54 = arith.constant 0 : index
    %53 = vector.load %arg2[%c7, %c0_53, %c0_54] : memref<9x128x128xbf16, #tpu.memory_space<vmem>>, vector<1x128x128xbf16>
    %54 = vector.shape_cast %53 : vector<1x128x128xbf16> to vector<128x128xbf16>
    %cst_55 = arith.constant dense<0.000000e+00> : vector<256x128xf32>
    %55 = tpu.matmul %52, %54, %cst_55 {dimension_numbers = #tpu.dot_dimension_numbers<[1], [0], [0], [1], [0, 0, 1, 1], [], []>} : vector<256x128xbf16>, vector<128x128xbf16>, vector<256x128xf32> -> vector<256x128xf32>
    %56 = arith.addf %49, %55 : vector<256x128xf32>
    %c0_56 = arith.constant 0 : index
    %c2_57 = arith.constant 2 : index
    %c2_58 = arith.constant 2 : index
    %c0_59 = arith.constant 0 : index
    %57 = vector.load %arg1[%c0_56, %c2_57, %c2_58, %c0_59] : memref<1x18x18x128xbf16, #tpu.memory_space<vmem>>, vector<1x16x16x128xbf16>
    %58 = vector.shape_cast %57 : vector<1x16x16x128xbf16> to vector<16x16x128xbf16>
    %59 = vector.shape_cast %58 : vector<16x16x128xbf16> to vector<256x128xbf16>
    %c8 = arith.constant 8 : index
    %c0_60 = arith.constant 0 : index
    %c0_61 = arith.constant 0 : index
    %60 = vector.load %arg2[%c8, %c0_60, %c0_61] : memref<9x128x128xbf16, #tpu.memory_space<vmem>>, vector<1x128x128xbf16>
    %61 = vector.shape_cast %60 : vector<1x128x128xbf16> to vector<128x128xbf16>
    %cst_62 = arith.constant dense<0.000000e+00> : vector<256x128xf32>
    %62 = tpu.matmul %59, %61, %cst_62 {dimension_numbers = #tpu.dot_dimension_numbers<[1], [0], [0], [1], [0, 0, 1, 1], [], []>} : vector<256x128xbf16>, vector<128x128xbf16>, vector<256x128xf32> -> vector<256x128xf32>
    %63 = arith.addf %56, %62 : vector<256x128xf32>
    %c0_63 = arith.constant 0 : index
    %c0_64 = arith.constant 0 : index
    %64 = vector.load %arg3[%c0_63, %c0_64] : memref<1x128xf32, #tpu.memory_space<vmem>>, vector<1x128xf32>
    %65 = vector.broadcast %64 : vector<1x128xf32> to vector<256x128xf32>
    %66 = arith.addf %63, %65 : vector<256x128xf32>
    %67 = vector.shape_cast %66 : vector<256x128xf32> to vector<16x16x128xf32>
    %68 = arith.truncf %67 : vector<16x16x128xf32> to vector<16x16x128xbf16>
    %c0_65 = arith.constant 0 : index
    %c0_66 = arith.constant 0 : index
    %c0_67 = arith.constant 0 : index
    %c0_68 = arith.constant 0 : index
    %69 = vector.load %arg4[%c0_65, %c0_66, %c0_67, %c0_68] : memref<1x16x16x128xbf16, #tpu.memory_space<vmem>>, vector<1x16x16x128xbf16>
    %70 = vector.shape_cast %69 : vector<1x16x16x128xbf16> to vector<16x16x128xbf16>
    %71 = vector.shape_cast %68 : vector<16x16x128xbf16> to vector<1x16x16x128xbf16>
    tpu.vector_store %arg4[%c0_65, %c0_66, %c0_67, %c0_68], %71 {strides = array<i32>} : memref<1x16x16x128xbf16, #tpu.memory_space<vmem>>, vector<1x16x16x128xbf16>,
    %cst_69 = arith.constant dense<0.000000e+00> : vector<128xf32>
    %72 = vector.multi_reduction <add>, %66, %cst_69 [0] : vector<256x128xf32> to vector<128xf32>
    %73 = vector.shape_cast %72 : vector<128xf32> to vector<1x128xf32>
    %cst_70 = arith.constant 2.560000e+02 : f32
    %74 = vector.broadcast %cst_70 : f32 to vector<1x128xf32>
    %75 = arith.divf %73, %74 : vector<1x128xf32>
    %76 = vector.broadcast %75 : vector<1x128xf32> to vector<256x128xf32>
    %77 = arith.subf %66, %76 : vector<256x128xf32>
    %78 = arith.mulf %77, %77 : vector<256x128xf32>
    %cst_71 = arith.constant dense<0.000000e+00> : vector<128xf32>
    %79 = vector.multi_reduction <add>, %78, %cst_71 [0] : vector<256x128xf32> to vector<128xf32>
    %80 = vector.shape_cast %79 : vector<128xf32> to vector<1x128xf32>
    %c0_72 = arith.constant 0 : index
    %c0_73 = arith.constant 0 : index
    %c0_74 = arith.constant 0 : index
    %81 = vector.load %arg5[%c0_72, %c0_73, %c0_74] : memref<1x2x128xf32, #tpu.memory_space<vmem>>, vector<1x1x128xf32>
    %82 = vector.shape_cast %81 : vector<1x1x128xf32> to vector<1x128xf32>
    %83 = vector.shape_cast %73 : vector<1x128xf32> to vector<1x1x128xf32>
    tpu.vector_store %arg5[%c0_72, %c0_73, %c0_74], %83 {strides = array<i32>} : memref<1x2x128xf32, #tpu.memory_space<vmem>>, vector<1x1x128xf32>,
    %c0_75 = arith.constant 0 : index
    %c1_76 = arith.constant 1 : index
    %c0_77 = arith.constant 0 : index
    %84 = vector.load %arg5[%c0_75, %c1_76, %c0_77] : memref<1x2x128xf32, #tpu.memory_space<vmem>>, vector<1x1x128xf32>
    %85 = vector.shape_cast %84 : vector<1x1x128xf32> to vector<1x128xf32>
    %86 = vector.shape_cast %80 : vector<1x128xf32> to vector<1x1x128xf32>
    tpu.vector_store %arg5[%c0_75, %c1_76, %c0_77], %86 {strides = array<i32>} : memref<1x2x128xf32, #tpu.memory_space<vmem>>, vector<1x1x128xf32>,
    return
  }
  func.func @transform_0(%arg0: i32) -> (i32, i32, i32, i32) {
    %c0_i32 = arith.constant 0 : i32
    %c0_i32_0 = arith.constant 0 : i32
    %c0_i32_1 = arith.constant 0 : i32
    %c0_i32_2 = arith.constant 0 : i32
    return %arg0, %c0_i32, %c0_i32_0, %c0_i32_1 : i32, i32, i32, i32
  }
  func.func @transform_1(%arg0: i32) -> (i32, i32, i32) {
    %c0_i32 = arith.constant 0 : i32
    %c0_i32_0 = arith.constant 0 : i32
    %c0_i32_1 = arith.constant 0 : i32
    %c0_i32_2 = arith.constant 0 : i32
    return %c0_i32, %c0_i32_0, %c0_i32_1 : i32, i32, i32
  }
  func.func @transform_2(%arg0: i32) -> (i32, i32) {
    %c0_i32 = arith.constant 0 : i32
    %c0_i32_0 = arith.constant 0 : i32
    %c0_i32_1 = arith.constant 0 : i32
    return %c0_i32, %c0_i32_0 : i32, i32
  }
  func.func @transform_3(%arg0: i32) -> (i32, i32, i32, i32) {
    %c0_i32 = arith.constant 0 : i32
    %c0_i32_0 = arith.constant 0 : i32
    %c0_i32_1 = arith.constant 0 : i32
    %c0_i32_2 = arith.constant 0 : i32
    return %arg0, %c0_i32, %c0_i32_0, %c0_i32_1 : i32, i32, i32, i32
  }
  func.func @transform_4(%arg0: i32) -> (i32, i32, i32) {
    %c0_i32 = arith.constant 0 : i32
    %c0_i32_0 = arith.constant 0 : i32
    %c0_i32_1 = arith.constant 0 : i32
    return %arg0, %c0_i32, %c0_i32_0 : i32, i32, i32
  }
}

module attributes {stable_mosaic.version = 11 : i64} {
  func.func @bn2_shortcut_kernel(%arg0: i32, %arg1: memref<1x16x16x128xbf16, #tpu.memory_space<vmem>>, %arg2: memref<1x128xf32, #tpu.memory_space<vmem>>, %arg3: memref<1x128xf32, #tpu.memory_space<vmem>>, %arg4: memref<1x18x18x128xbf16, #tpu.memory_space<vmem>>, %arg5: memref<128x128xbf16, #tpu.memory_space<vmem>>, %arg6: memref<1x128xf32, #tpu.memory_space<vmem>>, %arg7: memref<1x16x16x128xf32, #tpu.memory_space<vmem>>) attributes {dimension_semantics = [#tpu.dimension_semantics<parallel>], iteration_bounds = array<i64: 2>, scalar_prefetch = 0 : i64, scratch_operands = 0 : i64, tpu.core_type = #tpu.core_type<tc>, window_params = [{transform_indices = @transform_0, window_bounds = array<i64: 1, 16, 16, 128>}, {pipeline_mode = #tpu.pipeline_mode<synchronous>, transform_indices = @transform_1, window_bounds = array<i64: 1, 128>}, {pipeline_mode = #tpu.pipeline_mode<synchronous>, transform_indices = @transform_2, window_bounds = array<i64: 1, 128>}, {transform_indices = @transform_3, window_bounds = array<i64: 1, 18, 18, 128>}, {pipeline_mode = #tpu.pipeline_mode<synchronous>, transform_indices = @transform_4, window_bounds = array<i64: 128, 128>}, {pipeline_mode = #tpu.pipeline_mode<synchronous>, transform_indices = @transform_5, window_bounds = array<i64: 1, 128>}, {transform_indices = @transform_6, window_bounds = array<i64: 1, 16, 16, 128>}]} {
    %c0 = arith.constant 0 : index
    %c0_0 = arith.constant 0 : index
    %0 = vector.load %arg2[%c0, %c0_0] : memref<1x128xf32, #tpu.memory_space<vmem>>, vector<1x128xf32>
    %1 = vector.shape_cast %0 : vector<1x128xf32> to vector<1x1x128xf32>
    %c0_1 = arith.constant 0 : index
    %c0_2 = arith.constant 0 : index
    %2 = vector.load %arg3[%c0_1, %c0_2] : memref<1x128xf32, #tpu.memory_space<vmem>>, vector<1x128xf32>
    %3 = vector.shape_cast %2 : vector<1x128xf32> to vector<1x1x128xf32>
    %c0_3 = arith.constant 0 : index
    %c0_4 = arith.constant 0 : index
    %c0_5 = arith.constant 0 : index
    %c0_6 = arith.constant 0 : index
    %4 = vector.load %arg1[%c0_3, %c0_4, %c0_5, %c0_6] : memref<1x16x16x128xbf16, #tpu.memory_space<vmem>>, vector<1x16x16x128xbf16>
    %5 = vector.shape_cast %4 : vector<1x16x16x128xbf16> to vector<16x16x128xbf16>
    %6 = arith.extf %5 : vector<16x16x128xbf16> to vector<16x16x128xf32>
    %7 = vector.broadcast %1 : vector<1x1x128xf32> to vector<16x16x128xf32>
    %8 = arith.mulf %6, %7 : vector<16x16x128xf32>
    %9 = vector.broadcast %3 : vector<1x1x128xf32> to vector<16x16x128xf32>
    %10 = arith.addf %8, %9 : vector<16x16x128xf32>
    %cst = arith.constant 0.000000e+00 : f32
    %11 = vector.broadcast %cst : f32 to vector<16x16x128xf32>
    %12 = arith.maximumf %10, %11 : vector<16x16x128xf32>
    %c0_7 = arith.constant 0 : index
    %c1 = arith.constant 1 : index
    %c1_8 = arith.constant 1 : index
    %c0_9 = arith.constant 0 : index
    %13 = vector.load %arg4[%c0_7, %c1, %c1_8, %c0_9] : memref<1x18x18x128xbf16, #tpu.memory_space<vmem>>, vector<1x16x16x128xbf16>
    %14 = vector.shape_cast %13 : vector<1x16x16x128xbf16> to vector<16x16x128xbf16>
    %15 = vector.shape_cast %14 : vector<16x16x128xbf16> to vector<256x128xbf16>
    %c0_10 = arith.constant 0 : index
    %c0_11 = arith.constant 0 : index
    %16 = vector.load %arg5[%c0_10, %c0_11] : memref<128x128xbf16, #tpu.memory_space<vmem>>, vector<128x128xbf16>
    %cst_12 = arith.constant dense<0.000000e+00> : vector<256x128xf32>
    %17 = tpu.matmul %15, %16, %cst_12 {dimension_numbers = #tpu.dot_dimension_numbers<[1], [0], [0], [1], [0, 0, 1, 1], [], []>} : vector<256x128xbf16>, vector<128x128xbf16>, vector<256x128xf32> -> vector<256x128xf32>
    %18 = vector.shape_cast %17 : vector<256x128xf32> to vector<16x16x128xf32>
    %19 = arith.addf %12, %18 : vector<16x16x128xf32>
    %c0_13 = arith.constant 0 : index
    %c0_14 = arith.constant 0 : index
    %20 = vector.load %arg6[%c0_13, %c0_14] : memref<1x128xf32, #tpu.memory_space<vmem>>, vector<1x128xf32>
    %21 = vector.shape_cast %20 : vector<1x128xf32> to vector<1x1x128xf32>
    %22 = vector.broadcast %21 : vector<1x1x128xf32> to vector<16x16x128xf32>
    %23 = arith.addf %19, %22 : vector<16x16x128xf32>
    %c0_15 = arith.constant 0 : index
    %c0_16 = arith.constant 0 : index
    %c0_17 = arith.constant 0 : index
    %c0_18 = arith.constant 0 : index
    %24 = vector.load %arg7[%c0_15, %c0_16, %c0_17, %c0_18] : memref<1x16x16x128xf32, #tpu.memory_space<vmem>>, vector<1x16x16x128xf32>
    %25 = vector.shape_cast %24 : vector<1x16x16x128xf32> to vector<16x16x128xf32>
    %26 = vector.shape_cast %23 : vector<16x16x128xf32> to vector<1x16x16x128xf32>
    tpu.vector_store %arg7[%c0_15, %c0_16, %c0_17, %c0_18], %26 {strides = array<i32>} : memref<1x16x16x128xf32, #tpu.memory_space<vmem>>, vector<1x16x16x128xf32>,
    return
  }
  func.func @transform_0(%arg0: i32) -> (i32, i32, i32, i32) {
    %c0_i32 = arith.constant 0 : i32
    %c0_i32_0 = arith.constant 0 : i32
    %c0_i32_1 = arith.constant 0 : i32
    %c0_i32_2 = arith.constant 0 : i32
    return %arg0, %c0_i32, %c0_i32_0, %c0_i32_1 : i32, i32, i32, i32
  }
  func.func @transform_1(%arg0: i32) -> (i32, i32) {
    %c0_i32 = arith.constant 0 : i32
    %c0_i32_0 = arith.constant 0 : i32
    %c0_i32_1 = arith.constant 0 : i32
    return %c0_i32, %c0_i32_0 : i32, i32
  }
  func.func @transform_2(%arg0: i32) -> (i32, i32) {
    %c0_i32 = arith.constant 0 : i32
    %c0_i32_0 = arith.constant 0 : i32
    %c0_i32_1 = arith.constant 0 : i32
    return %c0_i32, %c0_i32_0 : i32, i32
  }
  func.func @transform_3(%arg0: i32) -> (i32, i32, i32, i32) {
    %c0_i32 = arith.constant 0 : i32
    %c0_i32_0 = arith.constant 0 : i32
    %c0_i32_1 = arith.constant 0 : i32
    %c0_i32_2 = arith.constant 0 : i32
    return %arg0, %c0_i32, %c0_i32_0, %c0_i32_1 : i32, i32, i32, i32
  }
  func.func @transform_4(%arg0: i32) -> (i32, i32) {
    %c0_i32 = arith.constant 0 : i32
    %c0_i32_0 = arith.constant 0 : i32
    %c0_i32_1 = arith.constant 0 : i32
    return %c0_i32, %c0_i32_0 : i32, i32
  }
  func.func @transform_5(%arg0: i32) -> (i32, i32) {
    %c0_i32 = arith.constant 0 : i32
    %c0_i32_0 = arith.constant 0 : i32
    %c0_i32_1 = arith.constant 0 : i32
    return %c0_i32, %c0_i32_0 : i32, i32
  }
  func.func @transform_6(%arg0: i32) -> (i32, i32, i32, i32) {
    %c0_i32 = arith.constant 0 : i32
    %c0_i32_0 = arith.constant 0 : i32
    %c0_i32_1 = arith.constant 0 : i32
    %c0_i32_2 = arith.constant 0 : i32
    return %arg0, %c0_i32, %c0_i32_0, %c0_i32_1 : i32, i32, i32, i32
  }
}

module attributes {stable_mosaic.version = 11 : i64} {
  func.func @bn1_conv2_kernel(%arg0: i32, %arg1: memref<1x16x16x128xbf16, #tpu.memory_space<vmem>>, %arg2: memref<1x128xf32, #tpu.memory_space<vmem>>, %arg3: memref<1x128xf32, #tpu.memory_space<vmem>>, %arg4: memref<9x128x128xbf16, #tpu.memory_space<vmem>>, %arg5: memref<1x128xf32, #tpu.memory_space<vmem>>, %arg6: memref<1x16x16x128xbf16, #tpu.memory_space<vmem>>, %arg7: memref<1x2x128xf32, #tpu.memory_space<vmem>>, %arg8: memref<18x18x128xbf16, #tpu.memory_space<vmem>>) attributes {dimension_semantics = [#tpu.dimension_semantics<parallel>], iteration_bounds = array<i64: 2>, scalar_prefetch = 0 : i64, scratch_operands = 1 : i64, tpu.core_type = #tpu.core_type<tc>, window_params = [{transform_indices = @transform_0, window_bounds = array<i64: 1, 16, 16, 128>}, {pipeline_mode = #tpu.pipeline_mode<synchronous>, transform_indices = @transform_1, window_bounds = array<i64: 1, 128>}, {pipeline_mode = #tpu.pipeline_mode<synchronous>, transform_indices = @transform_2, window_bounds = array<i64: 1, 128>}, {pipeline_mode = #tpu.pipeline_mode<synchronous>, transform_indices = @transform_3, window_bounds = array<i64: 9, 128, 128>}, {pipeline_mode = #tpu.pipeline_mode<synchronous>, transform_indices = @transform_4, window_bounds = array<i64: 1, 128>}, {transform_indices = @transform_5, window_bounds = array<i64: 1, 16, 16, 128>}, {transform_indices = @transform_6, window_bounds = array<i64: 1, 2, 128>}]} {
    %c0 = arith.constant 0 : index
    %c0_0 = arith.constant 0 : index
    %0 = vector.load %arg2[%c0, %c0_0] : memref<1x128xf32, #tpu.memory_space<vmem>>, vector<1x128xf32>
    %1 = vector.shape_cast %0 : vector<1x128xf32> to vector<1x1x128xf32>
    %c0_1 = arith.constant 0 : index
    %c0_2 = arith.constant 0 : index
    %2 = vector.load %arg3[%c0_1, %c0_2] : memref<1x128xf32, #tpu.memory_space<vmem>>, vector<1x128xf32>
    %3 = vector.shape_cast %2 : vector<1x128xf32> to vector<1x1x128xf32>
    %c0_3 = arith.constant 0 : index
    %c0_4 = arith.constant 0 : index
    %c0_5 = arith.constant 0 : index
    %c0_6 = arith.constant 0 : index
    %4 = vector.load %arg1[%c0_3, %c0_4, %c0_5, %c0_6] : memref<1x16x16x128xbf16, #tpu.memory_space<vmem>>, vector<1x16x16x128xbf16>
    %5 = vector.shape_cast %4 : vector<1x16x16x128xbf16> to vector<16x16x128xbf16>
    %6 = arith.extf %5 : vector<16x16x128xbf16> to vector<16x16x128xf32>
    %7 = vector.broadcast %1 : vector<1x1x128xf32> to vector<16x16x128xf32>
    %8 = arith.mulf %6, %7 : vector<16x16x128xf32>
    %9 = vector.broadcast %3 : vector<1x1x128xf32> to vector<16x16x128xf32>
    %10 = arith.addf %8, %9 : vector<16x16x128xf32>
    %cst = arith.constant 0.000000e+00 : f32
    %11 = vector.broadcast %cst : f32 to vector<16x16x128xf32>
    %12 = arith.maximumf %10, %11 : vector<16x16x128xf32>
    %cst_7 = arith.constant 0.000000e+00 : bf16
    %13 = vector.broadcast %cst_7 : bf16 to vector<18x18x128xbf16>
    %c0_8 = arith.constant 0 : index
    %c0_9 = arith.constant 0 : index
    %c0_10 = arith.constant 0 : index
    %14 = vector.load %arg8[%c0_8, %c0_9, %c0_10] : memref<18x18x128xbf16, #tpu.memory_space<vmem>>, vector<18x18x128xbf16>
    tpu.vector_store %arg8[%c0_8, %c0_9, %c0_10], %13 {strides = array<i32>} : memref<18x18x128xbf16, #tpu.memory_space<vmem>>, vector<18x18x128xbf16>,
    %15 = arith.truncf %12 : vector<16x16x128xf32> to vector<16x16x128xbf16>
    %c1 = arith.constant 1 : index
    %c1_11 = arith.constant 1 : index
    %c0_12 = arith.constant 0 : index
    %16 = vector.load %arg8[%c1, %c1_11, %c0_12] : memref<18x18x128xbf16, #tpu.memory_space<vmem>>, vector<16x16x128xbf16>
    tpu.vector_store %arg8[%c1, %c1_11, %c0_12], %15 {strides = array<i32>} : memref<18x18x128xbf16, #tpu.memory_space<vmem>>, vector<16x16x128xbf16>,
    %cst_13 = arith.constant 0.000000e+00 : f32
    %17 = vector.broadcast %cst_13 : f32 to vector<256x128xf32>
    %c0_14 = arith.constant 0 : index
    %c0_15 = arith.constant 0 : index
    %c0_16 = arith.constant 0 : index
    %18 = vector.load %arg8[%c0_14, %c0_15, %c0_16] : memref<18x18x128xbf16, #tpu.memory_space<vmem>>, vector<16x16x128xbf16>
    %19 = vector.shape_cast %18 : vector<16x16x128xbf16> to vector<256x128xbf16>
    %c0_17 = arith.constant 0 : index
    %c0_18 = arith.constant 0 : index
    %c0_19 = arith.constant 0 : index
    %20 = vector.load %arg4[%c0_17, %c0_18, %c0_19] : memref<9x128x128xbf16, #tpu.memory_space<vmem>>, vector<1x128x128xbf16>
    %21 = vector.shape_cast %20 : vector<1x128x128xbf16> to vector<128x128xbf16>
    %cst_20 = arith.constant dense<0.000000e+00> : vector<256x128xf32>
    %22 = tpu.matmul %19, %21, %cst_20 {dimension_numbers = #tpu.dot_dimension_numbers<[1], [0], [0], [1], [0, 0, 1, 1], [], []>} : vector<256x128xbf16>, vector<128x128xbf16>, vector<256x128xf32> -> vector<256x128xf32>
    %23 = arith.addf %17, %22 : vector<256x128xf32>
    %c0_21 = arith.constant 0 : index
    %c1_22 = arith.constant 1 : index
    %c0_23 = arith.constant 0 : index
    %24 = vector.load %arg8[%c0_21, %c1_22, %c0_23] : memref<18x18x128xbf16, #tpu.memory_space<vmem>>, vector<16x16x128xbf16>
    %25 = vector.shape_cast %24 : vector<16x16x128xbf16> to vector<256x128xbf16>
    %c1_24 = arith.constant 1 : index
    %c0_25 = arith.constant 0 : index
    %c0_26 = arith.constant 0 : index
    %26 = vector.load %arg4[%c1_24, %c0_25, %c0_26] : memref<9x128x128xbf16, #tpu.memory_space<vmem>>, vector<1x128x128xbf16>
    %27 = vector.shape_cast %26 : vector<1x128x128xbf16> to vector<128x128xbf16>
    %cst_27 = arith.constant dense<0.000000e+00> : vector<256x128xf32>
    %28 = tpu.matmul %25, %27, %cst_27 {dimension_numbers = #tpu.dot_dimension_numbers<[1], [0], [0], [1], [0, 0, 1, 1], [], []>} : vector<256x128xbf16>, vector<128x128xbf16>, vector<256x128xf32> -> vector<256x128xf32>
    %29 = arith.addf %23, %28 : vector<256x128xf32>
    %c0_28 = arith.constant 0 : index
    %c2 = arith.constant 2 : index
    %c0_29 = arith.constant 0 : index
    %30 = vector.load %arg8[%c0_28, %c2, %c0_29] : memref<18x18x128xbf16, #tpu.memory_space<vmem>>, vector<16x16x128xbf16>
    %31 = vector.shape_cast %30 : vector<16x16x128xbf16> to vector<256x128xbf16>
    %c2_30 = arith.constant 2 : index
    %c0_31 = arith.constant 0 : index
    %c0_32 = arith.constant 0 : index
    %32 = vector.load %arg4[%c2_30, %c0_31, %c0_32] : memref<9x128x128xbf16, #tpu.memory_space<vmem>>, vector<1x128x128xbf16>
    %33 = vector.shape_cast %32 : vector<1x128x128xbf16> to vector<128x128xbf16>
    %cst_33 = arith.constant dense<0.000000e+00> : vector<256x128xf32>
    %34 = tpu.matmul %31, %33, %cst_33 {dimension_numbers = #tpu.dot_dimension_numbers<[1], [0], [0], [1], [0, 0, 1, 1], [], []>} : vector<256x128xbf16>, vector<128x128xbf16>, vector<256x128xf32> -> vector<256x128xf32>
    %35 = arith.addf %29, %34 : vector<256x128xf32>
    %c1_34 = arith.constant 1 : index
    %c0_35 = arith.constant 0 : index
    %c0_36 = arith.constant 0 : index
    %36 = vector.load %arg8[%c1_34, %c0_35, %c0_36] : memref<18x18x128xbf16, #tpu.memory_space<vmem>>, vector<16x16x128xbf16>
    %37 = vector.shape_cast %36 : vector<16x16x128xbf16> to vector<256x128xbf16>
    %c3 = arith.constant 3 : index
    %c0_37 = arith.constant 0 : index
    %c0_38 = arith.constant 0 : index
    %38 = vector.load %arg4[%c3, %c0_37, %c0_38] : memref<9x128x128xbf16, #tpu.memory_space<vmem>>, vector<1x128x128xbf16>
    %39 = vector.shape_cast %38 : vector<1x128x128xbf16> to vector<128x128xbf16>
    %cst_39 = arith.constant dense<0.000000e+00> : vector<256x128xf32>
    %40 = tpu.matmul %37, %39, %cst_39 {dimension_numbers = #tpu.dot_dimension_numbers<[1], [0], [0], [1], [0, 0, 1, 1], [], []>} : vector<256x128xbf16>, vector<128x128xbf16>, vector<256x128xf32> -> vector<256x128xf32>
    %41 = arith.addf %35, %40 : vector<256x128xf32>
    %c1_40 = arith.constant 1 : index
    %c1_41 = arith.constant 1 : index
    %c0_42 = arith.constant 0 : index
    %42 = vector.load %arg8[%c1_40, %c1_41, %c0_42] : memref<18x18x128xbf16, #tpu.memory_space<vmem>>, vector<16x16x128xbf16>
    %43 = vector.shape_cast %42 : vector<16x16x128xbf16> to vector<256x128xbf16>
    %c4 = arith.constant 4 : index
    %c0_43 = arith.constant 0 : index
    %c0_44 = arith.constant 0 : index
    %44 = vector.load %arg4[%c4, %c0_43, %c0_44] : memref<9x128x128xbf16, #tpu.memory_space<vmem>>, vector<1x128x128xbf16>
    %45 = vector.shape_cast %44 : vector<1x128x128xbf16> to vector<128x128xbf16>
    %cst_45 = arith.constant dense<0.000000e+00> : vector<256x128xf32>
    %46 = tpu.matmul %43, %45, %cst_45 {dimension_numbers = #tpu.dot_dimension_numbers<[1], [0], [0], [1], [0, 0, 1, 1], [], []>} : vector<256x128xbf16>, vector<128x128xbf16>, vector<256x128xf32> -> vector<256x128xf32>
    %47 = arith.addf %41, %46 : vector<256x128xf32>
    %c1_46 = arith.constant 1 : index
    %c2_47 = arith.constant 2 : index
    %c0_48 = arith.constant 0 : index
    %48 = vector.load %arg8[%c1_46, %c2_47, %c0_48] : memref<18x18x128xbf16, #tpu.memory_space<vmem>>, vector<16x16x128xbf16>
    %49 = vector.shape_cast %48 : vector<16x16x128xbf16> to vector<256x128xbf16>
    %c5 = arith.constant 5 : index
    %c0_49 = arith.constant 0 : index
    %c0_50 = arith.constant 0 : index
    %50 = vector.load %arg4[%c5, %c0_49, %c0_50] : memref<9x128x128xbf16, #tpu.memory_space<vmem>>, vector<1x128x128xbf16>
    %51 = vector.shape_cast %50 : vector<1x128x128xbf16> to vector<128x128xbf16>
    %cst_51 = arith.constant dense<0.000000e+00> : vector<256x128xf32>
    %52 = tpu.matmul %49, %51, %cst_51 {dimension_numbers = #tpu.dot_dimension_numbers<[1], [0], [0], [1], [0, 0, 1, 1], [], []>} : vector<256x128xbf16>, vector<128x128xbf16>, vector<256x128xf32> -> vector<256x128xf32>
    %53 = arith.addf %47, %52 : vector<256x128xf32>
    %c2_52 = arith.constant 2 : index
    %c0_53 = arith.constant 0 : index
    %c0_54 = arith.constant 0 : index
    %54 = vector.load %arg8[%c2_52, %c0_53, %c0_54] : memref<18x18x128xbf16, #tpu.memory_space<vmem>>, vector<16x16x128xbf16>
    %55 = vector.shape_cast %54 : vector<16x16x128xbf16> to vector<256x128xbf16>
    %c6 = arith.constant 6 : index
    %c0_55 = arith.constant 0 : index
    %c0_56 = arith.constant 0 : index
    %56 = vector.load %arg4[%c6, %c0_55, %c0_56] : memref<9x128x128xbf16, #tpu.memory_space<vmem>>, vector<1x128x128xbf16>
    %57 = vector.shape_cast %56 : vector<1x128x128xbf16> to vector<128x128xbf16>
    %cst_57 = arith.constant dense<0.000000e+00> : vector<256x128xf32>
    %58 = tpu.matmul %55, %57, %cst_57 {dimension_numbers = #tpu.dot_dimension_numbers<[1], [0], [0], [1], [0, 0, 1, 1], [], []>} : vector<256x128xbf16>, vector<128x128xbf16>, vector<256x128xf32> -> vector<256x128xf32>
    %59 = arith.addf %53, %58 : vector<256x128xf32>
    %c2_58 = arith.constant 2 : index
    %c1_59 = arith.constant 1 : index
    %c0_60 = arith.constant 0 : index
    %60 = vector.load %arg8[%c2_58, %c1_59, %c0_60] : memref<18x18x128xbf16, #tpu.memory_space<vmem>>, vector<16x16x128xbf16>
    %61 = vector.shape_cast %60 : vector<16x16x128xbf16> to vector<256x128xbf16>
    %c7 = arith.constant 7 : index
    %c0_61 = arith.constant 0 : index
    %c0_62 = arith.constant 0 : index
    %62 = vector.load %arg4[%c7, %c0_61, %c0_62] : memref<9x128x128xbf16, #tpu.memory_space<vmem>>, vector<1x128x128xbf16>
    %63 = vector.shape_cast %62 : vector<1x128x128xbf16> to vector<128x128xbf16>
    %cst_63 = arith.constant dense<0.000000e+00> : vector<256x128xf32>
    %64 = tpu.matmul %61, %63, %cst_63 {dimension_numbers = #tpu.dot_dimension_numbers<[1], [0], [0], [1], [0, 0, 1, 1], [], []>} : vector<256x128xbf16>, vector<128x128xbf16>, vector<256x128xf32> -> vector<256x128xf32>
    %65 = arith.addf %59, %64 : vector<256x128xf32>
    %c2_64 = arith.constant 2 : index
    %c2_65 = arith.constant 2 : index
    %c0_66 = arith.constant 0 : index
    %66 = vector.load %arg8[%c2_64, %c2_65, %c0_66] : memref<18x18x128xbf16, #tpu.memory_space<vmem>>, vector<16x16x128xbf16>
    %67 = vector.shape_cast %66 : vector<16x16x128xbf16> to vector<256x128xbf16>
    %c8 = arith.constant 8 : index
    %c0_67 = arith.constant 0 : index
    %c0_68 = arith.constant 0 : index
    %68 = vector.load %arg4[%c8, %c0_67, %c0_68] : memref<9x128x128xbf16, #tpu.memory_space<vmem>>, vector<1x128x128xbf16>
    %69 = vector.shape_cast %68 : vector<1x128x128xbf16> to vector<128x128xbf16>
    %cst_69 = arith.constant dense<0.000000e+00> : vector<256x128xf32>
    %70 = tpu.matmul %67, %69, %cst_69 {dimension_numbers = #tpu.dot_dimension_numbers<[1], [0], [0], [1], [0, 0, 1, 1], [], []>} : vector<256x128xbf16>, vector<128x128xbf16>, vector<256x128xf32> -> vector<256x128xf32>
    %71 = arith.addf %65, %70 : vector<256x128xf32>
    %c0_70 = arith.constant 0 : index
    %c0_71 = arith.constant 0 : index
    %72 = vector.load %arg5[%c0_70, %c0_71] : memref<1x128xf32, #tpu.memory_space<vmem>>, vector<1x128xf32>
    %73 = vector.broadcast %72 : vector<1x128xf32> to vector<256x128xf32>
    %74 = arith.addf %71, %73 : vector<256x128xf32>
    %75 = vector.shape_cast %74 : vector<256x128xf32> to vector<16x16x128xf32>
    %76 = arith.truncf %75 : vector<16x16x128xf32> to vector<16x16x128xbf16>
    %c0_72 = arith.constant 0 : index
    %c0_73 = arith.constant 0 : index
    %c0_74 = arith.constant 0 : index
    %c0_75 = arith.constant 0 : index
    %77 = vector.load %arg6[%c0_72, %c0_73, %c0_74, %c0_75] : memref<1x16x16x128xbf16, #tpu.memory_space<vmem>>, vector<1x16x16x128xbf16>
    %78 = vector.shape_cast %77 : vector<1x16x16x128xbf16> to vector<16x16x128xbf16>
    %79 = vector.shape_cast %76 : vector<16x16x128xbf16> to vector<1x16x16x128xbf16>
    tpu.vector_store %arg6[%c0_72, %c0_73, %c0_74, %c0_75], %79 {strides = array<i32>} : memref<1x16x16x128xbf16, #tpu.memory_space<vmem>>, vector<1x16x16x128xbf16>,
    %cst_76 = arith.constant dense<0.000000e+00> : vector<128xf32>
    %80 = vector.multi_reduction <add>, %74, %cst_76 [0] : vector<256x128xf32> to vector<128xf32>
    %81 = vector.shape_cast %80 : vector<128xf32> to vector<1x128xf32>
    %cst_77 = arith.constant 2.560000e+02 : f32
    %82 = vector.broadcast %cst_77 : f32 to vector<1x128xf32>
    %83 = arith.divf %81, %82 : vector<1x128xf32>
    %84 = vector.broadcast %83 : vector<1x128xf32> to vector<256x128xf32>
    %85 = arith.subf %74, %84 : vector<256x128xf32>
    %86 = arith.mulf %85, %85 : vector<256x128xf32>
    %cst_78 = arith.constant dense<0.000000e+00> : vector<128xf32>
    %87 = vector.multi_reduction <add>, %86, %cst_78 [0] : vector<256x128xf32> to vector<128xf32>
    %88 = vector.shape_cast %87 : vector<128xf32> to vector<1x128xf32>
    %c0_79 = arith.constant 0 : index
    %c0_80 = arith.constant 0 : index
    %c0_81 = arith.constant 0 : index
    %89 = vector.load %arg7[%c0_79, %c0_80, %c0_81] : memref<1x2x128xf32, #tpu.memory_space<vmem>>, vector<1x1x128xf32>
    %90 = vector.shape_cast %89 : vector<1x1x128xf32> to vector<1x128xf32>
    %91 = vector.shape_cast %81 : vector<1x128xf32> to vector<1x1x128xf32>
    tpu.vector_store %arg7[%c0_79, %c0_80, %c0_81], %91 {strides = array<i32>} : memref<1x2x128xf32, #tpu.memory_space<vmem>>, vector<1x1x128xf32>,
    %c0_82 = arith.constant 0 : index
    %c1_83 = arith.constant 1 : index
    %c0_84 = arith.constant 0 : index
    %92 = vector.load %arg7[%c0_82, %c1_83, %c0_84] : memref<1x2x128xf32, #tpu.memory_space<vmem>>, vector<1x1x128xf32>
    %93 = vector.shape_cast %92 : vector<1x1x128xf32> to vector<1x128xf32>
    %94 = vector.shape_cast %88 : vector<1x128xf32> to vector<1x1x128xf32>
    tpu.vector_store %arg7[%c0_82, %c1_83, %c0_84], %94 {strides = array<i32>} : memref<1x2x128xf32, #tpu.memory_space<vmem>>, vector<1x1x128xf32>,
    return
  }
  func.func @transform_0(%arg0: i32) -> (i32, i32, i32, i32) {
    %c0_i32 = arith.constant 0 : i32
    %c0_i32_0 = arith.constant 0 : i32
    %c0_i32_1 = arith.constant 0 : i32
    %c0_i32_2 = arith.constant 0 : i32
    return %arg0, %c0_i32, %c0_i32_0, %c0_i32_1 : i32, i32, i32, i32
  }
  func.func @transform_1(%arg0: i32) -> (i32, i32) {
    %c0_i32 = arith.constant 0 : i32
    %c0_i32_0 = arith.constant 0 : i32
    %c0_i32_1 = arith.constant 0 : i32
    return %c0_i32, %c0_i32_0 : i32, i32
  }
  func.func @transform_2(%arg0: i32) -> (i32, i32) {
    %c0_i32 = arith.constant 0 : i32
    %c0_i32_0 = arith.constant 0 : i32
    %c0_i32_1 = arith.constant 0 : i32
    return %c0_i32, %c0_i32_0 : i32, i32
  }
  func.func @transform_3(%arg0: i32) -> (i32, i32, i32) {
    %c0_i32 = arith.constant 0 : i32
    %c0_i32_0 = arith.constant 0 : i32
    %c0_i32_1 = arith.constant 0 : i32
    %c0_i32_2 = arith.constant 0 : i32
    return %c0_i32, %c0_i32_0, %c0_i32_1 : i32, i32, i32
  }
  func.func @transform_4(%arg0: i32) -> (i32, i32) {
    %c0_i32 = arith.constant 0 : i32
    %c0_i32_0 = arith.constant 0 : i32
    %c0_i32_1 = arith.constant 0 : i32
    return %c0_i32, %c0_i32_0 : i32, i32
  }
  func.func @transform_5(%arg0: i32) -> (i32, i32, i32, i32) {
    %c0_i32 = arith.constant 0 : i32
    %c0_i32_0 = arith.constant 0 : i32
    %c0_i32_1 = arith.constant 0 : i32
    %c0_i32_2 = arith.constant 0 : i32
    return %arg0, %c0_i32, %c0_i32_0, %c0_i32_1 : i32, i32, i32, i32
  }
  func.func @transform_6(%arg0: i32) -> (i32, i32, i32) {
    %c0_i32 = arith.constant 0 : i32
    %c0_i32_0 = arith.constant 0 : i32
    %c0_i32_1 = arith.constant 0 : i32
    return %arg0, %c0_i32, %c0_i32_0 : i32, i32, i32
  }
}

</mosaic_0001>

<llo_original>
// kernel: _lambda_.5
$region0: #{_lambda_.5}
  #allocation0 [shape = 'u32[]', space=smem, size = 0x4, offset = 0x4, fixed_abs, tag = 'smem constant byte address 0x4 - core index']
  #allocation1 [shape = 'u32[144,128]{1,0:T(1,128)}', space=vmem, size = 0x12000, scoped, tag = 'internal scratch']
  %s0 = inlined_call_operand.vmem [shape: bf16[2,16,16,128], index: 0, kind: input, shape index: {}]
  %s1 = inlined_call_operand.vmem [shape: f32[1,128], index: 1, kind: input, shape index: {}]
  %s2 = inlined_call_operand.vmem [shape: f32[1,128], index: 2, kind: input, shape index: {}]
  %s3 = inlined_call_operand.vmem [shape: bf16[2,18,18,128], index: 3, kind: input, shape index: {}]
  %s4 = inlined_call_operand.vmem [shape: bf16[128,128], index: 4, kind: input, shape index: {}]
  %s5 = inlined_call_operand.vmem [shape: f32[1,128], index: 5, kind: input, shape index: {}]
  %s6 = inlined_call_operand.vmem [shape: f32[2,16,16,128], index: 6, kind: output, shape index: {}]
  %s7 = sld [smem:[#allocation0]]
  $region57: #{_lambda_.5} parent=0
    _
  %s9 = ssub.s32 1, %s7
  %s10 = scalar_select 0, %s9, %s7
  loop: start=0, step=1, limit=4
  $region2: #{_lambda_.5} parent=0 // loop_pre_header
    _
  $region3: #{_lambda_.5} parent=0 // loop_header
    %s12 = sphi 0, %s16
    %p13 = scmp.ge.s32.totalorder %s12, 4
    %s22 = sphi 0, %s24
    %s25 = sphi 0, %s22
    %s26 = sphi 0, %s25
    %s42 = sphi 0, %s26
    %s46 = sphi 0, %s46
    %s48 = sphi 0, %s46
    %s49 = sphi 0, %s48
    %s63 = sphi 0, %s49
    %s67 = sphi 0, %s67
    %s69 = sphi 0, %s67
    %s70 = sphi 0, %s69
    %s84 = sphi 0, %s70
    %s90 = sphi 0, %s92
    %s93 = sphi 0, %s90
    %s94 = sphi 0, %s93
    %s110 = sphi 0, %s94
    %s114 = sphi 0, %s114
    %s116 = sphi 0, %s114
    %s117 = sphi 0, %s116
    %s131 = sphi 0, %s117
    %s135 = sphi 0, %s135
    %s137 = sphi 0, %s135
    %s138 = sphi 0, %s137
    %s152 = sphi 0, %s138
    %s158 = sphi 0, %s160
    %s161 = sphi 0, %s158
    %s162 = sphi 0, %s161
    %s178 = sphi 0, %s162
  $region4: #{_lambda_.5} parent=0 // loop_header_branch
    %15 = sbr.rel (%p13) target = $region8
  $region5: #{_lambda_.5} parent=0 // loop_body
    %s17 = ssub.s32 %s12, 1
    %s18 = ssub.s32 %s12, 2
    %s19 = sadd.s32 %s12, 1
    %s20 = ssub.s32 %s12, %s19
    %p21 = scmp.eq.s32.totalorder %s20, 0
    %s23 = sadd.s32 %s22, 1
    %s24 = scalar_select %p21, %s22, %s23
    %p27 = pneg %p21
    %p28 = scmp.eq.s32.totalorder %s12, 1
    %p29 = por %p27, %p28
    %p30 = scmp.ne.s32.totalorder %s22, %s25
    %p31 = scmp.eq.s32.totalorder %s12, 0
    %p32 = por %p30, %p31
    %p33 = scmp.ne.s32.totalorder %s22, %s25
    %p34 = scmp.eq.s32.totalorder %s17, 1
    %p35 = por %p33, %p34
    %p36 = scmp.ne.s32.totalorder %s25, %s26
    %p37 = scmp.eq.s32.totalorder %s17, 0
    %p38 = por %p36, %p37
    %p39 = scmp.ne.s32.totalorder %s25, %s26
    %p40 = scmp.eq.s32.totalorder %s18, 1
    %p41 = por %p39, %p40
    %p43 = scmp.ne.s32.totalorder %s26, %s42
    %p44 = scmp.eq.s32.totalorder %s18, 0
    %p45 = por %p43, %p44
    %s47 = sadd.s32 %s46, 1
    %p50 = scmp.eq.s32.totalorder %s12, 1
    %p51 = scmp.ne.s32.totalorder %s46, %s48
    %p52 = scmp.eq.s32.totalorder %s12, 0
    %p53 = por %p51, %p52
    %p54 = scmp.ne.s32.totalorder %s46, %s48
    %p55 = scmp.eq.s32.totalorder %s17, 1
    %p56 = por %p54, %p55
    %p57 = scmp.ne.s32.totalorder %s48, %s49
    %p58 = scmp.eq.s32.totalorder %s17, 0
    %p59 = por %p57, %p58
    %p60 = scmp.ne.s32.totalorder %s48, %s49
    %p61 = scmp.eq.s32.totalorder %s18, 1
    %p62 = por %p60, %p61
    %p64 = scmp.ne.s32.totalorder %s49, %s63
    %p65 = scmp.eq.s32.totalorder %s18, 0
    %p66 = por %p64, %p65
    %s68 = sadd.s32 %s67, 1
    %p71 = scmp.eq.s32.totalorder %s12, 1
    %p72 = scmp.ne.s32.totalorder %s67, %s69
    %p73 = scmp.eq.s32.totalorder %s12, 0
    %p74 = por %p72, %p73
    %p75 = scmp.ne.s32.totalorder %s67, %s69
    %p76 = scmp.eq.s32.totalorder %s17, 1
    %p77 = por %p75, %p76
    %p78 = scmp.ne.s32.totalorder %s69, %s70
    %p79 = scmp.eq.s32.totalorder %s17, 0
    %p80 = por %p78, %p79
    %p81 = scmp.ne.s32.totalorder %s69, %s70
    %p82 = scmp.eq.s32.totalorder %s18, 1
    %p83 = por %p81, %p82
    %p85 = scmp.ne.s32.totalorder %s70, %s84
    %p86 = scmp.eq.s32.totalorder %s18, 0
    %p87 = por %p85, %p86
    %s88 = ssub.s32 %s12, %s19
    %p89 = scmp.eq.s32.totalorder %s88, 0
    %s91 = sadd.s32 %s90, 1
    %s92 = scalar_select %p89, %s90, %s91
    %p95 = pneg %p89
    %p96 = scmp.eq.s32.totalorder %s12, 1
    %p97 = por %p95, %p96
    %p98 = scmp.ne.s32.totalorder %s90, %s93
    %p99 = scmp.eq.s32.totalorder %s12, 0
    %p100 = por %p98, %p99
    %p101 = scmp.ne.s32.totalorder %s90, %s93
    %p102 = scmp.eq.s32.totalorder %s17, 1
    %p103 = por %p101, %p102
    %p104 = scmp.ne.s32.totalorder %s93, %s94
    %p105 = scmp.eq.s32.totalorder %s17, 0
    %p106 = por %p104, %p105
    %p107 = scmp.ne.s32.totalorder %s93, %s94
    %p108 = scmp.eq.s32.totalorder %s18, 1
    %p109 = por %p107, %p108
    %p111 = scmp.ne.s32.totalorder %s94, %s110
    %p112 = scmp.eq.s32.totalorder %s18, 0
    %p113 = por %p111, %p112
    %s115 = sadd.s32 %s114, 1
    %p118 = scmp.eq.s32.totalorder %s12, 1
    %p119 = scmp.ne.s32.totalorder %s114, %s116
    %p120 = scmp.eq.s32.totalorder %s12, 0
    %p121 = por %p119, %p120
    %p122 = scmp.ne.s32.totalorder %s114, %s116
    %p123 = scmp.eq.s32.totalorder %s17, 1
    %p124 = por %p122, %p123
    %p125 = scmp.ne.s32.totalorder %s116, %s117
    %p126 = scmp.eq.s32.totalorder %s17, 0
    %p127 = por %p125, %p126
    %p128 = scmp.ne.s32.totalorder %s116, %s117
    %p129 = scmp.eq.s32.totalorder %s18, 1
    %p130 = por %p128, %p129
    %p132 = scmp.ne.s32.totalorder %s117, %s131
    %p133 = scmp.eq.s32.totalorder %s18, 0
    %p134 = por %p132, %p133
    %s136 = sadd.s32 %s135, 1
    %p139 = scmp.eq.s32.totalorder %s12, 1
    %p140 = scmp.ne.s32.totalorder %s135, %s137
    %p141 = scmp.eq.s32.totalorder %s12, 0
    %p142 = por %p140, %p141
    %p143 = scmp.ne.s32.totalorder %s135, %s137
    %p144 = scmp.eq.s32.totalorder %s17, 1
    %p145 = por %p143, %p144
    %p146 = scmp.ne.s32.totalorder %s137, %s138
    %p147 = scmp.eq.s32.totalorder %s17, 0
    %p148 = por %p146, %p147
    %p149 = scmp.ne.s32.totalorder %s137, %s138
    %p150 = scmp.eq.s32.totalorder %s18, 1
    %p151 = por %p149, %p150
    %p153 = scmp.ne.s32.totalorder %s138, %s152
    %p154 = scmp.eq.s32.totalorder %s18, 0
    %p155 = por %p153, %p154
    %s156 = ssub.s32 %s12, %s19
    %p157 = scmp.eq.s32.totalorder %s156, 0
    %s159 = sadd.s32 %s158, 1
    %s160 = scalar_select %p157, %s158, %s159
    %p163 = pneg %p157
    %p164 = scmp.eq.s32.totalorder %s12, 1
    %p165 = por %p163, %p164
    %p166 = scmp.ne.s32.totalorder %s158, %s161
    %p167 = scmp.eq.s32.totalorder %s12, 0
    %p168 = por %p166, %p167
    %p169 = scmp.ne.s32.totalorder %s158, %s161
    %p170 = scmp.eq.s32.totalorder %s17, 1
    %p171 = por %p169, %p170
    %p172 = scmp.ne.s32.totalorder %s161, %s162
    %p173 = scmp.eq.s32.totalorder %s17, 0
    %p174 = por %p172, %p173
    %p175 = scmp.ne.s32.totalorder %s161, %s162
    %p176 = scmp.eq.s32.totalorder %s18, 1
    %p177 = por %p175, %p176
    %p179 = scmp.ne.s32.totalorder %s162, %s178
    %p180 = scmp.eq.s32.totalorder %s18, 0
    %p181 = por %p179, %p180
    %p182 = scmp.le.s32.totalorder 1, %s12
    %p183 = scmp.lt.s32.totalorder %s12, 3
    %p184 = pnand %p182, %p183
    %p185 = pneg %p184
    // Predicated region
    $region9: #{_lambda_.5} parent=5 // pred_check
      _
    $region10: #{_lambda_.5} parent=5 // pred_check_branch
      %187 = sbr.rel (%p184) target = $region12
    $region11: #{_lambda_.5} parent=5 // pred_region
      %s188 = ssub.s32 %s12, 1
      // Predicated region
      $region13: #{_lambda_.5} parent=11 // pred_check
        %p189 = pneg %p59
      $region14: #{_lambda_.5} parent=11 // pred_check_branch
        %191 = sbr.rel (%p189) target = $region16
      $region15: #{_lambda_.5} parent=11 // pred_region
        _
      $region16: #{_lambda_.5} parent=11 // pred_fallthru
        _
      // Predicated region
      $region17: #{_lambda_.5} parent=11 // pred_check
        %p192 = pneg %p80
      $region18: #{_lambda_.5} parent=11 // pred_check_branch
        %194 = sbr.rel (%p192) target = $region20
      $region19: #{_lambda_.5} parent=11 // pred_region
        _
      $region20: #{_lambda_.5} parent=11 // pred_fallthru
        _
      // Predicated region
      $region21: #{_lambda_.5} parent=11 // pred_check
        %p195 = pneg %p127
      $region22: #{_lambda_.5} parent=11 // pred_check_branch
        %197 = sbr.rel (%p195) target = $region24
      $region23: #{_lambda_.5} parent=11 // pred_region
        _
      $region24: #{_lambda_.5} parent=11 // pred_fallthru
        _
      // Predicated region
      $region25: #{_lambda_.5} parent=11 // pred_check
        %p198 = pneg %p148
      $region26: #{_lambda_.5} parent=11 // pred_check_branch
        %200 = sbr.rel (%p198) target = $region28
      $region27: #{_lambda_.5} parent=11 // pred_region
        _
      $region28: #{_lambda_.5} parent=11 // pred_fallthru
        _
    $region12: #{_lambda_.5} parent=5 // pred_fallthru
      _
    %p201 = scmp.lt.s32.totalorder %s12, 2
    // Predicated region
    $region29: #{_lambda_.5} parent=5 // pred_check
      %p202 = pneg %p201
    $region30: #{_lambda_.5} parent=5 // pred_check_branch
      %204 = sbr.rel (%p202) target = $region32
    $region31: #{_lambda_.5} parent=5 // pred_region
      // Predicated region
      $region33: #{_lambda_.5} parent=31 // pred_check
        %p205 = pneg %p32
      $region34: #{_lambda_.5} parent=31 // pred_check_branch
        %207 = sbr.rel (%p205) target = $region36
      $region35: #{_lambda_.5} parent=31 // pred_region
        %p208 = scmp.lt.s32.totalorder %s12, 1
        %s209 = scalar_select %p208, %s12, 1
        %s210 = smul.addr %s209, 32
        %s211 = smul.addr %s210, 4
        %s212 = scalar_lea.vmem %s0, %s211
      $region36: #{_lambda_.5} parent=31 // pred_fallthru
        _
      // Predicated region
      $region37: #{_lambda_.5} parent=31 // pred_check
        %p213 = pneg %p100
      $region38: #{_lambda_.5} parent=31 // pred_check_branch
        %215 = sbr.rel (%p213) target = $region40
      $region39: #{_lambda_.5} parent=31 // pred_region
        %p216 = scmp.lt.s32.totalorder %s12, 1
        %s217 = scalar_select %p216, %s12, 1
        %s218 = smul.addr %s217, 54
        %s219 = smul.addr %s218, 4
        %s220 = scalar_lea.vmem %s3, %s219
      $region40: #{_lambda_.5} parent=31 // pred_fallthru
        _
    $region32: #{_lambda_.5} parent=5 // pred_fallthru
      _
    %p221 = scmp.le.s32.totalorder 1, %s12
    %p222 = scmp.lt.s32.totalorder %s12, 3
    %p223 = pnand %p221, %p222
    %p224 = pneg %p223
    // Predicated region
    $region41: #{_lambda_.5} parent=5 // pred_check
      _
    $region42: #{_lambda_.5} parent=5 // pred_check_branch
      %226 = sbr.rel (%p223) target = $region44
    $region43: #{_lambda_.5} parent=5 // pred_region
      %s227 = ssub.s32 %s12, 1
      %p228 = scmp.lt.s32.totalorder %s17, 1
      %s229 = scalar_select %p228, %s17, 1
      %s230 = smul.addr %s229, 32
      %s231 = smul.addr %s230, 4
      %s232 = scalar_lea.vmem %s0, %s231
      %p233 = pneg %p38
      %p234 = pneg %p35
      %p235 = pneg %p59
      %p236 = pneg %p56
      %p237 = pneg %p80
      %p238 = pneg %p77
      %p239 = scmp.lt.s32.totalorder %s17, 1
      %s240 = scalar_select %p239, %s17, 1
      %s241 = smul.addr %s240, 54
      %s242 = smul.addr %s241, 4
      %s243 = scalar_lea.vmem %s3, %s242
      %p244 = pneg %p106
      %p245 = pneg %p103
      %p246 = pneg %p127
      %p247 = pneg %p124
      %p248 = pneg %p148
      %p249 = pneg %p145
      %p250 = pneg %p174
      %p251 = pneg %p171
      %p252 = scmp.lt.s32.totalorder %s17, 1
      %s253 = scalar_select %p252, %s17, 1
      %s254 = smul.addr %s253, 32
      %s255 = smul.addr %s254, 8
      %s256 = scalar_lea.vmem %s6, %s255
      %p257 = scmp.lt.s32.totalorder %s17, 1
      %s258 = scalar_select %p257, %s17, 1
      %s259 = smul.addr %s258, 32
      %s260 = smul.addr %s259, 4
      %s261 = scalar_lea.vmem %s0, %s260
      %p262 = scmp.lt.s32.totalorder %s17, 1
      %s263 = scalar_select %p262, %s17, 1
      %s264 = smul.addr %s263, 54
      %s265 = smul.addr %s264, 4
      %s266 = scalar_lea.vmem %s3, %s265
      %p267 = scmp.lt.s32.totalorder %s17, 1
      %s268 = scalar_select %p267, %s17, 1
      %s269 = smul.addr %s268, 32
      %s270 = smul.addr %s269, 8
      %s271 = scalar_lea.vmem %s6, %s270
      %v273 = vld [vmem:[%s1] sm:$0x1]
      %v274 = vld [vmem:[%s2] sm:$0x1]
      %v275 = vld [vmem:[%s261] sm:$0xf]
      %v276 = vld [vmem:[%s261 + $0x4] sm:$0xf]
      %v277 = vld [vmem:[%s261 + $0x8] sm:$0xf]
      %v278 = vld [vmem:[%s261 + $0xc] sm:$0xf]
      %v279 = vld [vmem:[%s261 + $0x10] sm:$0xf]
      %v280 = vld [vmem:[%s261 + $0x14] sm:$0xf]
      %v281 = vld [vmem:[%s261 + $0x18] sm:$0xf]
      %v282 = vld [vmem:[%s261 + $0x1c] sm:$0xf]
      %v283 = vld [vmem:[%s261 + $0x20] sm:$0xf]
      %v284 = vld [vmem:[%s261 + $0x24] sm:$0xf]
      %v285 = vld [vmem:[%s261 + $0x28] sm:$0xf]
      %v286 = vld [vmem:[%s261 + $0x2c] sm:$0xf]
      %v287 = vld [vmem:[%s261 + $0x30] sm:$0xf]
      %v288 = vld [vmem:[%s261 + $0x34] sm:$0xf]
      %v289 = vld [vmem:[%s261 + $0x38] sm:$0xf]
      %v290 = vld [vmem:[%s261 + $0x3c] sm:$0xf]
      %v291 = vld [vmem:[%s261 + $0x40] sm:$0xf]
      %v292 = vld [vmem:[%s261 + $0x44] sm:$0xf]
      %v293 = vld [vmem:[%s261 + $0x48] sm:$0xf]
      %v294 = vld [vmem:[%s261 + $0x4c] sm:$0xf]
      %v295 = vld [vmem:[%s261 + $0x50] sm:$0xf]
      %v296 = vld [vmem:[%s261 + $0x54] sm:$0xf]
      %v297 = vld [vmem:[%s261 + $0x58] sm:$0xf]
      %v298 = vld [vmem:[%s261 + $0x5c] sm:$0xf]
      %v299 = vld [vmem:[%s261 + $0x60] sm:$0xf]
      %v300 = vld [vmem:[%s261 + $0x64] sm:$0xf]
      %v301 = vld [vmem:[%s261 + $0x68] sm:$0xf]
      %v302 = vld [vmem:[%s261 + $0x6c] sm:$0xf]
      %v303 = vld [vmem:[%s261 + $0x70] sm:$0xf]
      %v304 = vld [vmem:[%s261 + $0x74] sm:$0xf]
      %v305 = vld [vmem:[%s261 + $0x78] sm:$0xf]
      %v306 = vld [vmem:[%s261 + $0x7c] sm:$0xf]
      %v307 = vunpack.c.l.bf16 %v275
      %v308 = vunpack.c.l.bf16 %v276
      %v309 = vunpack.c.l.bf16 %v277
      %v310 = vunpack.c.l.bf16 %v278
      %v311 = vunpack.c.l.bf16 %v279
      %v312 = vunpack.c.l.bf16 %v280
      %v313 = vunpack.c.l.bf16 %v281
      %v314 = vunpack.c.l.bf16 %v282
      %v315 = vunpack.c.l.bf16 %v283
      %v316 = vunpack.c.l.bf16 %v284
      %v317 = vunpack.c.l.bf16 %v285
      %v318 = vunpack.c.l.bf16 %v286
      %v319 = vunpack.c.l.bf16 %v287
      %v320 = vunpack.c.l.bf16 %v288
      %v321 = vunpack.c.l.bf16 %v289
      %v322 = vunpack.c.l.bf16 %v290
      %v323 = vunpack.c.l.bf16 %v291
      %v324 = vunpack.c.l.bf16 %v292
      %v325 = vunpack.c.l.bf16 %v293
      %v326 = vunpack.c.l.bf16 %v294
      %v327 = vunpack.c.l.bf16 %v295
      %v328 = vunpack.c.l.bf16 %v296
      %v329 = vunpack.c.l.bf16 %v297
      %v330 = vunpack.c.l.bf16 %v298
      %v331 = vunpack.c.l.bf16 %v299
      %v332 = vunpack.c.l.bf16 %v300
      %v333 = vunpack.c.l.bf16 %v301
      %v334 = vunpack.c.l.bf16 %v302
      %v335 = vunpack.c.l.bf16 %v303
      %v336 = vunpack.c.l.bf16 %v304
      %v337 = vunpack.c.l.bf16 %v305
      %v338 = vunpack.c.l.bf16 %v306
      %v340 = vlaneseq
      %v341 = vshrl.u32 %v340, 7
      %v342 = vsub.s32 0, %v341
      %v343 = vrot.slane %v273, %v342
      %v345 = vmul.f32 %v307, %v343
      %v346 = vmul.f32 %v308, %v343
      %v347 = vmul.f32 %v309, %v343
      %v348 = vmul.f32 %v310, %v343
      %v349 = vmul.f32 %v311, %v343
      %v350 = vmul.f32 %v312, %v343
      %v351 = vmul.f32 %v313, %v343
      %v352 = vmul.f32 %v314, %v343
      %v353 = vmul.f32 %v315, %v343
      %v354 = vmul.f32 %v316, %v343
      %v355 = vmul.f32 %v317, %v343
      %v356 = vmul.f32 %v318, %v343
      %v357 = vmul.f32 %v319, %v343
      %v358 = vmul.f32 %v320, %v343
      %v359 = vmul.f32 %v321, %v343
      %v360 = vmul.f32 %v322, %v343
      %v361 = vmul.f32 %v323, %v343
      %v362 = vmul.f32 %v324, %v343
      %v363 = vmul.f32 %v325, %v343
      %v364 = vmul.f32 %v326, %v343
      %v365 = vmul.f32 %v327, %v343
      %v366 = vmul.f32 %v328, %v343
      %v367 = vmul.f32 %v329, %v343
      %v368 = vmul.f32 %v330, %v343
      %v369 = vmul.f32 %v331, %v343
      %v370 = vmul.f32 %v332, %v343
      %v371 = vmul.f32 %v333, %v343
      %v372 = vmul.f32 %v334, %v343
      %v373 = vmul.f32 %v335, %v343
      %v374 = vmul.f32 %v336, %v343
      %v375 = vmul.f32 %v337, %v343
      %v376 = vmul.f32 %v338, %v343
      %v378 = vlaneseq
      %v379 = vshrl.u32 %v378, 7
      %v380 = vsub.s32 0, %v379
      %v381 = vrot.slane %v274, %v380
      %v383 = vadd.f32 %v345, %v381
      %v384 = vadd.f32 %v346, %v381
      %v385 = vadd.f32 %v347, %v381
      %v386 = vadd.f32 %v348, %v381
      %v387 = vadd.f32 %v349, %v381
      %v388 = vadd.f32 %v350, %v381
      %v389 = vadd.f32 %v351, %v381
      %v390 = vadd.f32 %v352, %v381
      %v391 = vadd.f32 %v353, %v381
      %v392 = vadd.f32 %v354, %v381
      %v393 = vadd.f32 %v355, %v381
      %v394 = vadd.f32 %v356, %v381
      %v395 = vadd.f32 %v357, %v381
      %v396 = vadd.f32 %v358, %v381
      %v397 = vadd.f32 %v359, %v381
      %v398 = vadd.f32 %v360, %v381
      %v399 = vadd.f32 %v361, %v381
      %v400 = vadd.f32 %v362, %v381
      %v401 = vadd.f32 %v363, %v381
      %v402 = vadd.f32 %v364, %v381
      %v403 = vadd.f32 %v365, %v381
      %v404 = vadd.f32 %v366, %v381
      %v405 = vadd.f32 %v367, %v381
      %v406 = vadd.f32 %v368, %v381
      %v407 = vadd.f32 %v369, %v381
      %v408 = vadd.f32 %v370, %v381
      %v409 = vadd.f32 %v371, %v381
      %v410 = vadd.f32 %v372, %v381
      %v411 = vadd.f32 %v373, %v381
      %v412 = vadd.f32 %v374, %v381
      %v413 = vadd.f32 %v375, %v381
      %v414 = vadd.f32 %v376, %v381
      %v415 = vmax.f32 %v383, 0.0
      %v416 = vmax.f32 %v384, 0.0
      %v417 = vmax.f32 %v385, 0.0
      %v418 = vmax.f32 %v386, 0.0
      %v419 = vmax.f32 %v387, 0.0
      %v420 = vmax.f32 %v388, 0.0
      %v421 = vmax.f32 %v389, 0.0
      %v422 = vmax.f32 %v390, 0.0
      %v423 = vmax.f32 %v391, 0.0
      %v424 = vmax.f32 %v392, 0.0
      %v425 = vmax.f32 %v393, 0.0
      %v426 = vmax.f32 %v394, 0.0
      %v427 = vmax.f32 %v395, 0.0
      %v428 = vmax.f32 %v396, 0.0
      %v429 = vmax.f32 %v397, 0.0
      %v430 = vmax.f32 %v398, 0.0
      %v431 = vmax.f32 %v399, 0.0
      %v432 = vmax.f32 %v400, 0.0
      %v433 = vmax.f32 %v401, 0.0
      %v434 = vmax.f32 %v402, 0.0
      %v435 = vmax.f32 %v403, 0.0
      %v436 = vmax.f32 %v404, 0.0
      %v437 = vmax.f32 %v405, 0.0
      %v438 = vmax.f32 %v406, 0.0
      %v439 = vmax.f32 %v407, 0.0
      %v440 = vmax.f32 %v408, 0.0
      %v441 = vmax.f32 %v409, 0.0
      %v442 = vmax.f32 %v410, 0.0
      %v443 = vmax.f32 %v411, 0.0
      %v444 = vmax.f32 %v412, 0.0
      %v445 = vmax.f32 %v413, 0.0
      %v446 = vmax.f32 %v414, 0.0
      %s447 = scalar_lea.vmem %s266, 12
      %v448 = vld [vmem:[%s447] sm:$0xf]
      %v449 = vld [vmem:[%s447 + $0x4] sm:$0xf]
      %v450 = vld [vmem:[%s447 + $0x8] sm:$0x1]
      %v451 = vld [vmem:[%s447 + $0xc] sm:$0xf]
      %v452 = vld [vmem:[%s447 + $0x10] sm:$0xf]
      %v453 = vld [vmem:[%s447 + $0x14] sm:$0x1]
      %v454 = vld [vmem:[%s447 + $0x18] sm:$0xf]
      %v455 = vld [vmem:[%s447 + $0x1c] sm:$0xf]
      %v456 = vld [vmem:[%s447 + $0x20] sm:$0x1]
      %v457 = vld [vmem:[%s447 + $0x24] sm:$0xf]
      %v458 = vld [vmem:[%s447 + $0x28] sm:$0xf]
      %v459 = vld [vmem:[%s447 + $0x2c] sm:$0x1]
      %v460 = vld [vmem:[%s447 + $0x30] sm:$0xf]
      %v461 = vld [vmem:[%s447 + $0x34] sm:$0xf]
      %v462 = vld [vmem:[%s447 + $0x38] sm:$0x1]
      %v463 = vld [vmem:[%s447 + $0x3c] sm:$0xf]
      %v464 = vld [vmem:[%s447 + $0x40] sm:$0xf]
      %v465 = vld [vmem:[%s447 + $0x44] sm:$0x1]
      %v466 = vld [vmem:[%s447 + $0x48] sm:$0xf]
      %v467 = vld [vmem:[%s447 + $0x4c] sm:$0xf]
      %v468 = vld [vmem:[%s447 + $0x50] sm:$0x1]
      %v469 = vld [vmem:[%s447 + $0x54] sm:$0xf]
      %v470 = vld [vmem:[%s447 + $0x58] sm:$0xf]
      %v471 = vld [vmem:[%s447 + $0x5c] sm:$0x1]
      %v472 = vld [vmem:[%s447 + $0x60] sm:$0xf]
      %v473 = vld [vmem:[%s447 + $0x64] sm:$0xf]
      %v474 = vld [vmem:[%s447 + $0x68] sm:$0x1]
      %v475 = vld [vmem:[%s447 + $0x6c] sm:$0xf]
      %v476 = vld [vmem:[%s447 + $0x70] sm:$0xf]
      %v477 = vld [vmem:[%s447 + $0x74] sm:$0x1]
      %v478 = vld [vmem:[%s447 + $0x78] sm:$0xf]
      %v479 = vld [vmem:[%s447 + $0x7c] sm:$0xf]
      %v480 = vld [vmem:[%s447 + $0x80] sm:$0x1]
      %v481 = vld [vmem:[%s447 + $0x84] sm:$0xf]
      %v482 = vld [vmem:[%s447 + $0x88] sm:$0xf]
      %v483 = vld [vmem:[%s447 + $0x8c] sm:$0x1]
      %v484 = vld [vmem:[%s447 + $0x90] sm:$0xf]
      %v485 = vld [vmem:[%s447 + $0x94] sm:$0xf]
      %v486 = vld [vmem:[%s447 + $0x98] sm:$0x1]
      %v487 = vld [vmem:[%s447 + $0x9c] sm:$0xf]
      %v488 = vld [vmem:[%s447 + $0xa0] sm:$0xf]
      %v489 = vld [vmem:[%s447 + $0xa4] sm:$0x1]
      %v490 = vld [vmem:[%s447 + $0xa8] sm:$0xf]
      %v491 = vld [vmem:[%s447 + $0xac] sm:$0xf]
      %v492 = vld [vmem:[%s447 + $0xb0] sm:$0x1]
      %v493 = vld [vmem:[%s447 + $0xb4] sm:$0xf]
      %v494 = vld [vmem:[%s447 + $0xb8] sm:$0xf]
      %v495 = vld [vmem:[%s447 + $0xbc] sm:$0x1]
      %vm496 = vsmask.f32 3328
      %vm497 = vsmask.f32 7440
      %vm498 = vmor %vm496, %vm497
      %v500 = vshrl.u32 %v448, 16
      %v502 = vrot.slane %v500, 4
      %v503 = vshll.u32 %v448, 16
      %v505 = vrot.slane %v503, 5
      %v506 = vor.u32 %v502, %v505
      %v507 = vrot.slane %v506, 4
      %v509 = vshll.u32 %v449, 16
      %v511 = vrot.slane %v509, 5
      %v512 = vsel %vm498, %v507, %v511
      %v513 = vshrl.u32 %v449, 16
      %v515 = vrot.slane %v513, 4
      %v516 = vor.u32 %v515, %v511
      %v517 = vrot.slane %v516, 4
      %v519 = vshll.u32 %v450, 16
      %v521 = vrot.slane %v519, 5
      %v522 = vsel %vm498, %v517, %v521
      %v524 = vshrl.u32 %v451, 16
      %v526 = vrot.slane %v524, 4
      %v527 = vshll.u32 %v451, 16
      %v529 = vrot.slane %v527, 5
      %v530 = vor.u32 %v526, %v529
      %v531 = vrot.slane %v530, 4
      %v533 = vshll.u32 %v452, 16
      %v535 = vrot.slane %v533, 5
      %v536 = vsel %vm498, %v531, %v535
      %v537 = vshrl.u32 %v452, 16
      %v539 = vrot.slane %v537, 4
      %v540 = vor.u32 %v539, %v535
      %v541 = vrot.slane %v540, 4
      %v543 = vshll.u32 %v453, 16
      %v545 = vrot.slane %v543, 5
      %v546 = vsel %vm498, %v541, %v545
      %v548 = vshrl.u32 %v454, 16
      %v550 = vrot.slane %v548, 4
      %v551 = vshll.u32 %v454, 16
      %v553 = vrot.slane %v551, 5
      %v554 = vor.u32 %v550, %v553
      %v555 = vrot.slane %v554, 4
      %v557 = vshll.u32 %v455, 16
      %v559 = vrot.slane %v557, 5
      %v560 = vsel %vm498, %v555, %v559
      %v561 = vshrl.u32 %v455, 16
      %v563 = vrot.slane %v561, 4
      %v564 = vor.u32 %v563, %v559
      %v565 = vrot.slane %v564, 4
      %v567 = vshll.u32 %v456, 16
      %v569 = vrot.slane %v567, 5
      %v570 = vsel %vm498, %v565, %v569
      %v572 = vshrl.u32 %v457, 16
      %v574 = vrot.slane %v572, 4
      %v575 = vshll.u32 %v457, 16
      %v577 = vrot.slane %v575, 5
      %v578 = vor.u32 %v574, %v577
      %v579 = vrot.slane %v578, 4
      %v581 = vshll.u32 %v458, 16
      %v583 = vrot.slane %v581, 5
      %v584 = vsel %vm498, %v579, %v583
      %v585 = vshrl.u32 %v458, 16
      %v587 = vrot.slane %v585, 4
      %v588 = vor.u32 %v587, %v583
      %v589 = vrot.slane %v588, 4
      %v591 = vshll.u32 %v459, 16
      %v593 = vrot.slane %v591, 5
      %v594 = vsel %vm498, %v589, %v593
      %v596 = vshrl.u32 %v460, 16
      %v598 = vrot.slane %v596, 4
      %v599 = vshll.u32 %v460, 16
      %v601 = vrot.slane %v599, 5
      %v602 = vor.u32 %v598, %v601
      %v603 = vrot.slane %v602, 4
      %v605 = vshll.u32 %v461, 16
      %v607 = vrot.slane %v605, 5
      %v608 = vsel %vm498, %v603, %v607
      %v609 = vshrl.u32 %v461, 16
      %v611 = vrot.slane %v609, 4
      %v612 = vor.u32 %v611, %v607
      %v613 = vrot.slane %v612, 4
      %v615 = vshll.u32 %v462, 16
      %v617 = vrot.slane %v615, 5
      %v618 = vsel %vm498, %v613, %v617
      %v620 = vshrl.u32 %v463, 16
      %v622 = vrot.slane %v620, 4
      %v623 = vshll.u32 %v463, 16
      %v625 = vrot.slane %v623, 5
      %v626 = vor.u32 %v622, %v625
      %v627 = vrot.slane %v626, 4
      %v629 = vshll.u32 %v464, 16
      %v631 = vrot.slane %v629, 5
      %v632 = vsel %vm498, %v627, %v631
      %v633 = vshrl.u32 %v464, 16
      %v635 = vrot.slane %v633, 4
      %v636 = vor.u32 %v635, %v631
      %v637 = vrot.slane %v636, 4
      %v639 = vshll.u32 %v465, 16
      %v641 = vrot.slane %v639, 5
      %v642 = vsel %vm498, %v637, %v641
      %v644 = vshrl.u32 %v466, 16
      %v646 = vrot.slane %v644, 4
      %v647 = vshll.u32 %v466, 16
      %v649 = vrot.slane %v647, 5
      %v650 = vor.u32 %v646, %v649
      %v651 = vrot.slane %v650, 4
      %v653 = vshll.u32 %v467, 16
      %v655 = vrot.slane %v653, 5
      %v656 = vsel %vm498, %v651, %v655
      %v657 = vshrl.u32 %v467, 16
      %v659 = vrot.slane %v657, 4
      %v660 = vor.u32 %v659, %v655
      %v661 = vrot.slane %v660, 4
      %v663 = vshll.u32 %v468, 16
      %v665 = vrot.slane %v663, 5
      %v666 = vsel %vm498, %v661, %v665
      %v668 = vshrl.u32 %v469, 16
      %v670 = vrot.slane %v668, 4
      %v671 = vshll.u32 %v469, 16
      %v673 = vrot.slane %v671, 5
      %v674 = vor.u32 %v670, %v673
      %v675 = vrot.slane %v674, 4
      %v677 = vshll.u32 %v470, 16
      %v679 = vrot.slane %v677, 5
      %v680 = vsel %vm498, %v675, %v679
      %v681 = vshrl.u32 %v470, 16
      %v683 = vrot.slane %v681, 4
      %v684 = vor.u32 %v683, %v679
      %v685 = vrot.slane %v684, 4
      %v687 = vshll.u32 %v471, 16
      %v689 = vrot.slane %v687, 5
      %v690 = vsel %vm498, %v685, %v689
      %v692 = vshrl.u32 %v472, 16
      %v694 = vrot.slane %v692, 4
      %v695 = vshll.u32 %v472, 16
      %v697 = vrot.slane %v695, 5
      %v698 = vor.u32 %v694, %v697
      %v699 = vrot.slane %v698, 4
      %v701 = vshll.u32 %v473, 16
      %v703 = vrot.slane %v701, 5
      %v704 = vsel %vm498, %v699, %v703
      %v705 = vshrl.u32 %v473, 16
      %v707 = vrot.slane %v705, 4
      %v708 = vor.u32 %v707, %v703
      %v709 = vrot.slane %v708, 4
      %v711 = vshll.u32 %v474, 16
      %v713 = vrot.slane %v711, 5
      %v714 = vsel %vm498, %v709, %v713
      %v716 = vshrl.u32 %v475, 16
      %v718 = vrot.slane %v716, 4
      %v719 = vshll.u32 %v475, 16
      %v721 = vrot.slane %v719, 5
      %v722 = vor.u32 %v718, %v721
      %v723 = vrot.slane %v722, 4
      %v725 = vshll.u32 %v476, 16
      %v727 = vrot.slane %v725, 5
      %v728 = vsel %vm498, %v723, %v727
      %v729 = vshrl.u32 %v476, 16
      %v731 = vrot.slane %v729, 4
      %v732 = vor.u32 %v731, %v727
      %v733 = vrot.slane %v732, 4
      %v735 = vshll.u32 %v477, 16
      %v737 = vrot.slane %v735, 5
      %v738 = vsel %vm498, %v733, %v737
      %v740 = vshrl.u32 %v478, 16
      %v742 = vrot.slane %v740, 4
      %v743 = vshll.u32 %v478, 16
      %v745 = vrot.slane %v743, 5
      %v746 = vor.u32 %v742, %v745
      %v747 = vrot.slane %v746, 4
      %v749 = vshll.u32 %v479, 16
      %v751 = vrot.slane %v749, 5
      %v752 = vsel %vm498, %v747, %v751
      %v753 = vshrl.u32 %v479, 16
      %v755 = vrot.slane %v753, 4
      %v756 = vor.u32 %v755, %v751
      %v757 = vrot.slane %v756, 4
      %v759 = vshll.u32 %v480, 16
      %v761 = vrot.slane %v759, 5
      %v762 = vsel %vm498, %v757, %v761
      %v764 = vshrl.u32 %v481, 16
      %v766 = vrot.slane %v764, 4
      %v767 = vshll.u32 %v481, 16
      %v769 = vrot.slane %v767, 5
      %v770 = vor.u32 %v766, %v769
      %v771 = vrot.slane %v770, 4
      %v773 = vshll.u32 %v482, 16
      %v775 = vrot.slane %v773, 5
      %v776 = vsel %vm498, %v771, %v775
      %v777 = vshrl.u32 %v482, 16
      %v779 = vrot.slane %v777, 4
      %v780 = vor.u32 %v779, %v775
      %v781 = vrot.slane %v780, 4
      %v783 = vshll.u32 %v483, 16
      %v785 = vrot.slane %v783, 5
      %v786 = vsel %vm498, %v781, %v785
      %v788 = vshrl.u32 %v484, 16
      %v790 = vrot.slane %v788, 4
      %v791 = vshll.u32 %v484, 16
      %v793 = vrot.slane %v791, 5
      %v794 = vor.u32 %v790, %v793
      %v795 = vrot.slane %v794, 4
      %v797 = vshll.u32 %v485, 16
      %v799 = vrot.slane %v797, 5
      %v800 = vsel %vm498, %v795, %v799
      %v801 = vshrl.u32 %v485, 16
      %v803 = vrot.slane %v801, 4
      %v804 = vor.u32 %v803, %v799
      %v805 = vrot.slane %v804, 4
      %v807 = vshll.u32 %v486, 16
      %v809 = vrot.slane %v807, 5
      %v810 = vsel %vm498, %v805, %v809
      %v812 = vshrl.u32 %v487, 16
      %v814 = vrot.slane %v812, 4
      %v815 = vshll.u32 %v487, 16
      %v817 = vrot.slane %v815, 5
      %v818 = vor.u32 %v814, %v817
      %v819 = vrot.slane %v818, 4
      %v821 = vshll.u32 %v488, 16
      %v823 = vrot.slane %v821, 5
      %v824 = vsel %vm498, %v819, %v823
      %v825 = vshrl.u32 %v488, 16
      %v827 = vrot.slane %v825, 4
      %v828 = vor.u32 %v827, %v823
      %v829 = vrot.slane %v828, 4
      %v831 = vshll.u32 %v489, 16
      %v833 = vrot.slane %v831, 5
      %v834 = vsel %vm498, %v829, %v833
      %v836 = vshrl.u32 %v490, 16
      %v838 = vrot.slane %v836, 4
      %v839 = vshll.u32 %v490, 16
      %v841 = vrot.slane %v839, 5
      %v842 = vor.u32 %v838, %v841
      %v843 = vrot.slane %v842, 4
      %v845 = vshll.u32 %v491, 16
      %v847 = vrot.slane %v845, 5
      %v848 = vsel %vm498, %v843, %v847
      %v849 = vshrl.u32 %v491, 16
      %v851 = vrot.slane %v849, 4
      %v852 = vor.u32 %v851, %v847
      %v853 = vrot.slane %v852, 4
      %v855 = vshll.u32 %v492, 16
      %v857 = vrot.slane %v855, 5
      %v858 = vsel %vm498, %v853, %v857
      %v860 = vshrl.u32 %v493, 16
      %v862 = vrot.slane %v860, 4
      %v863 = vshll.u32 %v493, 16
      %v865 = vrot.slane %v863, 5
      %v866 = vor.u32 %v862, %v865
      %v867 = vrot.slane %v866, 4
      %v869 = vshll.u32 %v494, 16
      %v871 = vrot.slane %v869, 5
      %v872 = vsel %vm498, %v867, %v871
      %v873 = vshrl.u32 %v494, 16
      %v875 = vrot.slane %v873, 4
      %v876 = vor.u32 %v875, %v871
      %v877 = vrot.slane %v876, 4
      %v879 = vshll.u32 %v495, 16
      %v881 = vrot.slane %v879, 5
      %v882 = vsel %vm498, %v877, %v881
      %v883 = vld [vmem:[%s4] sm:$0xf]
      %v884 = vld [vmem:[%s4 + $0x4] sm:$0xf]
      %v885 = vld [vmem:[%s4 + $0x8] sm:$0xf]
      %v886 = vld [vmem:[%s4 + $0xc] sm:$0xf]
      %v887 = vld [vmem:[%s4 + $0x10] sm:$0xf]
      %v888 = vld [vmem:[%s4 + $0x14] sm:$0xf]
      %v889 = vld [vmem:[%s4 + $0x18] sm:$0xf]
      %v890 = vld [vmem:[%s4 + $0x1c] sm:$0xf]
      %v891 = vld [vmem:[%s4 + $0x20] sm:$0xf]
      %v892 = vld [vmem:[%s4 + $0x24] sm:$0xf]
      %v893 = vld [vmem:[%s4 + $0x28] sm:$0xf]
      %v894 = vld [vmem:[%s4 + $0x2c] sm:$0xf]
      %v895 = vld [vmem:[%s4 + $0x30] sm:$0xf]
      %v896 = vld [vmem:[%s4 + $0x34] sm:$0xf]
      %v897 = vld [vmem:[%s4 + $0x38] sm:$0xf]
      %v898 = vld [vmem:[%s4 + $0x3c] sm:$0xf]
      %v899 = vunpack.c.l.b16 %v512
      %v900 = vunpack.c.l.b16 %v522
      %v901 = vunpack.c.l.b16 %v536
      %v902 = vunpack.c.l.b16 %v546
      %v903 = vunpack.c.l.b16 %v560
      %v904 = vunpack.c.l.b16 %v570
      %v905 = vunpack.c.l.b16 %v584
      %v906 = vunpack.c.l.b16 %v594
      %v907 = vunpack.c.l.b16 %v608
      %v908 = vunpack.c.l.b16 %v618
      %v909 = vunpack.c.l.b16 %v632
      %v910 = vunpack.c.l.b16 %v642
      %v911 = vunpack.c.l.b16 %v656
      %v912 = vunpack.c.l.b16 %v666
      %v913 = vunpack.c.l.b16 %v680
      %v914 = vunpack.c.l.b16 %v690
      %v915 = vunpack.c.l.b16 %v704
      %v916 = vunpack.c.l.b16 %v714
      %v917 = vunpack.c.l.b16 %v728
      %v918 = vunpack.c.l.b16 %v738
      %v919 = vunpack.c.l.b16 %v752
      %v920 = vunpack.c.l.b16 %v762
      %v921 = vunpack.c.l.b16 %v776
      %v922 = vunpack.c.l.b16 %v786
      %v923 = vunpack.c.l.b16 %v800
      %v924 = vunpack.c.l.b16 %v810
      %v925 = vunpack.c.l.b16 %v824
      %v926 = vunpack.c.l.b16 %v834
      %v927 = vunpack.c.l.b16 %v848
      %v928 = vunpack.c.l.b16 %v858
      %v929 = vunpack.c.l.b16 %v872
      %v930 = vunpack.c.l.b16 %v882
      %v931 = vpack.c.b16 %v900, %v899
      %v932 = vpack.c.b16 %v902, %v901
      %v933 = vpack.c.b16 %v904, %v903
      %v934 = vpack.c.b16 %v906, %v905
      %v935 = vpack.c.b16 %v908, %v907
      %v936 = vpack.c.b16 %v910, %v909
      %v937 = vpack.c.b16 %v912, %v911
      %v938 = vpack.c.b16 %v914, %v913
      %v939 = vpack.c.b16 %v916, %v915
      %v940 = vpack.c.b16 %v918, %v917
      %v941 = vpack.c.b16 %v920, %v919
      %v942 = vpack.c.b16 %v922, %v921
      %v943 = vpack.c.b16 %v924, %v923
      %v944 = vpack.c.b16 %v926, %v925
      %v945 = vpack.c.b16 %v928, %v927
      %v946 = vpack.c.b16 %v930, %v929
      %v979 = vunpack.c.l.b16 %v883
      %v980 = vunpack.c.l.b16 %v884
      %v981 = vunpack.c.l.b16 %v885
      %v982 = vunpack.c.l.b16 %v886
      %v983 = vunpack.c.l.b16 %v887
      %v984 = vunpack.c.l.b16 %v888
      %v985 = vunpack.c.l.b16 %v889
      %v986 = vunpack.c.l.b16 %v890
      %v987 = vunpack.c.l.b16 %v891
      %v988 = vunpack.c.l.b16 %v892
      %v989 = vunpack.c.l.b16 %v893
      %v990 = vunpack.c.l.b16 %v894
      %v991 = vunpack.c.l.b16 %v895
      %v992 = vunpack.c.l.b16 %v896
      %v993 = vunpack.c.l.b16 %v897
      %v994 = vunpack.c.l.b16 %v898
      %v995 = vpack.c.b16 %v980, %v979
      %v996 = vpack.c.b16 %v982, %v981
      %v997 = vpack.c.b16 %v984, %v983
      %v998 = vpack.c.b16 %v986, %v985
      %v999 = vpack.c.b16 %v988, %v987
      %v1000 = vpack.c.b16 %v990, %v989
      %v1001 = vpack.c.b16 %v992, %v991
      %v1002 = vpack.c.b16 %v994, %v993
      %1011 = vmatprep.subr.bf16.mxu0 0
      %1012 = vmatpush1.bf16.msra.mxu0 %v995
      %1013 = vmatprep.subr.bf16.mxu0 0
      %1014 = vmatpush1.bf16.msra.mxu0 %v996
      %1015 = vmatprep.subr.bf16.mxu0 0
      %1016 = vmatpush1.bf16.msra.mxu0 %v997
      %1017 = vmatprep.subr.bf16.mxu0 0
      %1018 = vmatpush1.bf16.msra.mxu0 %v998
      %1019 = vmatprep.subr.bf16.mxu0 0
      %1020 = vmatpush1.bf16.msra.mxu0 %v999
      %1021 = vmatprep.subr.bf16.mxu0 0
      %1022 = vmatpush1.bf16.msra.mxu0 %v1000
      %1023 = vmatprep.subr.bf16.mxu0 0
      %1024 = vmatpush1.bf16.msra.mxu0 %v1001
      %1025 = vmatprep.subr.bf16.mxu0 0
      %1026 = vmatpush1.bf16.msra.mxu0 %v1002
      %1027 = vmatprep.subr.bf16.mxu0 0
      %1028 = vmatpush1.bf16.msra.mxu0 0
      %1029 = vmatprep.subr.bf16.mxu0 0
      %1030 = vmatpush1.bf16.msra.mxu0 0
      %1031 = vmatprep.subr.bf16.mxu0 0
      %1032 = vmatpush1.bf16.msra.mxu0 0
      %1033 = vmatprep.subr.bf16.mxu0 0
      %1034 = vmatpush1.bf16.msra.mxu0 0
      %1035 = vmatprep.subr.bf16.mxu0 0
      %1036 = vmatpush1.bf16.msra.mxu0 0
      %1037 = vmatprep.subr.bf16.mxu0 0
      %1038 = vmatpush1.bf16.msra.mxu0 0
      %1039 = vmatprep.subr.bf16.mxu0 0
      %1040 = vmatpush1.bf16.msra.mxu0 0
      %1041 = vmatprep.subr.bf16.mxu0 0
      %1042 = vmatpush1.bf16.msra.mxu0 0
      %1043 = vmatprep.mubr.bf16.mxu0 0
      %1044 = vmatmul.mubr.bf16.gmra.mrb[0].mxu0 %v931
      %v1045 = vpop.f32.mrb[0].mxu0
      %v1046 = vadd.f32 0.0, %v1045
      %v1047 = vpop.f32.mrb[0].mxu0
      %v1048 = vpop.f32.mrb[0].mxu0
      %v1049 = vadd.f32 0.0, %v1048
      %v1050 = vpop.f32.mrb[0].mxu0
      %1051 = vmatprep.mubr.bf16.mxu0 0
      %1052 = vmatmul.mubr.bf16.gmra.mrb[0].mxu0 %v932
      %v1053 = vpop.f32.mrb[0].mxu0
      %v1054 = vadd.f32 0.0, %v1053
      %v1055 = vpop.f32.mrb[0].mxu0
      %v1056 = vpop.f32.mrb[0].mxu0
      %v1057 = vadd.f32 0.0, %v1056
      %v1058 = vpop.f32.mrb[0].mxu0
      %1059 = vmatprep.mubr.bf16.mxu0 0
      %1060 = vmatmul.mubr.bf16.gmra.mrb[0].mxu0 %v933
      %v1061 = vpop.f32.mrb[0].mxu0
      %v1062 = vadd.f32 0.0, %v1061
      %v1063 = vpop.f32.mrb[0].mxu0
      %v1064 = vpop.f32.mrb[0].mxu0
      %v1065 = vadd.f32 0.0, %v1064
      %v1066 = vpop.f32.mrb[0].mxu0
      %1067 = vmatprep.mubr.bf16.mxu0 0
      %1068 = vmatmul.mubr.bf16.gmra.mrb[0].mxu0 %v934
      %v1069 = vpop.f32.mrb[0].mxu0
      %v1070 = vadd.f32 0.0, %v1069
      %v1071 = vpop.f32.mrb[0].mxu0
      %v1072 = vpop.f32.mrb[0].mxu0
      %v1073 = vadd.f32 0.0, %v1072
      %v1074 = vpop.f32.mrb[0].mxu0
      %1075 = vmatprep.mubr.bf16.mxu0 0
      %1076 = vmatmul.mubr.bf16.gmra.mrb[0].mxu0 %v935
      %v1077 = vpop.f32.mrb[0].mxu0
      %v1078 = vadd.f32 0.0, %v1077
      %v1079 = vpop.f32.mrb[0].mxu0
      %v1080 = vpop.f32.mrb[0].mxu0
      %v1081 = vadd.f32 0.0, %v1080
      %v1082 = vpop.f32.mrb[0].mxu0
      %1083 = vmatprep.mubr.bf16.mxu0 0
      %1084 = vmatmul.mubr.bf16.gmra.mrb[0].mxu0 %v936
      %v1085 = vpop.f32.mrb[0].mxu0
      %v1086 = vadd.f32 0.0, %v1085
      %v1087 = vpop.f32.mrb[0].mxu0
      %v1088 = vpop.f32.mrb[0].mxu0
      %v1089 = vadd.f32 0.0, %v1088
      %v1090 = vpop.f32.mrb[0].mxu0
      %1091 = vmatprep.mubr.bf16.mxu0 0
      %1092 = vmatmul.mubr.bf16.gmra.mrb[0].mxu0 %v937
      %v1093 = vpop.f32.mrb[0].mxu0
      %v1094 = vadd.f32 0.0, %v1093
      %v1095 = vpop.f32.mrb[0].mxu0
      %v1096 = vpop.f32.mrb[0].mxu0
      %v1097 = vadd.f32 0.0, %v1096
      %v1098 = vpop.f32.mrb[0].mxu0
      %1099 = vmatprep.mubr.bf16.mxu0 0
      %1100 = vmatmul.mubr.bf16.gmra.mrb[0].mxu0 %v938
      %v1101 = vpop.f32.mrb[0].mxu0
      %v1102 = vadd.f32 0.0, %v1101
      %v1103 = vpop.f32.mrb[0].mxu0
      %v1104 = vpop.f32.mrb[0].mxu0
      %v1105 = vadd.f32 0.0, %v1104
      %v1106 = vpop.f32.mrb[0].mxu0
      %1107 = vmatprep.mubr.bf16.mxu0 0
      %1108 = vmatmul.mubr.bf16.gmra.mrb[0].mxu0 %v939
      %v1109 = vpop.f32.mrb[0].mxu0
      %v1110 = vadd.f32 0.0, %v1109
      %v1111 = vpop.f32.mrb[0].mxu0
      %v1112 = vpop.f32.mrb[0].mxu0
      %v1113 = vadd.f32 0.0, %v1112
      %v1114 = vpop.f32.mrb[0].mxu0
      %1115 = vmatprep.mubr.bf16.mxu0 0
      %1116 = vmatmul.mubr.bf16.gmra.mrb[0].mxu0 %v940
      %v1117 = vpop.f32.mrb[0].mxu0
      %v1118 = vadd.f32 0.0, %v1117
      %v1119 = vpop.f32.mrb[0].mxu0
      %v1120 = vpop.f32.mrb[0].mxu0
      %v1121 = vadd.f32 0.0, %v1120
      %v1122 = vpop.f32.mrb[0].mxu0
      %1123 = vmatprep.mubr.bf16.mxu0 0
      %1124 = vmatmul.mubr.bf16.gmra.mrb[0].mxu0 %v941
      %v1125 = vpop.f32.mrb[0].mxu0
      %v1126 = vadd.f32 0.0, %v1125
      %v1127 = vpop.f32.mrb[0].mxu0
      %v1128 = vpop.f32.mrb[0].mxu0
      %v1129 = vadd.f32 0.0, %v1128
      %v1130 = vpop.f32.mrb[0].mxu0
      %1131 = vmatprep.mubr.bf16.mxu0 0
      %1132 = vmatmul.mubr.bf16.gmra.mrb[0].mxu0 %v942
      %v1133 = vpop.f32.mrb[0].mxu0
      %v1134 = vadd.f32 0.0, %v1133
      %v1135 = vpop.f32.mrb[0].mxu0
      %v1136 = vpop.f32.mrb[0].mxu0
      %v1137 = vadd.f32 0.0, %v1136
      %v1138 = vpop.f32.mrb[0].mxu0
      %1139 = vmatprep.mubr.bf16.mxu0 0
      %1140 = vmatmul.mubr.bf16.gmra.mrb[0].mxu0 %v943
      %v1141 = vpop.f32.mrb[0].mxu0
      %v1142 = vadd.f32 0.0, %v1141
      %v1143 = vpop.f32.mrb[0].mxu0
      %v1144 = vpop.f32.mrb[0].mxu0
      %v1145 = vadd.f32 0.0, %v1144
      %v1146 = vpop.f32.mrb[0].mxu0
      %1147 = vmatprep.mubr.bf16.mxu0 0
      %1148 = vmatmul.mubr.bf16.gmra.mrb[0].mxu0 %v944
      %v1149 = vpop.f32.mrb[0].mxu0
      %v1150 = vadd.f32 0.0, %v1149
      %v1151 = vpop.f32.mrb[0].mxu0
      %v1152 = vpop.f32.mrb[0].mxu0
      %v1153 = vadd.f32 0.0, %v1152
      %v1154 = vpop.f32.mrb[0].mxu0
      %1155 = vmatprep.mubr.bf16.mxu0 0
      %1156 = vmatmul.mubr.bf16.gmra.mrb[0].mxu0 %v945
      %v1157 = vpop.f32.mrb[0].mxu0
      %v1158 = vadd.f32 0.0, %v1157
      %v1159 = vpop.f32.mrb[0].mxu0
      %v1160 = vpop.f32.mrb[0].mxu0
      %v1161 = vadd.f32 0.0, %v1160
      %v1162 = vpop.f32.mrb[0].mxu0
      %1163 = vmatprep.mubr.bf16.mxu0 0
      %1164 = vmatmul.mubr.bf16.gmra.mrb[0].mxu0 %v946
      %v1165 = vpop.f32.mrb[0].mxu0
      %v1166 = vadd.f32 0.0, %v1165
      %v1167 = vpop.f32.mrb[0].mxu0
      %v1168 = vpop.f32.mrb[0].mxu0
      %v1169 = vadd.f32 0.0, %v1168
      %v1170 = vpop.f32.mrb[0].mxu0
      %1171 = vdwg.mxu0
      %v1172 = vadd.f32 %v415, %v1046
      %v1173 = vadd.f32 %v416, %v1049
      %v1174 = vadd.f32 %v417, %v1054
      %v1175 = vadd.f32 %v418, %v1057
      %v1176 = vadd.f32 %v419, %v1062
      %v1177 = vadd.f32 %v420, %v1065
      %v1178 = vadd.f32 %v421, %v1070
      %v1179 = vadd.f32 %v422, %v1073
      %v1180 = vadd.f32 %v423, %v1078
      %v1181 = vadd.f32 %v424, %v1081
      %v1182 = vadd.f32 %v425, %v1086
      %v1183 = vadd.f32 %v426, %v1089
      %v1184 = vadd.f32 %v427, %v1094
      %v1185 = vadd.f32 %v428, %v1097
      %v1186 = vadd.f32 %v429, %v1102
      %v1187 = vadd.f32 %v430, %v1105
      %v1188 = vadd.f32 %v431, %v1110
      %v1189 = vadd.f32 %v432, %v1113
      %v1190 = vadd.f32 %v433, %v1118
      %v1191 = vadd.f32 %v434, %v1121
      %v1192 = vadd.f32 %v435, %v1126
      %v1193 = vadd.f32 %v436, %v1129
      %v1194 = vadd.f32 %v437, %v1134
      %v1195 = vadd.f32 %v438, %v1137
      %v1196 = vadd.f32 %v439, %v1142
      %v1197 = vadd.f32 %v440, %v1145
      %v1198 = vadd.f32 %v441, %v1150
      %v1199 = vadd.f32 %v442, %v1153
      %v1200 = vadd.f32 %v443, %v1158
      %v1201 = vadd.f32 %v444, %v1161
      %v1202 = vadd.f32 %v445, %v1166
      %v1203 = vadd.f32 %v446, %v1169
      %v1204 = vld [vmem:[%s5] sm:$0x1]
      %v1206 = vlaneseq
      %v1207 = vshrl.u32 %v1206, 7
      %v1208 = vsub.s32 0, %v1207
      %v1209 = vrot.slane %v1204, %v1208
      %v1211 = vadd.f32 %v1172, %v1209
      %v1212 = vadd.f32 %v1173, %v1209
      %v1213 = vadd.f32 %v1174, %v1209
      %v1214 = vadd.f32 %v1175, %v1209
      %v1215 = vadd.f32 %v1176, %v1209
      %v1216 = vadd.f32 %v1177, %v1209
      %v1217 = vadd.f32 %v1178, %v1209
      %v1218 = vadd.f32 %v1179, %v1209
      %v1219 = vadd.f32 %v1180, %v1209
      %v1220 = vadd.f32 %v1181, %v1209
      %v1221 = vadd.f32 %v1182, %v1209
      %v1222 = vadd.f32 %v1183, %v1209
      %v1223 = vadd.f32 %v1184, %v1209
      %v1224 = vadd.f32 %v1185, %v1209
      %v1225 = vadd.f32 %v1186, %v1209
      %v1226 = vadd.f32 %v1187, %v1209
      %v1227 = vadd.f32 %v1188, %v1209
      %v1228 = vadd.f32 %v1189, %v1209
      %v1229 = vadd.f32 %v1190, %v1209
      %v1230 = vadd.f32 %v1191, %v1209
      %v1231 = vadd.f32 %v1192, %v1209
      %v1232 = vadd.f32 %v1193, %v1209
      %v1233 = vadd.f32 %v1194, %v1209
      %v1234 = vadd.f32 %v1195, %v1209
      %v1235 = vadd.f32 %v1196, %v1209
      %v1236 = vadd.f32 %v1197, %v1209
      %v1237 = vadd.f32 %v1198, %v1209
      %v1238 = vadd.f32 %v1199, %v1209
      %v1239 = vadd.f32 %v1200, %v1209
      %v1240 = vadd.f32 %v1201, %v1209
      %v1241 = vadd.f32 %v1202, %v1209
      %v1242 = vadd.f32 %v1203, %v1209
      %1243 = vst [vmem:[%s271] sm:$0xff] %v1211
      %1244 = vst [vmem:[%s271 + $0x8] sm:$0xff] %v1212
      %1245 = vst [vmem:[%s271 + $0x10] sm:$0xff] %v1213
      %1246 = vst [vmem:[%s271 + $0x18] sm:$0xff] %v1214
      %1247 = vst [vmem:[%s271 + $0x20] sm:$0xff] %v1215
      %1248 = vst [vmem:[%s271 + $0x28] sm:$0xff] %v1216
      %1249 = vst [vmem:[%s271 + $0x30] sm:$0xff] %v1217
      %1250 = vst [vmem:[%s271 + $0x38] sm:$0xff] %v1218
      %1251 = vst [vmem:[%s271 + $0x40] sm:$0xff] %v1219
      %1252 = vst [vmem:[%s271 + $0x48] sm:$0xff] %v1220
      %1253 = vst [vmem:[%s271 + $0x50] sm:$0xff] %v1221
      %1254 = vst [vmem:[%s271 + $0x58] sm:$0xff] %v1222
      %1255 = vst [vmem:[%s271 + $0x60] sm:$0xff] %v1223
      %1256 = vst [vmem:[%s271 + $0x68] sm:$0xff] %v1224
      %1257 = vst [vmem:[%s271 + $0x70] sm:$0xff] %v1225
      %1258 = vst [vmem:[%s271 + $0x78] sm:$0xff] %v1226
      %1259 = vst [vmem:[%s271 + $0x80] sm:$0xff] %v1227
      %1260 = vst [vmem:[%s271 + $0x88] sm:$0xff] %v1228
      %1261 = vst [vmem:[%s271 + $0x90] sm:$0xff] %v1229
      %1262 = vst [vmem:[%s271 + $0x98] sm:$0xff] %v1230
      %1263 = vst [vmem:[%s271 + $0xa0] sm:$0xff] %v1231
      %1264 = vst [vmem:[%s271 + $0xa8] sm:$0xff] %v1232
      %1265 = vst [vmem:[%s271 + $0xb0] sm:$0xff] %v1233
      %1266 = vst [vmem:[%s271 + $0xb8] sm:$0xff] %v1234
      %1267 = vst [vmem:[%s271 + $0xc0] sm:$0xff] %v1235
      %1268 = vst [vmem:[%s271 + $0xc8] sm:$0xff] %v1236
      %1269 = vst [vmem:[%s271 + $0xd0] sm:$0xff] %v1237
      %1270 = vst [vmem:[%s271 + $0xd8] sm:$0xff] %v1238
      %1271 = vst [vmem:[%s271 + $0xe0] sm:$0xff] %v1239
      %1272 = vst [vmem:[%s271 + $0xe8] sm:$0xff] %v1240
      %1273 = vst [vmem:[%s271 + $0xf0] sm:$0xff] %v1241
      %1274 = vst [vmem:[%s271 + $0xf8] sm:$0xff] %v1242
      %p1275 = scmp.lt.s32.totalorder %s17, 1
      %s1276 = scalar_select %p1275, %s17, 1
      %s1277 = smul.addr %s1276, 32
      %s1278 = smul.addr %s1277, 8
      %s1279 = scalar_lea.vmem %s6, %s1278
      // Predicated region
      $region45: #{_lambda_.5} parent=43 // pred_check
        %p1280 = pneg %p171
      $region46: #{_lambda_.5} parent=43 // pred_check_branch
        %1282 = sbr.rel (%p1280) target = $region48
      $region47: #{_lambda_.5} parent=43 // pred_region
        _
      $region48: #{_lambda_.5} parent=43 // pred_fallthru
        _
    $region44: #{_lambda_.5} parent=5 // pred_fallthru
      _
    %p1283 = scmp.le.s32.totalorder 2, %s12
    // Predicated region
    $region49: #{_lambda_.5} parent=5 // pred_check
      %p1284 = pneg %p1283
    $region50: #{_lambda_.5} parent=5 // pred_check_branch
      %1286 = sbr.rel (%p1284) target = $region52
    $region51: #{_lambda_.5} parent=5 // pred_region
      %s1287 = ssub.s32 %s12, 2
      // Predicated region
      $region53: #{_lambda_.5} parent=51 // pred_check
        %p1288 = pneg %p177
      $region54: #{_lambda_.5} parent=51 // pred_check_branch
        %1290 = sbr.rel (%p1288) target = $region56
      $region55: #{_lambda_.5} parent=51 // pred_region
        %p1291 = scmp.lt.s32.totalorder %s18, 1
        %s1292 = scalar_select %p1291, %s18, 1
        %s1293 = smul.addr %s1292, 32
        %s1294 = smul.addr %s1293, 8
        %s1295 = scalar_lea.vmem %s6, %s1294
      $region56: #{_lambda_.5} parent=51 // pred_fallthru
        _
    $region52: #{_lambda_.5} parent=5 // pred_fallthru
      _
  $region6: #{_lambda_.5} parent=0 // loop_footer
    %s16 = sadd.s32 1, %s12
  $region7: #{_lambda_.5} parent=0 // loop_footer_branch
    %11 = sbr.rel target = $region3
  $region8: #{_lambda_.5} parent=0 // loop_exit
    _

// kernel: _lambda_.3
$region0: #{_lambda_.3}
  #allocation0 [shape = 'u32[]', space=smem, size = 0x4, offset = 0x4, fixed_abs, tag = 'smem constant byte address 0x4 - core index']
  #allocation1 [shape = 'u32[144,128]{1,0:T(1,128)}', space=vmem, size = 0x12000, scoped, tag = 'internal scratch']
  %s0 = inlined_call_operand.vmem [shape: bf16[2,18,18,128], index: 0, kind: input, shape index: {}]
  %s1 = inlined_call_operand.vmem [shape: bf16[9,128,128], index: 1, kind: input, shape index: {}]
  %s2 = inlined_call_operand.vmem [shape: f32[1,128], index: 2, kind: input, shape index: {}]
  %s3 = inlined_call_operand.vmem [shape: bf16[2,16,16,128], index: 3, kind: output, shape index: {0}]
  %s4 = inlined_call_operand.vmem [shape: f32[2,2,128], index: 4, kind: output, shape index: {1}]
  %5 = xla_tuple %s3, %s4
  %s6 = sld [smem:[#allocation0]]
  $region53: #{_lambda_.3} parent=0
    _
  %s8 = ssub.s32 1, %s6
  %s9 = scalar_select 0, %s8, %s6
  loop: start=0, step=1, limit=4
  $region2: #{_lambda_.3} parent=0 // loop_pre_header
    _
  $region3: #{_lambda_.3} parent=0 // loop_header
    %s11 = sphi 0, %s15
    %p12 = scmp.ge.s32.totalorder %s11, 4
    %s21 = sphi 0, %s23
    %s24 = sphi 0, %s21
    %s25 = sphi 0, %s24
    %s41 = sphi 0, %s25
    %s45 = sphi 0, %s45
    %s47 = sphi 0, %s45
    %s48 = sphi 0, %s47
    %s62 = sphi 0, %s48
    %s66 = sphi 0, %s66
    %s68 = sphi 0, %s66
    %s69 = sphi 0, %s68
    %s83 = sphi 0, %s69
    %s89 = sphi 0, %s91
    %s92 = sphi 0, %s89
    %s93 = sphi 0, %s92
    %s109 = sphi 0, %s93
    %s115 = sphi 0, %s117
    %s118 = sphi 0, %s115
    %s119 = sphi 0, %s118
    %s135 = sphi 0, %s119
  $region4: #{_lambda_.3} parent=0 // loop_header_branch
    %14 = sbr.rel (%p12) target = $region8
  $region5: #{_lambda_.3} parent=0 // loop_body
    %s16 = ssub.s32 %s11, 1
    %s17 = ssub.s32 %s11, 2
    %s18 = sadd.s32 %s11, 1
    %s19 = ssub.s32 %s11, %s18
    %p20 = scmp.eq.s32.totalorder %s19, 0
    %s22 = sadd.s32 %s21, 1
    %s23 = scalar_select %p20, %s21, %s22
    %p26 = pneg %p20
    %p27 = scmp.eq.s32.totalorder %s11, 1
    %p28 = por %p26, %p27
    %p29 = scmp.ne.s32.totalorder %s21, %s24
    %p30 = scmp.eq.s32.totalorder %s11, 0
    %p31 = por %p29, %p30
    %p32 = scmp.ne.s32.totalorder %s21, %s24
    %p33 = scmp.eq.s32.totalorder %s16, 1
    %p34 = por %p32, %p33
    %p35 = scmp.ne.s32.totalorder %s24, %s25
    %p36 = scmp.eq.s32.totalorder %s16, 0
    %p37 = por %p35, %p36
    %p38 = scmp.ne.s32.totalorder %s24, %s25
    %p39 = scmp.eq.s32.totalorder %s17, 1
    %p40 = por %p38, %p39
    %p42 = scmp.ne.s32.totalorder %s25, %s41
    %p43 = scmp.eq.s32.totalorder %s17, 0
    %p44 = por %p42, %p43
    %s46 = sadd.s32 %s45, 1
    %p49 = scmp.eq.s32.totalorder %s11, 1
    %p50 = scmp.ne.s32.totalorder %s45, %s47
    %p51 = scmp.eq.s32.totalorder %s11, 0
    %p52 = por %p50, %p51
    %p53 = scmp.ne.s32.totalorder %s45, %s47
    %p54 = scmp.eq.s32.totalorder %s16, 1
    %p55 = por %p53, %p54
    %p56 = scmp.ne.s32.totalorder %s47, %s48
    %p57 = scmp.eq.s32.totalorder %s16, 0
    %p58 = por %p56, %p57
    %p59 = scmp.ne.s32.totalorder %s47, %s48
    %p60 = scmp.eq.s32.totalorder %s17, 1
    %p61 = por %p59, %p60
    %p63 = scmp.ne.s32.totalorder %s48, %s62
    %p64 = scmp.eq.s32.totalorder %s17, 0
    %p65 = por %p63, %p64
    %s67 = sadd.s32 %s66, 1
    %p70 = scmp.eq.s32.totalorder %s11, 1
    %p71 = scmp.ne.s32.totalorder %s66, %s68
    %p72 = scmp.eq.s32.totalorder %s11, 0
    %p73 = por %p71, %p72
    %p74 = scmp.ne.s32.totalorder %s66, %s68
    %p75 = scmp.eq.s32.totalorder %s16, 1
    %p76 = por %p74, %p75
    %p77 = scmp.ne.s32.totalorder %s68, %s69
    %p78 = scmp.eq.s32.totalorder %s16, 0
    %p79 = por %p77, %p78
    %p80 = scmp.ne.s32.totalorder %s68, %s69
    %p81 = scmp.eq.s32.totalorder %s17, 1
    %p82 = por %p80, %p81
    %p84 = scmp.ne.s32.totalorder %s69, %s83
    %p85 = scmp.eq.s32.totalorder %s17, 0
    %p86 = por %p84, %p85
    %s87 = ssub.s32 %s11, %s18
    %p88 = scmp.eq.s32.totalorder %s87, 0
    %s90 = sadd.s32 %s89, 1
    %s91 = scalar_select %p88, %s89, %s90
    %p94 = pneg %p88
    %p95 = scmp.eq.s32.totalorder %s11, 1
    %p96 = por %p94, %p95
    %p97 = scmp.ne.s32.totalorder %s89, %s92
    %p98 = scmp.eq.s32.totalorder %s11, 0
    %p99 = por %p97, %p98
    %p100 = scmp.ne.s32.totalorder %s89, %s92
    %p101 = scmp.eq.s32.totalorder %s16, 1
    %p102 = por %p100, %p101
    %p103 = scmp.ne.s32.totalorder %s92, %s93
    %p104 = scmp.eq.s32.totalorder %s16, 0
    %p105 = por %p103, %p104
    %p106 = scmp.ne.s32.totalorder %s92, %s93
    %p107 = scmp.eq.s32.totalorder %s17, 1
    %p108 = por %p106, %p107
    %p110 = scmp.ne.s32.totalorder %s93, %s109
    %p111 = scmp.eq.s32.totalorder %s17, 0
    %p112 = por %p110, %p111
    %s113 = ssub.s32 %s11, %s18
    %p114 = scmp.eq.s32.totalorder %s113, 0
    %s116 = sadd.s32 %s115, 1
    %s117 = scalar_select %p114, %s115, %s116
    %p120 = pneg %p114
    %p121 = scmp.eq.s32.totalorder %s11, 1
    %p122 = por %p120, %p121
    %p123 = scmp.ne.s32.totalorder %s115, %s118
    %p124 = scmp.eq.s32.totalorder %s11, 0
    %p125 = por %p123, %p124
    %p126 = scmp.ne.s32.totalorder %s115, %s118
    %p127 = scmp.eq.s32.totalorder %s16, 1
    %p128 = por %p126, %p127
    %p129 = scmp.ne.s32.totalorder %s118, %s119
    %p130 = scmp.eq.s32.totalorder %s16, 0
    %p131 = por %p129, %p130
    %p132 = scmp.ne.s32.totalorder %s118, %s119
    %p133 = scmp.eq.s32.totalorder %s17, 1
    %p134 = por %p132, %p133
    %p136 = scmp.ne.s32.totalorder %s119, %s135
    %p137 = scmp.eq.s32.totalorder %s17, 0
    %p138 = por %p136, %p137
    %p139 = scmp.le.s32.totalorder 1, %s11
    %p140 = scmp.lt.s32.totalorder %s11, 3
    %p141 = pnand %p139, %p140
    %p142 = pneg %p141
    // Predicated region
    $region9: #{_lambda_.3} parent=5 // pred_check
      _
    $region10: #{_lambda_.3} parent=5 // pred_check_branch
      %144 = sbr.rel (%p141) target = $region12
    $region11: #{_lambda_.3} parent=5 // pred_region
      %s145 = ssub.s32 %s11, 1
      // Predicated region
      $region13: #{_lambda_.3} parent=11 // pred_check
        %p146 = pneg %p58
      $region14: #{_lambda_.3} parent=11 // pred_check_branch
        %148 = sbr.rel (%p146) target = $region16
      $region15: #{_lambda_.3} parent=11 // pred_region
        _
      $region16: #{_lambda_.3} parent=11 // pred_fallthru
        _
      // Predicated region
      $region17: #{_lambda_.3} parent=11 // pred_check
        %p149 = pneg %p79
      $region18: #{_lambda_.3} parent=11 // pred_check_branch
        %151 = sbr.rel (%p149) target = $region20
      $region19: #{_lambda_.3} parent=11 // pred_region
        _
      $region20: #{_lambda_.3} parent=11 // pred_fallthru
        _
    $region12: #{_lambda_.3} parent=5 // pred_fallthru
      _
    %p152 = scmp.lt.s32.totalorder %s11, 2
    // Predicated region
    $region21: #{_lambda_.3} parent=5 // pred_check
      %p153 = pneg %p152
    $region22: #{_lambda_.3} parent=5 // pred_check_branch
      %155 = sbr.rel (%p153) target = $region24
    $region23: #{_lambda_.3} parent=5 // pred_region
      // Predicated region
      $region25: #{_lambda_.3} parent=23 // pred_check
        %p156 = pneg %p31
      $region26: #{_lambda_.3} parent=23 // pred_check_branch
        %158 = sbr.rel (%p156) target = $region28
      $region27: #{_lambda_.3} parent=23 // pred_region
        %p159 = scmp.lt.s32.totalorder %s11, 1
        %s160 = scalar_select %p159, %s11, 1
        %s161 = smul.addr %s160, 54
        %s162 = smul.addr %s161, 4
        %s163 = scalar_lea.vmem %s0, %s162
      $region28: #{_lambda_.3} parent=23 // pred_fallthru
        _
    $region24: #{_lambda_.3} parent=5 // pred_fallthru
      _
    %p164 = scmp.le.s32.totalorder 1, %s11
    %p165 = scmp.lt.s32.totalorder %s11, 3
    %p166 = pnand %p164, %p165
    %p167 = pneg %p166
    // Predicated region
    $region29: #{_lambda_.3} parent=5 // pred_check
      _
    $region30: #{_lambda_.3} parent=5 // pred_check_branch
      %169 = sbr.rel (%p166) target = $region32
    $region31: #{_lambda_.3} parent=5 // pred_region
      %s170 = ssub.s32 %s11, 1
      %p171 = scmp.lt.s32.totalorder %s16, 1
      %s172 = scalar_select %p171, %s16, 1
      %s173 = smul.addr %s172, 54
      %s174 = smul.addr %s173, 4
      %s175 = scalar_lea.vmem %s0, %s174
      %p176 = pneg %p37
      %p177 = pneg %p34
      %p178 = pneg %p58
      %p179 = pneg %p55
      %p180 = pneg %p79
      %p181 = pneg %p76
      %p182 = pneg %p105
      %p183 = pneg %p102
      %p184 = scmp.lt.s32.totalorder %s16, 1
      %s185 = scalar_select %p184, %s16, 1
      %s186 = smul.addr %s185, 32
      %s187 = smul.addr %s186, 4
      %s188 = scalar_lea.vmem %s3, %s187
      %p189 = pneg %p131
      %p190 = pneg %p128
      %p191 = scmp.lt.s32.totalorder %s16, 1
      %s192 = scalar_select %p191, %s16, 1
      %s193 = smul.addr %s192, 2
      %s194 = scalar_lea.vmem %s4, %s193
      %p195 = scmp.lt.s32.totalorder %s16, 1
      %s196 = scalar_select %p195, %s16, 1
      %s197 = smul.addr %s196, 54
      %s198 = smul.addr %s197, 4
      %s199 = scalar_lea.vmem %s0, %s198
      %p200 = scmp.lt.s32.totalorder %s16, 1
      %s201 = scalar_select %p200, %s16, 1
      %s202 = smul.addr %s201, 32
      %s203 = smul.addr %s202, 4
      %s204 = scalar_lea.vmem %s3, %s203
      %p205 = scmp.lt.s32.totalorder %s16, 1
      %s206 = scalar_select %p205, %s16, 1
      %s207 = smul.addr %s206, 2
      %s208 = scalar_lea.vmem %s4, %s207
      %v210 = vld [vmem:[%s199] sm:$0xf]
      %v211 = vld [vmem:[%s199 + $0x4] sm:$0xf]
      %v212 = vld [vmem:[%s199 + $0xc] sm:$0xf]
      %v213 = vld [vmem:[%s199 + $0x10] sm:$0xf]
      %v214 = vld [vmem:[%s199 + $0x18] sm:$0xf]
      %v215 = vld [vmem:[%s199 + $0x1c] sm:$0xf]
      %v216 = vld [vmem:[%s199 + $0x24] sm:$0xf]
      %v217 = vld [vmem:[%s199 + $0x28] sm:$0xf]
      %v218 = vld [vmem:[%s199 + $0x30] sm:$0xf]
      %v219 = vld [vmem:[%s199 + $0x34] sm:$0xf]
      %v220 = vld [vmem:[%s199 + $0x3c] sm:$0xf]
      %v221 = vld [vmem:[%s199 + $0x40] sm:$0xf]
      %v222 = vld [vmem:[%s199 + $0x48] sm:$0xf]
      %v223 = vld [vmem:[%s199 + $0x4c] sm:$0xf]
      %v224 = vld [vmem:[%s199 + $0x54] sm:$0xf]
      %v225 = vld [vmem:[%s199 + $0x58] sm:$0xf]
      %v226 = vld [vmem:[%s199 + $0x60] sm:$0xf]
      %v227 = vld [vmem:[%s199 + $0x64] sm:$0xf]
      %v228 = vld [vmem:[%s199 + $0x6c] sm:$0xf]
      %v229 = vld [vmem:[%s199 + $0x70] sm:$0xf]
      %v230 = vld [vmem:[%s199 + $0x78] sm:$0xf]
      %v231 = vld [vmem:[%s199 + $0x7c] sm:$0xf]
      %v232 = vld [vmem:[%s199 + $0x84] sm:$0xf]
      %v233 = vld [vmem:[%s199 + $0x88] sm:$0xf]
      %v234 = vld [vmem:[%s199 + $0x90] sm:$0xf]
      %v235 = vld [vmem:[%s199 + $0x94] sm:$0xf]
      %v236 = vld [vmem:[%s199 + $0x9c] sm:$0xf]
      %v237 = vld [vmem:[%s199 + $0xa0] sm:$0xf]
      %v238 = vld [vmem:[%s199 + $0xa8] sm:$0xf]
      %v239 = vld [vmem:[%s199 + $0xac] sm:$0xf]
      %v240 = vld [vmem:[%s199 + $0xb4] sm:$0xf]
      %v241 = vld [vmem:[%s199 + $0xb8] sm:$0xf]
      %v242 = vld [vmem:[%s1] sm:$0xf]
      %v243 = vld [vmem:[%s1 + $0x4] sm:$0xf]
      %v244 = vld [vmem:[%s1 + $0x8] sm:$0xf]
      %v245 = vld [vmem:[%s1 + $0xc] sm:$0xf]
      %v246 = vld [vmem:[%s1 + $0x10] sm:$0xf]
      %v247 = vld [vmem:[%s1 + $0x14] sm:$0xf]
      %v248 = vld [vmem:[%s1 + $0x18] sm:$0xf]
      %v249 = vld [vmem:[%s1 + $0x1c] sm:$0xf]
      %v250 = vld [vmem:[%s1 + $0x20] sm:$0xf]
      %v251 = vld [vmem:[%s1 + $0x24] sm:$0xf]
      %v252 = vld [vmem:[%s1 + $0x28] sm:$0xf]
      %v253 = vld [vmem:[%s1 + $0x2c] sm:$0xf]
      %v254 = vld [vmem:[%s1 + $0x30] sm:$0xf]
      %v255 = vld [vmem:[%s1 + $0x34] sm:$0xf]
      %v256 = vld [vmem:[%s1 + $0x38] sm:$0xf]
      %v257 = vld [vmem:[%s1 + $0x3c] sm:$0xf]
      %v258 = vld [vmem:[%s199 + $0x8] sm:$0x1]
      %v259 = vld [vmem:[%s199 + $0x14] sm:$0x1]
      %v260 = vld [vmem:[%s199 + $0x20] sm:$0x1]
      %v261 = vld [vmem:[%s199 + $0x2c] sm:$0x1]
      %v262 = vld [vmem:[%s199 + $0x38] sm:$0x1]
      %v263 = vld [vmem:[%s199 + $0x44] sm:$0x1]
      %v264 = vld [vmem:[%s199 + $0x50] sm:$0x1]
      %v265 = vld [vmem:[%s199 + $0x5c] sm:$0x1]
      %v266 = vld [vmem:[%s199 + $0x68] sm:$0x1]
      %v267 = vld [vmem:[%s199 + $0x74] sm:$0x1]
      %v268 = vld [vmem:[%s199 + $0x80] sm:$0x1]
      %v269 = vld [vmem:[%s199 + $0x8c] sm:$0x1]
      %v270 = vld [vmem:[%s199 + $0x98] sm:$0x1]
      %v271 = vld [vmem:[%s199 + $0xa4] sm:$0x1]
      %v272 = vld [vmem:[%s199 + $0xb0] sm:$0x1]
      %v273 = vld [vmem:[%s199 + $0xbc] sm:$0x1]
      %vm274 = vsmask.f32 3328
      %vm275 = vsmask.f32 7440
      %vm276 = vmor %vm274, %vm275
      %v278 = vshrl.u32 %v210, 16
      %v280 = vrot.slane %v278, 4
      %v281 = vshll.u32 %v210, 16
      %v283 = vrot.slane %v281, 5
      %v284 = vor.u32 %v280, %v283
      %v285 = vrot.slane %v284, 4
      %v287 = vshll.u32 %v211, 16
      %v289 = vrot.slane %v287, 5
      %v290 = vsel %vm276, %v285, %v289
      %v291 = vshrl.u32 %v211, 16
      %v293 = vrot.slane %v291, 4
      %v294 = vor.u32 %v293, %v289
      %v295 = vrot.slane %v294, 4
      %v297 = vshll.u32 %v258, 16
      %v299 = vrot.slane %v297, 5
      %v300 = vsel %vm276, %v295, %v299
      %v302 = vshrl.u32 %v212, 16
      %v304 = vrot.slane %v302, 4
      %v305 = vshll.u32 %v212, 16
      %v307 = vrot.slane %v305, 5
      %v308 = vor.u32 %v304, %v307
      %v309 = vrot.slane %v308, 4
      %v311 = vshll.u32 %v213, 16
      %v313 = vrot.slane %v311, 5
      %v314 = vsel %vm276, %v309, %v313
      %v315 = vshrl.u32 %v213, 16
      %v317 = vrot.slane %v315, 4
      %v318 = vor.u32 %v317, %v313
      %v319 = vrot.slane %v318, 4
      %v321 = vshll.u32 %v259, 16
      %v323 = vrot.slane %v321, 5
      %v324 = vsel %vm276, %v319, %v323
      %v326 = vshrl.u32 %v214, 16
      %v328 = vrot.slane %v326, 4
      %v329 = vshll.u32 %v214, 16
      %v331 = vrot.slane %v329, 5
      %v332 = vor.u32 %v328, %v331
      %v333 = vrot.slane %v332, 4
      %v335 = vshll.u32 %v215, 16
      %v337 = vrot.slane %v335, 5
      %v338 = vsel %vm276, %v333, %v337
      %v339 = vshrl.u32 %v215, 16
      %v341 = vrot.slane %v339, 4
      %v342 = vor.u32 %v341, %v337
      %v343 = vrot.slane %v342, 4
      %v345 = vshll.u32 %v260, 16
      %v347 = vrot.slane %v345, 5
      %v348 = vsel %vm276, %v343, %v347
      %v350 = vshrl.u32 %v216, 16
      %v352 = vrot.slane %v350, 4
      %v353 = vshll.u32 %v216, 16
      %v355 = vrot.slane %v353, 5
      %v356 = vor.u32 %v352, %v355
      %v357 = vrot.slane %v356, 4
      %v359 = vshll.u32 %v217, 16
      %v361 = vrot.slane %v359, 5
      %v362 = vsel %vm276, %v357, %v361
      %v363 = vshrl.u32 %v217, 16
      %v365 = vrot.slane %v363, 4
      %v366 = vor.u32 %v365, %v361
      %v367 = vrot.slane %v366, 4
      %v369 = vshll.u32 %v261, 16
      %v371 = vrot.slane %v369, 5
      %v372 = vsel %vm276, %v367, %v371
      %v374 = vshrl.u32 %v218, 16
      %v376 = vrot.slane %v374, 4
      %v377 = vshll.u32 %v218, 16
      %v379 = vrot.slane %v377, 5
      %v380 = vor.u32 %v376, %v379
      %v381 = vrot.slane %v380, 4
      %v383 = vshll.u32 %v219, 16
      %v385 = vrot.slane %v383, 5
      %v386 = vsel %vm276, %v381, %v385
      %v387 = vshrl.u32 %v219, 16
      %v389 = vrot.slane %v387, 4
      %v390 = vor.u32 %v389, %v385
      %v391 = vrot.slane %v390, 4
      %v393 = vshll.u32 %v262, 16
      %v395 = vrot.slane %v393, 5
      %v396 = vsel %vm276, %v391, %v395
      %v398 = vshrl.u32 %v220, 16
      %v400 = vrot.slane %v398, 4
      %v401 = vshll.u32 %v220, 16
      %v403 = vrot.slane %v401, 5
      %v404 = vor.u32 %v400, %v403
      %v405 = vrot.slane %v404, 4
      %v407 = vshll.u32 %v221, 16
      %v409 = vrot.slane %v407, 5
      %v410 = vsel %vm276, %v405, %v409
      %v411 = vshrl.u32 %v221, 16
      %v413 = vrot.slane %v411, 4
      %v414 = vor.u32 %v413, %v409
      %v415 = vrot.slane %v414, 4
      %v417 = vshll.u32 %v263, 16
      %v419 = vrot.slane %v417, 5
      %v420 = vsel %vm276, %v415, %v419
      %v422 = vshrl.u32 %v222, 16
      %v424 = vrot.slane %v422, 4
      %v425 = vshll.u32 %v222, 16
      %v427 = vrot.slane %v425, 5
      %v428 = vor.u32 %v424, %v427
      %v429 = vrot.slane %v428, 4
      %v431 = vshll.u32 %v223, 16
      %v433 = vrot.slane %v431, 5
      %v434 = vsel %vm276, %v429, %v433
      %v435 = vshrl.u32 %v223, 16
      %v437 = vrot.slane %v435, 4
      %v438 = vor.u32 %v437, %v433
      %v439 = vrot.slane %v438, 4
      %v441 = vshll.u32 %v264, 16
      %v443 = vrot.slane %v441, 5
      %v444 = vsel %vm276, %v439, %v443
      %v446 = vshrl.u32 %v224, 16
      %v448 = vrot.slane %v446, 4
      %v449 = vshll.u32 %v224, 16
      %v451 = vrot.slane %v449, 5
      %v452 = vor.u32 %v448, %v451
      %v453 = vrot.slane %v452, 4
      %v455 = vshll.u32 %v225, 16
      %v457 = vrot.slane %v455, 5
      %v458 = vsel %vm276, %v453, %v457
      %v459 = vshrl.u32 %v225, 16
      %v461 = vrot.slane %v459, 4
      %v462 = vor.u32 %v461, %v457
      %v463 = vrot.slane %v462, 4
      %v465 = vshll.u32 %v265, 16
      %v467 = vrot.slane %v465, 5
      %v468 = vsel %vm276, %v463, %v467
      %v470 = vshrl.u32 %v226, 16
      %v472 = vrot.slane %v470, 4
      %v473 = vshll.u32 %v226, 16
      %v475 = vrot.slane %v473, 5
      %v476 = vor.u32 %v472, %v475
      %v477 = vrot.slane %v476, 4
      %v479 = vshll.u32 %v227, 16
      %v481 = vrot.slane %v479, 5
      %v482 = vsel %vm276, %v477, %v481
      %v483 = vshrl.u32 %v227, 16
      %v485 = vrot.slane %v483, 4
      %v486 = vor.u32 %v485, %v481
      %v487 = vrot.slane %v486, 4
      %v489 = vshll.u32 %v266, 16
      %v491 = vrot.slane %v489, 5
      %v492 = vsel %vm276, %v487, %v491
      %v494 = vshrl.u32 %v228, 16
      %v496 = vrot.slane %v494, 4
      %v497 = vshll.u32 %v228, 16
      %v499 = vrot.slane %v497, 5
      %v500 = vor.u32 %v496, %v499
      %v501 = vrot.slane %v500, 4
      %v503 = vshll.u32 %v229, 16
      %v505 = vrot.slane %v503, 5
      %v506 = vsel %vm276, %v501, %v505
      %v507 = vshrl.u32 %v229, 16
      %v509 = vrot.slane %v507, 4
      %v510 = vor.u32 %v509, %v505
      %v511 = vrot.slane %v510, 4
      %v513 = vshll.u32 %v267, 16
      %v515 = vrot.slane %v513, 5
      %v516 = vsel %vm276, %v511, %v515
      %v518 = vshrl.u32 %v230, 16
      %v520 = vrot.slane %v518, 4
      %v521 = vshll.u32 %v230, 16
      %v523 = vrot.slane %v521, 5
      %v524 = vor.u32 %v520, %v523
      %v525 = vrot.slane %v524, 4
      %v527 = vshll.u32 %v231, 16
      %v529 = vrot.slane %v527, 5
      %v530 = vsel %vm276, %v525, %v529
      %v531 = vshrl.u32 %v231, 16
      %v533 = vrot.slane %v531, 4
      %v534 = vor.u32 %v533, %v529
      %v535 = vrot.slane %v534, 4
      %v537 = vshll.u32 %v268, 16
      %v539 = vrot.slane %v537, 5
      %v540 = vsel %vm276, %v535, %v539
      %v542 = vshrl.u32 %v232, 16
      %v544 = vrot.slane %v542, 4
      %v545 = vshll.u32 %v232, 16
      %v547 = vrot.slane %v545, 5
      %v548 = vor.u32 %v544, %v547
      %v549 = vrot.slane %v548, 4
      %v551 = vshll.u32 %v233, 16
      %v553 = vrot.slane %v551, 5
      %v554 = vsel %vm276, %v549, %v553
      %v555 = vshrl.u32 %v233, 16
      %v557 = vrot.slane %v555, 4
      %v558 = vor.u32 %v557, %v553
      %v559 = vrot.slane %v558, 4
      %v561 = vshll.u32 %v269, 16
      %v563 = vrot.slane %v561, 5
      %v564 = vsel %vm276, %v559, %v563
      %v566 = vshrl.u32 %v234, 16
      %v568 = vrot.slane %v566, 4
      %v569 = vshll.u32 %v234, 16
      %v571 = vrot.slane %v569, 5
      %v572 = vor.u32 %v568, %v571
      %v573 = vrot.slane %v572, 4
      %v575 = vshll.u32 %v235, 16
      %v577 = vrot.slane %v575, 5
      %v578 = vsel %vm276, %v573, %v577
      %v579 = vshrl.u32 %v235, 16
      %v581 = vrot.slane %v579, 4
      %v582 = vor.u32 %v581, %v577
      %v583 = vrot.slane %v582, 4
      %v585 = vshll.u32 %v270, 16
      %v587 = vrot.slane %v585, 5
      %v588 = vsel %vm276, %v583, %v587
      %v590 = vshrl.u32 %v236, 16
      %v592 = vrot.slane %v590, 4
      %v593 = vshll.u32 %v236, 16
      %v595 = vrot.slane %v593, 5
      %v596 = vor.u32 %v592, %v595
      %v597 = vrot.slane %v596, 4
      %v599 = vshll.u32 %v237, 16
      %v601 = vrot.slane %v599, 5
      %v602 = vsel %vm276, %v597, %v601
      %v603 = vshrl.u32 %v237, 16
      %v605 = vrot.slane %v603, 4
      %v606 = vor.u32 %v605, %v601
      %v607 = vrot.slane %v606, 4
      %v609 = vshll.u32 %v271, 16
      %v611 = vrot.slane %v609, 5
      %v612 = vsel %vm276, %v607, %v611
      %v614 = vshrl.u32 %v238, 16
      %v616 = vrot.slane %v614, 4
      %v617 = vshll.u32 %v238, 16
      %v619 = vrot.slane %v617, 5
      %v620 = vor.u32 %v616, %v619
      %v621 = vrot.slane %v620, 4
      %v623 = vshll.u32 %v239, 16
      %v625 = vrot.slane %v623, 5
      %v626 = vsel %vm276, %v621, %v625
      %v627 = vshrl.u32 %v239, 16
      %v629 = vrot.slane %v627, 4
      %v630 = vor.u32 %v629, %v625
      %v631 = vrot.slane %v630, 4
      %v633 = vshll.u32 %v272, 16
      %v635 = vrot.slane %v633, 5
      %v636 = vsel %vm276, %v631, %v635
      %v638 = vshrl.u32 %v240, 16
      %v640 = vrot.slane %v638, 4
      %v641 = vshll.u32 %v240, 16
      %v643 = vrot.slane %v641, 5
      %v644 = vor.u32 %v640, %v643
      %v645 = vrot.slane %v644, 4
      %v647 = vshll.u32 %v241, 16
      %v649 = vrot.slane %v647, 5
      %v650 = vsel %vm276, %v645, %v649
      %v651 = vshrl.u32 %v241, 16
      %v653 = vrot.slane %v651, 4
      %v654 = vor.u32 %v653, %v649
      %v655 = vrot.slane %v654, 4
      %v657 = vshll.u32 %v273, 16
      %v659 = vrot.slane %v657, 5
      %v660 = vsel %vm276, %v655, %v659
      %s661 = scalar_lea.vmem %s1, 64
      %v662 = vld [vmem:[%s661] sm:$0xf]
      %v663 = vld [vmem:[%s661 + $0x4] sm:$0xf]
      %v664 = vld [vmem:[%s661 + $0x8] sm:$0xf]
      %v665 = vld [vmem:[%s661 + $0xc] sm:$0xf]
      %v666 = vld [vmem:[%s661 + $0x10] sm:$0xf]
      %v667 = vld [vmem:[%s661 + $0x14] sm:$0xf]
      %v668 = vld [vmem:[%s661 + $0x18] sm:$0xf]
      %v669 = vld [vmem:[%s661 + $0x1c] sm:$0xf]
      %v670 = vld [vmem:[%s661 + $0x20] sm:$0xf]
      %v671 = vld [vmem:[%s661 + $0x24] sm:$0xf]
      %v672 = vld [vmem:[%s661 + $0x28] sm:$0xf]
      %v673 = vld [vmem:[%s661 + $0x2c] sm:$0xf]
      %v674 = vld [vmem:[%s661 + $0x30] sm:$0xf]
      %v675 = vld [vmem:[%s661 + $0x34] sm:$0xf]
      %v676 = vld [vmem:[%s661 + $0x38] sm:$0xf]
      %v677 = vld [vmem:[%s661 + $0x3c] sm:$0xf]
      %v678 = vunpack.c.l.b16 %v290
      %v679 = vunpack.c.l.b16 %v300
      %v680 = vunpack.c.l.b16 %v314
      %v681 = vunpack.c.l.b16 %v324
      %v682 = vunpack.c.l.b16 %v338
      %v683 = vunpack.c.l.b16 %v348
      %v684 = vunpack.c.l.b16 %v362
      %v685 = vunpack.c.l.b16 %v372
      %v686 = vunpack.c.l.b16 %v386
      %v687 = vunpack.c.l.b16 %v396
      %v688 = vunpack.c.l.b16 %v410
      %v689 = vunpack.c.l.b16 %v420
      %v690 = vunpack.c.l.b16 %v434
      %v691 = vunpack.c.l.b16 %v444
      %v692 = vunpack.c.l.b16 %v458
      %v693 = vunpack.c.l.b16 %v468
      %v694 = vunpack.c.l.b16 %v482
      %v695 = vunpack.c.l.b16 %v492
      %v696 = vunpack.c.l.b16 %v506
      %v697 = vunpack.c.l.b16 %v516
      %v698 = vunpack.c.l.b16 %v530
      %v699 = vunpack.c.l.b16 %v540
      %v700 = vunpack.c.l.b16 %v554
      %v701 = vunpack.c.l.b16 %v564
      %v702 = vunpack.c.l.b16 %v578
      %v703 = vunpack.c.l.b16 %v588
      %v704 = vunpack.c.l.b16 %v602
      %v705 = vunpack.c.l.b16 %v612
      %v706 = vunpack.c.l.b16 %v626
      %v707 = vunpack.c.l.b16 %v636
      %v708 = vunpack.c.l.b16 %v650
      %v709 = vunpack.c.l.b16 %v660
      %v710 = vpack.c.b16 %v679, %v678
      %v711 = vpack.c.b16 %v681, %v680
      %v712 = vpack.c.b16 %v683, %v682
      %v713 = vpack.c.b16 %v685, %v684
      %v714 = vpack.c.b16 %v687, %v686
      %v715 = vpack.c.b16 %v689, %v688
      %v716 = vpack.c.b16 %v691, %v690
      %v717 = vpack.c.b16 %v693, %v692
      %v718 = vpack.c.b16 %v695, %v694
      %v719 = vpack.c.b16 %v697, %v696
      %v720 = vpack.c.b16 %v699, %v698
      %v721 = vpack.c.b16 %v701, %v700
      %v722 = vpack.c.b16 %v703, %v702
      %v723 = vpack.c.b16 %v705, %v704
      %v724 = vpack.c.b16 %v707, %v706
      %v725 = vpack.c.b16 %v709, %v708
      %v758 = vunpack.c.l.b16 %v662
      %v759 = vunpack.c.l.b16 %v663
      %v760 = vunpack.c.l.b16 %v664
      %v761 = vunpack.c.l.b16 %v665
      %v762 = vunpack.c.l.b16 %v666
      %v763 = vunpack.c.l.b16 %v667
      %v764 = vunpack.c.l.b16 %v668
      %v765 = vunpack.c.l.b16 %v669
      %v766 = vunpack.c.l.b16 %v670
      %v767 = vunpack.c.l.b16 %v671
      %v768 = vunpack.c.l.b16 %v672
      %v769 = vunpack.c.l.b16 %v673
      %v770 = vunpack.c.l.b16 %v674
      %v771 = vunpack.c.l.b16 %v675
      %v772 = vunpack.c.l.b16 %v676
      %v773 = vunpack.c.l.b16 %v677
      %v774 = vpack.c.b16 %v759, %v758
      %v775 = vpack.c.b16 %v761, %v760
      %v776 = vpack.c.b16 %v763, %v762
      %v777 = vpack.c.b16 %v765, %v764
      %v778 = vpack.c.b16 %v767, %v766
      %v779 = vpack.c.b16 %v769, %v768
      %v780 = vpack.c.b16 %v771, %v770
      %v781 = vpack.c.b16 %v773, %v772
      %790 = vmatprep.subr.bf16.mxu0 0
      %791 = vmatpush1.bf16.msra.mxu0 %v774
      %792 = vmatprep.subr.bf16.mxu0 0
      %793 = vmatpush1.bf16.msra.mxu0 %v775
      %794 = vmatprep.subr.bf16.mxu0 0
      %795 = vmatpush1.bf16.msra.mxu0 %v776
      %796 = vmatprep.subr.bf16.mxu0 0
      %797 = vmatpush1.bf16.msra.mxu0 %v777
      %798 = vmatprep.subr.bf16.mxu0 0
      %799 = vmatpush1.bf16.msra.mxu0 %v778
      %800 = vmatprep.subr.bf16.mxu0 0
      %801 = vmatpush1.bf16.msra.mxu0 %v779
      %802 = vmatprep.subr.bf16.mxu0 0
      %803 = vmatpush1.bf16.msra.mxu0 %v780
      %804 = vmatprep.subr.bf16.mxu0 0
      %805 = vmatpush1.bf16.msra.mxu0 %v781
      %806 = vmatprep.subr.bf16.mxu0 0
      %807 = vmatpush1.bf16.msra.mxu0 0
      %808 = vmatprep.subr.bf16.mxu0 0
      %809 = vmatpush1.bf16.msra.mxu0 0
      %810 = vmatprep.subr.bf16.mxu0 0
      %811 = vmatpush1.bf16.msra.mxu0 0
      %812 = vmatprep.subr.bf16.mxu0 0
      %813 = vmatpush1.bf16.msra.mxu0 0
      %814 = vmatprep.subr.bf16.mxu0 0
      %815 = vmatpush1.bf16.msra.mxu0 0
      %816 = vmatprep.subr.bf16.mxu0 0
      %817 = vmatpush1.bf16.msra.mxu0 0
      %818 = vmatprep.subr.bf16.mxu0 0
      %819 = vmatpush1.bf16.msra.mxu0 0
      %820 = vmatprep.subr.bf16.mxu0 0
      %821 = vmatpush1.bf16.msra.mxu0 0
      %822 = vmatprep.mubr.bf16.mxu0 0
      %823 = vmatmul.mubr.bf16.gmra.mrb[0].mxu0 %v710
      %v824 = vpop.f32.mrb[0].mxu0
      %v825 = vadd.f32 0.0, %v824
      %v826 = vpop.f32.mrb[0].mxu0
      %v827 = vpop.f32.mrb[0].mxu0
      %v828 = vadd.f32 0.0, %v827
      %v829 = vpop.f32.mrb[0].mxu0
      %830 = vmatprep.mubr.bf16.mxu0 0
      %831 = vmatmul.mubr.bf16.gmra.mrb[0].mxu0 %v711
      %v832 = vpop.f32.mrb[0].mxu0
      %v833 = vadd.f32 0.0, %v832
      %v834 = vpop.f32.mrb[0].mxu0
      %v835 = vpop.f32.mrb[0].mxu0
      %v836 = vadd.f32 0.0, %v835
      %v837 = vpop.f32.mrb[0].mxu0
      %838 = vmatprep.mubr.bf16.mxu0 0
      %839 = vmatmul.mubr.bf16.gmra.mrb[0].mxu0 %v712
      %v840 = vpop.f32.mrb[0].mxu0
      %v841 = vadd.f32 0.0, %v840
      %v842 = vpop.f32.mrb[0].mxu0
      %v843 = vpop.f32.mrb[0].mxu0
      %v844 = vadd.f32 0.0, %v843
      %v845 = vpop.f32.mrb[0].mxu0
      %846 = vmatprep.mubr.bf16.mxu0 0
      %847 = vmatmul.mubr.bf16.gmra.mrb[0].mxu0 %v713
      %v848 = vpop.f32.mrb[0].mxu0
      %v849 = vadd.f32 0.0, %v848
      %v850 = vpop.f32.mrb[0].mxu0
      %v851 = vpop.f32.mrb[0].mxu0
      %v852 = vadd.f32 0.0, %v851
      %v853 = vpop.f32.mrb[0].mxu0
      %854 = vmatprep.mubr.bf16.mxu0 0
      %855 = vmatmul.mubr.bf16.gmra.mrb[0].mxu0 %v714
      %v856 = vpop.f32.mrb[0].mxu0
      %v857 = vadd.f32 0.0, %v856
      %v858 = vpop.f32.mrb[0].mxu0
      %v859 = vpop.f32.mrb[0].mxu0
      %v860 = vadd.f32 0.0, %v859
      %v861 = vpop.f32.mrb[0].mxu0
      %862 = vmatprep.mubr.bf16.mxu0 0
      %863 = vmatmul.mubr.bf16.gmra.mrb[0].mxu0 %v715
      %v864 = vpop.f32.mrb[0].mxu0
      %v865 = vadd.f32 0.0, %v864
      %v866 = vpop.f32.mrb[0].mxu0
      %v867 = vpop.f32.mrb[0].mxu0
      %v868 = vadd.f32 0.0, %v867
      %v869 = vpop.f32.mrb[0].mxu0
      %870 = vmatprep.mubr.bf16.mxu0 0
      %871 = vmatmul.mubr.bf16.gmra.mrb[0].mxu0 %v716
      %v872 = vpop.f32.mrb[0].mxu0
      %v873 = vadd.f32 0.0, %v872
      %v874 = vpop.f32.mrb[0].mxu0
      %v875 = vpop.f32.mrb[0].mxu0
      %v876 = vadd.f32 0.0, %v875
      %v877 = vpop.f32.mrb[0].mxu0
      %878 = vmatprep.mubr.bf16.mxu0 0
      %879 = vmatmul.mubr.bf16.gmra.mrb[0].mxu0 %v717
      %v880 = vpop.f32.mrb[0].mxu0
      %v881 = vadd.f32 0.0, %v880
      %v882 = vpop.f32.mrb[0].mxu0
      %v883 = vpop.f32.mrb[0].mxu0
      %v884 = vadd.f32 0.0, %v883
      %v885 = vpop.f32.mrb[0].mxu0
      %886 = vmatprep.mubr.bf16.mxu0 0
      %887 = vmatmul.mubr.bf16.gmra.mrb[0].mxu0 %v718
      %v888 = vpop.f32.mrb[0].mxu0
      %v889 = vadd.f32 0.0, %v888
      %v890 = vpop.f32.mrb[0].mxu0
      %v891 = vpop.f32.mrb[0].mxu0
      %v892 = vadd.f32 0.0, %v891
      %v893 = vpop.f32.mrb[0].mxu0
      %894 = vmatprep.mubr.bf16.mxu0 0
      %895 = vmatmul.mubr.bf16.gmra.mrb[0].mxu0 %v719
      %v896 = vpop.f32.mrb[0].mxu0
      %v897 = vadd.f32 0.0, %v896
      %v898 = vpop.f32.mrb[0].mxu0
      %v899 = vpop.f32.mrb[0].mxu0
      %v900 = vadd.f32 0.0, %v899
      %v901 = vpop.f32.mrb[0].mxu0
      %902 = vmatprep.mubr.bf16.mxu0 0
      %903 = vmatmul.mubr.bf16.gmra.mrb[0].mxu0 %v720
      %v904 = vpop.f32.mrb[0].mxu0
      %v905 = vadd.f32 0.0, %v904
      %v906 = vpop.f32.mrb[0].mxu0
      %v907 = vpop.f32.mrb[0].mxu0
      %v908 = vadd.f32 0.0, %v907
      %v909 = vpop.f32.mrb[0].mxu0
      %910 = vmatprep.mubr.bf16.mxu0 0
      %911 = vmatmul.mubr.bf16.gmra.mrb[0].mxu0 %v721
      %v912 = vpop.f32.mrb[0].mxu0
      %v913 = vadd.f32 0.0, %v912
      %v914 = vpop.f32.mrb[0].mxu0
      %v915 = vpop.f32.mrb[0].mxu0
      %v916 = vadd.f32 0.0, %v915
      %v917 = vpop.f32.mrb[0].mxu0
      %918 = vmatprep.mubr.bf16.mxu0 0
      %919 = vmatmul.mubr.bf16.gmra.mrb[0].mxu0 %v722
      %v920 = vpop.f32.mrb[0].mxu0
      %v921 = vadd.f32 0.0, %v920
      %v922 = vpop.f32.mrb[0].mxu0
      %v923 = vpop.f32.mrb[0].mxu0
      %v924 = vadd.f32 0.0, %v923
      %v925 = vpop.f32.mrb[0].mxu0
      %926 = vmatprep.mubr.bf16.mxu0 0
      %927 = vmatmul.mubr.bf16.gmra.mrb[0].mxu0 %v723
      %v928 = vpop.f32.mrb[0].mxu0
      %v929 = vadd.f32 0.0, %v928
      %v930 = vpop.f32.mrb[0].mxu0
      %v931 = vpop.f32.mrb[0].mxu0
      %v932 = vadd.f32 0.0, %v931
      %v933 = vpop.f32.mrb[0].mxu0
      %934 = vmatprep.mubr.bf16.mxu0 0
      %935 = vmatmul.mubr.bf16.gmra.mrb[0].mxu0 %v724
      %v936 = vpop.f32.mrb[0].mxu0
      %v937 = vadd.f32 0.0, %v936
      %v938 = vpop.f32.mrb[0].mxu0
      %v939 = vpop.f32.mrb[0].mxu0
      %v940 = vadd.f32 0.0, %v939
      %v941 = vpop.f32.mrb[0].mxu0
      %942 = vmatprep.mubr.bf16.mxu0 0
      %943 = vmatmul.mubr.bf16.gmra.mrb[0].mxu0 %v725
      %v944 = vpop.f32.mrb[0].mxu0
      %v945 = vadd.f32 0.0, %v944
      %v946 = vpop.f32.mrb[0].mxu0
      %v947 = vpop.f32.mrb[0].mxu0
      %v948 = vadd.f32 0.0, %v947
      %v949 = vpop.f32.mrb[0].mxu0
      %950 = vdwg.mxu0
      %v983 = vunpack.c.l.b16 %v210
      %v984 = vunpack.c.l.b16 %v211
      %v985 = vunpack.c.l.b16 %v212
      %v986 = vunpack.c.l.b16 %v213
      %v987 = vunpack.c.l.b16 %v214
      %v988 = vunpack.c.l.b16 %v215
      %v989 = vunpack.c.l.b16 %v216
      %v990 = vunpack.c.l.b16 %v217
      %v991 = vunpack.c.l.b16 %v218
      %v992 = vunpack.c.l.b16 %v219
      %v993 = vunpack.c.l.b16 %v220
      %v994 = vunpack.c.l.b16 %v221
      %v995 = vunpack.c.l.b16 %v222
      %v996 = vunpack.c.l.b16 %v223
      %v997 = vunpack.c.l.b16 %v224
      %v998 = vunpack.c.l.b16 %v225
      %v999 = vunpack.c.l.b16 %v226
      %v1000 = vunpack.c.l.b16 %v227
      %v1001 = vunpack.c.l.b16 %v228
      %v1002 = vunpack.c.l.b16 %v229
      %v1003 = vunpack.c.l.b16 %v230
      %v1004 = vunpack.c.l.b16 %v231
      %v1005 = vunpack.c.l.b16 %v232
      %v1006 = vunpack.c.l.b16 %v233
      %v1007 = vunpack.c.l.b16 %v234
      %v1008 = vunpack.c.l.b16 %v235
      %v1009 = vunpack.c.l.b16 %v236
      %v1010 = vunpack.c.l.b16 %v237
      %v1011 = vunpack.c.l.b16 %v238
      %v1012 = vunpack.c.l.b16 %v239
      %v1013 = vunpack.c.l.b16 %v240
      %v1014 = vunpack.c.l.b16 %v241
      %v1015 = vpack.c.b16 %v984, %v983
      %v1016 = vpack.c.b16 %v986, %v985
      %v1017 = vpack.c.b16 %v988, %v987
      %v1018 = vpack.c.b16 %v990, %v989
      %v1019 = vpack.c.b16 %v992, %v991
      %v1020 = vpack.c.b16 %v994, %v993
      %v1021 = vpack.c.b16 %v996, %v995
      %v1022 = vpack.c.b16 %v998, %v997
      %v1023 = vpack.c.b16 %v1000, %v999
      %v1024 = vpack.c.b16 %v1002, %v1001
      %v1025 = vpack.c.b16 %v1004, %v1003
      %v1026 = vpack.c.b16 %v1006, %v1005
      %v1027 = vpack.c.b16 %v1008, %v1007
      %v1028 = vpack.c.b16 %v1010, %v1009
      %v1029 = vpack.c.b16 %v1012, %v1011
      %v1030 = vpack.c.b16 %v1014, %v1013
      %v1063 = vunpack.c.l.b16 %v242
      %v1064 = vunpack.c.l.b16 %v243
      %v1065 = vunpack.c.l.b16 %v244
      %v1066 = vunpack.c.l.b16 %v245
      %v1067 = vunpack.c.l.b16 %v246
      %v1068 = vunpack.c.l.b16 %v247
      %v1069 = vunpack.c.l.b16 %v248
      %v1070 = vunpack.c.l.b16 %v249
      %v1071 = vunpack.c.l.b16 %v250
      %v1072 = vunpack.c.l.b16 %v251
      %v1073 = vunpack.c.l.b16 %v252
      %v1074 = vunpack.c.l.b16 %v253
      %v1075 = vunpack.c.l.b16 %v254
      %v1076 = vunpack.c.l.b16 %v255
      %v1077 = vunpack.c.l.b16 %v256
      %v1078 = vunpack.c.l.b16 %v257
      %v1079 = vpack.c.b16 %v1064, %v1063
      %v1080 = vpack.c.b16 %v1066, %v1065
      %v1081 = vpack.c.b16 %v1068, %v1067
      %v1082 = vpack.c.b16 %v1070, %v1069
      %v1083 = vpack.c.b16 %v1072, %v1071
      %v1084 = vpack.c.b16 %v1074, %v1073
      %v1085 = vpack.c.b16 %v1076, %v1075
      %v1086 = vpack.c.b16 %v1078, %v1077
      %1095 = vmatprep.subr.bf16.mxu0 0
      %1096 = vmatpush1.bf16.msra.mxu0 %v1079
      %1097 = vmatprep.subr.bf16.mxu0 0
      %1098 = vmatpush1.bf16.msra.mxu0 %v1080
      %1099 = vmatprep.subr.bf16.mxu0 0
      %1100 = vmatpush1.bf16.msra.mxu0 %v1081
      %1101 = vmatprep.subr.bf16.mxu0 0
      %1102 = vmatpush1.bf16.msra.mxu0 %v1082
      %1103 = vmatprep.subr.bf16.mxu0 0
      %1104 = vmatpush1.bf16.msra.mxu0 %v1083
      %1105 = vmatprep.subr.bf16.mxu0 0
      %1106 = vmatpush1.bf16.msra.mxu0 %v1084
      %1107 = vmatprep.subr.bf16.mxu0 0
      %1108 = vmatpush1.bf16.msra.mxu0 %v1085
      %1109 = vmatprep.subr.bf16.mxu0 0
      %1110 = vmatpush1.bf16.msra.mxu0 %v1086
      %1111 = vmatprep.subr.bf16.mxu0 0
      %1112 = vmatpush1.bf16.msra.mxu0 0
      %1113 = vmatprep.subr.bf16.mxu0 0
      %1114 = vmatpush1.bf16.msra.mxu0 0
      %1115 = vmatprep.subr.bf16.mxu0 0
      %1116 = vmatpush1.bf16.msra.mxu0 0
      %1117 = vmatprep.subr.bf16.mxu0 0
      %1118 = vmatpush1.bf16.msra.mxu0 0
      %1119 = vmatprep.subr.bf16.mxu0 0
      %1120 = vmatpush1.bf16.msra.mxu0 0
      %1121 = vmatprep.subr.bf16.mxu0 0
      %1122 = vmatpush1.bf16.msra.mxu0 0
      %1123 = vmatprep.subr.bf16.mxu0 0
      %1124 = vmatpush1.bf16.msra.mxu0 0
      %1125 = vmatprep.subr.bf16.mxu0 0
      %1126 = vmatpush1.bf16.msra.mxu0 0
      %1127 = vmatprep.mubr.bf16.mxu0 0
      %1128 = vmatmul.mubr.bf16.gmra.mrb[0].mxu0 %v1015
      %v1129 = vpop.f32.mrb[0].mxu0
      %v1130 = vadd.f32 %v825, %v1129
      %v1131 = vpop.f32.mrb[0].mxu0
      %v1132 = vpop.f32.mrb[0].mxu0
      %v1133 = vadd.f32 %v828, %v1132
      %v1134 = vpop.f32.mrb[0].mxu0
      %1135 = vmatprep.mubr.bf16.mxu0 0
      %1136 = vmatmul.mubr.bf16.gmra.mrb[0].mxu0 %v1016
      %v1137 = vpop.f32.mrb[0].mxu0
      %v1138 = vadd.f32 %v833, %v1137
      %v1139 = vpop.f32.mrb[0].mxu0
      %v1140 = vpop.f32.mrb[0].mxu0
      %v1141 = vadd.f32 %v836, %v1140
      %v1142 = vpop.f32.mrb[0].mxu0
      %1143 = vmatprep.mubr.bf16.mxu0 0
      %1144 = vmatmul.mubr.bf16.gmra.mrb[0].mxu0 %v1017
      %v1145 = vpop.f32.mrb[0].mxu0
      %v1146 = vadd.f32 %v841, %v1145
      %v1147 = vpop.f32.mrb[0].mxu0
      %v1148 = vpop.f32.mrb[0].mxu0
      %v1149 = vadd.f32 %v844, %v1148
      %v1150 = vpop.f32.mrb[0].mxu0
      %1151 = vmatprep.mubr.bf16.mxu0 0
      %1152 = vmatmul.mubr.bf16.gmra.mrb[0].mxu0 %v1018
      %v1153 = vpop.f32.mrb[0].mxu0
      %v1154 = vadd.f32 %v849, %v1153
      %v1155 = vpop.f32.mrb[0].mxu0
      %v1156 = vpop.f32.mrb[0].mxu0
      %v1157 = vadd.f32 %v852, %v1156
      %v1158 = vpop.f32.mrb[0].mxu0
      %1159 = vmatprep.mubr.bf16.mxu0 0
      %1160 = vmatmul.mubr.bf16.gmra.mrb[0].mxu0 %v1019
      %v1161 = vpop.f32.mrb[0].mxu0
      %v1162 = vadd.f32 %v857, %v1161
      %v1163 = vpop.f32.mrb[0].mxu0
      %v1164 = vpop.f32.mrb[0].mxu0
      %v1165 = vadd.f32 %v860, %v1164
      %v1166 = vpop.f32.mrb[0].mxu0
      %1167 = vmatprep.mubr.bf16.mxu0 0
      %1168 = vmatmul.mubr.bf16.gmra.mrb[0].mxu0 %v1020
      %v1169 = vpop.f32.mrb[0].mxu0
      %v1170 = vadd.f32 %v865, %v1169
      %v1171 = vpop.f32.mrb[0].mxu0
      %v1172 = vpop.f32.mrb[0].mxu0
      %v1173 = vadd.f32 %v868, %v1172
      %v1174 = vpop.f32.mrb[0].mxu0
      %1175 = vmatprep.mubr.bf16.mxu0 0
      %1176 = vmatmul.mubr.bf16.gmra.mrb[0].mxu0 %v1021
      %v1177 = vpop.f32.mrb[0].mxu0
      %v1178 = vadd.f32 %v873, %v1177
      %v1179 = vpop.f32.mrb[0].mxu0
      %v1180 = vpop.f32.mrb[0].mxu0
      %v1181 = vadd.f32 %v876, %v1180
      %v1182 = vpop.f32.mrb[0].mxu0
      %1183 = vmatprep.mubr.bf16.mxu0 0
      %1184 = vmatmul.mubr.bf16.gmra.mrb[0].mxu0 %v1022
      %v1185 = vpop.f32.mrb[0].mxu0
      %v1186 = vadd.f32 %v881, %v1185
      %v1187 = vpop.f32.mrb[0].mxu0
      %v1188 = vpop.f32.mrb[0].mxu0
      %v1189 = vadd.f32 %v884, %v1188
      %v1190 = vpop.f32.mrb[0].mxu0
      %1191 = vmatprep.mubr.bf16.mxu0 0
      %1192 = vmatmul.mubr.bf16.gmra.mrb[0].mxu0 %v1023
      %v1193 = vpop.f32.mrb[0].mxu0
      %v1194 = vadd.f32 %v889, %v1193
      %v1195 = vpop.f32.mrb[0].mxu0
      %v1196 = vpop.f32.mrb[0].mxu0
      %v1197 = vadd.f32 %v892, %v1196
      %v1198 = vpop.f32.mrb[0].mxu0
      %1199 = vmatprep.mubr.bf16.mxu0 0
      %1200 = vmatmul.mubr.bf16.gmra.mrb[0].mxu0 %v1024
      %v1201 = vpop.f32.mrb[0].mxu0
      %v1202 = vadd.f32 %v897, %v1201
      %v1203 = vpop.f32.mrb[0].mxu0
      %v1204 = vpop.f32.mrb[0].mxu0
      %v1205 = vadd.f32 %v900, %v1204
      %v1206 = vpop.f32.mrb[0].mxu0
      %1207 = vmatprep.mubr.bf16.mxu0 0
      %1208 = vmatmul.mubr.bf16.gmra.mrb[0].mxu0 %v1025
      %v1209 = vpop.f32.mrb[0].mxu0
      %v1210 = vadd.f32 %v905, %v1209
      %v1211 = vpop.f32.mrb[0].mxu0
      %v1212 = vpop.f32.mrb[0].mxu0
      %v1213 = vadd.f32 %v908, %v1212
      %v1214 = vpop.f32.mrb[0].mxu0
      %1215 = vmatprep.mubr.bf16.mxu0 0
      %1216 = vmatmul.mubr.bf16.gmra.mrb[0].mxu0 %v1026
      %v1217 = vpop.f32.mrb[0].mxu0
      %v1218 = vadd.f32 %v913, %v1217
      %v1219 = vpop.f32.mrb[0].mxu0
      %v1220 = vpop.f32.mrb[0].mxu0
      %v1221 = vadd.f32 %v916, %v1220
      %v1222 = vpop.f32.mrb[0].mxu0
      %1223 = vmatprep.mubr.bf16.mxu0 0
      %1224 = vmatmul.mubr.bf16.gmra.mrb[0].mxu0 %v1027
      %v1225 = vpop.f32.mrb[0].mxu0
      %v1226 = vadd.f32 %v921, %v1225
      %v1227 = vpop.f32.mrb[0].mxu0
      %v1228 = vpop.f32.mrb[0].mxu0
      %v1229 = vadd.f32 %v924, %v1228
      %v1230 = vpop.f32.mrb[0].mxu0
      %1231 = vmatprep.mubr.bf16.mxu0 0
      %1232 = vmatmul.mubr.bf16.gmra.mrb[0].mxu0 %v1028
      %v1233 = vpop.f32.mrb[0].mxu0
      %v1234 = vadd.f32 %v929, %v1233
      %v1235 = vpop.f32.mrb[0].mxu0
      %v1236 = vpop.f32.mrb[0].mxu0
      %v1237 = vadd.f32 %v932, %v1236
      %v1238 = vpop.f32.mrb[0].mxu0
      %1239 = vmatprep.mubr.bf16.mxu0 0
      %1240 = vmatmul.mubr.bf16.gmra.mrb[0].mxu0 %v1029
      %v1241 = vpop.f32.mrb[0].mxu0
      %v1242 = vadd.f32 %v937, %v1241
      %v1243 = vpop.f32.mrb[0].mxu0
      %v1244 = vpop.f32.mrb[0].mxu0
      %v1245 = vadd.f32 %v940, %v1244
      %v1246 = vpop.f32.mrb[0].mxu0
      %1247 = vmatprep.mubr.bf16.mxu0 0
      %1248 = vmatmul.mubr.bf16.gmra.mrb[0].mxu0 %v1030
      %v1249 = vpop.f32.mrb[0].mxu0
      %v1250 = vadd.f32 %v945, %v1249
      %v1251 = vpop.f32.mrb[0].mxu0
      %v1252 = vpop.f32.mrb[0].mxu0
      %v1253 = vadd.f32 %v948, %v1252
      %v1254 = vpop.f32.mrb[0].mxu0
      %1255 = vdwg.mxu0
      %v1256 = vld [vmem:[%s199] sm:$0xe]
      %v1257 = vld [vmem:[%s199 + $0xc] sm:$0xe]
      %v1258 = vld [vmem:[%s199 + $0x18] sm:$0xe]
      %v1259 = vld [vmem:[%s199 + $0x24] sm:$0xe]
      %v1260 = vld [vmem:[%s199 + $0x30] sm:$0xe]
      %v1261 = vld [vmem:[%s199 + $0x3c] sm:$0xe]
      %v1262 = vld [vmem:[%s199 + $0x48] sm:$0xe]
      %v1263 = vld [vmem:[%s199 + $0x54] sm:$0xe]
      %v1264 = vld [vmem:[%s199 + $0x60] sm:$0xe]
      %v1265 = vld [vmem:[%s199 + $0x6c] sm:$0xe]
      %v1266 = vld [vmem:[%s199 + $0x78] sm:$0xe]
      %v1267 = vld [vmem:[%s199 + $0x84] sm:$0xe]
      %v1268 = vld [vmem:[%s199 + $0x90] sm:$0xe]
      %v1269 = vld [vmem:[%s199 + $0x9c] sm:$0xe]
      %v1270 = vld [vmem:[%s199 + $0xa8] sm:$0xe]
      %v1271 = vld [vmem:[%s199 + $0xb4] sm:$0xe]
      %vm1304 = vcmask 1042432
      %vm1305 = vcmask 1046532
      %vm1306 = vmor %vm1304, %vm1305
      %v1307 = vrot.slane %v1256, 5
      %v1308 = vrot.slane %v1307, 4
      %v1309 = vrot.slane %v211, 5
      %v1310 = vsel %vm1306, %v1308, %v1309
      %v1311 = vrot.slane %v1309, 4
      %v1312 = vrot.slane %v258, 5
      %v1313 = vsel %vm1306, %v1311, %v1312
      %v1314 = vrot.slane %v1257, 5
      %v1315 = vrot.slane %v1314, 4
      %v1316 = vrot.slane %v213, 5
      %v1317 = vsel %vm1306, %v1315, %v1316
      %v1318 = vrot.slane %v1316, 4
      %v1319 = vrot.slane %v259, 5
      %v1320 = vsel %vm1306, %v1318, %v1319
      %v1321 = vrot.slane %v1258, 5
      %v1322 = vrot.slane %v1321, 4
      %v1323 = vrot.slane %v215, 5
      %v1324 = vsel %vm1306, %v1322, %v1323
      %v1325 = vrot.slane %v1323, 4
      %v1326 = vrot.slane %v260, 5
      %v1327 = vsel %vm1306, %v1325, %v1326
      %v1328 = vrot.slane %v1259, 5
      %v1329 = vrot.slane %v1328, 4
      %v1330 = vrot.slane %v217, 5
      %v1331 = vsel %vm1306, %v1329, %v1330
      %v1332 = vrot.slane %v1330, 4
      %v1333 = vrot.slane %v261, 5
      %v1334 = vsel %vm1306, %v1332, %v1333
      %v1335 = vrot.slane %v1260, 5
      %v1336 = vrot.slane %v1335, 4
      %v1337 = vrot.slane %v219, 5
      %v1338 = vsel %vm1306, %v1336, %v1337
      %v1339 = vrot.slane %v1337, 4
      %v1340 = vrot.slane %v262, 5
      %v1341 = vsel %vm1306, %v1339, %v1340
      %v1342 = vrot.slane %v1261, 5
      %v1343 = vrot.slane %v1342, 4
      %v1344 = vrot.slane %v221, 5
      %v1345 = vsel %vm1306, %v1343, %v1344
      %v1346 = vrot.slane %v1344, 4
      %v1347 = vrot.slane %v263, 5
      %v1348 = vsel %vm1306, %v1346, %v1347
      %v1349 = vrot.slane %v1262, 5
      %v1350 = vrot.slane %v1349, 4
      %v1351 = vrot.slane %v223, 5
      %v1352 = vsel %vm1306, %v1350, %v1351
      %v1353 = vrot.slane %v1351, 4
      %v1354 = vrot.slane %v264, 5
      %v1355 = vsel %vm1306, %v1353, %v1354
      %v1356 = vrot.slane %v1263, 5
      %v1357 = vrot.slane %v1356, 4
      %v1358 = vrot.slane %v225, 5
      %v1359 = vsel %vm1306, %v1357, %v1358
      %v1360 = vrot.slane %v1358, 4
      %v1361 = vrot.slane %v265, 5
      %v1362 = vsel %vm1306, %v1360, %v1361
      %v1363 = vrot.slane %v1264, 5
      %v1364 = vrot.slane %v1363, 4
      %v1365 = vrot.slane %v227, 5
      %v1366 = vsel %vm1306, %v1364, %v1365
      %v1367 = vrot.slane %v1365, 4
      %v1368 = vrot.slane %v266, 5
      %v1369 = vsel %vm1306, %v1367, %v1368
      %v1370 = vrot.slane %v1265, 5
      %v1371 = vrot.slane %v1370, 4
      %v1372 = vrot.slane %v229, 5
      %v1373 = vsel %vm1306, %v1371, %v1372
      %v1374 = vrot.slane %v1372, 4
      %v1375 = vrot.slane %v267, 5
      %v1376 = vsel %vm1306, %v1374, %v1375
      %v1377 = vrot.slane %v1266, 5
      %v1378 = vrot.slane %v1377, 4
      %v1379 = vrot.slane %v231, 5
      %v1380 = vsel %vm1306, %v1378, %v1379
      %v1381 = vrot.slane %v1379, 4
      %v1382 = vrot.slane %v268, 5
      %v1383 = vsel %vm1306, %v1381, %v1382
      %v1384 = vrot.slane %v1267, 5
      %v1385 = vrot.slane %v1384, 4
      %v1386 = vrot.slane %v233, 5
      %v1387 = vsel %vm1306, %v1385, %v1386
      %v1388 = vrot.slane %v1386, 4
      %v1389 = vrot.slane %v269, 5
      %v1390 = vsel %vm1306, %v1388, %v1389
      %v1391 = vrot.slane %v1268, 5
      %v1392 = vrot.slane %v1391, 4
      %v1393 = vrot.slane %v235, 5
      %v1394 = vsel %vm1306, %v1392, %v1393
      %v1395 = vrot.slane %v1393, 4
      %v1396 = vrot.slane %v270, 5
      %v1397 = vsel %vm1306, %v1395, %v1396
      %v1398 = vrot.slane %v1269, 5
      %v1399 = vrot.slane %v1398, 4
      %v1400 = vrot.slane %v237, 5
      %v1401 = vsel %vm1306, %v1399, %v1400
      %v1402 = vrot.slane %v1400, 4
      %v1403 = vrot.slane %v271, 5
      %v1404 = vsel %vm1306, %v1402, %v1403
      %v1405 = vrot.slane %v1270, 5
      %v1406 = vrot.slane %v1405, 4
      %v1407 = vrot.slane %v239, 5
      %v1408 = vsel %vm1306, %v1406, %v1407
      %v1409 = vrot.slane %v1407, 4
      %v1410 = vrot.slane %v272, 5
      %v1411 = vsel %vm1306, %v1409, %v1410
      %v1412 = vrot.slane %v1271, 5
      %v1413 = vrot.slane %v1412, 4
      %v1414 = vrot.slane %v241, 5
      %v1415 = vsel %vm1306, %v1413, %v1414
      %v1416 = vrot.slane %v1414, 4
      %v1417 = vrot.slane %v273, 5
      %v1418 = vsel %vm1306, %v1416, %v1417
      %s1419 = scalar_lea.vmem %s1, 128
      %v1420 = vld [vmem:[%s1419] sm:$0xf]
      %v1421 = vld [vmem:[%s1419 + $0x4] sm:$0xf]
      %v1422 = vld [vmem:[%s1419 + $0x8] sm:$0xf]
      %v1423 = vld [vmem:[%s1419 + $0xc] sm:$0xf]
      %v1424 = vld [vmem:[%s1419 + $0x10] sm:$0xf]
      %v1425 = vld [vmem:[%s1419 + $0x14] sm:$0xf]
      %v1426 = vld [vmem:[%s1419 + $0x18] sm:$0xf]
      %v1427 = vld [vmem:[%s1419 + $0x1c] sm:$0xf]
      %v1428 = vld [vmem:[%s1419 + $0x20] sm:$0xf]
      %v1429 = vld [vmem:[%s1419 + $0x24] sm:$0xf]
      %v1430 = vld [vmem:[%s1419 + $0x28] sm:$0xf]
      %v1431 = vld [vmem:[%s1419 + $0x2c] sm:$0xf]
      %v1432 = vld [vmem:[%s1419 + $0x30] sm:$0xf]
      %v1433 = vld [vmem:[%s1419 + $0x34] sm:$0xf]
      %v1434 = vld [vmem:[%s1419 + $0x38] sm:$0xf]
      %v1435 = vld [vmem:[%s1419 + $0x3c] sm:$0xf]
      %v1436 = vunpack.c.l.b16 %v1310
      %v1437 = vunpack.c.l.b16 %v1313
      %v1438 = vunpack.c.l.b16 %v1317
      %v1439 = vunpack.c.l.b16 %v1320
      %v1440 = vunpack.c.l.b16 %v1324
      %v1441 = vunpack.c.l.b16 %v1327
      %v1442 = vunpack.c.l.b16 %v1331
      %v1443 = vunpack.c.l.b16 %v1334
      %v1444 = vunpack.c.l.b16 %v1338
      %v1445 = vunpack.c.l.b16 %v1341
      %v1446 = vunpack.c.l.b16 %v1345
      %v1447 = vunpack.c.l.b16 %v1348
      %v1448 = vunpack.c.l.b16 %v1352
      %v1449 = vunpack.c.l.b16 %v1355
      %v1450 = vunpack.c.l.b16 %v1359
      %v1451 = vunpack.c.l.b16 %v1362
      %v1452 = vunpack.c.l.b16 %v1366
      %v1453 = vunpack.c.l.b16 %v1369
      %v1454 = vunpack.c.l.b16 %v1373
      %v1455 = vunpack.c.l.b16 %v1376
      %v1456 = vunpack.c.l.b16 %v1380
      %v1457 = vunpack.c.l.b16 %v1383
      %v1458 = vunpack.c.l.b16 %v1387
      %v1459 = vunpack.c.l.b16 %v1390
      %v1460 = vunpack.c.l.b16 %v1394
      %v1461 = vunpack.c.l.b16 %v1397
      %v1462 = vunpack.c.l.b16 %v1401
      %v1463 = vunpack.c.l.b16 %v1404
      %v1464 = vunpack.c.l.b16 %v1408
      %v1465 = vunpack.c.l.b16 %v1411
      %v1466 = vunpack.c.l.b16 %v1415
      %v1467 = vunpack.c.l.b16 %v1418
      %v1468 = vpack.c.b16 %v1437, %v1436
      %v1469 = vpack.c.b16 %v1439, %v1438
      %v1470 = vpack.c.b16 %v1441, %v1440
      %v1471 = vpack.c.b16 %v1443, %v1442
      %v1472 = vpack.c.b16 %v1445, %v1444
      %v1473 = vpack.c.b16 %v1447, %v1446
      %v1474 = vpack.c.b16 %v1449, %v1448
      %v1475 = vpack.c.b16 %v1451, %v1450
      %v1476 = vpack.c.b16 %v1453, %v1452
      %v1477 = vpack.c.b16 %v1455, %v1454
      %v1478 = vpack.c.b16 %v1457, %v1456
      %v1479 = vpack.c.b16 %v1459, %v1458
      %v1480 = vpack.c.b16 %v1461, %v1460
      %v1481 = vpack.c.b16 %v1463, %v1462
      %v1482 = vpack.c.b16 %v1465, %v1464
      %v1483 = vpack.c.b16 %v1467, %v1466
      %v1516 = vunpack.c.l.b16 %v1420
      %v1517 = vunpack.c.l.b16 %v1421
      %v1518 = vunpack.c.l.b16 %v1422
      %v1519 = vunpack.c.l.b16 %v1423
      %v1520 = vunpack.c.l.b16 %v1424
      %v1521 = vunpack.c.l.b16 %v1425
      %v1522 = vunpack.c.l.b16 %v1426
      %v1523 = vunpack.c.l.b16 %v1427
      %v1524 = vunpack.c.l.b16 %v1428
      %v1525 = vunpack.c.l.b16 %v1429
      %v1526 = vunpack.c.l.b16 %v1430
      %v1527 = vunpack.c.l.b16 %v1431
      %v1528 = vunpack.c.l.b16 %v1432
      %v1529 = vunpack.c.l.b16 %v1433
      %v1530 = vunpack.c.l.b16 %v1434
      %v1531 = vunpack.c.l.b16 %v1435
      %v1532 = vpack.c.b16 %v1517, %v1516
      %v1533 = vpack.c.b16 %v1519, %v1518
      %v1534 = vpack.c.b16 %v1521, %v1520
      %v1535 = vpack.c.b16 %v1523, %v1522
      %v1536 = vpack.c.b16 %v1525, %v1524
      %v1537 = vpack.c.b16 %v1527, %v1526
      %v1538 = vpack.c.b16 %v1529, %v1528
      %v1539 = vpack.c.b16 %v1531, %v1530
      %1548 = vmatprep.subr.bf16.mxu0 0
      %1549 = vmatpush1.bf16.msra.mxu0 %v1532
      %1550 = vmatprep.subr.bf16.mxu0 0
      %1551 = vmatpush1.bf16.msra.mxu0 %v1533
      %1552 = vmatprep.subr.bf16.mxu0 0
      %1553 = vmatpush1.bf16.msra.mxu0 %v1534
      %1554 = vmatprep.subr.bf16.mxu0 0
      %1555 = vmatpush1.bf16.msra.mxu0 %v1535
      %1556 = vmatprep.subr.bf16.mxu0 0
      %1557 = vmatpush1.bf16.msra.mxu0 %v1536
      %1558 = vmatprep.subr.bf16.mxu0 0
      %1559 = vmatpush1.bf16.msra.mxu0 %v1537
      %1560 = vmatprep.subr.bf16.mxu0 0
      %1561 = vmatpush1.bf16.msra.mxu0 %v1538
      %1562 = vmatprep.subr.bf16.mxu0 0
      %1563 = vmatpush1.bf16.msra.mxu0 %v1539
      %1564 = vmatprep.subr.bf16.mxu0 0
      %1565 = vmatpush1.bf16.msra.mxu0 0
      %1566 = vmatprep.subr.bf16.mxu0 0
      %1567 = vmatpush1.bf16.msra.mxu0 0
      %1568 = vmatprep.subr.bf16.mxu0 0
      %1569 = vmatpush1.bf16.msra.mxu0 0
      %1570 = vmatprep.subr.bf16.mxu0 0
      %1571 = vmatpush1.bf16.msra.mxu0 0
      %1572 = vmatprep.subr.bf16.mxu0 0
      %1573 = vmatpush1.bf16.msra.mxu0 0
      %1574 = vmatprep.subr.bf16.mxu0 0
      %1575 = vmatpush1.bf16.msra.mxu0 0
      %1576 = vmatprep.subr.bf16.mxu0 0
      %1577 = vmatpush1.bf16.msra.mxu0 0
      %1578 = vmatprep.subr.bf16.mxu0 0
      %1579 = vmatpush1.bf16.msra.mxu0 0
      %1580 = vmatprep.mubr.bf16.mxu0 0
      %1581 = vmatmul.mubr.bf16.gmra.mrb[0].mxu0 %v1468
      %v1582 = vpop.f32.mrb[0].mxu0
      %v1583 = vadd.f32 0.0, %v1582
      %v1584 = vpop.f32.mrb[0].mxu0
      %v1585 = vpop.f32.mrb[0].mxu0
      %v1586 = vadd.f32 0.0, %v1585
      %v1587 = vpop.f32.mrb[0].mxu0
      %1588 = vmatprep.mubr.bf16.mxu0 0
      %1589 = vmatmul.mubr.bf16.gmra.mrb[0].mxu0 %v1469
      %v1590 = vpop.f32.mrb[0].mxu0
      %v1591 = vadd.f32 0.0, %v1590
      %v1592 = vpop.f32.mrb[0].mxu0
      %v1593 = vpop.f32.mrb[0].mxu0
      %v1594 = vadd.f32 0.0, %v1593
      %v1595 = vpop.f32.mrb[0].mxu0
      %1596 = vmatprep.mubr.bf16.mxu0 0
      %1597 = vmatmul.mubr.bf16.gmra.mrb[0].mxu0 %v1470
      %v1598 = vpop.f32.mrb[0].mxu0
      %v1599 = vadd.f32 0.0, %v1598
      %v1600 = vpop.f32.mrb[0].mxu0
      %v1601 = vpop.f32.mrb[0].mxu0
      %v1602 = vadd.f32 0.0, %v1601
      %v1603 = vpop.f32.mrb[0].mxu0
      %1604 = vmatprep.mubr.bf16.mxu0 0
      %1605 = vmatmul.mubr.bf16.gmra.mrb[0].mxu0 %v1471
      %v1606 = vpop.f32.mrb[0].mxu0
      %v1607 = vadd.f32 0.0, %v1606
      %v1608 = vpop.f32.mrb[0].mxu0
      %v1609 = vpop.f32.mrb[0].mxu0
      %v1610 = vadd.f32 0.0, %v1609
      %v1611 = vpop.f32.mrb[0].mxu0
      %1612 = vmatprep.mubr.bf16.mxu0 0
      %1613 = vmatmul.mubr.bf16.gmra.mrb[0].mxu0 %v1472
      %v1614 = vpop.f32.mrb[0].mxu0
      %v1615 = vadd.f32 0.0, %v1614
      %v1616 = vpop.f32.mrb[0].mxu0
      %v1617 = vpop.f32.mrb[0].mxu0
      %v1618 = vadd.f32 0.0, %v1617
      %v1619 = vpop.f32.mrb[0].mxu0
      %1620 = vmatprep.mubr.bf16.mxu0 0
      %1621 = vmatmul.mubr.bf16.gmra.mrb[0].mxu0 %v1473
      %v1622 = vpop.f32.mrb[0].mxu0
      %v1623 = vadd.f32 0.0, %v1622
      %v1624 = vpop.f32.mrb[0].mxu0
      %v1625 = vpop.f32.mrb[0].mxu0
      %v1626 = vadd.f32 0.0, %v1625
      %v1627 = vpop.f32.mrb[0].mxu0
      %1628 = vmatprep.mubr.bf16.mxu0 0
      %1629 = vmatmul.mubr.bf16.gmra.mrb[0].mxu0 %v1474
      %v1630 = vpop.f32.mrb[0].mxu0
      %v1631 = vadd.f32 0.0, %v1630
      %v1632 = vpop.f32.mrb[0].mxu0
      %v1633 = vpop.f32.mrb[0].mxu0
      %v1634 = vadd.f32 0.0, %v1633
      %v1635 = vpop.f32.mrb[0].mxu0
      %1636 = vmatprep.mubr.bf16.mxu0 0
      %1637 = vmatmul.mubr.bf16.gmra.mrb[0].mxu0 %v1475
      %v1638 = vpop.f32.mrb[0].mxu0
      %v1639 = vadd.f32 0.0, %v1638
      %v1640 = vpop.f32.mrb[0].mxu0
      %v1641 = vpop.f32.mrb[0].mxu0
      %v1642 = vadd.f32 0.0, %v1641
      %v1643 = vpop.f32.mrb[0].mxu0
      %1644 = vmatprep.mubr.bf16.mxu0 0
      %1645 = vmatmul.mubr.bf16.gmra.mrb[0].mxu0 %v1476
      %v1646 = vpop.f32.mrb[0].mxu0
      %v1647 = vadd.f32 0.0, %v1646
      %v1648 = vpop.f32.mrb[0].mxu0
      %v1649 = vpop.f32.mrb[0].mxu0
      %v1650 = vadd.f32 0.0, %v1649
      %v1651 = vpop.f32.mrb[0].mxu0
      %1652 = vmatprep.mubr.bf16.mxu0 0
      %1653 = vmatmul.mubr.bf16.gmra.mrb[0].mxu0 %v1477
      %v1654 = vpop.f32.mrb[0].mxu0
      %v1655 = vadd.f32 0.0, %v1654
      %v1656 = vpop.f32.mrb[0].mxu0
      %v1657 = vpop.f32.mrb[0].mxu0
      %v1658 = vadd.f32 0.0, %v1657
      %v1659 = vpop.f32.mrb[0].mxu0
      %1660 = vmatprep.mubr.bf16.mxu0 0
      %1661 = vmatmul.mubr.bf16.gmra.mrb[0].mxu0 %v1478
      %v1662 = vpop.f32.mrb[0].mxu0
      %v1663 = vadd.f32 0.0, %v1662
      %v1664 = vpop.f32.mrb[0].mxu0
      %v1665 = vpop.f32.mrb[0].mxu0
      %v1666 = vadd.f32 0.0, %v1665
      %v1667 = vpop.f32.mrb[0].mxu0
      %1668 = vmatprep.mubr.bf16.mxu0 0
      %1669 = vmatmul.mubr.bf16.gmra.mrb[0].mxu0 %v1479
      %v1670 = vpop.f32.mrb[0].mxu0
      %v1671 = vadd.f32 0.0, %v1670
      %v1672 = vpop.f32.mrb[0].mxu0
      %v1673 = vpop.f32.mrb[0].mxu0
      %v1674 = vadd.f32 0.0, %v1673
      %v1675 = vpop.f32.mrb[0].mxu0
      %1676 = vmatprep.mubr.bf16.mxu0 0
      %1677 = vmatmul.mubr.bf16.gmra.mrb[0].mxu0 %v1480
      %v1678 = vpop.f32.mrb[0].mxu0
      %v1679 = vadd.f32 0.0, %v1678
      %v1680 = vpop.f32.mrb[0].mxu0
      %v1681 = vpop.f32.mrb[0].mxu0
      %v1682 = vadd.f32 0.0, %v1681
      %v1683 = vpop.f32.mrb[0].mxu0
      %1684 = vmatprep.mubr.bf16.mxu0 0
      %1685 = vmatmul.mubr.bf16.gmra.mrb[0].mxu0 %v1481
      %v1686 = vpop.f32.mrb[0].mxu0
      %v1687 = vadd.f32 0.0, %v1686
      %v1688 = vpop.f32.mrb[0].mxu0
      %v1689 = vpop.f32.mrb[0].mxu0
      %v1690 = vadd.f32 0.0, %v1689
      %v1691 = vpop.f32.mrb[0].mxu0
      %1692 = vmatprep.mubr.bf16.mxu0 0
      %1693 = vmatmul.mubr.bf16.gmra.mrb[0].mxu0 %v1482
      %v1694 = vpop.f32.mrb[0].mxu0
      %v1695 = vadd.f32 0.0, %v1694
      %v1696 = vpop.f32.mrb[0].mxu0
      %v1697 = vpop.f32.mrb[0].mxu0
      %v1698 = vadd.f32 0.0, %v1697
      %v1699 = vpop.f32.mrb[0].mxu0
      %1700 = vmatprep.mubr.bf16.mxu0 0
      %1701 = vmatmul.mubr.bf16.gmra.mrb[0].mxu0 %v1483
      %v1702 = vpop.f32.mrb[0].mxu0
      %v1703 = vadd.f32 0.0, %v1702
      %v1704 = vpop.f32.mrb[0].mxu0
      %v1705 = vpop.f32.mrb[0].mxu0
      %v1706 = vadd.f32 0.0, %v1705
      %v1707 = vpop.f32.mrb[0].mxu0
      %1708 = vdwg.mxu0
      %v1709 = vadd.f32 %v1130, %v1583
      %v1710 = vadd.f32 %v1133, %v1586
      %v1711 = vadd.f32 %v1138, %v1591
      %v1712 = vadd.f32 %v1141, %v1594
      %v1713 = vadd.f32 %v1146, %v1599
      %v1714 = vadd.f32 %v1149, %v1602
      %v1715 = vadd.f32 %v1154, %v1607
      %v1716 = vadd.f32 %v1157, %v1610
      %v1717 = vadd.f32 %v1162, %v1615
      %v1718 = vadd.f32 %v1165, %v1618
      %v1719 = vadd.f32 %v1170, %v1623
      %v1720 = vadd.f32 %v1173, %v1626
      %v1721 = vadd.f32 %v1178, %v1631
      %v1722 = vadd.f32 %v1181, %v1634
      %v1723 = vadd.f32 %v1186, %v1639
      %v1724 = vadd.f32 %v1189, %v1642
      %v1725 = vadd.f32 %v1194, %v1647
      %v1726 = vadd.f32 %v1197, %v1650
      %v1727 = vadd.f32 %v1202, %v1655
      %v1728 = vadd.f32 %v1205, %v1658
      %v1729 = vadd.f32 %v1210, %v1663
      %v1730 = vadd.f32 %v1213, %v1666
      %v1731 = vadd.f32 %v1218, %v1671
      %v1732 = vadd.f32 %v1221, %v1674
      %v1733 = vadd.f32 %v1226, %v1679
      %v1734 = vadd.f32 %v1229, %v1682
      %v1735 = vadd.f32 %v1234, %v1687
      %v1736 = vadd.f32 %v1237, %v1690
      %v1737 = vadd.f32 %v1242, %v1695
      %v1738 = vadd.f32 %v1245, %v1698
      %v1739 = vadd.f32 %v1250, %v1703
      %v1740 = vadd.f32 %v1253, %v1706
      %s1741 = scalar_lea.vmem %s199, 12
      %v1742 = vld [vmem:[%s1741] sm:$0xf]
      %v1743 = vld [vmem:[%s1741 + $0x4] sm:$0xf]
      %v1744 = vld [vmem:[%s1741 + $0xc] sm:$0xf]
      %v1745 = vld [vmem:[%s1741 + $0x10] sm:$0xf]
      %v1746 = vld [vmem:[%s1741 + $0x18] sm:$0xf]
      %v1747 = vld [vmem:[%s1741 + $0x1c] sm:$0xf]
      %v1748 = vld [vmem:[%s1741 + $0x24] sm:$0xf]
      %v1749 = vld [vmem:[%s1741 + $0x28] sm:$0xf]
      %v1750 = vld [vmem:[%s1741 + $0x30] sm:$0xf]
      %v1751 = vld [vmem:[%s1741 + $0x34] sm:$0xf]
      %v1752 = vld [vmem:[%s1741 + $0x3c] sm:$0xf]
      %v1753 = vld [vmem:[%s1741 + $0x40] sm:$0xf]
      %v1754 = vld [vmem:[%s1741 + $0x48] sm:$0xf]
      %v1755 = vld [vmem:[%s1741 + $0x4c] sm:$0xf]
      %v1756 = vld [vmem:[%s1741 + $0x54] sm:$0xf]
      %v1757 = vld [vmem:[%s1741 + $0x58] sm:$0xf]
      %v1758 = vld [vmem:[%s1741 + $0x60] sm:$0xf]
      %v1759 = vld [vmem:[%s1741 + $0x64] sm:$0xf]
      %v1760 = vld [vmem:[%s1741 + $0x6c] sm:$0xf]
      %v1761 = vld [vmem:[%s1741 + $0x70] sm:$0xf]
      %v1762 = vld [vmem:[%s1741 + $0x78] sm:$0xf]
      %v1763 = vld [vmem:[%s1741 + $0x7c] sm:$0xf]
      %v1764 = vld [vmem:[%s1741 + $0x84] sm:$0xf]
      %v1765 = vld [vmem:[%s1741 + $0x88] sm:$0xf]
      %v1766 = vld [vmem:[%s1741 + $0x90] sm:$0xf]
      %v1767 = vld [vmem:[%s1741 + $0x94] sm:$0xf]
      %v1768 = vld [vmem:[%s1741 + $0x9c] sm:$0xf]
      %v1769 = vld [vmem:[%s1741 + $0xa0] sm:$0xf]
      %v1770 = vld [vmem:[%s1741 + $0xa8] sm:$0xf]
      %v1771 = vld [vmem:[%s1741 + $0xac] sm:$0xf]
      %v1772 = vld [vmem:[%s1741 + $0xb4] sm:$0xf]
      %v1773 = vld [vmem:[%s1741 + $0xb8] sm:$0xf]
      %s1774 = scalar_lea.vmem %s1, 192
      %v1775 = vld [vmem:[%s1774] sm:$0xf]
      %v1776 = vld [vmem:[%s1774 + $0x4] sm:$0xf]
      %v1777 = vld [vmem:[%s1774 + $0x8] sm:$0xf]
      %v1778 = vld [vmem:[%s1774 + $0xc] sm:$0xf]
      %v1779 = vld [vmem:[%s1774 + $0x10] sm:$0xf]
      %v1780 = vld [vmem:[%s1774 + $0x14] sm:$0xf]
      %v1781 = vld [vmem:[%s1774 + $0x18] sm:$0xf]
      %v1782 = vld [vmem:[%s1774 + $0x1c] sm:$0xf]
      %v1783 = vld [vmem:[%s1774 + $0x20] sm:$0xf]
      %v1784 = vld [vmem:[%s1774 + $0x24] sm:$0xf]
      %v1785 = vld [vmem:[%s1774 + $0x28] sm:$0xf]
      %v1786 = vld [vmem:[%s1774 + $0x2c] sm:$0xf]
      %v1787 = vld [vmem:[%s1774 + $0x30] sm:$0xf]
      %v1788 = vld [vmem:[%s1774 + $0x34] sm:$0xf]
      %v1789 = vld [vmem:[%s1774 + $0x38] sm:$0xf]
      %v1790 = vld [vmem:[%s1774 + $0x3c] sm:$0xf]
      %v1823 = vunpack.c.l.b16 %v1742
      %v1824 = vunpack.c.l.b16 %v1743
      %v1825 = vunpack.c.l.b16 %v1744
      %v1826 = vunpack.c.l.b16 %v1745
      %v1827 = vunpack.c.l.b16 %v1746
      %v1828 = vunpack.c.l.b16 %v1747
      %v1829 = vunpack.c.l.b16 %v1748
      %v1830 = vunpack.c.l.b16 %v1749
      %v1831 = vunpack.c.l.b16 %v1750
      %v1832 = vunpack.c.l.b16 %v1751
      %v1833 = vunpack.c.l.b16 %v1752
      %v1834 = vunpack.c.l.b16 %v1753
      %v1835 = vunpack.c.l.b16 %v1754
      %v1836 = vunpack.c.l.b16 %v1755
      %v1837 = vunpack.c.l.b16 %v1756
      %v1838 = vunpack.c.l.b16 %v1757
      %v1839 = vunpack.c.l.b16 %v1758
      %v1840 = vunpack.c.l.b16 %v1759
      %v1841 = vunpack.c.l.b16 %v1760
      %v1842 = vunpack.c.l.b16 %v1761
      %v1843 = vunpack.c.l.b16 %v1762
      %v1844 = vunpack.c.l.b16 %v1763
      %v1845 = vunpack.c.l.b16 %v1764
      %v1846 = vunpack.c.l.b16 %v1765
      %v1847 = vunpack.c.l.b16 %v1766
      %v1848 = vunpack.c.l.b16 %v1767
      %v1849 = vunpack.c.l.b16 %v1768
      %v1850 = vunpack.c.l.b16 %v1769
      %v1851 = vunpack.c.l.b16 %v1770
      %v1852 = vunpack.c.l.b16 %v1771
      %v1853 = vunpack.c.l.b16 %v1772
      %v1854 = vunpack.c.l.b16 %v1773
      %v1855 = vpack.c.b16 %v1824, %v1823
      %v1856 = vpack.c.b16 %v1826, %v1825
      %v1857 = vpack.c.b16 %v1828, %v1827
      %v1858 = vpack.c.b16 %v1830, %v1829
      %v1859 = vpack.c.b16 %v1832, %v1831
      %v1860 = vpack.c.b16 %v1834, %v1833
      %v1861 = vpack.c.b16 %v1836, %v1835
      %v1862 = vpack.c.b16 %v1838, %v1837
      %v1863 = vpack.c.b16 %v1840, %v1839
      %v1864 = vpack.c.b16 %v1842, %v1841
      %v1865 = vpack.c.b16 %v1844, %v1843
      %v1866 = vpack.c.b16 %v1846, %v1845
      %v1867 = vpack.c.b16 %v1848, %v1847
      %v1868 = vpack.c.b16 %v1850, %v1849
      %v1869 = vpack.c.b16 %v1852, %v1851
      %v1870 = vpack.c.b16 %v1854, %v1853
      %v1903 = vunpack.c.l.b16 %v1775
      %v1904 = vunpack.c.l.b16 %v1776
      %v1905 = vunpack.c.l.b16 %v1777
      %v1906 = vunpack.c.l.b16 %v1778
      %v1907 = vunpack.c.l.b16 %v1779
      %v1908 = vunpack.c.l.b16 %v1780
      %v1909 = vunpack.c.l.b16 %v1781
      %v1910 = vunpack.c.l.b16 %v1782
      %v1911 = vunpack.c.l.b16 %v1783
      %v1912 = vunpack.c.l.b16 %v1784
      %v1913 = vunpack.c.l.b16 %v1785
      %v1914 = vunpack.c.l.b16 %v1786
      %v1915 = vunpack.c.l.b16 %v1787
      %v1916 = vunpack.c.l.b16 %v1788
      %v1917 = vunpack.c.l.b16 %v1789
      %v1918 = vunpack.c.l.b16 %v1790
      %v1919 = vpack.c.b16 %v1904, %v1903
      %v1920 = vpack.c.b16 %v1906, %v1905
      %v1921 = vpack.c.b16 %v1908, %v1907
      %v1922 = vpack.c.b16 %v1910, %v1909
      %v1923 = vpack.c.b16 %v1912, %v1911
      %v1924 = vpack.c.b16 %v1914, %v1913
      %v1925 = vpack.c.b16 %v1916, %v1915
      %v1926 = vpack.c.b16 %v1918, %v1917
      %1935 = vmatprep.subr.bf16.mxu0 0
      %1936 = vmatpush1.bf16.msra.mxu0 %v1919
      %1937 = vmatprep.subr.bf16.mxu0 0
      %1938 = vmatpush1.bf16.msra.mxu0 %v1920
      %1939 = vmatprep.subr.bf16.mxu0 0
      %1940 = vmatpush1.bf16.msra.mxu0 %v1921
      %1941 = vmatprep.subr.bf16.mxu0 0
      %1942 = vmatpush1.bf16.msra.mxu0 %v1922
      %1943 = vmatprep.subr.bf16.mxu0 0
      %1944 = vmatpush1.bf16.msra.mxu0 %v1923
      %1945 = vmatprep.subr.bf16.mxu0 0
      %1946 = vmatpush1.bf16.msra.mxu0 %v1924
      %1947 = vmatprep.subr.bf16.mxu0 0
      %1948 = vmatpush1.bf16.msra.mxu0 %v1925
      %1949 = vmatprep.subr.bf16.mxu0 0
      %1950 = vmatpush1.bf16.msra.mxu0 %v1926
      %1951 = vmatprep.subr.bf16.mxu0 0
      %1952 = vmatpush1.bf16.msra.mxu0 0
      %1953 = vmatprep.subr.bf16.mxu0 0
      %1954 = vmatpush1.bf16.msra.mxu0 0
      %1955 = vmatprep.subr.bf16.mxu0 0
      %1956 = vmatpush1.bf16.msra.mxu0 0
      %1957 = vmatprep.subr.bf16.mxu0 0
      %1958 = vmatpush1.bf16.msra.mxu0 0
      %1959 = vmatprep.subr.bf16.mxu0 0
      %1960 = vmatpush1.bf16.msra.mxu0 0
      %1961 = vmatprep.subr.bf16.mxu0 0
      %1962 = vmatpush1.bf16.msra.mxu0 0
      %1963 = vmatprep.subr.bf16.mxu0 0
      %1964 = vmatpush1.bf16.msra.mxu0 0
      %1965 = vmatprep.subr.bf16.mxu0 0
      %1966 = vmatpush1.bf16.msra.mxu0 0
      %1967 = vmatprep.mubr.bf16.mxu0 0
      %1968 = vmatmul.mubr.bf16.gmra.mrb[0].mxu0 %v1855
      %v1969 = vpop.f32.mrb[0].mxu0
      %v1970 = vadd.f32 0.0, %v1969
      %v1971 = vpop.f32.mrb[0].mxu0
      %v1972 = vpop.f32.mrb[0].mxu0
      %v1973 = vadd.f32 0.0, %v1972
      %v1974 = vpop.f32.mrb[0].mxu0
      %1975 = vmatprep.mubr.bf16.mxu0 0
      %1976 = vmatmul.mubr.bf16.gmra.mrb[0].mxu0 %v1856
      %v1977 = vpop.f32.mrb[0].mxu0
      %v1978 = vadd.f32 0.0, %v1977
      %v1979 = vpop.f32.mrb[0].mxu0
      %v1980 = vpop.f32.mrb[0].mxu0
      %v1981 = vadd.f32 0.0, %v1980
      %v1982 = vpop.f32.mrb[0].mxu0
      %1983 = vmatprep.mubr.bf16.mxu0 0
      %1984 = vmatmul.mubr.bf16.gmra.mrb[0].mxu0 %v1857
      %v1985 = vpop.f32.mrb[0].mxu0
      %v1986 = vadd.f32 0.0, %v1985
      %v1987 = vpop.f32.mrb[0].mxu0
      %v1988 = vpop.f32.mrb[0].mxu0
      %v1989 = vadd.f32 0.0, %v1988
      %v1990 = vpop.f32.mrb[0].mxu0
      %1991 = vmatprep.mubr.bf16.mxu0 0
      %1992 = vmatmul.mubr.bf16.gmra.mrb[0].mxu0 %v1858
      %v1993 = vpop.f32.mrb[0].mxu0
      %v1994 = vadd.f32 0.0, %v1993
      %v1995 = vpop.f32.mrb[0].mxu0
      %v1996 = vpop.f32.mrb[0].mxu0
      %v1997 = vadd.f32 0.0, %v1996
      %v1998 = vpop.f32.mrb[0].mxu0
      %1999 = vmatprep.mubr.bf16.mxu0 0
      %2000 = vmatmul.mubr.bf16.gmra.mrb[0].mxu0 %v1859
      %v2001 = vpop.f32.mrb[0].mxu0
      %v2002 = vadd.f32 0.0, %v2001
      %v2003 = vpop.f32.mrb[0].mxu0
      %v2004 = vpop.f32.mrb[0].mxu0
      %v2005 = vadd.f32 0.0, %v2004
      %v2006 = vpop.f32.mrb[0].mxu0
      %2007 = vmatprep.mubr.bf16.mxu0 0
      %2008 = vmatmul.mubr.bf16.gmra.mrb[0].mxu0 %v1860
      %v2009 = vpop.f32.mrb[0].mxu0
      %v2010 = vadd.f32 0.0, %v2009
      %v2011 = vpop.f32.mrb[0].mxu0
      %v2012 = vpop.f32.mrb[0].mxu0
      %v2013 = vadd.f32 0.0, %v2012
      %v2014 = vpop.f32.mrb[0].mxu0
      %2015 = vmatprep.mubr.bf16.mxu0 0
      %2016 = vmatmul.mubr.bf16.gmra.mrb[0].mxu0 %v1861
      %v2017 = vpop.f32.mrb[0].mxu0
      %v2018 = vadd.f32 0.0, %v2017
      %v2019 = vpop.f32.mrb[0].mxu0
      %v2020 = vpop.f32.mrb[0].mxu0
      %v2021 = vadd.f32 0.0, %v2020
      %v2022 = vpop.f32.mrb[0].mxu0
      %2023 = vmatprep.mubr.bf16.mxu0 0
      %2024 = vmatmul.mubr.bf16.gmra.mrb[0].mxu0 %v1862
      %v2025 = vpop.f32.mrb[0].mxu0
      %v2026 = vadd.f32 0.0, %v2025
      %v2027 = vpop.f32.mrb[0].mxu0
      %v2028 = vpop.f32.mrb[0].mxu0
      %v2029 = vadd.f32 0.0, %v2028
      %v2030 = vpop.f32.mrb[0].mxu0
      %2031 = vmatprep.mubr.bf16.mxu0 0
      %2032 = vmatmul.mubr.bf16.gmra.mrb[0].mxu0 %v1863
      %v2033 = vpop.f32.mrb[0].mxu0
      %v2034 = vadd.f32 0.0, %v2033
      %v2035 = vpop.f32.mrb[0].mxu0
      %v2036 = vpop.f32.mrb[0].mxu0
      %v2037 = vadd.f32 0.0, %v2036
      %v2038 = vpop.f32.mrb[0].mxu0
      %2039 = vmatprep.mubr.bf16.mxu0 0
      %2040 = vmatmul.mubr.bf16.gmra.mrb[0].mxu0 %v1864
      %v2041 = vpop.f32.mrb[0].mxu0
      %v2042 = vadd.f32 0.0, %v2041
      %v2043 = vpop.f32.mrb[0].mxu0
      %v2044 = vpop.f32.mrb[0].mxu0
      %v2045 = vadd.f32 0.0, %v2044
      %v2046 = vpop.f32.mrb[0].mxu0
      %2047 = vmatprep.mubr.bf16.mxu0 0
      %2048 = vmatmul.mubr.bf16.gmra.mrb[0].mxu0 %v1865
      %v2049 = vpop.f32.mrb[0].mxu0
      %v2050 = vadd.f32 0.0, %v2049
      %v2051 = vpop.f32.mrb[0].mxu0
      %v2052 = vpop.f32.mrb[0].mxu0
      %v2053 = vadd.f32 0.0, %v2052
      %v2054 = vpop.f32.mrb[0].mxu0
      %2055 = vmatprep.mubr.bf16.mxu0 0
      %2056 = vmatmul.mubr.bf16.gmra.mrb[0].mxu0 %v1866
      %v2057 = vpop.f32.mrb[0].mxu0
      %v2058 = vadd.f32 0.0, %v2057
      %v2059 = vpop.f32.mrb[0].mxu0
      %v2060 = vpop.f32.mrb[0].mxu0
      %v2061 = vadd.f32 0.0, %v2060
      %v2062 = vpop.f32.mrb[0].mxu0
      %2063 = vmatprep.mubr.bf16.mxu0 0
      %2064 = vmatmul.mubr.bf16.gmra.mrb[0].mxu0 %v1867
      %v2065 = vpop.f32.mrb[0].mxu0
      %v2066 = vadd.f32 0.0, %v2065
      %v2067 = vpop.f32.mrb[0].mxu0
      %v2068 = vpop.f32.mrb[0].mxu0
      %v2069 = vadd.f32 0.0, %v2068
      %v2070 = vpop.f32.mrb[0].mxu0
      %2071 = vmatprep.mubr.bf16.mxu0 0
      %2072 = vmatmul.mubr.bf16.gmra.mrb[0].mxu0 %v1868
      %v2073 = vpop.f32.mrb[0].mxu0
      %v2074 = vadd.f32 0.0, %v2073
      %v2075 = vpop.f32.mrb[0].mxu0
      %v2076 = vpop.f32.mrb[0].mxu0
      %v2077 = vadd.f32 0.0, %v2076
      %v2078 = vpop.f32.mrb[0].mxu0
      %2079 = vmatprep.mubr.bf16.mxu0 0
      %2080 = vmatmul.mubr.bf16.gmra.mrb[0].mxu0 %v1869
      %v2081 = vpop.f32.mrb[0].mxu0
      %v2082 = vadd.f32 0.0, %v2081
      %v2083 = vpop.f32.mrb[0].mxu0
      %v2084 = vpop.f32.mrb[0].mxu0
      %v2085 = vadd.f32 0.0, %v2084
      %v2086 = vpop.f32.mrb[0].mxu0
      %2087 = vmatprep.mubr.bf16.mxu0 0
      %2088 = vmatmul.mubr.bf16.gmra.mrb[0].mxu0 %v1870
      %v2089 = vpop.f32.mrb[0].mxu0
      %v2090 = vadd.f32 0.0, %v2089
      %v2091 = vpop.f32.mrb[0].mxu0
      %v2092 = vpop.f32.mrb[0].mxu0
      %v2093 = vadd.f32 0.0, %v2092
      %v2094 = vpop.f32.mrb[0].mxu0
      %2095 = vdwg.mxu0
      %v2096 = vadd.f32 %v1709, %v1970
      %v2097 = vadd.f32 %v1710, %v1973
      %v2098 = vadd.f32 %v1711, %v1978
      %v2099 = vadd.f32 %v1712, %v1981
      %v2100 = vadd.f32 %v1713, %v1986
      %v2101 = vadd.f32 %v1714, %v1989
      %v2102 = vadd.f32 %v1715, %v1994
      %v2103 = vadd.f32 %v1716, %v1997
      %v2104 = vadd.f32 %v1717, %v2002
      %v2105 = vadd.f32 %v1718, %v2005
      %v2106 = vadd.f32 %v1719, %v2010
      %v2107 = vadd.f32 %v1720, %v2013
      %v2108 = vadd.f32 %v1721, %v2018
      %v2109 = vadd.f32 %v1722, %v2021
      %v2110 = vadd.f32 %v1723, %v2026
      %v2111 = vadd.f32 %v1724, %v2029
      %v2112 = vadd.f32 %v1725, %v2034
      %v2113 = vadd.f32 %v1726, %v2037
      %v2114 = vadd.f32 %v1727, %v2042
      %v2115 = vadd.f32 %v1728, %v2045
      %v2116 = vadd.f32 %v1729, %v2050
      %v2117 = vadd.f32 %v1730, %v2053
      %v2118 = vadd.f32 %v1731, %v2058
      %v2119 = vadd.f32 %v1732, %v2061
      %v2120 = vadd.f32 %v1733, %v2066
      %v2121 = vadd.f32 %v1734, %v2069
      %v2122 = vadd.f32 %v1735, %v2074
      %v2123 = vadd.f32 %v1736, %v2077
      %v2124 = vadd.f32 %v1737, %v2082
      %v2125 = vadd.f32 %v1738, %v2085
      %v2126 = vadd.f32 %v1739, %v2090
      %v2127 = vadd.f32 %v1740, %v2093
      %v2128 = vld [vmem:[%s1741] sm:$0xf]
      %v2129 = vld [vmem:[%s1741 + $0x4] sm:$0xf]
      %v2130 = vld [vmem:[%s1741 + $0x8] sm:$0x1]
      %v2131 = vld [vmem:[%s1741 + $0xc] sm:$0xf]
      %v2132 = vld [vmem:[%s1741 + $0x10] sm:$0xf]
      %v2133 = vld [vmem:[%s1741 + $0x14] sm:$0x1]
      %v2134 = vld [vmem:[%s1741 + $0x18] sm:$0xf]
      %v2135 = vld [vmem:[%s1741 + $0x1c] sm:$0xf]
      %v2136 = vld [vmem:[%s1741 + $0x20] sm:$0x1]
      %v2137 = vld [vmem:[%s1741 + $0x24] sm:$0xf]
      %v2138 = vld [vmem:[%s1741 + $0x28] sm:$0xf]
      %v2139 = vld [vmem:[%s1741 + $0x2c] sm:$0x1]
      %v2140 = vld [vmem:[%s1741 + $0x30] sm:$0xf]
      %v2141 = vld [vmem:[%s1741 + $0x34] sm:$0xf]
      %v2142 = vld [vmem:[%s1741 + $0x38] sm:$0x1]
      %v2143 = vld [vmem:[%s1741 + $0x3c] sm:$0xf]
      %v2144 = vld [vmem:[%s1741 + $0x40] sm:$0xf]
      %v2145 = vld [vmem:[%s1741 + $0x44] sm:$0x1]
      %v2146 = vld [vmem:[%s1741 + $0x48] sm:$0xf]
      %v2147 = vld [vmem:[%s1741 + $0x4c] sm:$0xf]
      %v2148 = vld [vmem:[%s1741 + $0x50] sm:$0x1]
      %v2149 = vld [vmem:[%s1741 + $0x54] sm:$0xf]
      %v2150 = vld [vmem:[%s1741 + $0x58] sm:$0xf]
      %v2151 = vld [vmem:[%s1741 + $0x5c] sm:$0x1]
      %v2152 = vld [vmem:[%s1741 + $0x60] sm:$0xf]
      %v2153 = vld [vmem:[%s1741 + $0x64] sm:$0xf]
      %v2154 = vld [vmem:[%s1741 + $0x68] sm:$0x1]
      %v2155 = vld [vmem:[%s1741 + $0x6c] sm:$0xf]
      %v2156 = vld [vmem:[%s1741 + $0x70] sm:$0xf]
      %v2157 = vld [vmem:[%s1741 + $0x74] sm:$0x1]
      %v2158 = vld [vmem:[%s1741 + $0x78] sm:$0xf]
      %v2159 = vld [vmem:[%s1741 + $0x7c] sm:$0xf]
      %v2160 = vld [vmem:[%s1741 + $0x80] sm:$0x1]
      %v2161 = vld [vmem:[%s1741 + $0x84] sm:$0xf]
      %v2162 = vld [vmem:[%s1741 + $0x88] sm:$0xf]
      %v2163 = vld [vmem:[%s1741 + $0x8c] sm:$0x1]
      %v2164 = vld [vmem:[%s1741 + $0x90] sm:$0xf]
      %v2165 = vld [vmem:[%s1741 + $0x94] sm:$0xf]
      %v2166 = vld [vmem:[%s1741 + $0x98] sm:$0x1]
      %v2167 = vld [vmem:[%s1741 + $0x9c] sm:$0xf]
      %v2168 = vld [vmem:[%s1741 + $0xa0] sm:$0xf]
      %v2169 = vld [vmem:[%s1741 + $0xa4] sm:$0x1]
      %v2170 = vld [vmem:[%s1741 + $0xa8] sm:$0xf]
      %v2171 = vld [vmem:[%s1741 + $0xac] sm:$0xf]
      %v2172 = vld [vmem:[%s1741 + $0xb0] sm:$0x1]
      %v2173 = vld [vmem:[%s1741 + $0xb4] sm:$0xf]
      %v2174 = vld [vmem:[%s1741 + $0xb8] sm:$0xf]
      %v2175 = vld [vmem:[%s1741 + $0xbc] sm:$0x1]
      %v2177 = vshrl.u32 %v2128, 16
      %v2179 = vrot.slane %v2177, 4
      %v2180 = vshll.u32 %v2128, 16
      %v2182 = vrot.slane %v2180, 5
      %v2183 = vor.u32 %v2179, %v2182
      %v2184 = vrot.slane %v2183, 4
      %v2186 = vshll.u32 %v2129, 16
      %v2188 = vrot.slane %v2186, 5
      %v2189 = vsel %vm276, %v2184, %v2188
      %v2190 = vshrl.u32 %v2129, 16
      %v2192 = vrot.slane %v2190, 4
      %v2193 = vor.u32 %v2192, %v2188
      %v2194 = vrot.slane %v2193, 4
      %v2196 = vshll.u32 %v2130, 16
      %v2198 = vrot.slane %v2196, 5
      %v2199 = vsel %vm276, %v2194, %v2198
      %v2201 = vshrl.u32 %v2131, 16
      %v2203 = vrot.slane %v2201, 4
      %v2204 = vshll.u32 %v2131, 16
      %v2206 = vrot.slane %v2204, 5
      %v2207 = vor.u32 %v2203, %v2206
      %v2208 = vrot.slane %v2207, 4
      %v2210 = vshll.u32 %v2132, 16
      %v2212 = vrot.slane %v2210, 5
      %v2213 = vsel %vm276, %v2208, %v2212
      %v2214 = vshrl.u32 %v2132, 16
      %v2216 = vrot.slane %v2214, 4
      %v2217 = vor.u32 %v2216, %v2212
      %v2218 = vrot.slane %v2217, 4
      %v2220 = vshll.u32 %v2133, 16
      %v2222 = vrot.slane %v2220, 5
      %v2223 = vsel %vm276, %v2218, %v2222
      %v2225 = vshrl.u32 %v2134, 16
      %v2227 = vrot.slane %v2225, 4
      %v2228 = vshll.u32 %v2134, 16
      %v2230 = vrot.slane %v2228, 5
      %v2231 = vor.u32 %v2227, %v2230
      %v2232 = vrot.slane %v2231, 4
      %v2234 = vshll.u32 %v2135, 16
      %v2236 = vrot.slane %v2234, 5
      %v2237 = vsel %vm276, %v2232, %v2236
      %v2238 = vshrl.u32 %v2135, 16
      %v2240 = vrot.slane %v2238, 4
      %v2241 = vor.u32 %v2240, %v2236
      %v2242 = vrot.slane %v2241, 4
      %v2244 = vshll.u32 %v2136, 16
      %v2246 = vrot.slane %v2244, 5
      %v2247 = vsel %vm276, %v2242, %v2246
      %v2249 = vshrl.u32 %v2137, 16
      %v2251 = vrot.slane %v2249, 4
      %v2252 = vshll.u32 %v2137, 16
      %v2254 = vrot.slane %v2252, 5
      %v2255 = vor.u32 %v2251, %v2254
      %v2256 = vrot.slane %v2255, 4
      %v2258 = vshll.u32 %v2138, 16
      %v2260 = vrot.slane %v2258, 5
      %v2261 = vsel %vm276, %v2256, %v2260
      %v2262 = vshrl.u32 %v2138, 16
      %v2264 = vrot.slane %v2262, 4
      %v2265 = vor.u32 %v2264, %v2260
      %v2266 = vrot.slane %v2265, 4
      %v2268 = vshll.u32 %v2139, 16
      %v2270 = vrot.slane %v2268, 5
      %v2271 = vsel %vm276, %v2266, %v2270
      %v2273 = vshrl.u32 %v2140, 16
      %v2275 = vrot.slane %v2273, 4
      %v2276 = vshll.u32 %v2140, 16
      %v2278 = vrot.slane %v2276, 5
      %v2279 = vor.u32 %v2275, %v2278
      %v2280 = vrot.slane %v2279, 4
      %v2282 = vshll.u32 %v2141, 16
      %v2284 = vrot.slane %v2282, 5
      %v2285 = vsel %vm276, %v2280, %v2284
      %v2286 = vshrl.u32 %v2141, 16
      %v2288 = vrot.slane %v2286, 4
      %v2289 = vor.u32 %v2288, %v2284
      %v2290 = vrot.slane %v2289, 4
      %v2292 = vshll.u32 %v2142, 16
      %v2294 = vrot.slane %v2292, 5
      %v2295 = vsel %vm276, %v2290, %v2294
      %v2297 = vshrl.u32 %v2143, 16
      %v2299 = vrot.slane %v2297, 4
      %v2300 = vshll.u32 %v2143, 16
      %v2302 = vrot.slane %v2300, 5
      %v2303 = vor.u32 %v2299, %v2302
      %v2304 = vrot.slane %v2303, 4
      %v2306 = vshll.u32 %v2144, 16
      %v2308 = vrot.slane %v2306, 5
      %v2309 = vsel %vm276, %v2304, %v2308
      %v2310 = vshrl.u32 %v2144, 16
      %v2312 = vrot.slane %v2310, 4
      %v2313 = vor.u32 %v2312, %v2308
      %v2314 = vrot.slane %v2313, 4
      %v2316 = vshll.u32 %v2145, 16
      %v2318 = vrot.slane %v2316, 5
      %v2319 = vsel %vm276, %v2314, %v2318
      %v2321 = vshrl.u32 %v2146, 16
      %v2323 = vrot.slane %v2321, 4
      %v2324 = vshll.u32 %v2146, 16
      %v2326 = vrot.slane %v2324, 5
      %v2327 = vor.u32 %v2323, %v2326
      %v2328 = vrot.slane %v2327, 4
      %v2330 = vshll.u32 %v2147, 16
      %v2332 = vrot.slane %v2330, 5
      %v2333 = vsel %vm276, %v2328, %v2332
      %v2334 = vshrl.u32 %v2147, 16
      %v2336 = vrot.slane %v2334, 4
      %v2337 = vor.u32 %v2336, %v2332
      %v2338 = vrot.slane %v2337, 4
      %v2340 = vshll.u32 %v2148, 16
      %v2342 = vrot.slane %v2340, 5
      %v2343 = vsel %vm276, %v2338, %v2342
      %v2345 = vshrl.u32 %v2149, 16
      %v2347 = vrot.slane %v2345, 4
      %v2348 = vshll.u32 %v2149, 16
      %v2350 = vrot.slane %v2348, 5
      %v2351 = vor.u32 %v2347, %v2350
      %v2352 = vrot.slane %v2351, 4
      %v2354 = vshll.u32 %v2150, 16
      %v2356 = vrot.slane %v2354, 5
      %v2357 = vsel %vm276, %v2352, %v2356
      %v2358 = vshrl.u32 %v2150, 16
      %v2360 = vrot.slane %v2358, 4
      %v2361 = vor.u32 %v2360, %v2356
      %v2362 = vrot.slane %v2361, 4
      %v2364 = vshll.u32 %v2151, 16
      %v2366 = vrot.slane %v2364, 5
      %v2367 = vsel %vm276, %v2362, %v2366
      %v2369 = vshrl.u32 %v2152, 16
      %v2371 = vrot.slane %v2369, 4
      %v2372 = vshll.u32 %v2152, 16
      %v2374 = vrot.slane %v2372, 5
      %v2375 = vor.u32 %v2371, %v2374
      %v2376 = vrot.slane %v2375, 4
      %v2378 = vshll.u32 %v2153, 16
      %v2380 = vrot.slane %v2378, 5
      %v2381 = vsel %vm276, %v2376, %v2380
      %v2382 = vshrl.u32 %v2153, 16
      %v2384 = vrot.slane %v2382, 4
      %v2385 = vor.u32 %v2384, %v2380
      %v2386 = vrot.slane %v2385, 4
      %v2388 = vshll.u32 %v2154, 16
      %v2390 = vrot.slane %v2388, 5
      %v2391 = vsel %vm276, %v2386, %v2390
      %v2393 = vshrl.u32 %v2155, 16
      %v2395 = vrot.slane %v2393, 4
      %v2396 = vshll.u32 %v2155, 16
      %v2398 = vrot.slane %v2396, 5
      %v2399 = vor.u32 %v2395, %v2398
      %v2400 = vrot.slane %v2399, 4
      %v2402 = vshll.u32 %v2156, 16
      %v2404 = vrot.slane %v2402, 5
      %v2405 = vsel %vm276, %v2400, %v2404
      %v2406 = vshrl.u32 %v2156, 16
      %v2408 = vrot.slane %v2406, 4
      %v2409 = vor.u32 %v2408, %v2404
      %v2410 = vrot.slane %v2409, 4
      %v2412 = vshll.u32 %v2157, 16
      %v2414 = vrot.slane %v2412, 5
      %v2415 = vsel %vm276, %v2410, %v2414
      %v2417 = vshrl.u32 %v2158, 16
      %v2419 = vrot.slane %v2417, 4
      %v2420 = vshll.u32 %v2158, 16
      %v2422 = vrot.slane %v2420, 5
      %v2423 = vor.u32 %v2419, %v2422
      %v2424 = vrot.slane %v2423, 4
      %v2426 = vshll.u32 %v2159, 16
      %v2428 = vrot.slane %v2426, 5
      %v2429 = vsel %vm276, %v2424, %v2428
      %v2430 = vshrl.u32 %v2159, 16
      %v2432 = vrot.slane %v2430, 4
      %v2433 = vor.u32 %v2432, %v2428
      %v2434 = vrot.slane %v2433, 4
      %v2436 = vshll.u32 %v2160, 16
      %v2438 = vrot.slane %v2436, 5
      %v2439 = vsel %vm276, %v2434, %v2438
      %v2441 = vshrl.u32 %v2161, 16
      %v2443 = vrot.slane %v2441, 4
      %v2444 = vshll.u32 %v2161, 16
      %v2446 = vrot.slane %v2444, 5
      %v2447 = vor.u32 %v2443, %v2446
      %v2448 = vrot.slane %v2447, 4
      %v2450 = vshll.u32 %v2162, 16
      %v2452 = vrot.slane %v2450, 5
      %v2453 = vsel %vm276, %v2448, %v2452
      %v2454 = vshrl.u32 %v2162, 16
      %v2456 = vrot.slane %v2454, 4
      %v2457 = vor.u32 %v2456, %v2452
      %v2458 = vrot.slane %v2457, 4
      %v2460 = vshll.u32 %v2163, 16
      %v2462 = vrot.slane %v2460, 5
      %v2463 = vsel %vm276, %v2458, %v2462
      %v2465 = vshrl.u32 %v2164, 16
      %v2467 = vrot.slane %v2465, 4
      %v2468 = vshll.u32 %v2164, 16
      %v2470 = vrot.slane %v2468, 5
      %v2471 = vor.u32 %v2467, %v2470
      %v2472 = vrot.slane %v2471, 4
      %v2474 = vshll.u32 %v2165, 16
      %v2476 = vrot.slane %v2474, 5
      %v2477 = vsel %vm276, %v2472, %v2476
      %v2478 = vshrl.u32 %v2165, 16
      %v2480 = vrot.slane %v2478, 4
      %v2481 = vor.u32 %v2480, %v2476
      %v2482 = vrot.slane %v2481, 4
      %v2484 = vshll.u32 %v2166, 16
      %v2486 = vrot.slane %v2484, 5
      %v2487 = vsel %vm276, %v2482, %v2486
      %v2489 = vshrl.u32 %v2167, 16
      %v2491 = vrot.slane %v2489, 4
      %v2492 = vshll.u32 %v2167, 16
      %v2494 = vrot.slane %v2492, 5
      %v2495 = vor.u32 %v2491, %v2494
      %v2496 = vrot.slane %v2495, 4
      %v2498 = vshll.u32 %v2168, 16
      %v2500 = vrot.slane %v2498, 5
      %v2501 = vsel %vm276, %v2496, %v2500
      %v2502 = vshrl.u32 %v2168, 16
      %v2504 = vrot.slane %v2502, 4
      %v2505 = vor.u32 %v2504, %v2500
      %v2506 = vrot.slane %v2505, 4
      %v2508 = vshll.u32 %v2169, 16
      %v2510 = vrot.slane %v2508, 5
      %v2511 = vsel %vm276, %v2506, %v2510
      %v2513 = vshrl.u32 %v2170, 16
      %v2515 = vrot.slane %v2513, 4
      %v2516 = vshll.u32 %v2170, 16
      %v2518 = vrot.slane %v2516, 5
      %v2519 = vor.u32 %v2515, %v2518
      %v2520 = vrot.slane %v2519, 4
      %v2522 = vshll.u32 %v2171, 16
      %v2524 = vrot.slane %v2522, 5
      %v2525 = vsel %vm276, %v2520, %v2524
      %v2526 = vshrl.u32 %v2171, 16
      %v2528 = vrot.slane %v2526, 4
      %v2529 = vor.u32 %v2528, %v2524
      %v2530 = vrot.slane %v2529, 4
      %v2532 = vshll.u32 %v2172, 16
      %v2534 = vrot.slane %v2532, 5
      %v2535 = vsel %vm276, %v2530, %v2534
      %v2537 = vshrl.u32 %v2173, 16
      %v2539 = vrot.slane %v2537, 4
      %v2540 = vshll.u32 %v2173, 16
      %v2542 = vrot.slane %v2540, 5
      %v2543 = vor.u32 %v2539, %v2542
      %v2544 = vrot.slane %v2543, 4
      %v2546 = vshll.u32 %v2174, 16
      %v2548 = vrot.slane %v2546, 5
      %v2549 = vsel %vm276, %v2544, %v2548
      %v2550 = vshrl.u32 %v2174, 16
      %v2552 = vrot.slane %v2550, 4
      %v2553 = vor.u32 %v2552, %v2548
      %v2554 = vrot.slane %v2553, 4
      %v2556 = vshll.u32 %v2175, 16
      %v2558 = vrot.slane %v2556, 5
      %v2559 = vsel %vm276, %v2554, %v2558
      %s2560 = scalar_lea.vmem %s1, 256
      %v2561 = vld [vmem:[%s2560] sm:$0xf]
      %v2562 = vld [vmem:[%s2560 + $0x4] sm:$0xf]
      %v2563 = vld [vmem:[%s2560 + $0x8] sm:$0xf]
      %v2564 = vld [vmem:[%s2560 + $0xc] sm:$0xf]
      %v2565 = vld [vmem:[%s2560 + $0x10] sm:$0xf]
      %v2566 = vld [vmem:[%s2560 + $0x14] sm:$0xf]
      %v2567 = vld [vmem:[%s2560 + $0x18] sm:$0xf]
      %v2568 = vld [vmem:[%s2560 + $0x1c] sm:$0xf]
      %v2569 = vld [vmem:[%s2560 + $0x20] sm:$0xf]
      %v2570 = vld [vmem:[%s2560 + $0x24] sm:$0xf]
      %v2571 = vld [vmem:[%s2560 + $0x28] sm:$0xf]
      %v2572 = vld [vmem:[%s2560 + $0x2c] sm:$0xf]
      %v2573 = vld [vmem:[%s2560 + $0x30] sm:$0xf]
      %v2574 = vld [vmem:[%s2560 + $0x34] sm:$0xf]
      %v2575 = vld [vmem:[%s2560 + $0x38] sm:$0xf]
      %v2576 = vld [vmem:[%s2560 + $0x3c] sm:$0xf]
      %v2577 = vunpack.c.l.b16 %v2189
      %v2578 = vunpack.c.l.b16 %v2199
      %v2579 = vunpack.c.l.b16 %v2213
      %v2580 = vunpack.c.l.b16 %v2223
      %v2581 = vunpack.c.l.b16 %v2237
      %v2582 = vunpack.c.l.b16 %v2247
      %v2583 = vunpack.c.l.b16 %v2261
      %v2584 = vunpack.c.l.b16 %v2271
      %v2585 = vunpack.c.l.b16 %v2285
      %v2586 = vunpack.c.l.b16 %v2295
      %v2587 = vunpack.c.l.b16 %v2309
      %v2588 = vunpack.c.l.b16 %v2319
      %v2589 = vunpack.c.l.b16 %v2333
      %v2590 = vunpack.c.l.b16 %v2343
      %v2591 = vunpack.c.l.b16 %v2357
      %v2592 = vunpack.c.l.b16 %v2367
      %v2593 = vunpack.c.l.b16 %v2381
      %v2594 = vunpack.c.l.b16 %v2391
      %v2595 = vunpack.c.l.b16 %v2405
      %v2596 = vunpack.c.l.b16 %v2415
      %v2597 = vunpack.c.l.b16 %v2429
      %v2598 = vunpack.c.l.b16 %v2439
      %v2599 = vunpack.c.l.b16 %v2453
      %v2600 = vunpack.c.l.b16 %v2463
      %v2601 = vunpack.c.l.b16 %v2477
      %v2602 = vunpack.c.l.b16 %v2487
      %v2603 = vunpack.c.l.b16 %v2501
      %v2604 = vunpack.c.l.b16 %v2511
      %v2605 = vunpack.c.l.b16 %v2525
      %v2606 = vunpack.c.l.b16 %v2535
      %v2607 = vunpack.c.l.b16 %v2549
      %v2608 = vunpack.c.l.b16 %v2559
      %v2609 = vpack.c.b16 %v2578, %v2577
      %v2610 = vpack.c.b16 %v2580, %v2579
      %v2611 = vpack.c.b16 %v2582, %v2581
      %v2612 = vpack.c.b16 %v2584, %v2583
      %v2613 = vpack.c.b16 %v2586, %v2585
      %v2614 = vpack.c.b16 %v2588, %v2587
      %v2615 = vpack.c.b16 %v2590, %v2589
      %v2616 = vpack.c.b16 %v2592, %v2591
      %v2617 = vpack.c.b16 %v2594, %v2593
      %v2618 = vpack.c.b16 %v2596, %v2595
      %v2619 = vpack.c.b16 %v2598, %v2597
      %v2620 = vpack.c.b16 %v2600, %v2599
      %v2621 = vpack.c.b16 %v2602, %v2601
      %v2622 = vpack.c.b16 %v2604, %v2603
      %v2623 = vpack.c.b16 %v2606, %v2605
      %v2624 = vpack.c.b16 %v2608, %v2607
      %v2657 = vunpack.c.l.b16 %v2561
      %v2658 = vunpack.c.l.b16 %v2562
      %v2659 = vunpack.c.l.b16 %v2563
      %v2660 = vunpack.c.l.b16 %v2564
      %v2661 = vunpack.c.l.b16 %v2565
      %v2662 = vunpack.c.l.b16 %v2566
      %v2663 = vunpack.c.l.b16 %v2567
      %v2664 = vunpack.c.l.b16 %v2568
      %v2665 = vunpack.c.l.b16 %v2569
      %v2666 = vunpack.c.l.b16 %v2570
      %v2667 = vunpack.c.l.b16 %v2571
      %v2668 = vunpack.c.l.b16 %v2572
      %v2669 = vunpack.c.l.b16 %v2573
      %v2670 = vunpack.c.l.b16 %v2574
      %v2671 = vunpack.c.l.b16 %v2575
      %v2672 = vunpack.c.l.b16 %v2576
      %v2673 = vpack.c.b16 %v2658, %v2657
      %v2674 = vpack.c.b16 %v2660, %v2659
      %v2675 = vpack.c.b16 %v2662, %v2661
      %v2676 = vpack.c.b16 %v2664, %v2663
      %v2677 = vpack.c.b16 %v2666, %v2665
      %v2678 = vpack.c.b16 %v2668, %v2667
      %v2679 = vpack.c.b16 %v2670, %v2669
      %v2680 = vpack.c.b16 %v2672, %v2671
      %2689 = vmatprep.subr.bf16.mxu0 0
      %2690 = vmatpush1.bf16.msra.mxu0 %v2673
      %2691 = vmatprep.subr.bf16.mxu0 0
      %2692 = vmatpush1.bf16.msra.mxu0 %v2674
      %2693 = vmatprep.subr.bf16.mxu0 0
      %2694 = vmatpush1.bf16.msra.mxu0 %v2675
      %2695 = vmatprep.subr.bf16.mxu0 0
      %2696 = vmatpush1.bf16.msra.mxu0 %v2676
      %2697 = vmatprep.subr.bf16.mxu0 0
      %2698 = vmatpush1.bf16.msra.mxu0 %v2677
      %2699 = vmatprep.subr.bf16.mxu0 0
      %2700 = vmatpush1.bf16.msra.mxu0 %v2678
      %2701 = vmatprep.subr.bf16.mxu0 0
      %2702 = vmatpush1.bf16.msra.mxu0 %v2679
      %2703 = vmatprep.subr.bf16.mxu0 0
      %2704 = vmatpush1.bf16.msra.mxu0 %v2680
      %2705 = vmatprep.subr.bf16.mxu0 0
      %2706 = vmatpush1.bf16.msra.mxu0 0
      %2707 = vmatprep.subr.bf16.mxu0 0
      %2708 = vmatpush1.bf16.msra.mxu0 0
      %2709 = vmatprep.subr.bf16.mxu0 0
      %2710 = vmatpush1.bf16.msra.mxu0 0
      %2711 = vmatprep.subr.bf16.mxu0 0
      %2712 = vmatpush1.bf16.msra.mxu0 0
      %2713 = vmatprep.subr.bf16.mxu0 0
      %2714 = vmatpush1.bf16.msra.mxu0 0
      %2715 = vmatprep.subr.bf16.mxu0 0
      %2716 = vmatpush1.bf16.msra.mxu0 0
      %2717 = vmatprep.subr.bf16.mxu0 0
      %2718 = vmatpush1.bf16.msra.mxu0 0
      %2719 = vmatprep.subr.bf16.mxu0 0
      %2720 = vmatpush1.bf16.msra.mxu0 0
      %2721 = vmatprep.mubr.bf16.mxu0 0
      %2722 = vmatmul.mubr.bf16.gmra.mrb[0].mxu0 %v2609
      %v2723 = vpop.f32.mrb[0].mxu0
      %v2724 = vadd.f32 0.0, %v2723
      %v2725 = vpop.f32.mrb[0].mxu0
      %v2726 = vpop.f32.mrb[0].mxu0
      %v2727 = vadd.f32 0.0, %v2726
      %v2728 = vpop.f32.mrb[0].mxu0
      %2729 = vmatprep.mubr.bf16.mxu0 0
      %2730 = vmatmul.mubr.bf16.gmra.mrb[0].mxu0 %v2610
      %v2731 = vpop.f32.mrb[0].mxu0
      %v2732 = vadd.f32 0.0, %v2731
      %v2733 = vpop.f32.mrb[0].mxu0
      %v2734 = vpop.f32.mrb[0].mxu0
      %v2735 = vadd.f32 0.0, %v2734
      %v2736 = vpop.f32.mrb[0].mxu0
      %2737 = vmatprep.mubr.bf16.mxu0 0
      %2738 = vmatmul.mubr.bf16.gmra.mrb[0].mxu0 %v2611
      %v2739 = vpop.f32.mrb[0].mxu0
      %v2740 = vadd.f32 0.0, %v2739
      %v2741 = vpop.f32.mrb[0].mxu0
      %v2742 = vpop.f32.mrb[0].mxu0
      %v2743 = vadd.f32 0.0, %v2742
      %v2744 = vpop.f32.mrb[0].mxu0
      %2745 = vmatprep.mubr.bf16.mxu0 0
      %2746 = vmatmul.mubr.bf16.gmra.mrb[0].mxu0 %v2612
      %v2747 = vpop.f32.mrb[0].mxu0
      %v2748 = vadd.f32 0.0, %v2747
      %v2749 = vpop.f32.mrb[0].mxu0
      %v2750 = vpop.f32.mrb[0].mxu0
      %v2751 = vadd.f32 0.0, %v2750
      %v2752 = vpop.f32.mrb[0].mxu0
      %2753 = vmatprep.mubr.bf16.mxu0 0
      %2754 = vmatmul.mubr.bf16.gmra.mrb[0].mxu0 %v2613
      %v2755 = vpop.f32.mrb[0].mxu0
      %v2756 = vadd.f32 0.0, %v2755
      %v2757 = vpop.f32.mrb[0].mxu0
      %v2758 = vpop.f32.mrb[0].mxu0
      %v2759 = vadd.f32 0.0, %v2758
      %v2760 = vpop.f32.mrb[0].mxu0
      %2761 = vmatprep.mubr.bf16.mxu0 0
      %2762 = vmatmul.mubr.bf16.gmra.mrb[0].mxu0 %v2614
      %v2763 = vpop.f32.mrb[0].mxu0
      %v2764 = vadd.f32 0.0, %v2763
      %v2765 = vpop.f32.mrb[0].mxu0
      %v2766 = vpop.f32.mrb[0].mxu0
      %v2767 = vadd.f32 0.0, %v2766
      %v2768 = vpop.f32.mrb[0].mxu0
      %2769 = vmatprep.mubr.bf16.mxu0 0
      %2770 = vmatmul.mubr.bf16.gmra.mrb[0].mxu0 %v2615
      %v2771 = vpop.f32.mrb[0].mxu0
      %v2772 = vadd.f32 0.0, %v2771
      %v2773 = vpop.f32.mrb[0].mxu0
      %v2774 = vpop.f32.mrb[0].mxu0
      %v2775 = vadd.f32 0.0, %v2774
      %v2776 = vpop.f32.mrb[0].mxu0
      %2777 = vmatprep.mubr.bf16.mxu0 0
      %2778 = vmatmul.mubr.bf16.gmra.mrb[0].mxu0 %v2616
      %v2779 = vpop.f32.mrb[0].mxu0
      %v2780 = vadd.f32 0.0, %v2779
      %v2781 = vpop.f32.mrb[0].mxu0
      %v2782 = vpop.f32.mrb[0].mxu0
      %v2783 = vadd.f32 0.0, %v2782
      %v2784 = vpop.f32.mrb[0].mxu0
      %2785 = vmatprep.mubr.bf16.mxu0 0
      %2786 = vmatmul.mubr.bf16.gmra.mrb[0].mxu0 %v2617
      %v2787 = vpop.f32.mrb[0].mxu0
      %v2788 = vadd.f32 0.0, %v2787
      %v2789 = vpop.f32.mrb[0].mxu0
      %v2790 = vpop.f32.mrb[0].mxu0
      %v2791 = vadd.f32 0.0, %v2790
      %v2792 = vpop.f32.mrb[0].mxu0
      %2793 = vmatprep.mubr.bf16.mxu0 0
      %2794 = vmatmul.mubr.bf16.gmra.mrb[0].mxu0 %v2618
      %v2795 = vpop.f32.mrb[0].mxu0
      %v2796 = vadd.f32 0.0, %v2795
      %v2797 = vpop.f32.mrb[0].mxu0
      %v2798 = vpop.f32.mrb[0].mxu0
      %v2799 = vadd.f32 0.0, %v2798
      %v2800 = vpop.f32.mrb[0].mxu0
      %2801 = vmatprep.mubr.bf16.mxu0 0
      %2802 = vmatmul.mubr.bf16.gmra.mrb[0].mxu0 %v2619
      %v2803 = vpop.f32.mrb[0].mxu0
      %v2804 = vadd.f32 0.0, %v2803
      %v2805 = vpop.f32.mrb[0].mxu0
      %v2806 = vpop.f32.mrb[0].mxu0
      %v2807 = vadd.f32 0.0, %v2806
      %v2808 = vpop.f32.mrb[0].mxu0
      %2809 = vmatprep.mubr.bf16.mxu0 0
      %2810 = vmatmul.mubr.bf16.gmra.mrb[0].mxu0 %v2620
      %v2811 = vpop.f32.mrb[0].mxu0
      %v2812 = vadd.f32 0.0, %v2811
      %v2813 = vpop.f32.mrb[0].mxu0
      %v2814 = vpop.f32.mrb[0].mxu0
      %v2815 = vadd.f32 0.0, %v2814
      %v2816 = vpop.f32.mrb[0].mxu0
      %2817 = vmatprep.mubr.bf16.mxu0 0
      %2818 = vmatmul.mubr.bf16.gmra.mrb[0].mxu0 %v2621
      %v2819 = vpop.f32.mrb[0].mxu0
      %v2820 = vadd.f32 0.0, %v2819
      %v2821 = vpop.f32.mrb[0].mxu0
      %v2822 = vpop.f32.mrb[0].mxu0
      %v2823 = vadd.f32 0.0, %v2822
      %v2824 = vpop.f32.mrb[0].mxu0
      %2825 = vmatprep.mubr.bf16.mxu0 0
      %2826 = vmatmul.mubr.bf16.gmra.mrb[0].mxu0 %v2622
      %v2827 = vpop.f32.mrb[0].mxu0
      %v2828 = vadd.f32 0.0, %v2827
      %v2829 = vpop.f32.mrb[0].mxu0
      %v2830 = vpop.f32.mrb[0].mxu0
      %v2831 = vadd.f32 0.0, %v2830
      %v2832 = vpop.f32.mrb[0].mxu0
      %2833 = vmatprep.mubr.bf16.mxu0 0
      %2834 = vmatmul.mubr.bf16.gmra.mrb[0].mxu0 %v2623
      %v2835 = vpop.f32.mrb[0].mxu0
      %v2836 = vadd.f32 0.0, %v2835
      %v2837 = vpop.f32.mrb[0].mxu0
      %v2838 = vpop.f32.mrb[0].mxu0
      %v2839 = vadd.f32 0.0, %v2838
      %v2840 = vpop.f32.mrb[0].mxu0
      %2841 = vmatprep.mubr.bf16.mxu0 0
      %2842 = vmatmul.mubr.bf16.gmra.mrb[0].mxu0 %v2624
      %v2843 = vpop.f32.mrb[0].mxu0
      %v2844 = vadd.f32 0.0, %v2843
      %v2845 = vpop.f32.mrb[0].mxu0
      %v2846 = vpop.f32.mrb[0].mxu0
      %v2847 = vadd.f32 0.0, %v2846
      %v2848 = vpop.f32.mrb[0].mxu0
      %2849 = vdwg.mxu0
      %v2850 = vadd.f32 %v2096, %v2724
      %v2851 = vadd.f32 %v2097, %v2727
      %v2852 = vadd.f32 %v2098, %v2732
      %v2853 = vadd.f32 %v2099, %v2735
      %v2854 = vadd.f32 %v2100, %v2740
      %v2855 = vadd.f32 %v2101, %v2743
      %v2856 = vadd.f32 %v2102, %v2748
      %v2857 = vadd.f32 %v2103, %v2751
      %v2858 = vadd.f32 %v2104, %v2756
      %v2859 = vadd.f32 %v2105, %v2759
      %v2860 = vadd.f32 %v2106, %v2764
      %v2861 = vadd.f32 %v2107, %v2767
      %v2862 = vadd.f32 %v2108, %v2772
      %v2863 = vadd.f32 %v2109, %v2775
      %v2864 = vadd.f32 %v2110, %v2780
      %v2865 = vadd.f32 %v2111, %v2783
      %v2866 = vadd.f32 %v2112, %v2788
      %v2867 = vadd.f32 %v2113, %v2791
      %v2868 = vadd.f32 %v2114, %v2796
      %v2869 = vadd.f32 %v2115, %v2799
      %v2870 = vadd.f32 %v2116, %v2804
      %v2871 = vadd.f32 %v2117, %v2807
      %v2872 = vadd.f32 %v2118, %v2812
      %v2873 = vadd.f32 %v2119, %v2815
      %v2874 = vadd.f32 %v2120, %v2820
      %v2875 = vadd.f32 %v2121, %v2823
      %v2876 = vadd.f32 %v2122, %v2828
      %v2877 = vadd.f32 %v2123, %v2831
      %v2878 = vadd.f32 %v2124, %v2836
      %v2879 = vadd.f32 %v2125, %v2839
      %v2880 = vadd.f32 %v2126, %v2844
      %v2881 = vadd.f32 %v2127, %v2847
      %v2882 = vld [vmem:[%s1741] sm:$0xe]
      %v2883 = vld [vmem:[%s1741 + $0xc] sm:$0xe]
      %v2884 = vld [vmem:[%s1741 + $0x18] sm:$0xe]
      %v2885 = vld [vmem:[%s1741 + $0x24] sm:$0xe]
      %v2886 = vld [vmem:[%s1741 + $0x30] sm:$0xe]
      %v2887 = vld [vmem:[%s1741 + $0x3c] sm:$0xe]
      %v2888 = vld [vmem:[%s1741 + $0x48] sm:$0xe]
      %v2889 = vld [vmem:[%s1741 + $0x54] sm:$0xe]
      %v2890 = vld [vmem:[%s1741 + $0x60] sm:$0xe]
      %v2891 = vld [vmem:[%s1741 + $0x6c] sm:$0xe]
      %v2892 = vld [vmem:[%s1741 + $0x78] sm:$0xe]
      %v2893 = vld [vmem:[%s1741 + $0x84] sm:$0xe]
      %v2894 = vld [vmem:[%s1741 + $0x90] sm:$0xe]
      %v2895 = vld [vmem:[%s1741 + $0x9c] sm:$0xe]
      %v2896 = vld [vmem:[%s1741 + $0xa8] sm:$0xe]
      %v2897 = vld [vmem:[%s1741 + $0xb4] sm:$0xe]
      %v2946 = vrot.slane %v2882, 5
      %v2947 = vrot.slane %v2946, 4
      %v2948 = vrot.slane %v2129, 5
      %v2949 = vsel %vm1306, %v2947, %v2948
      %v2950 = vrot.slane %v2948, 4
      %v2951 = vrot.slane %v2130, 5
      %v2952 = vsel %vm1306, %v2950, %v2951
      %v2953 = vrot.slane %v2883, 5
      %v2954 = vrot.slane %v2953, 4
      %v2955 = vrot.slane %v2132, 5
      %v2956 = vsel %vm1306, %v2954, %v2955
      %v2957 = vrot.slane %v2955, 4
      %v2958 = vrot.slane %v2133, 5
      %v2959 = vsel %vm1306, %v2957, %v2958
      %v2960 = vrot.slane %v2884, 5
      %v2961 = vrot.slane %v2960, 4
      %v2962 = vrot.slane %v2135, 5
      %v2963 = vsel %vm1306, %v2961, %v2962
      %v2964 = vrot.slane %v2962, 4
      %v2965 = vrot.slane %v2136, 5
      %v2966 = vsel %vm1306, %v2964, %v2965
      %v2967 = vrot.slane %v2885, 5
      %v2968 = vrot.slane %v2967, 4
      %v2969 = vrot.slane %v2138, 5
      %v2970 = vsel %vm1306, %v2968, %v2969
      %v2971 = vrot.slane %v2969, 4
      %v2972 = vrot.slane %v2139, 5
      %v2973 = vsel %vm1306, %v2971, %v2972
      %v2974 = vrot.slane %v2886, 5
      %v2975 = vrot.slane %v2974, 4
      %v2976 = vrot.slane %v2141, 5
      %v2977 = vsel %vm1306, %v2975, %v2976
      %v2978 = vrot.slane %v2976, 4
      %v2979 = vrot.slane %v2142, 5
      %v2980 = vsel %vm1306, %v2978, %v2979
      %v2981 = vrot.slane %v2887, 5
      %v2982 = vrot.slane %v2981, 4
      %v2983 = vrot.slane %v2144, 5
      %v2984 = vsel %vm1306, %v2982, %v2983
      %v2985 = vrot.slane %v2983, 4
      %v2986 = vrot.slane %v2145, 5
      %v2987 = vsel %vm1306, %v2985, %v2986
      %v2988 = vrot.slane %v2888, 5
      %v2989 = vrot.slane %v2988, 4
      %v2990 = vrot.slane %v2147, 5
      %v2991 = vsel %vm1306, %v2989, %v2990
      %v2992 = vrot.slane %v2990, 4
      %v2993 = vrot.slane %v2148, 5
      %v2994 = vsel %vm1306, %v2992, %v2993
      %v2995 = vrot.slane %v2889, 5
      %v2996 = vrot.slane %v2995, 4
      %v2997 = vrot.slane %v2150, 5
      %v2998 = vsel %vm1306, %v2996, %v2997
      %v2999 = vrot.slane %v2997, 4
      %v3000 = vrot.slane %v2151, 5
      %v3001 = vsel %vm1306, %v2999, %v3000
      %v3002 = vrot.slane %v2890, 5
      %v3003 = vrot.slane %v3002, 4
      %v3004 = vrot.slane %v2153, 5
      %v3005 = vsel %vm1306, %v3003, %v3004
      %v3006 = vrot.slane %v3004, 4
      %v3007 = vrot.slane %v2154, 5
      %v3008 = vsel %vm1306, %v3006, %v3007
      %v3009 = vrot.slane %v2891, 5
      %v3010 = vrot.slane %v3009, 4
      %v3011 = vrot.slane %v2156, 5
      %v3012 = vsel %vm1306, %v3010, %v3011
      %v3013 = vrot.slane %v3011, 4
      %v3014 = vrot.slane %v2157, 5
      %v3015 = vsel %vm1306, %v3013, %v3014
      %v3016 = vrot.slane %v2892, 5
      %v3017 = vrot.slane %v3016, 4
      %v3018 = vrot.slane %v2159, 5
      %v3019 = vsel %vm1306, %v3017, %v3018
      %v3020 = vrot.slane %v3018, 4
      %v3021 = vrot.slane %v2160, 5
      %v3022 = vsel %vm1306, %v3020, %v3021
      %v3023 = vrot.slane %v2893, 5
      %v3024 = vrot.slane %v3023, 4
      %v3025 = vrot.slane %v2162, 5
      %v3026 = vsel %vm1306, %v3024, %v3025
      %v3027 = vrot.slane %v3025, 4
      %v3028 = vrot.slane %v2163, 5
      %v3029 = vsel %vm1306, %v3027, %v3028
      %v3030 = vrot.slane %v2894, 5
      %v3031 = vrot.slane %v3030, 4
      %v3032 = vrot.slane %v2165, 5
      %v3033 = vsel %vm1306, %v3031, %v3032
      %v3034 = vrot.slane %v3032, 4
      %v3035 = vrot.slane %v2166, 5
      %v3036 = vsel %vm1306, %v3034, %v3035
      %v3037 = vrot.slane %v2895, 5
      %v3038 = vrot.slane %v3037, 4
      %v3039 = vrot.slane %v2168, 5
      %v3040 = vsel %vm1306, %v3038, %v3039
      %v3041 = vrot.slane %v3039, 4
      %v3042 = vrot.slane %v2169, 5
      %v3043 = vsel %vm1306, %v3041, %v3042
      %v3044 = vrot.slane %v2896, 5
      %v3045 = vrot.slane %v3044, 4
      %v3046 = vrot.slane %v2171, 5
      %v3047 = vsel %vm1306, %v3045, %v3046
      %v3048 = vrot.slane %v3046, 4
      %v3049 = vrot.slane %v2172, 5
      %v3050 = vsel %vm1306, %v3048, %v3049
      %v3051 = vrot.slane %v2897, 5
      %v3052 = vrot.slane %v3051, 4
      %v3053 = vrot.slane %v2174, 5
      %v3054 = vsel %vm1306, %v3052, %v3053
      %v3055 = vrot.slane %v3053, 4
      %v3056 = vrot.slane %v2175, 5
      %v3057 = vsel %vm1306, %v3055, %v3056
      %s3058 = scalar_lea.vmem %s1, 320
      %v3059 = vld [vmem:[%s3058] sm:$0xf]
      %v3060 = vld [vmem:[%s3058 + $0x4] sm:$0xf]
      %v3061 = vld [vmem:[%s3058 + $0x8] sm:$0xf]
      %v3062 = vld [vmem:[%s3058 + $0xc] sm:$0xf]
      %v3063 = vld [vmem:[%s3058 + $0x10] sm:$0xf]
      %v3064 = vld [vmem:[%s3058 + $0x14] sm:$0xf]
      %v3065 = vld [vmem:[%s3058 + $0x18] sm:$0xf]
      %v3066 = vld [vmem:[%s3058 + $0x1c] sm:$0xf]
      %v3067 = vld [vmem:[%s3058 + $0x20] sm:$0xf]
      %v3068 = vld [vmem:[%s3058 + $0x24] sm:$0xf]
      %v3069 = vld [vmem:[%s3058 + $0x28] sm:$0xf]
      %v3070 = vld [vmem:[%s3058 + $0x2c] sm:$0xf]
      %v3071 = vld [vmem:[%s3058 + $0x30] sm:$0xf]
      %v3072 = vld [vmem:[%s3058 + $0x34] sm:$0xf]
      %v3073 = vld [vmem:[%s3058 + $0x38] sm:$0xf]
      %v3074 = vld [vmem:[%s3058 + $0x3c] sm:$0xf]
      %v3075 = vunpack.c.l.b16 %v2949
      %v3076 = vunpack.c.l.b16 %v2952
      %v3077 = vunpack.c.l.b16 %v2956
      %v3078 = vunpack.c.l.b16 %v2959
      %v3079 = vunpack.c.l.b16 %v2963
      %v3080 = vunpack.c.l.b16 %v2966
      %v3081 = vunpack.c.l.b16 %v2970
      %v3082 = vunpack.c.l.b16 %v2973
      %v3083 = vunpack.c.l.b16 %v2977
      %v3084 = vunpack.c.l.b16 %v2980
      %v3085 = vunpack.c.l.b16 %v2984
      %v3086 = vunpack.c.l.b16 %v2987
      %v3087 = vunpack.c.l.b16 %v2991
      %v3088 = vunpack.c.l.b16 %v2994
      %v3089 = vunpack.c.l.b16 %v2998
      %v3090 = vunpack.c.l.b16 %v3001
      %v3091 = vunpack.c.l.b16 %v3005
      %v3092 = vunpack.c.l.b16 %v3008
      %v3093 = vunpack.c.l.b16 %v3012
      %v3094 = vunpack.c.l.b16 %v3015
      %v3095 = vunpack.c.l.b16 %v3019
      %v3096 = vunpack.c.l.b16 %v3022
      %v3097 = vunpack.c.l.b16 %v3026
      %v3098 = vunpack.c.l.b16 %v3029
      %v3099 = vunpack.c.l.b16 %v3033
      %v3100 = vunpack.c.l.b16 %v3036
      %v3101 = vunpack.c.l.b16 %v3040
      %v3102 = vunpack.c.l.b16 %v3043
      %v3103 = vunpack.c.l.b16 %v3047
      %v3104 = vunpack.c.l.b16 %v3050
      %v3105 = vunpack.c.l.b16 %v3054
      %v3106 = vunpack.c.l.b16 %v3057
      %v3107 = vpack.c.b16 %v3076, %v3075
      %v3108 = vpack.c.b16 %v3078, %v3077
      %v3109 = vpack.c.b16 %v3080, %v3079
      %v3110 = vpack.c.b16 %v3082, %v3081
      %v3111 = vpack.c.b16 %v3084, %v3083
      %v3112 = vpack.c.b16 %v3086, %v3085
      %v3113 = vpack.c.b16 %v3088, %v3087
      %v3114 = vpack.c.b16 %v3090, %v3089
      %v3115 = vpack.c.b16 %v3092, %v3091
      %v3116 = vpack.c.b16 %v3094, %v3093
      %v3117 = vpack.c.b16 %v3096, %v3095
      %v3118 = vpack.c.b16 %v3098, %v3097
      %v3119 = vpack.c.b16 %v3100, %v3099
      %v3120 = vpack.c.b16 %v3102, %v3101
      %v3121 = vpack.c.b16 %v3104, %v3103
      %v3122 = vpack.c.b16 %v3106, %v3105
      %v3155 = vunpack.c.l.b16 %v3059
      %v3156 = vunpack.c.l.b16 %v3060
      %v3157 = vunpack.c.l.b16 %v3061
      %v3158 = vunpack.c.l.b16 %v3062
      %v3159 = vunpack.c.l.b16 %v3063
      %v3160 = vunpack.c.l.b16 %v3064
      %v3161 = vunpack.c.l.b16 %v3065
      %v3162 = vunpack.c.l.b16 %v3066
      %v3163 = vunpack.c.l.b16 %v3067
      %v3164 = vunpack.c.l.b16 %v3068
      %v3165 = vunpack.c.l.b16 %v3069
      %v3166 = vunpack.c.l.b16 %v3070
      %v3167 = vunpack.c.l.b16 %v3071
      %v3168 = vunpack.c.l.b16 %v3072
      %v3169 = vunpack.c.l.b16 %v3073
      %v3170 = vunpack.c.l.b16 %v3074
      %v3171 = vpack.c.b16 %v3156, %v3155
      %v3172 = vpack.c.b16 %v3158, %v3157
      %v3173 = vpack.c.b16 %v3160, %v3159
      %v3174 = vpack.c.b16 %v3162, %v3161
      %v3175 = vpack.c.b16 %v3164, %v3163
      %v3176 = vpack.c.b16 %v3166, %v3165
      %v3177 = vpack.c.b16 %v3168, %v3167
      %v3178 = vpack.c.b16 %v3170, %v3169
      %3187 = vmatprep.subr.bf16.mxu0 0
      %3188 = vmatpush1.bf16.msra.mxu0 %v3171
      %3189 = vmatprep.subr.bf16.mxu0 0
      %3190 = vmatpush1.bf16.msra.mxu0 %v3172
      %3191 = vmatprep.subr.bf16.mxu0 0
      %3192 = vmatpush1.bf16.msra.mxu0 %v3173
      %3193 = vmatprep.subr.bf16.mxu0 0
      %3194 = vmatpush1.bf16.msra.mxu0 %v3174
      %3195 = vmatprep.subr.bf16.mxu0 0
      %3196 = vmatpush1.bf16.msra.mxu0 %v3175
      %3197 = vmatprep.subr.bf16.mxu0 0
      %3198 = vmatpush1.bf16.msra.mxu0 %v3176
      %3199 = vmatprep.subr.bf16.mxu0 0
      %3200 = vmatpush1.bf16.msra.mxu0 %v3177
      %3201 = vmatprep.subr.bf16.mxu0 0
      %3202 = vmatpush1.bf16.msra.mxu0 %v3178
      %3203 = vmatprep.subr.bf16.mxu0 0
      %3204 = vmatpush1.bf16.msra.mxu0 0
      %3205 = vmatprep.subr.bf16.mxu0 0
      %3206 = vmatpush1.bf16.msra.mxu0 0
      %3207 = vmatprep.subr.bf16.mxu0 0
      %3208 = vmatpush1.bf16.msra.mxu0 0
      %3209 = vmatprep.subr.bf16.mxu0 0
      %3210 = vmatpush1.bf16.msra.mxu0 0
      %3211 = vmatprep.subr.bf16.mxu0 0
      %3212 = vmatpush1.bf16.msra.mxu0 0
      %3213 = vmatprep.subr.bf16.mxu0 0
      %3214 = vmatpush1.bf16.msra.mxu0 0
      %3215 = vmatprep.subr.bf16.mxu0 0
      %3216 = vmatpush1.bf16.msra.mxu0 0
      %3217 = vmatprep.subr.bf16.mxu0 0
      %3218 = vmatpush1.bf16.msra.mxu0 0
      %3219 = vmatprep.mubr.bf16.mxu0 0
      %3220 = vmatmul.mubr.bf16.gmra.mrb[0].mxu0 %v3107
      %v3221 = vpop.f32.mrb[0].mxu0
      %v3222 = vadd.f32 0.0, %v3221
      %v3223 = vpop.f32.mrb[0].mxu0
      %v3224 = vpop.f32.mrb[0].mxu0
      %v3225 = vadd.f32 0.0, %v3224
      %v3226 = vpop.f32.mrb[0].mxu0
      %3227 = vmatprep.mubr.bf16.mxu0 0
      %3228 = vmatmul.mubr.bf16.gmra.mrb[0].mxu0 %v3108
      %v3229 = vpop.f32.mrb[0].mxu0
      %v3230 = vadd.f32 0.0, %v3229
      %v3231 = vpop.f32.mrb[0].mxu0
      %v3232 = vpop.f32.mrb[0].mxu0
      %v3233 = vadd.f32 0.0, %v3232
      %v3234 = vpop.f32.mrb[0].mxu0
      %3235 = vmatprep.mubr.bf16.mxu0 0
      %3236 = vmatmul.mubr.bf16.gmra.mrb[0].mxu0 %v3109
      %v3237 = vpop.f32.mrb[0].mxu0
      %v3238 = vadd.f32 0.0, %v3237
      %v3239 = vpop.f32.mrb[0].mxu0
      %v3240 = vpop.f32.mrb[0].mxu0
      %v3241 = vadd.f32 0.0, %v3240
      %v3242 = vpop.f32.mrb[0].mxu0
      %3243 = vmatprep.mubr.bf16.mxu0 0
      %3244 = vmatmul.mubr.bf16.gmra.mrb[0].mxu0 %v3110
      %v3245 = vpop.f32.mrb[0].mxu0
      %v3246 = vadd.f32 0.0, %v3245
      %v3247 = vpop.f32.mrb[0].mxu0
      %v3248 = vpop.f32.mrb[0].mxu0
      %v3249 = vadd.f32 0.0, %v3248
      %v3250 = vpop.f32.mrb[0].mxu0
      %3251 = vmatprep.mubr.bf16.mxu0 0
      %3252 = vmatmul.mubr.bf16.gmra.mrb[0].mxu0 %v3111
      %v3253 = vpop.f32.mrb[0].mxu0
      %v3254 = vadd.f32 0.0, %v3253
      %v3255 = vpop.f32.mrb[0].mxu0
      %v3256 = vpop.f32.mrb[0].mxu0
      %v3257 = vadd.f32 0.0, %v3256
      %v3258 = vpop.f32.mrb[0].mxu0
      %3259 = vmatprep.mubr.bf16.mxu0 0
      %3260 = vmatmul.mubr.bf16.gmra.mrb[0].mxu0 %v3112
      %v3261 = vpop.f32.mrb[0].mxu0
      %v3262 = vadd.f32 0.0, %v3261
      %v3263 = vpop.f32.mrb[0].mxu0
      %v3264 = vpop.f32.mrb[0].mxu0
      %v3265 = vadd.f32 0.0, %v3264
      %v3266 = vpop.f32.mrb[0].mxu0
      %3267 = vmatprep.mubr.bf16.mxu0 0
      %3268 = vmatmul.mubr.bf16.gmra.mrb[0].mxu0 %v3113
      %v3269 = vpop.f32.mrb[0].mxu0
      %v3270 = vadd.f32 0.0, %v3269
      %v3271 = vpop.f32.mrb[0].mxu0
      %v3272 = vpop.f32.mrb[0].mxu0
      %v3273 = vadd.f32 0.0, %v3272
      %v3274 = vpop.f32.mrb[0].mxu0
      %3275 = vmatprep.mubr.bf16.mxu0 0
      %3276 = vmatmul.mubr.bf16.gmra.mrb[0].mxu0 %v3114
      %v3277 = vpop.f32.mrb[0].mxu0
      %v3278 = vadd.f32 0.0, %v3277
      %v3279 = vpop.f32.mrb[0].mxu0
      %v3280 = vpop.f32.mrb[0].mxu0
      %v3281 = vadd.f32 0.0, %v3280
      %v3282 = vpop.f32.mrb[0].mxu0
      %3283 = vmatprep.mubr.bf16.mxu0 0
      %3284 = vmatmul.mubr.bf16.gmra.mrb[0].mxu0 %v3115
      %v3285 = vpop.f32.mrb[0].mxu0
      %v3286 = vadd.f32 0.0, %v3285
      %v3287 = vpop.f32.mrb[0].mxu0
      %v3288 = vpop.f32.mrb[0].mxu0
      %v3289 = vadd.f32 0.0, %v3288
      %v3290 = vpop.f32.mrb[0].mxu0
      %3291 = vmatprep.mubr.bf16.mxu0 0
      %3292 = vmatmul.mubr.bf16.gmra.mrb[0].mxu0 %v3116
      %v3293 = vpop.f32.mrb[0].mxu0
      %v3294 = vadd.f32 0.0, %v3293
      %v3295 = vpop.f32.mrb[0].mxu0
      %v3296 = vpop.f32.mrb[0].mxu0
      %v3297 = vadd.f32 0.0, %v3296
      %v3298 = vpop.f32.mrb[0].mxu0
      %3299 = vmatprep.mubr.bf16.mxu0 0
      %3300 = vmatmul.mubr.bf16.gmra.mrb[0].mxu0 %v3117
      %v3301 = vpop.f32.mrb[0].mxu0
      %v3302 = vadd.f32 0.0, %v3301
      %v3303 = vpop.f32.mrb[0].mxu0
      %v3304 = vpop.f32.mrb[0].mxu0
      %v3305 = vadd.f32 0.0, %v3304
      %v3306 = vpop.f32.mrb[0].mxu0
      %3307 = vmatprep.mubr.bf16.mxu0 0
      %3308 = vmatmul.mubr.bf16.gmra.mrb[0].mxu0 %v3118
      %v3309 = vpop.f32.mrb[0].mxu0
      %v3310 = vadd.f32 0.0, %v3309
      %v3311 = vpop.f32.mrb[0].mxu0
      %v3312 = vpop.f32.mrb[0].mxu0
      %v3313 = vadd.f32 0.0, %v3312
      %v3314 = vpop.f32.mrb[0].mxu0
      %3315 = vmatprep.mubr.bf16.mxu0 0
      %3316 = vmatmul.mubr.bf16.gmra.mrb[0].mxu0 %v3119
      %v3317 = vpop.f32.mrb[0].mxu0
      %v3318 = vadd.f32 0.0, %v3317
      %v3319 = vpop.f32.mrb[0].mxu0
      %v3320 = vpop.f32.mrb[0].mxu0
      %v3321 = vadd.f32 0.0, %v3320
      %v3322 = vpop.f32.mrb[0].mxu0
      %3323 = vmatprep.mubr.bf16.mxu0 0
      %3324 = vmatmul.mubr.bf16.gmra.mrb[0].mxu0 %v3120
      %v3325 = vpop.f32.mrb[0].mxu0
      %v3326 = vadd.f32 0.0, %v3325
      %v3327 = vpop.f32.mrb[0].mxu0
      %v3328 = vpop.f32.mrb[0].mxu0
      %v3329 = vadd.f32 0.0, %v3328
      %v3330 = vpop.f32.mrb[0].mxu0
      %3331 = vmatprep.mubr.bf16.mxu0 0
      %3332 = vmatmul.mubr.bf16.gmra.mrb[0].mxu0 %v3121
      %v3333 = vpop.f32.mrb[0].mxu0
      %v3334 = vadd.f32 0.0, %v3333
      %v3335 = vpop.f32.mrb[0].mxu0
      %v3336 = vpop.f32.mrb[0].mxu0
      %v3337 = vadd.f32 0.0, %v3336
      %v3338 = vpop.f32.mrb[0].mxu0
      %3339 = vmatprep.mubr.bf16.mxu0 0
      %3340 = vmatmul.mubr.bf16.gmra.mrb[0].mxu0 %v3122
      %v3341 = vpop.f32.mrb[0].mxu0
      %v3342 = vadd.f32 0.0, %v3341
      %v3343 = vpop.f32.mrb[0].mxu0
      %v3344 = vpop.f32.mrb[0].mxu0
      %v3345 = vadd.f32 0.0, %v3344
      %v3346 = vpop.f32.mrb[0].mxu0
      %3347 = vdwg.mxu0
      %v3348 = vadd.f32 %v2850, %v3222
      %v3349 = vadd.f32 %v2851, %v3225
      %v3350 = vadd.f32 %v2852, %v3230
      %v3351 = vadd.f32 %v2853, %v3233
      %v3352 = vadd.f32 %v2854, %v3238
      %v3353 = vadd.f32 %v2855, %v3241
      %v3354 = vadd.f32 %v2856, %v3246
      %v3355 = vadd.f32 %v2857, %v3249
      %v3356 = vadd.f32 %v2858, %v3254
      %v3357 = vadd.f32 %v2859, %v3257
      %v3358 = vadd.f32 %v2860, %v3262
      %v3359 = vadd.f32 %v2861, %v3265
      %v3360 = vadd.f32 %v2862, %v3270
      %v3361 = vadd.f32 %v2863, %v3273
      %v3362 = vadd.f32 %v2864, %v3278
      %v3363 = vadd.f32 %v2865, %v3281
      %v3364 = vadd.f32 %v2866, %v3286
      %v3365 = vadd.f32 %v2867, %v3289
      %v3366 = vadd.f32 %v2868, %v3294
      %v3367 = vadd.f32 %v2869, %v3297
      %v3368 = vadd.f32 %v2870, %v3302
      %v3369 = vadd.f32 %v2871, %v3305
      %v3370 = vadd.f32 %v2872, %v3310
      %v3371 = vadd.f32 %v2873, %v3313
      %v3372 = vadd.f32 %v2874, %v3318
      %v3373 = vadd.f32 %v2875, %v3321
      %v3374 = vadd.f32 %v2876, %v3326
      %v3375 = vadd.f32 %v2877, %v3329
      %v3376 = vadd.f32 %v2878, %v3334
      %v3377 = vadd.f32 %v2879, %v3337
      %v3378 = vadd.f32 %v2880, %v3342
      %v3379 = vadd.f32 %v2881, %v3345
      %s3380 = scalar_lea.vmem %s199, 24
      %v3381 = vld [vmem:[%s3380] sm:$0xf]
      %v3382 = vld [vmem:[%s3380 + $0x4] sm:$0xf]
      %v3383 = vld [vmem:[%s3380 + $0xc] sm:$0xf]
      %v3384 = vld [vmem:[%s3380 + $0x10] sm:$0xf]
      %v3385 = vld [vmem:[%s3380 + $0x18] sm:$0xf]
      %v3386 = vld [vmem:[%s3380 + $0x1c] sm:$0xf]
      %v3387 = vld [vmem:[%s3380 + $0x24] sm:$0xf]
      %v3388 = vld [vmem:[%s3380 + $0x28] sm:$0xf]
      %v3389 = vld [vmem:[%s3380 + $0x30] sm:$0xf]
      %v3390 = vld [vmem:[%s3380 + $0x34] sm:$0xf]
      %v3391 = vld [vmem:[%s3380 + $0x3c] sm:$0xf]
      %v3392 = vld [vmem:[%s3380 + $0x40] sm:$0xf]
      %v3393 = vld [vmem:[%s3380 + $0x48] sm:$0xf]
      %v3394 = vld [vmem:[%s3380 + $0x4c] sm:$0xf]
      %v3395 = vld [vmem:[%s3380 + $0x54] sm:$0xf]
      %v3396 = vld [vmem:[%s3380 + $0x58] sm:$0xf]
      %v3397 = vld [vmem:[%s3380 + $0x60] sm:$0xf]
      %v3398 = vld [vmem:[%s3380 + $0x64] sm:$0xf]
      %v3399 = vld [vmem:[%s3380 + $0x6c] sm:$0xf]
      %v3400 = vld [vmem:[%s3380 + $0x70] sm:$0xf]
      %v3401 = vld [vmem:[%s3380 + $0x78] sm:$0xf]
      %v3402 = vld [vmem:[%s3380 + $0x7c] sm:$0xf]
      %v3403 = vld [vmem:[%s3380 + $0x84] sm:$0xf]
      %v3404 = vld [vmem:[%s3380 + $0x88] sm:$0xf]
      %v3405 = vld [vmem:[%s3380 + $0x90] sm:$0xf]
      %v3406 = vld [vmem:[%s3380 + $0x94] sm:$0xf]
      %v3407 = vld [vmem:[%s3380 + $0x9c] sm:$0xf]
      %v3408 = vld [vmem:[%s3380 + $0xa0] sm:$0xf]
      %v3409 = vld [vmem:[%s3380 + $0xa8] sm:$0xf]
      %v3410 = vld [vmem:[%s3380 + $0xac] sm:$0xf]
      %v3411 = vld [vmem:[%s3380 + $0xb4] sm:$0xf]
      %v3412 = vld [vmem:[%s3380 + $0xb8] sm:$0xf]
      %s3413 = scalar_lea.vmem %s1, 384
      %v3414 = vld [vmem:[%s3413] sm:$0xf]
      %v3415 = vld [vmem:[%s3413 + $0x4] sm:$0xf]
      %v3416 = vld [vmem:[%s3413 + $0x8] sm:$0xf]
      %v3417 = vld [vmem:[%s3413 + $0xc] sm:$0xf]
      %v3418 = vld [vmem:[%s3413 + $0x10] sm:$0xf]
      %v3419 = vld [vmem:[%s3413 + $0x14] sm:$0xf]
      %v3420 = vld [vmem:[%s3413 + $0x18] sm:$0xf]
      %v3421 = vld [vmem:[%s3413 + $0x1c] sm:$0xf]
      %v3422 = vld [vmem:[%s3413 + $0x20] sm:$0xf]
      %v3423 = vld [vmem:[%s3413 + $0x24] sm:$0xf]
      %v3424 = vld [vmem:[%s3413 + $0x28] sm:$0xf]
      %v3425 = vld [vmem:[%s3413 + $0x2c] sm:$0xf]
      %v3426 = vld [vmem:[%s3413 + $0x30] sm:$0xf]
      %v3427 = vld [vmem:[%s3413 + $0x34] sm:$0xf]
      %v3428 = vld [vmem:[%s3413 + $0x38] sm:$0xf]
      %v3429 = vld [vmem:[%s3413 + $0x3c] sm:$0xf]
      %v3462 = vunpack.c.l.b16 %v3381
      %v3463 = vunpack.c.l.b16 %v3382
      %v3464 = vunpack.c.l.b16 %v3383
      %v3465 = vunpack.c.l.b16 %v3384
      %v3466 = vunpack.c.l.b16 %v3385
      %v3467 = vunpack.c.l.b16 %v3386
      %v3468 = vunpack.c.l.b16 %v3387
      %v3469 = vunpack.c.l.b16 %v3388
      %v3470 = vunpack.c.l.b16 %v3389
      %v3471 = vunpack.c.l.b16 %v3390
      %v3472 = vunpack.c.l.b16 %v3391
      %v3473 = vunpack.c.l.b16 %v3392
      %v3474 = vunpack.c.l.b16 %v3393
      %v3475 = vunpack.c.l.b16 %v3394
      %v3476 = vunpack.c.l.b16 %v3395
      %v3477 = vunpack.c.l.b16 %v3396
      %v3478 = vunpack.c.l.b16 %v3397
      %v3479 = vunpack.c.l.b16 %v3398
      %v3480 = vunpack.c.l.b16 %v3399
      %v3481 = vunpack.c.l.b16 %v3400
      %v3482 = vunpack.c.l.b16 %v3401
      %v3483 = vunpack.c.l.b16 %v3402
      %v3484 = vunpack.c.l.b16 %v3403
      %v3485 = vunpack.c.l.b16 %v3404
      %v3486 = vunpack.c.l.b16 %v3405
      %v3487 = vunpack.c.l.b16 %v3406
      %v3488 = vunpack.c.l.b16 %v3407
      %v3489 = vunpack.c.l.b16 %v3408
      %v3490 = vunpack.c.l.b16 %v3409
      %v3491 = vunpack.c.l.b16 %v3410
      %v3492 = vunpack.c.l.b16 %v3411
      %v3493 = vunpack.c.l.b16 %v3412
      %v3494 = vpack.c.b16 %v3463, %v3462
      %v3495 = vpack.c.b16 %v3465, %v3464
      %v3496 = vpack.c.b16 %v3467, %v3466
      %v3497 = vpack.c.b16 %v3469, %v3468
      %v3498 = vpack.c.b16 %v3471, %v3470
      %v3499 = vpack.c.b16 %v3473, %v3472
      %v3500 = vpack.c.b16 %v3475, %v3474
      %v3501 = vpack.c.b16 %v3477, %v3476
      %v3502 = vpack.c.b16 %v3479, %v3478
      %v3503 = vpack.c.b16 %v3481, %v3480
      %v3504 = vpack.c.b16 %v3483, %v3482
      %v3505 = vpack.c.b16 %v3485, %v3484
      %v3506 = vpack.c.b16 %v3487, %v3486
      %v3507 = vpack.c.b16 %v3489, %v3488
      %v3508 = vpack.c.b16 %v3491, %v3490
      %v3509 = vpack.c.b16 %v3493, %v3492
      %v3542 = vunpack.c.l.b16 %v3414
      %v3543 = vunpack.c.l.b16 %v3415
      %v3544 = vunpack.c.l.b16 %v3416
      %v3545 = vunpack.c.l.b16 %v3417
      %v3546 = vunpack.c.l.b16 %v3418
      %v3547 = vunpack.c.l.b16 %v3419
      %v3548 = vunpack.c.l.b16 %v3420
      %v3549 = vunpack.c.l.b16 %v3421
      %v3550 = vunpack.c.l.b16 %v3422
      %v3551 = vunpack.c.l.b16 %v3423
      %v3552 = vunpack.c.l.b16 %v3424
      %v3553 = vunpack.c.l.b16 %v3425
      %v3554 = vunpack.c.l.b16 %v3426
      %v3555 = vunpack.c.l.b16 %v3427
      %v3556 = vunpack.c.l.b16 %v3428
      %v3557 = vunpack.c.l.b16 %v3429
      %v3558 = vpack.c.b16 %v3543, %v3542
      %v3559 = vpack.c.b16 %v3545, %v3544
      %v3560 = vpack.c.b16 %v3547, %v3546
      %v3561 = vpack.c.b16 %v3549, %v3548
      %v3562 = vpack.c.b16 %v3551, %v3550
      %v3563 = vpack.c.b16 %v3553, %v3552
      %v3564 = vpack.c.b16 %v3555, %v3554
      %v3565 = vpack.c.b16 %v3557, %v3556
      %3574 = vmatprep.subr.bf16.mxu0 0
      %3575 = vmatpush1.bf16.msra.mxu0 %v3558
      %3576 = vmatprep.subr.bf16.mxu0 0
      %3577 = vmatpush1.bf16.msra.mxu0 %v3559
      %3578 = vmatprep.subr.bf16.mxu0 0
      %3579 = vmatpush1.bf16.msra.mxu0 %v3560
      %3580 = vmatprep.subr.bf16.mxu0 0
      %3581 = vmatpush1.bf16.msra.mxu0 %v3561
      %3582 = vmatprep.subr.bf16.mxu0 0
      %3583 = vmatpush1.bf16.msra.mxu0 %v3562
      %3584 = vmatprep.subr.bf16.mxu0 0
      %3585 = vmatpush1.bf16.msra.mxu0 %v3563
      %3586 = vmatprep.subr.bf16.mxu0 0
      %3587 = vmatpush1.bf16.msra.mxu0 %v3564
      %3588 = vmatprep.subr.bf16.mxu0 0
      %3589 = vmatpush1.bf16.msra.mxu0 %v3565
      %3590 = vmatprep.subr.bf16.mxu0 0
      %3591 = vmatpush1.bf16.msra.mxu0 0
      %3592 = vmatprep.subr.bf16.mxu0 0
      %3593 = vmatpush1.bf16.msra.mxu0 0
      %3594 = vmatprep.subr.bf16.mxu0 0
      %3595 = vmatpush1.bf16.msra.mxu0 0
      %3596 = vmatprep.subr.bf16.mxu0 0
      %3597 = vmatpush1.bf16.msra.mxu0 0
      %3598 = vmatprep.subr.bf16.mxu0 0
      %3599 = vmatpush1.bf16.msra.mxu0 0
      %3600 = vmatprep.subr.bf16.mxu0 0
      %3601 = vmatpush1.bf16.msra.mxu0 0
      %3602 = vmatprep.subr.bf16.mxu0 0
      %3603 = vmatpush1.bf16.msra.mxu0 0
      %3604 = vmatprep.subr.bf16.mxu0 0
      %3605 = vmatpush1.bf16.msra.mxu0 0
      %3606 = vmatprep.mubr.bf16.mxu0 0
      %3607 = vmatmul.mubr.bf16.gmra.mrb[0].mxu0 %v3494
      %v3608 = vpop.f32.mrb[0].mxu0
      %v3609 = vadd.f32 0.0, %v3608
      %v3610 = vpop.f32.mrb[0].mxu0
      %v3611 = vpop.f32.mrb[0].mxu0
      %v3612 = vadd.f32 0.0, %v3611
      %v3613 = vpop.f32.mrb[0].mxu0
      %3614 = vmatprep.mubr.bf16.mxu0 0
      %3615 = vmatmul.mubr.bf16.gmra.mrb[0].mxu0 %v3495
      %v3616 = vpop.f32.mrb[0].mxu0
      %v3617 = vadd.f32 0.0, %v3616
      %v3618 = vpop.f32.mrb[0].mxu0
      %v3619 = vpop.f32.mrb[0].mxu0
      %v3620 = vadd.f32 0.0, %v3619
      %v3621 = vpop.f32.mrb[0].mxu0
      %3622 = vmatprep.mubr.bf16.mxu0 0
      %3623 = vmatmul.mubr.bf16.gmra.mrb[0].mxu0 %v3496
      %v3624 = vpop.f32.mrb[0].mxu0
      %v3625 = vadd.f32 0.0, %v3624
      %v3626 = vpop.f32.mrb[0].mxu0
      %v3627 = vpop.f32.mrb[0].mxu0
      %v3628 = vadd.f32 0.0, %v3627
      %v3629 = vpop.f32.mrb[0].mxu0
      %3630 = vmatprep.mubr.bf16.mxu0 0
      %3631 = vmatmul.mubr.bf16.gmra.mrb[0].mxu0 %v3497
      %v3632 = vpop.f32.mrb[0].mxu0
      %v3633 = vadd.f32 0.0, %v3632
      %v3634 = vpop.f32.mrb[0].mxu0
      %v3635 = vpop.f32.mrb[0].mxu0
      %v3636 = vadd.f32 0.0, %v3635
      %v3637 = vpop.f32.mrb[0].mxu0
      %3638 = vmatprep.mubr.bf16.mxu0 0
      %3639 = vmatmul.mubr.bf16.gmra.mrb[0].mxu0 %v3498
      %v3640 = vpop.f32.mrb[0].mxu0
      %v3641 = vadd.f32 0.0, %v3640
      %v3642 = vpop.f32.mrb[0].mxu0
      %v3643 = vpop.f32.mrb[0].mxu0
      %v3644 = vadd.f32 0.0, %v3643
      %v3645 = vpop.f32.mrb[0].mxu0
      %3646 = vmatprep.mubr.bf16.mxu0 0
      %3647 = vmatmul.mubr.bf16.gmra.mrb[0].mxu0 %v3499
      %v3648 = vpop.f32.mrb[0].mxu0
      %v3649 = vadd.f32 0.0, %v3648
      %v3650 = vpop.f32.mrb[0].mxu0
      %v3651 = vpop.f32.mrb[0].mxu0
      %v3652 = vadd.f32 0.0, %v3651
      %v3653 = vpop.f32.mrb[0].mxu0
      %3654 = vmatprep.mubr.bf16.mxu0 0
      %3655 = vmatmul.mubr.bf16.gmra.mrb[0].mxu0 %v3500
      %v3656 = vpop.f32.mrb[0].mxu0
      %v3657 = vadd.f32 0.0, %v3656
      %v3658 = vpop.f32.mrb[0].mxu0
      %v3659 = vpop.f32.mrb[0].mxu0
      %v3660 = vadd.f32 0.0, %v3659
      %v3661 = vpop.f32.mrb[0].mxu0
      %3662 = vmatprep.mubr.bf16.mxu0 0
      %3663 = vmatmul.mubr.bf16.gmra.mrb[0].mxu0 %v3501
      %v3664 = vpop.f32.mrb[0].mxu0
      %v3665 = vadd.f32 0.0, %v3664
      %v3666 = vpop.f32.mrb[0].mxu0
      %v3667 = vpop.f32.mrb[0].mxu0
      %v3668 = vadd.f32 0.0, %v3667
      %v3669 = vpop.f32.mrb[0].mxu0
      %3670 = vmatprep.mubr.bf16.mxu0 0
      %3671 = vmatmul.mubr.bf16.gmra.mrb[0].mxu0 %v3502
      %v3672 = vpop.f32.mrb[0].mxu0
      %v3673 = vadd.f32 0.0, %v3672
      %v3674 = vpop.f32.mrb[0].mxu0
      %v3675 = vpop.f32.mrb[0].mxu0
      %v3676 = vadd.f32 0.0, %v3675
      %v3677 = vpop.f32.mrb[0].mxu0
      %3678 = vmatprep.mubr.bf16.mxu0 0
      %3679 = vmatmul.mubr.bf16.gmra.mrb[0].mxu0 %v3503
      %v3680 = vpop.f32.mrb[0].mxu0
      %v3681 = vadd.f32 0.0, %v3680
      %v3682 = vpop.f32.mrb[0].mxu0
      %v3683 = vpop.f32.mrb[0].mxu0
      %v3684 = vadd.f32 0.0, %v3683
      %v3685 = vpop.f32.mrb[0].mxu0
      %3686 = vmatprep.mubr.bf16.mxu0 0
      %3687 = vmatmul.mubr.bf16.gmra.mrb[0].mxu0 %v3504
      %v3688 = vpop.f32.mrb[0].mxu0
      %v3689 = vadd.f32 0.0, %v3688
      %v3690 = vpop.f32.mrb[0].mxu0
      %v3691 = vpop.f32.mrb[0].mxu0
      %v3692 = vadd.f32 0.0, %v3691
      %v3693 = vpop.f32.mrb[0].mxu0
      %3694 = vmatprep.mubr.bf16.mxu0 0
      %3695 = vmatmul.mubr.bf16.gmra.mrb[0].mxu0 %v3505
      %v3696 = vpop.f32.mrb[0].mxu0
      %v3697 = vadd.f32 0.0, %v3696
      %v3698 = vpop.f32.mrb[0].mxu0
      %v3699 = vpop.f32.mrb[0].mxu0
      %v3700 = vadd.f32 0.0, %v3699
      %v3701 = vpop.f32.mrb[0].mxu0
      %3702 = vmatprep.mubr.bf16.mxu0 0
      %3703 = vmatmul.mubr.bf16.gmra.mrb[0].mxu0 %v3506
      %v3704 = vpop.f32.mrb[0].mxu0
      %v3705 = vadd.f32 0.0, %v3704
      %v3706 = vpop.f32.mrb[0].mxu0
      %v3707 = vpop.f32.mrb[0].mxu0
      %v3708 = vadd.f32 0.0, %v3707
      %v3709 = vpop.f32.mrb[0].mxu0
      %3710 = vmatprep.mubr.bf16.mxu0 0
      %3711 = vmatmul.mubr.bf16.gmra.mrb[0].mxu0 %v3507
      %v3712 = vpop.f32.mrb[0].mxu0
      %v3713 = vadd.f32 0.0, %v3712
      %v3714 = vpop.f32.mrb[0].mxu0
      %v3715 = vpop.f32.mrb[0].mxu0
      %v3716 = vadd.f32 0.0, %v3715
      %v3717 = vpop.f32.mrb[0].mxu0
      %3718 = vmatprep.mubr.bf16.mxu0 0
      %3719 = vmatmul.mubr.bf16.gmra.mrb[0].mxu0 %v3508
      %v3720 = vpop.f32.mrb[0].mxu0
      %v3721 = vadd.f32 0.0, %v3720
      %v3722 = vpop.f32.mrb[0].mxu0
      %v3723 = vpop.f32.mrb[0].mxu0
      %v3724 = vadd.f32 0.0, %v3723
      %v3725 = vpop.f32.mrb[0].mxu0
      %3726 = vmatprep.mubr.bf16.mxu0 0
      %3727 = vmatmul.mubr.bf16.gmra.mrb[0].mxu0 %v3509
      %v3728 = vpop.f32.mrb[0].mxu0
      %v3729 = vadd.f32 0.0, %v3728
      %v3730 = vpop.f32.mrb[0].mxu0
      %v3731 = vpop.f32.mrb[0].mxu0
      %v3732 = vadd.f32 0.0, %v3731
      %v3733 = vpop.f32.mrb[0].mxu0
      %3734 = vdwg.mxu0
      %v3735 = vadd.f32 %v3348, %v3609
      %v3736 = vadd.f32 %v3349, %v3612
      %v3737 = vadd.f32 %v3350, %v3617
      %v3738 = vadd.f32 %v3351, %v3620
      %v3739 = vadd.f32 %v3352, %v3625
      %v3740 = vadd.f32 %v3353, %v3628
      %v3741 = vadd.f32 %v3354, %v3633
      %v3742 = vadd.f32 %v3355, %v3636
      %v3743 = vadd.f32 %v3356, %v3641
      %v3744 = vadd.f32 %v3357, %v3644
      %v3745 = vadd.f32 %v3358, %v3649
      %v3746 = vadd.f32 %v3359, %v3652
      %v3747 = vadd.f32 %v3360, %v3657
      %v3748 = vadd.f32 %v3361, %v3660
      %v3749 = vadd.f32 %v3362, %v3665
      %v3750 = vadd.f32 %v3363, %v3668
      %v3751 = vadd.f32 %v3364, %v3673
      %v3752 = vadd.f32 %v3365, %v3676
      %v3753 = vadd.f32 %v3366, %v3681
      %v3754 = vadd.f32 %v3367, %v3684
      %v3755 = vadd.f32 %v3368, %v3689
      %v3756 = vadd.f32 %v3369, %v3692
      %v3757 = vadd.f32 %v3370, %v3697
      %v3758 = vadd.f32 %v3371, %v3700
      %v3759 = vadd.f32 %v3372, %v3705
      %v3760 = vadd.f32 %v3373, %v3708
      %v3761 = vadd.f32 %v3374, %v3713
      %v3762 = vadd.f32 %v3375, %v3716
      %v3763 = vadd.f32 %v3376, %v3721
      %v3764 = vadd.f32 %v3377, %v3724
      %v3765 = vadd.f32 %v3378, %v3729
      %v3766 = vadd.f32 %v3379, %v3732
      %v3767 = vld [vmem:[%s3380] sm:$0xf]
      %v3768 = vld [vmem:[%s3380 + $0x4] sm:$0xf]
      %v3769 = vld [vmem:[%s3380 + $0x8] sm:$0x1]
      %v3770 = vld [vmem:[%s3380 + $0xc] sm:$0xf]
      %v3771 = vld [vmem:[%s3380 + $0x10] sm:$0xf]
      %v3772 = vld [vmem:[%s3380 + $0x14] sm:$0x1]
      %v3773 = vld [vmem:[%s3380 + $0x18] sm:$0xf]
      %v3774 = vld [vmem:[%s3380 + $0x1c] sm:$0xf]
      %v3775 = vld [vmem:[%s3380 + $0x20] sm:$0x1]
      %v3776 = vld [vmem:[%s3380 + $0x24] sm:$0xf]
      %v3777 = vld [vmem:[%s3380 + $0x28] sm:$0xf]
      %v3778 = vld [vmem:[%s3380 + $0x2c] sm:$0x1]
      %v3779 = vld [vmem:[%s3380 + $0x30] sm:$0xf]
      %v3780 = vld [vmem:[%s3380 + $0x34] sm:$0xf]
      %v3781 = vld [vmem:[%s3380 + $0x38] sm:$0x1]
      %v3782 = vld [vmem:[%s3380 + $0x3c] sm:$0xf]
      %v3783 = vld [vmem:[%s3380 + $0x40] sm:$0xf]
      %v3784 = vld [vmem:[%s3380 + $0x44] sm:$0x1]
      %v3785 = vld [vmem:[%s3380 + $0x48] sm:$0xf]
      %v3786 = vld [vmem:[%s3380 + $0x4c] sm:$0xf]
      %v3787 = vld [vmem:[%s3380 + $0x50] sm:$0x1]
      %v3788 = vld [vmem:[%s3380 + $0x54] sm:$0xf]
      %v3789 = vld [vmem:[%s3380 + $0x58] sm:$0xf]
      %v3790 = vld [vmem:[%s3380 + $0x5c] sm:$0x1]
      %v3791 = vld [vmem:[%s3380 + $0x60] sm:$0xf]
      %v3792 = vld [vmem:[%s3380 + $0x64] sm:$0xf]
      %v3793 = vld [vmem:[%s3380 + $0x68] sm:$0x1]
      %v3794 = vld [vmem:[%s3380 + $0x6c] sm:$0xf]
      %v3795 = vld [vmem:[%s3380 + $0x70] sm:$0xf]
      %v3796 = vld [vmem:[%s3380 + $0x74] sm:$0x1]
      %v3797 = vld [vmem:[%s3380 + $0x78] sm:$0xf]
      %v3798 = vld [vmem:[%s3380 + $0x7c] sm:$0xf]
      %v3799 = vld [vmem:[%s3380 + $0x80] sm:$0x1]
      %v3800 = vld [vmem:[%s3380 + $0x84] sm:$0xf]
      %v3801 = vld [vmem:[%s3380 + $0x88] sm:$0xf]
      %v3802 = vld [vmem:[%s3380 + $0x8c] sm:$0x1]
      %v3803 = vld [vmem:[%s3380 + $0x90] sm:$0xf]
      %v3804 = vld [vmem:[%s3380 + $0x94] sm:$0xf]
      %v3805 = vld [vmem:[%s3380 + $0x98] sm:$0x1]
      %v3806 = vld [vmem:[%s3380 + $0x9c] sm:$0xf]
      %v3807 = vld [vmem:[%s3380 + $0xa0] sm:$0xf]
      %v3808 = vld [vmem:[%s3380 + $0xa4] sm:$0x1]
      %v3809 = vld [vmem:[%s3380 + $0xa8] sm:$0xf]
      %v3810 = vld [vmem:[%s3380 + $0xac] sm:$0xf]
      %v3811 = vld [vmem:[%s3380 + $0xb0] sm:$0x1]
      %v3812 = vld [vmem:[%s3380 + $0xb4] sm:$0xf]
      %v3813 = vld [vmem:[%s3380 + $0xb8] sm:$0xf]
      %v3814 = vld [vmem:[%s3380 + $0xbc] sm:$0x1]
      %v3816 = vshrl.u32 %v3767, 16
      %v3818 = vrot.slane %v3816, 4
      %v3819 = vshll.u32 %v3767, 16
      %v3821 = vrot.slane %v3819, 5
      %v3822 = vor.u32 %v3818, %v3821
      %v3823 = vrot.slane %v3822, 4
      %v3825 = vshll.u32 %v3768, 16
      %v3827 = vrot.slane %v3825, 5
      %v3828 = vsel %vm276, %v3823, %v3827
      %v3829 = vshrl.u32 %v3768, 16
      %v3831 = vrot.slane %v3829, 4
      %v3832 = vor.u32 %v3831, %v3827
      %v3833 = vrot.slane %v3832, 4
      %v3835 = vshll.u32 %v3769, 16
      %v3837 = vrot.slane %v3835, 5
      %v3838 = vsel %vm276, %v3833, %v3837
      %v3840 = vshrl.u32 %v3770, 16
      %v3842 = vrot.slane %v3840, 4
      %v3843 = vshll.u32 %v3770, 16
      %v3845 = vrot.slane %v3843, 5
      %v3846 = vor.u32 %v3842, %v3845
      %v3847 = vrot.slane %v3846, 4
      %v3849 = vshll.u32 %v3771, 16
      %v3851 = vrot.slane %v3849, 5
      %v3852 = vsel %vm276, %v3847, %v3851
      %v3853 = vshrl.u32 %v3771, 16
      %v3855 = vrot.slane %v3853, 4
      %v3856 = vor.u32 %v3855, %v3851
      %v3857 = vrot.slane %v3856, 4
      %v3859 = vshll.u32 %v3772, 16
      %v3861 = vrot.slane %v3859, 5
      %v3862 = vsel %vm276, %v3857, %v3861
      %v3864 = vshrl.u32 %v3773, 16
      %v3866 = vrot.slane %v3864, 4
      %v3867 = vshll.u32 %v3773, 16
      %v3869 = vrot.slane %v3867, 5
      %v3870 = vor.u32 %v3866, %v3869
      %v3871 = vrot.slane %v3870, 4
      %v3873 = vshll.u32 %v3774, 16
      %v3875 = vrot.slane %v3873, 5
      %v3876 = vsel %vm276, %v3871, %v3875
      %v3877 = vshrl.u32 %v3774, 16
      %v3879 = vrot.slane %v3877, 4
      %v3880 = vor.u32 %v3879, %v3875
      %v3881 = vrot.slane %v3880, 4
      %v3883 = vshll.u32 %v3775, 16
      %v3885 = vrot.slane %v3883, 5
      %v3886 = vsel %vm276, %v3881, %v3885
      %v3888 = vshrl.u32 %v3776, 16
      %v3890 = vrot.slane %v3888, 4
      %v3891 = vshll.u32 %v3776, 16
      %v3893 = vrot.slane %v3891, 5
      %v3894 = vor.u32 %v3890, %v3893
      %v3895 = vrot.slane %v3894, 4
      %v3897 = vshll.u32 %v3777, 16
      %v3899 = vrot.slane %v3897, 5
      %v3900 = vsel %vm276, %v3895, %v3899
      %v3901 = vshrl.u32 %v3777, 16
      %v3903 = vrot.slane %v3901, 4
      %v3904 = vor.u32 %v3903, %v3899
      %v3905 = vrot.slane %v3904, 4
      %v3907 = vshll.u32 %v3778, 16
      %v3909 = vrot.slane %v3907, 5
      %v3910 = vsel %vm276, %v3905, %v3909
      %v3912 = vshrl.u32 %v3779, 16
      %v3914 = vrot.slane %v3912, 4
      %v3915 = vshll.u32 %v3779, 16
      %v3917 = vrot.slane %v3915, 5
      %v3918 = vor.u32 %v3914, %v3917
      %v3919 = vrot.slane %v3918, 4
      %v3921 = vshll.u32 %v3780, 16
      %v3923 = vrot.slane %v3921, 5
      %v3924 = vsel %vm276, %v3919, %v3923
      %v3925 = vshrl.u32 %v3780, 16
      %v3927 = vrot.slane %v3925, 4
      %v3928 = vor.u32 %v3927, %v3923
      %v3929 = vrot.slane %v3928, 4
      %v3931 = vshll.u32 %v3781, 16
      %v3933 = vrot.slane %v3931, 5
      %v3934 = vsel %vm276, %v3929, %v3933
      %v3936 = vshrl.u32 %v3782, 16
      %v3938 = vrot.slane %v3936, 4
      %v3939 = vshll.u32 %v3782, 16
      %v3941 = vrot.slane %v3939, 5
      %v3942 = vor.u32 %v3938, %v3941
      %v3943 = vrot.slane %v3942, 4
      %v3945 = vshll.u32 %v3783, 16
      %v3947 = vrot.slane %v3945, 5
      %v3948 = vsel %vm276, %v3943, %v3947
      %v3949 = vshrl.u32 %v3783, 16
      %v3951 = vrot.slane %v3949, 4
      %v3952 = vor.u32 %v3951, %v3947
      %v3953 = vrot.slane %v3952, 4
      %v3955 = vshll.u32 %v3784, 16
      %v3957 = vrot.slane %v3955, 5
      %v3958 = vsel %vm276, %v3953, %v3957
      %v3960 = vshrl.u32 %v3785, 16
      %v3962 = vrot.slane %v3960, 4
      %v3963 = vshll.u32 %v3785, 16
      %v3965 = vrot.slane %v3963, 5
      %v3966 = vor.u32 %v3962, %v3965
      %v3967 = vrot.slane %v3966, 4
      %v3969 = vshll.u32 %v3786, 16
      %v3971 = vrot.slane %v3969, 5
      %v3972 = vsel %vm276, %v3967, %v3971
      %v3973 = vshrl.u32 %v3786, 16
      %v3975 = vrot.slane %v3973, 4
      %v3976 = vor.u32 %v3975, %v3971
      %v3977 = vrot.slane %v3976, 4
      %v3979 = vshll.u32 %v3787, 16
      %v3981 = vrot.slane %v3979, 5
      %v3982 = vsel %vm276, %v3977, %v3981
      %v3984 = vshrl.u32 %v3788, 16
      %v3986 = vrot.slane %v3984, 4
      %v3987 = vshll.u32 %v3788, 16
      %v3989 = vrot.slane %v3987, 5
      %v3990 = vor.u32 %v3986, %v3989
      %v3991 = vrot.slane %v3990, 4
      %v3993 = vshll.u32 %v3789, 16
      %v3995 = vrot.slane %v3993, 5
      %v3996 = vsel %vm276, %v3991, %v3995
      %v3997 = vshrl.u32 %v3789, 16
      %v3999 = vrot.slane %v3997, 4
      %v4000 = vor.u32 %v3999, %v3995
      %v4001 = vrot.slane %v4000, 4
      %v4003 = vshll.u32 %v3790, 16
      %v4005 = vrot.slane %v4003, 5
      %v4006 = vsel %vm276, %v4001, %v4005
      %v4008 = vshrl.u32 %v3791, 16
      %v4010 = vrot.slane %v4008, 4
      %v4011 = vshll.u32 %v3791, 16
      %v4013 = vrot.slane %v4011, 5
      %v4014 = vor.u32 %v4010, %v4013
      %v4015 = vrot.slane %v4014, 4
      %v4017 = vshll.u32 %v3792, 16
      %v4019 = vrot.slane %v4017, 5
      %v4020 = vsel %vm276, %v4015, %v4019
      %v4021 = vshrl.u32 %v3792, 16
      %v4023 = vrot.slane %v4021, 4
      %v4024 = vor.u32 %v4023, %v4019
      %v4025 = vrot.slane %v4024, 4
      %v4027 = vshll.u32 %v3793, 16
      %v4029 = vrot.slane %v4027, 5
      %v4030 = vsel %vm276, %v4025, %v4029
      %v4032 = vshrl.u32 %v3794, 16
      %v4034 = vrot.slane %v4032, 4
      %v4035 = vshll.u32 %v3794, 16
      %v4037 = vrot.slane %v4035, 5
      %v4038 = vor.u32 %v4034, %v4037
      %v4039 = vrot.slane %v4038, 4
      %v4041 = vshll.u32 %v3795, 16
      %v4043 = vrot.slane %v4041, 5
      %v4044 = vsel %vm276, %v4039, %v4043
      %v4045 = vshrl.u32 %v3795, 16
      %v4047 = vrot.slane %v4045, 4
      %v4048 = vor.u32 %v4047, %v4043
      %v4049 = vrot.slane %v4048, 4
      %v4051 = vshll.u32 %v3796, 16
      %v4053 = vrot.slane %v4051, 5
      %v4054 = vsel %vm276, %v4049, %v4053
      %v4056 = vshrl.u32 %v3797, 16
      %v4058 = vrot.slane %v4056, 4
      %v4059 = vshll.u32 %v3797, 16
      %v4061 = vrot.slane %v4059, 5
      %v4062 = vor.u32 %v4058, %v4061
      %v4063 = vrot.slane %v4062, 4
      %v4065 = vshll.u32 %v3798, 16
      %v4067 = vrot.slane %v4065, 5
      %v4068 = vsel %vm276, %v4063, %v4067
      %v4069 = vshrl.u32 %v3798, 16
      %v4071 = vrot.slane %v4069, 4
      %v4072 = vor.u32 %v4071, %v4067
      %v4073 = vrot.slane %v4072, 4
      %v4075 = vshll.u32 %v3799, 16
      %v4077 = vrot.slane %v4075, 5
      %v4078 = vsel %vm276, %v4073, %v4077
      %v4080 = vshrl.u32 %v3800, 16
      %v4082 = vrot.slane %v4080, 4
      %v4083 = vshll.u32 %v3800, 16
      %v4085 = vrot.slane %v4083, 5
      %v4086 = vor.u32 %v4082, %v4085
      %v4087 = vrot.slane %v4086, 4
      %v4089 = vshll.u32 %v3801, 16
      %v4091 = vrot.slane %v4089, 5
      %v4092 = vsel %vm276, %v4087, %v4091
      %v4093 = vshrl.u32 %v3801, 16
      %v4095 = vrot.slane %v4093, 4
      %v4096 = vor.u32 %v4095, %v4091
      %v4097 = vrot.slane %v4096, 4
      %v4099 = vshll.u32 %v3802, 16
      %v4101 = vrot.slane %v4099, 5
      %v4102 = vsel %vm276, %v4097, %v4101
      %v4104 = vshrl.u32 %v3803, 16
      %v4106 = vrot.slane %v4104, 4
      %v4107 = vshll.u32 %v3803, 16
      %v4109 = vrot.slane %v4107, 5
      %v4110 = vor.u32 %v4106, %v4109
      %v4111 = vrot.slane %v4110, 4
      %v4113 = vshll.u32 %v3804, 16
      %v4115 = vrot.slane %v4113, 5
      %v4116 = vsel %vm276, %v4111, %v4115
      %v4117 = vshrl.u32 %v3804, 16
      %v4119 = vrot.slane %v4117, 4
      %v4120 = vor.u32 %v4119, %v4115
      %v4121 = vrot.slane %v4120, 4
      %v4123 = vshll.u32 %v3805, 16
      %v4125 = vrot.slane %v4123, 5
      %v4126 = vsel %vm276, %v4121, %v4125
      %v4128 = vshrl.u32 %v3806, 16
      %v4130 = vrot.slane %v4128, 4
      %v4131 = vshll.u32 %v3806, 16
      %v4133 = vrot.slane %v4131, 5
      %v4134 = vor.u32 %v4130, %v4133
      %v4135 = vrot.slane %v4134, 4
      %v4137 = vshll.u32 %v3807, 16
      %v4139 = vrot.slane %v4137, 5
      %v4140 = vsel %vm276, %v4135, %v4139
      %v4141 = vshrl.u32 %v3807, 16
      %v4143 = vrot.slane %v4141, 4
      %v4144 = vor.u32 %v4143, %v4139
      %v4145 = vrot.slane %v4144, 4
      %v4147 = vshll.u32 %v3808, 16
      %v4149 = vrot.slane %v4147, 5
      %v4150 = vsel %vm276, %v4145, %v4149
      %v4152 = vshrl.u32 %v3809, 16
      %v4154 = vrot.slane %v4152, 4
      %v4155 = vshll.u32 %v3809, 16
      %v4157 = vrot.slane %v4155, 5
      %v4158 = vor.u32 %v4154, %v4157
      %v4159 = vrot.slane %v4158, 4
      %v4161 = vshll.u32 %v3810, 16
      %v4163 = vrot.slane %v4161, 5
      %v4164 = vsel %vm276, %v4159, %v4163
      %v4165 = vshrl.u32 %v3810, 16
      %v4167 = vrot.slane %v4165, 4
      %v4168 = vor.u32 %v4167, %v4163
      %v4169 = vrot.slane %v4168, 4
      %v4171 = vshll.u32 %v3811, 16
      %v4173 = vrot.slane %v4171, 5
      %v4174 = vsel %vm276, %v4169, %v4173
      %v4176 = vshrl.u32 %v3812, 16
      %v4178 = vrot.slane %v4176, 4
      %v4179 = vshll.u32 %v3812, 16
      %v4181 = vrot.slane %v4179, 5
      %v4182 = vor.u32 %v4178, %v4181
      %v4183 = vrot.slane %v4182, 4
      %v4185 = vshll.u32 %v3813, 16
      %v4187 = vrot.slane %v4185, 5
      %v4188 = vsel %vm276, %v4183, %v4187
      %v4189 = vshrl.u32 %v3813, 16
      %v4191 = vrot.slane %v4189, 4
      %v4192 = vor.u32 %v4191, %v4187
      %v4193 = vrot.slane %v4192, 4
      %v4195 = vshll.u32 %v3814, 16
      %v4197 = vrot.slane %v4195, 5
      %v4198 = vsel %vm276, %v4193, %v4197
      %s4199 = scalar_lea.vmem %s1, 448
      %v4200 = vld [vmem:[%s4199] sm:$0xf]
      %v4201 = vld [vmem:[%s4199 + $0x4] sm:$0xf]
      %v4202 = vld [vmem:[%s4199 + $0x8] sm:$0xf]
      %v4203 = vld [vmem:[%s4199 + $0xc] sm:$0xf]
      %v4204 = vld [vmem:[%s4199 + $0x10] sm:$0xf]
      %v4205 = vld [vmem:[%s4199 + $0x14] sm:$0xf]
      %v4206 = vld [vmem:[%s4199 + $0x18] sm:$0xf]
      %v4207 = vld [vmem:[%s4199 + $0x1c] sm:$0xf]
      %v4208 = vld [vmem:[%s4199 + $0x20] sm:$0xf]
      %v4209 = vld [vmem:[%s4199 + $0x24] sm:$0xf]
      %v4210 = vld [vmem:[%s4199 + $0x28] sm:$0xf]
      %v4211 = vld [vmem:[%s4199 + $0x2c] sm:$0xf]
      %v4212 = vld [vmem:[%s4199 + $0x30] sm:$0xf]
      %v4213 = vld [vmem:[%s4199 + $0x34] sm:$0xf]
      %v4214 = vld [vmem:[%s4199 + $0x38] sm:$0xf]
      %v4215 = vld [vmem:[%s4199 + $0x3c] sm:$0xf]
      %v4216 = vunpack.c.l.b16 %v3828
      %v4217 = vunpack.c.l.b16 %v3838
      %v4218 = vunpack.c.l.b16 %v3852
      %v4219 = vunpack.c.l.b16 %v3862
      %v4220 = vunpack.c.l.b16 %v3876
      %v4221 = vunpack.c.l.b16 %v3886
      %v4222 = vunpack.c.l.b16 %v3900
      %v4223 = vunpack.c.l.b16 %v3910
      %v4224 = vunpack.c.l.b16 %v3924
      %v4225 = vunpack.c.l.b16 %v3934
      %v4226 = vunpack.c.l.b16 %v3948
      %v4227 = vunpack.c.l.b16 %v3958
      %v4228 = vunpack.c.l.b16 %v3972
      %v4229 = vunpack.c.l.b16 %v3982
      %v4230 = vunpack.c.l.b16 %v3996
      %v4231 = vunpack.c.l.b16 %v4006
      %v4232 = vunpack.c.l.b16 %v4020
      %v4233 = vunpack.c.l.b16 %v4030
      %v4234 = vunpack.c.l.b16 %v4044
      %v4235 = vunpack.c.l.b16 %v4054
      %v4236 = vunpack.c.l.b16 %v4068
      %v4237 = vunpack.c.l.b16 %v4078
      %v4238 = vunpack.c.l.b16 %v4092
      %v4239 = vunpack.c.l.b16 %v4102
      %v4240 = vunpack.c.l.b16 %v4116
      %v4241 = vunpack.c.l.b16 %v4126
      %v4242 = vunpack.c.l.b16 %v4140
      %v4243 = vunpack.c.l.b16 %v4150
      %v4244 = vunpack.c.l.b16 %v4164
      %v4245 = vunpack.c.l.b16 %v4174
      %v4246 = vunpack.c.l.b16 %v4188
      %v4247 = vunpack.c.l.b16 %v4198
      %v4248 = vpack.c.b16 %v4217, %v4216
      %v4249 = vpack.c.b16 %v4219, %v4218
      %v4250 = vpack.c.b16 %v4221, %v4220
      %v4251 = vpack.c.b16 %v4223, %v4222
      %v4252 = vpack.c.b16 %v4225, %v4224
      %v4253 = vpack.c.b16 %v4227, %v4226
      %v4254 = vpack.c.b16 %v4229, %v4228
      %v4255 = vpack.c.b16 %v4231, %v4230
      %v4256 = vpack.c.b16 %v4233, %v4232
      %v4257 = vpack.c.b16 %v4235, %v4234
      %v4258 = vpack.c.b16 %v4237, %v4236
      %v4259 = vpack.c.b16 %v4239, %v4238
      %v4260 = vpack.c.b16 %v4241, %v4240
      %v4261 = vpack.c.b16 %v4243, %v4242
      %v4262 = vpack.c.b16 %v4245, %v4244
      %v4263 = vpack.c.b16 %v4247, %v4246
      %v4296 = vunpack.c.l.b16 %v4200
      %v4297 = vunpack.c.l.b16 %v4201
      %v4298 = vunpack.c.l.b16 %v4202
      %v4299 = vunpack.c.l.b16 %v4203
      %v4300 = vunpack.c.l.b16 %v4204
      %v4301 = vunpack.c.l.b16 %v4205
      %v4302 = vunpack.c.l.b16 %v4206
      %v4303 = vunpack.c.l.b16 %v4207
      %v4304 = vunpack.c.l.b16 %v4208
      %v4305 = vunpack.c.l.b16 %v4209
      %v4306 = vunpack.c.l.b16 %v4210
      %v4307 = vunpack.c.l.b16 %v4211
      %v4308 = vunpack.c.l.b16 %v4212
      %v4309 = vunpack.c.l.b16 %v4213
      %v4310 = vunpack.c.l.b16 %v4214
      %v4311 = vunpack.c.l.b16 %v4215
      %v4312 = vpack.c.b16 %v4297, %v4296
      %v4313 = vpack.c.b16 %v4299, %v4298
      %v4314 = vpack.c.b16 %v4301, %v4300
      %v4315 = vpack.c.b16 %v4303, %v4302
      %v4316 = vpack.c.b16 %v4305, %v4304
      %v4317 = vpack.c.b16 %v4307, %v4306
      %v4318 = vpack.c.b16 %v4309, %v4308
      %v4319 = vpack.c.b16 %v4311, %v4310
      %4328 = vmatprep.subr.bf16.mxu0 0
      %4329 = vmatpush1.bf16.msra.mxu0 %v4312
      %4330 = vmatprep.subr.bf16.mxu0 0
      %4331 = vmatpush1.bf16.msra.mxu0 %v4313
      %4332 = vmatprep.subr.bf16.mxu0 0
      %4333 = vmatpush1.bf16.msra.mxu0 %v4314
      %4334 = vmatprep.subr.bf16.mxu0 0
      %4335 = vmatpush1.bf16.msra.mxu0 %v4315
      %4336 = vmatprep.subr.bf16.mxu0 0
      %4337 = vmatpush1.bf16.msra.mxu0 %v4316
      %4338 = vmatprep.subr.bf16.mxu0 0
      %4339 = vmatpush1.bf16.msra.mxu0 %v4317
      %4340 = vmatprep.subr.bf16.mxu0 0
      %4341 = vmatpush1.bf16.msra.mxu0 %v4318
      %4342 = vmatprep.subr.bf16.mxu0 0
      %4343 = vmatpush1.bf16.msra.mxu0 %v4319
      %4344 = vmatprep.subr.bf16.mxu0 0
      %4345 = vmatpush1.bf16.msra.mxu0 0
      %4346 = vmatprep.subr.bf16.mxu0 0
      %4347 = vmatpush1.bf16.msra.mxu0 0
      %4348 = vmatprep.subr.bf16.mxu0 0
      %4349 = vmatpush1.bf16.msra.mxu0 0
      %4350 = vmatprep.subr.bf16.mxu0 0
      %4351 = vmatpush1.bf16.msra.mxu0 0
      %4352 = vmatprep.subr.bf16.mxu0 0
      %4353 = vmatpush1.bf16.msra.mxu0 0
      %4354 = vmatprep.subr.bf16.mxu0 0
      %4355 = vmatpush1.bf16.msra.mxu0 0
      %4356 = vmatprep.subr.bf16.mxu0 0
      %4357 = vmatpush1.bf16.msra.mxu0 0
      %4358 = vmatprep.subr.bf16.mxu0 0
      %4359 = vmatpush1.bf16.msra.mxu0 0
      %4360 = vmatprep.mubr.bf16.mxu0 0
      %4361 = vmatmul.mubr.bf16.gmra.mrb[0].mxu0 %v4248
      %v4362 = vpop.f32.mrb[0].mxu0
      %v4363 = vadd.f32 0.0, %v4362
      %v4364 = vpop.f32.mrb[0].mxu0
      %v4365 = vpop.f32.mrb[0].mxu0
      %v4366 = vadd.f32 0.0, %v4365
      %v4367 = vpop.f32.mrb[0].mxu0
      %4368 = vmatprep.mubr.bf16.mxu0 0
      %4369 = vmatmul.mubr.bf16.gmra.mrb[0].mxu0 %v4249
      %v4370 = vpop.f32.mrb[0].mxu0
      %v4371 = vadd.f32 0.0, %v4370
      %v4372 = vpop.f32.mrb[0].mxu0
      %v4373 = vpop.f32.mrb[0].mxu0
      %v4374 = vadd.f32 0.0, %v4373
      %v4375 = vpop.f32.mrb[0].mxu0
      %4376 = vmatprep.mubr.bf16.mxu0 0
      %4377 = vmatmul.mubr.bf16.gmra.mrb[0].mxu0 %v4250
      %v4378 = vpop.f32.mrb[0].mxu0
      %v4379 = vadd.f32 0.0, %v4378
      %v4380 = vpop.f32.mrb[0].mxu0
      %v4381 = vpop.f32.mrb[0].mxu0
      %v4382 = vadd.f32 0.0, %v4381
      %v4383 = vpop.f32.mrb[0].mxu0
      %4384 = vmatprep.mubr.bf16.mxu0 0
      %4385 = vmatmul.mubr.bf16.gmra.mrb[0].mxu0 %v4251
      %v4386 = vpop.f32.mrb[0].mxu0
      %v4387 = vadd.f32 0.0, %v4386
      %v4388 = vpop.f32.mrb[0].mxu0
      %v4389 = vpop.f32.mrb[0].mxu0
      %v4390 = vadd.f32 0.0, %v4389
      %v4391 = vpop.f32.mrb[0].mxu0
      %4392 = vmatprep.mubr.bf16.mxu0 0
      %4393 = vmatmul.mubr.bf16.gmra.mrb[0].mxu0 %v4252
      %v4394 = vpop.f32.mrb[0].mxu0
      %v4395 = vadd.f32 0.0, %v4394
      %v4396 = vpop.f32.mrb[0].mxu0
      %v4397 = vpop.f32.mrb[0].mxu0
      %v4398 = vadd.f32 0.0, %v4397
      %v4399 = vpop.f32.mrb[0].mxu0
      %4400 = vmatprep.mubr.bf16.mxu0 0
      %4401 = vmatmul.mubr.bf16.gmra.mrb[0].mxu0 %v4253
      %v4402 = vpop.f32.mrb[0].mxu0
      %v4403 = vadd.f32 0.0, %v4402
      %v4404 = vpop.f32.mrb[0].mxu0
      %v4405 = vpop.f32.mrb[0].mxu0
      %v4406 = vadd.f32 0.0, %v4405
      %v4407 = vpop.f32.mrb[0].mxu0
      %4408 = vmatprep.mubr.bf16.mxu0 0
      %4409 = vmatmul.mubr.bf16.gmra.mrb[0].mxu0 %v4254
      %v4410 = vpop.f32.mrb[0].mxu0
      %v4411 = vadd.f32 0.0, %v4410
      %v4412 = vpop.f32.mrb[0].mxu0
      %v4413 = vpop.f32.mrb[0].mxu0
      %v4414 = vadd.f32 0.0, %v4413
      %v4415 = vpop.f32.mrb[0].mxu0
      %4416 = vmatprep.mubr.bf16.mxu0 0
      %4417 = vmatmul.mubr.bf16.gmra.mrb[0].mxu0 %v4255
      %v4418 = vpop.f32.mrb[0].mxu0
      %v4419 = vadd.f32 0.0, %v4418
      %v4420 = vpop.f32.mrb[0].mxu0
      %v4421 = vpop.f32.mrb[0].mxu0
      %v4422 = vadd.f32 0.0, %v4421
      %v4423 = vpop.f32.mrb[0].mxu0
      %4424 = vmatprep.mubr.bf16.mxu0 0
      %4425 = vmatmul.mubr.bf16.gmra.mrb[0].mxu0 %v4256
      %v4426 = vpop.f32.mrb[0].mxu0
      %v4427 = vadd.f32 0.0, %v4426
      %v4428 = vpop.f32.mrb[0].mxu0
      %v4429 = vpop.f32.mrb[0].mxu0
      %v4430 = vadd.f32 0.0, %v4429
      %v4431 = vpop.f32.mrb[0].mxu0
      %4432 = vmatprep.mubr.bf16.mxu0 0
      %4433 = vmatmul.mubr.bf16.gmra.mrb[0].mxu0 %v4257
      %v4434 = vpop.f32.mrb[0].mxu0
      %v4435 = vadd.f32 0.0, %v4434
      %v4436 = vpop.f32.mrb[0].mxu0
      %v4437 = vpop.f32.mrb[0].mxu0
      %v4438 = vadd.f32 0.0, %v4437
      %v4439 = vpop.f32.mrb[0].mxu0
      %4440 = vmatprep.mubr.bf16.mxu0 0
      %4441 = vmatmul.mubr.bf16.gmra.mrb[0].mxu0 %v4258
      %v4442 = vpop.f32.mrb[0].mxu0
      %v4443 = vadd.f32 0.0, %v4442
      %v4444 = vpop.f32.mrb[0].mxu0
      %v4445 = vpop.f32.mrb[0].mxu0
      %v4446 = vadd.f32 0.0, %v4445
      %v4447 = vpop.f32.mrb[0].mxu0
      %4448 = vmatprep.mubr.bf16.mxu0 0
      %4449 = vmatmul.mubr.bf16.gmra.mrb[0].mxu0 %v4259
      %v4450 = vpop.f32.mrb[0].mxu0
      %v4451 = vadd.f32 0.0, %v4450
      %v4452 = vpop.f32.mrb[0].mxu0
      %v4453 = vpop.f32.mrb[0].mxu0
      %v4454 = vadd.f32 0.0, %v4453
      %v4455 = vpop.f32.mrb[0].mxu0
      %4456 = vmatprep.mubr.bf16.mxu0 0
      %4457 = vmatmul.mubr.bf16.gmra.mrb[0].mxu0 %v4260
      %v4458 = vpop.f32.mrb[0].mxu0
      %v4459 = vadd.f32 0.0, %v4458
      %v4460 = vpop.f32.mrb[0].mxu0
      %v4461 = vpop.f32.mrb[0].mxu0
      %v4462 = vadd.f32 0.0, %v4461
      %v4463 = vpop.f32.mrb[0].mxu0
      %4464 = vmatprep.mubr.bf16.mxu0 0
      %4465 = vmatmul.mubr.bf16.gmra.mrb[0].mxu0 %v4261
      %v4466 = vpop.f32.mrb[0].mxu0
      %v4467 = vadd.f32 0.0, %v4466
      %v4468 = vpop.f32.mrb[0].mxu0
      %v4469 = vpop.f32.mrb[0].mxu0
      %v4470 = vadd.f32 0.0, %v4469
      %v4471 = vpop.f32.mrb[0].mxu0
      %4472 = vmatprep.mubr.bf16.mxu0 0
      %4473 = vmatmul.mubr.bf16.gmra.mrb[0].mxu0 %v4262
      %v4474 = vpop.f32.mrb[0].mxu0
      %v4475 = vadd.f32 0.0, %v4474
      %v4476 = vpop.f32.mrb[0].mxu0
      %v4477 = vpop.f32.mrb[0].mxu0
      %v4478 = vadd.f32 0.0, %v4477
      %v4479 = vpop.f32.mrb[0].mxu0
      %4480 = vmatprep.mubr.bf16.mxu0 0
      %4481 = vmatmul.mubr.bf16.gmra.mrb[0].mxu0 %v4263
      %v4482 = vpop.f32.mrb[0].mxu0
      %v4483 = vadd.f32 0.0, %v4482
      %v4484 = vpop.f32.mrb[0].mxu0
      %v4485 = vpop.f32.mrb[0].mxu0
      %v4486 = vadd.f32 0.0, %v4485
      %v4487 = vpop.f32.mrb[0].mxu0
      %4488 = vdwg.mxu0
      %v4489 = vadd.f32 %v3735, %v4363
      %v4490 = vadd.f32 %v3736, %v4366
      %v4491 = vadd.f32 %v3737, %v4371
      %v4492 = vadd.f32 %v3738, %v4374
      %v4493 = vadd.f32 %v3739, %v4379
      %v4494 = vadd.f32 %v3740, %v4382
      %v4495 = vadd.f32 %v3741, %v4387
      %v4496 = vadd.f32 %v3742, %v4390
      %v4497 = vadd.f32 %v3743, %v4395
      %v4498 = vadd.f32 %v3744, %v4398
      %v4499 = vadd.f32 %v3745, %v4403
      %v4500 = vadd.f32 %v3746, %v4406
      %v4501 = vadd.f32 %v3747, %v4411
      %v4502 = vadd.f32 %v3748, %v4414
      %v4503 = vadd.f32 %v3749, %v4419
      %v4504 = vadd.f32 %v3750, %v4422
      %v4505 = vadd.f32 %v3751, %v4427
      %v4506 = vadd.f32 %v3752, %v4430
      %v4507 = vadd.f32 %v3753, %v4435
      %v4508 = vadd.f32 %v3754, %v4438
      %v4509 = vadd.f32 %v3755, %v4443
      %v4510 = vadd.f32 %v3756, %v4446
      %v4511 = vadd.f32 %v3757, %v4451
      %v4512 = vadd.f32 %v3758, %v4454
      %v4513 = vadd.f32 %v3759, %v4459
      %v4514 = vadd.f32 %v3760, %v4462
      %v4515 = vadd.f32 %v3761, %v4467
      %v4516 = vadd.f32 %v3762, %v4470
      %v4517 = vadd.f32 %v3763, %v4475
      %v4518 = vadd.f32 %v3764, %v4478
      %v4519 = vadd.f32 %v3765, %v4483
      %v4520 = vadd.f32 %v3766, %v4486
      %v4521 = vld [vmem:[%s3380] sm:$0xe]
      %v4522 = vld [vmem:[%s3380 + $0xc] sm:$0xe]
      %v4523 = vld [vmem:[%s3380 + $0x18] sm:$0xe]
      %v4524 = vld [vmem:[%s3380 + $0x24] sm:$0xe]
      %v4525 = vld [vmem:[%s3380 + $0x30] sm:$0xe]
      %v4526 = vld [vmem:[%s3380 + $0x3c] sm:$0xe]
      %v4527 = vld [vmem:[%s3380 + $0x48] sm:$0xe]
      %v4528 = vld [vmem:[%s3380 + $0x54] sm:$0xe]
      %v4529 = vld [vmem:[%s3380 + $0x60] sm:$0xe]
      %v4530 = vld [vmem:[%s3380 + $0x6c] sm:$0xe]
      %v4531 = vld [vmem:[%s3380 + $0x78] sm:$0xe]
      %v4532 = vld [vmem:[%s3380 + $0x84] sm:$0xe]
      %v4533 = vld [vmem:[%s3380 + $0x90] sm:$0xe]
      %v4534 = vld [vmem:[%s3380 + $0x9c] sm:$0xe]
      %v4535 = vld [vmem:[%s3380 + $0xa8] sm:$0xe]
      %v4536 = vld [vmem:[%s3380 + $0xb4] sm:$0xe]
      %v4585 = vrot.slane %v4521, 5
      %v4586 = vrot.slane %v4585, 4
      %v4587 = vrot.slane %v3768, 5
      %v4588 = vsel %vm1306, %v4586, %v4587
      %v4589 = vrot.slane %v4587, 4
      %v4590 = vrot.slane %v3769, 5
      %v4591 = vsel %vm1306, %v4589, %v4590
      %v4592 = vrot.slane %v4522, 5
      %v4593 = vrot.slane %v4592, 4
      %v4594 = vrot.slane %v3771, 5
      %v4595 = vsel %vm1306, %v4593, %v4594
      %v4596 = vrot.slane %v4594, 4
      %v4597 = vrot.slane %v3772, 5
      %v4598 = vsel %vm1306, %v4596, %v4597
      %v4599 = vrot.slane %v4523, 5
      %v4600 = vrot.slane %v4599, 4
      %v4601 = vrot.slane %v3774, 5
      %v4602 = vsel %vm1306, %v4600, %v4601
      %v4603 = vrot.slane %v4601, 4
      %v4604 = vrot.slane %v3775, 5
      %v4605 = vsel %vm1306, %v4603, %v4604
      %v4606 = vrot.slane %v4524, 5
      %v4607 = vrot.slane %v4606, 4
      %v4608 = vrot.slane %v3777, 5
      %v4609 = vsel %vm1306, %v4607, %v4608
      %v4610 = vrot.slane %v4608, 4
      %v4611 = vrot.slane %v3778, 5
      %v4612 = vsel %vm1306, %v4610, %v4611
      %v4613 = vrot.slane %v4525, 5
      %v4614 = vrot.slane %v4613, 4
      %v4615 = vrot.slane %v3780, 5
      %v4616 = vsel %vm1306, %v4614, %v4615
      %v4617 = vrot.slane %v4615, 4
      %v4618 = vrot.slane %v3781, 5
      %v4619 = vsel %vm1306, %v4617, %v4618
      %v4620 = vrot.slane %v4526, 5
      %v4621 = vrot.slane %v4620, 4
      %v4622 = vrot.slane %v3783, 5
      %v4623 = vsel %vm1306, %v4621, %v4622
      %v4624 = vrot.slane %v4622, 4
      %v4625 = vrot.slane %v3784, 5
      %v4626 = vsel %vm1306, %v4624, %v4625
      %v4627 = vrot.slane %v4527, 5
      %v4628 = vrot.slane %v4627, 4
      %v4629 = vrot.slane %v3786, 5
      %v4630 = vsel %vm1306, %v4628, %v4629
      %v4631 = vrot.slane %v4629, 4
      %v4632 = vrot.slane %v3787, 5
      %v4633 = vsel %vm1306, %v4631, %v4632
      %v4634 = vrot.slane %v4528, 5
      %v4635 = vrot.slane %v4634, 4
      %v4636 = vrot.slane %v3789, 5
      %v4637 = vsel %vm1306, %v4635, %v4636
      %v4638 = vrot.slane %v4636, 4
      %v4639 = vrot.slane %v3790, 5
      %v4640 = vsel %vm1306, %v4638, %v4639
      %v4641 = vrot.slane %v4529, 5
      %v4642 = vrot.slane %v4641, 4
      %v4643 = vrot.slane %v3792, 5
      %v4644 = vsel %vm1306, %v4642, %v4643
      %v4645 = vrot.slane %v4643, 4
      %v4646 = vrot.slane %v3793, 5
      %v4647 = vsel %vm1306, %v4645, %v4646
      %v4648 = vrot.slane %v4530, 5
      %v4649 = vrot.slane %v4648, 4
      %v4650 = vrot.slane %v3795, 5
      %v4651 = vsel %vm1306, %v4649, %v4650
      %v4652 = vrot.slane %v4650, 4
      %v4653 = vrot.slane %v3796, 5
      %v4654 = vsel %vm1306, %v4652, %v4653
      %v4655 = vrot.slane %v4531, 5
      %v4656 = vrot.slane %v4655, 4
      %v4657 = vrot.slane %v3798, 5
      %v4658 = vsel %vm1306, %v4656, %v4657
      %v4659 = vrot.slane %v4657, 4
      %v4660 = vrot.slane %v3799, 5
      %v4661 = vsel %vm1306, %v4659, %v4660
      %v4662 = vrot.slane %v4532, 5
      %v4663 = vrot.slane %v4662, 4
      %v4664 = vrot.slane %v3801, 5
      %v4665 = vsel %vm1306, %v4663, %v4664
      %v4666 = vrot.slane %v4664, 4
      %v4667 = vrot.slane %v3802, 5
      %v4668 = vsel %vm1306, %v4666, %v4667
      %v4669 = vrot.slane %v4533, 5
      %v4670 = vrot.slane %v4669, 4
      %v4671 = vrot.slane %v3804, 5
      %v4672 = vsel %vm1306, %v4670, %v4671
      %v4673 = vrot.slane %v4671, 4
      %v4674 = vrot.slane %v3805, 5
      %v4675 = vsel %vm1306, %v4673, %v4674
      %v4676 = vrot.slane %v4534, 5
      %v4677 = vrot.slane %v4676, 4
      %v4678 = vrot.slane %v3807, 5
      %v4679 = vsel %vm1306, %v4677, %v4678
      %v4680 = vrot.slane %v4678, 4
      %v4681 = vrot.slane %v3808, 5
      %v4682 = vsel %vm1306, %v4680, %v4681
      %v4683 = vrot.slane %v4535, 5
      %v4684 = vrot.slane %v4683, 4
      %v4685 = vrot.slane %v3810, 5
      %v4686 = vsel %vm1306, %v4684, %v4685
      %v4687 = vrot.slane %v4685, 4
      %v4688 = vrot.slane %v3811, 5
      %v4689 = vsel %vm1306, %v4687, %v4688
      %v4690 = vrot.slane %v4536, 5
      %v4691 = vrot.slane %v4690, 4
      %v4692 = vrot.slane %v3813, 5
      %v4693 = vsel %vm1306, %v4691, %v4692
      %v4694 = vrot.slane %v4692, 4
      %v4695 = vrot.slane %v3814, 5
      %v4696 = vsel %vm1306, %v4694, %v4695
      %s4697 = scalar_lea.vmem %s1, 512
      %v4698 = vld [vmem:[%s4697] sm:$0xf]
      %v4699 = vld [vmem:[%s4697 + $0x4] sm:$0xf]
      %v4700 = vld [vmem:[%s4697 + $0x8] sm:$0xf]
      %v4701 = vld [vmem:[%s4697 + $0xc] sm:$0xf]
      %v4702 = vld [vmem:[%s4697 + $0x10] sm:$0xf]
      %v4703 = vld [vmem:[%s4697 + $0x14] sm:$0xf]
      %v4704 = vld [vmem:[%s4697 + $0x18] sm:$0xf]
      %v4705 = vld [vmem:[%s4697 + $0x1c] sm:$0xf]
      %v4706 = vld [vmem:[%s4697 + $0x20] sm:$0xf]
      %v4707 = vld [vmem:[%s4697 + $0x24] sm:$0xf]
      %v4708 = vld [vmem:[%s4697 + $0x28] sm:$0xf]
      %v4709 = vld [vmem:[%s4697 + $0x2c] sm:$0xf]
      %v4710 = vld [vmem:[%s4697 + $0x30] sm:$0xf]
      %v4711 = vld [vmem:[%s4697 + $0x34] sm:$0xf]
      %v4712 = vld [vmem:[%s4697 + $0x38] sm:$0xf]
      %v4713 = vld [vmem:[%s4697 + $0x3c] sm:$0xf]
      %v4714 = vunpack.c.l.b16 %v4588
      %v4715 = vunpack.c.l.b16 %v4591
      %v4716 = vunpack.c.l.b16 %v4595
      %v4717 = vunpack.c.l.b16 %v4598
      %v4718 = vunpack.c.l.b16 %v4602
      %v4719 = vunpack.c.l.b16 %v4605
      %v4720 = vunpack.c.l.b16 %v4609
      %v4721 = vunpack.c.l.b16 %v4612
      %v4722 = vunpack.c.l.b16 %v4616
      %v4723 = vunpack.c.l.b16 %v4619
      %v4724 = vunpack.c.l.b16 %v4623
      %v4725 = vunpack.c.l.b16 %v4626
      %v4726 = vunpack.c.l.b16 %v4630
      %v4727 = vunpack.c.l.b16 %v4633
      %v4728 = vunpack.c.l.b16 %v4637
      %v4729 = vunpack.c.l.b16 %v4640
      %v4730 = vunpack.c.l.b16 %v4644
      %v4731 = vunpack.c.l.b16 %v4647
      %v4732 = vunpack.c.l.b16 %v4651
      %v4733 = vunpack.c.l.b16 %v4654
      %v4734 = vunpack.c.l.b16 %v4658
      %v4735 = vunpack.c.l.b16 %v4661
      %v4736 = vunpack.c.l.b16 %v4665
      %v4737 = vunpack.c.l.b16 %v4668
      %v4738 = vunpack.c.l.b16 %v4672
      %v4739 = vunpack.c.l.b16 %v4675
      %v4740 = vunpack.c.l.b16 %v4679
      %v4741 = vunpack.c.l.b16 %v4682
      %v4742 = vunpack.c.l.b16 %v4686
      %v4743 = vunpack.c.l.b16 %v4689
      %v4744 = vunpack.c.l.b16 %v4693
      %v4745 = vunpack.c.l.b16 %v4696
      %v4746 = vpack.c.b16 %v4715, %v4714
      %v4747 = vpack.c.b16 %v4717, %v4716
      %v4748 = vpack.c.b16 %v4719, %v4718
      %v4749 = vpack.c.b16 %v4721, %v4720
      %v4750 = vpack.c.b16 %v4723, %v4722
      %v4751 = vpack.c.b16 %v4725, %v4724
      %v4752 = vpack.c.b16 %v4727, %v4726
      %v4753 = vpack.c.b16 %v4729, %v4728
      %v4754 = vpack.c.b16 %v4731, %v4730
      %v4755 = vpack.c.b16 %v4733, %v4732
      %v4756 = vpack.c.b16 %v4735, %v4734
      %v4757 = vpack.c.b16 %v4737, %v4736
      %v4758 = vpack.c.b16 %v4739, %v4738
      %v4759 = vpack.c.b16 %v4741, %v4740
      %v4760 = vpack.c.b16 %v4743, %v4742
      %v4761 = vpack.c.b16 %v4745, %v4744
      %v4794 = vunpack.c.l.b16 %v4698
      %v4795 = vunpack.c.l.b16 %v4699
      %v4796 = vunpack.c.l.b16 %v4700
      %v4797 = vunpack.c.l.b16 %v4701
      %v4798 = vunpack.c.l.b16 %v4702
      %v4799 = vunpack.c.l.b16 %v4703
      %v4800 = vunpack.c.l.b16 %v4704
      %v4801 = vunpack.c.l.b16 %v4705
      %v4802 = vunpack.c.l.b16 %v4706
      %v4803 = vunpack.c.l.b16 %v4707
      %v4804 = vunpack.c.l.b16 %v4708
      %v4805 = vunpack.c.l.b16 %v4709
      %v4806 = vunpack.c.l.b16 %v4710
      %v4807 = vunpack.c.l.b16 %v4711
      %v4808 = vunpack.c.l.b16 %v4712
      %v4809 = vunpack.c.l.b16 %v4713
      %v4810 = vpack.c.b16 %v4795, %v4794
      %v4811 = vpack.c.b16 %v4797, %v4796
      %v4812 = vpack.c.b16 %v4799, %v4798
      %v4813 = vpack.c.b16 %v4801, %v4800
      %v4814 = vpack.c.b16 %v4803, %v4802
      %v4815 = vpack.c.b16 %v4805, %v4804
      %v4816 = vpack.c.b16 %v4807, %v4806
      %v4817 = vpack.c.b16 %v4809, %v4808
      %4826 = vmatprep.subr.bf16.mxu0 0
      %4827 = vmatpush1.bf16.msra.mxu0 %v4810
      %4828 = vmatprep.subr.bf16.mxu0 0
      %4829 = vmatpush1.bf16.msra.mxu0 %v4811
      %4830 = vmatprep.subr.bf16.mxu0 0
      %4831 = vmatpush1.bf16.msra.mxu0 %v4812
      %4832 = vmatprep.subr.bf16.mxu0 0
      %4833 = vmatpush1.bf16.msra.mxu0 %v4813
      %4834 = vmatprep.subr.bf16.mxu0 0
      %4835 = vmatpush1.bf16.msra.mxu0 %v4814
      %4836 = vmatprep.subr.bf16.mxu0 0
      %4837 = vmatpush1.bf16.msra.mxu0 %v4815
      %4838 = vmatprep.subr.bf16.mxu0 0
      %4839 = vmatpush1.bf16.msra.mxu0 %v4816
      %4840 = vmatprep.subr.bf16.mxu0 0
      %4841 = vmatpush1.bf16.msra.mxu0 %v4817
      %4842 = vmatprep.subr.bf16.mxu0 0
      %4843 = vmatpush1.bf16.msra.mxu0 0
      %4844 = vmatprep.subr.bf16.mxu0 0
      %4845 = vmatpush1.bf16.msra.mxu0 0
      %4846 = vmatprep.subr.bf16.mxu0 0
      %4847 = vmatpush1.bf16.msra.mxu0 0
      %4848 = vmatprep.subr.bf16.mxu0 0
      %4849 = vmatpush1.bf16.msra.mxu0 0
      %4850 = vmatprep.subr.bf16.mxu0 0
      %4851 = vmatpush1.bf16.msra.mxu0 0
      %4852 = vmatprep.subr.bf16.mxu0 0
      %4853 = vmatpush1.bf16.msra.mxu0 0
      %4854 = vmatprep.subr.bf16.mxu0 0
      %4855 = vmatpush1.bf16.msra.mxu0 0
      %4856 = vmatprep.subr.bf16.mxu0 0
      %4857 = vmatpush1.bf16.msra.mxu0 0
      %4858 = vmatprep.mubr.bf16.mxu0 0
      %4859 = vmatmul.mubr.bf16.gmra.mrb[0].mxu0 %v4746
      %v4860 = vpop.f32.mrb[0].mxu0
      %v4861 = vadd.f32 0.0, %v4860
      %v4862 = vpop.f32.mrb[0].mxu0
      %v4863 = vpop.f32.mrb[0].mxu0
      %v4864 = vadd.f32 0.0, %v4863
      %v4865 = vpop.f32.mrb[0].mxu0
      %4866 = vmatprep.mubr.bf16.mxu0 0
      %4867 = vmatmul.mubr.bf16.gmra.mrb[0].mxu0 %v4747
      %v4868 = vpop.f32.mrb[0].mxu0
      %v4869 = vadd.f32 0.0, %v4868
      %v4870 = vpop.f32.mrb[0].mxu0
      %v4871 = vpop.f32.mrb[0].mxu0
      %v4872 = vadd.f32 0.0, %v4871
      %v4873 = vpop.f32.mrb[0].mxu0
      %4874 = vmatprep.mubr.bf16.mxu0 0
      %4875 = vmatmul.mubr.bf16.gmra.mrb[0].mxu0 %v4748
      %v4876 = vpop.f32.mrb[0].mxu0
      %v4877 = vadd.f32 0.0, %v4876
      %v4878 = vpop.f32.mrb[0].mxu0
      %v4879 = vpop.f32.mrb[0].mxu0
      %v4880 = vadd.f32 0.0, %v4879
      %v4881 = vpop.f32.mrb[0].mxu0
      %4882 = vmatprep.mubr.bf16.mxu0 0
      %4883 = vmatmul.mubr.bf16.gmra.mrb[0].mxu0 %v4749
      %v4884 = vpop.f32.mrb[0].mxu0
      %v4885 = vadd.f32 0.0, %v4884
      %v4886 = vpop.f32.mrb[0].mxu0
      %v4887 = vpop.f32.mrb[0].mxu0
      %v4888 = vadd.f32 0.0, %v4887
      %v4889 = vpop.f32.mrb[0].mxu0
      %4890 = vmatprep.mubr.bf16.mxu0 0
      %4891 = vmatmul.mubr.bf16.gmra.mrb[0].mxu0 %v4750
      %v4892 = vpop.f32.mrb[0].mxu0
      %v4893 = vadd.f32 0.0, %v4892
      %v4894 = vpop.f32.mrb[0].mxu0
      %v4895 = vpop.f32.mrb[0].mxu0
      %v4896 = vadd.f32 0.0, %v4895
      %v4897 = vpop.f32.mrb[0].mxu0
      %4898 = vmatprep.mubr.bf16.mxu0 0
      %4899 = vmatmul.mubr.bf16.gmra.mrb[0].mxu0 %v4751
      %v4900 = vpop.f32.mrb[0].mxu0
      %v4901 = vadd.f32 0.0, %v4900
      %v4902 = vpop.f32.mrb[0].mxu0
      %v4903 = vpop.f32.mrb[0].mxu0
      %v4904 = vadd.f32 0.0, %v4903
      %v4905 = vpop.f32.mrb[0].mxu0
      %4906 = vmatprep.mubr.bf16.mxu0 0
      %4907 = vmatmul.mubr.bf16.gmra.mrb[0].mxu0 %v4752
      %v4908 = vpop.f32.mrb[0].mxu0
      %v4909 = vadd.f32 0.0, %v4908
      %v4910 = vpop.f32.mrb[0].mxu0
      %v4911 = vpop.f32.mrb[0].mxu0
      %v4912 = vadd.f32 0.0, %v4911
      %v4913 = vpop.f32.mrb[0].mxu0
      %4914 = vmatprep.mubr.bf16.mxu0 0
      %4915 = vmatmul.mubr.bf16.gmra.mrb[0].mxu0 %v4753
      %v4916 = vpop.f32.mrb[0].mxu0
      %v4917 = vadd.f32 0.0, %v4916
      %v4918 = vpop.f32.mrb[0].mxu0
      %v4919 = vpop.f32.mrb[0].mxu0
      %v4920 = vadd.f32 0.0, %v4919
      %v4921 = vpop.f32.mrb[0].mxu0
      %4922 = vmatprep.mubr.bf16.mxu0 0
      %4923 = vmatmul.mubr.bf16.gmra.mrb[0].mxu0 %v4754
      %v4924 = vpop.f32.mrb[0].mxu0
      %v4925 = vadd.f32 0.0, %v4924
      %v4926 = vpop.f32.mrb[0].mxu0
      %v4927 = vpop.f32.mrb[0].mxu0
      %v4928 = vadd.f32 0.0, %v4927
      %v4929 = vpop.f32.mrb[0].mxu0
      %4930 = vmatprep.mubr.bf16.mxu0 0
      %4931 = vmatmul.mubr.bf16.gmra.mrb[0].mxu0 %v4755
      %v4932 = vpop.f32.mrb[0].mxu0
      %v4933 = vadd.f32 0.0, %v4932
      %v4934 = vpop.f32.mrb[0].mxu0
      %v4935 = vpop.f32.mrb[0].mxu0
      %v4936 = vadd.f32 0.0, %v4935
      %v4937 = vpop.f32.mrb[0].mxu0
      %4938 = vmatprep.mubr.bf16.mxu0 0
      %4939 = vmatmul.mubr.bf16.gmra.mrb[0].mxu0 %v4756
      %v4940 = vpop.f32.mrb[0].mxu0
      %v4941 = vadd.f32 0.0, %v4940
      %v4942 = vpop.f32.mrb[0].mxu0
      %v4943 = vpop.f32.mrb[0].mxu0
      %v4944 = vadd.f32 0.0, %v4943
      %v4945 = vpop.f32.mrb[0].mxu0
      %4946 = vmatprep.mubr.bf16.mxu0 0
      %4947 = vmatmul.mubr.bf16.gmra.mrb[0].mxu0 %v4757
      %v4948 = vpop.f32.mrb[0].mxu0
      %v4949 = vadd.f32 0.0, %v4948
      %v4950 = vpop.f32.mrb[0].mxu0
      %v4951 = vpop.f32.mrb[0].mxu0
      %v4952 = vadd.f32 0.0, %v4951
      %v4953 = vpop.f32.mrb[0].mxu0
      %4954 = vmatprep.mubr.bf16.mxu0 0
      %4955 = vmatmul.mubr.bf16.gmra.mrb[0].mxu0 %v4758
      %v4956 = vpop.f32.mrb[0].mxu0
      %v4957 = vadd.f32 0.0, %v4956
      %v4958 = vpop.f32.mrb[0].mxu0
      %v4959 = vpop.f32.mrb[0].mxu0
      %v4960 = vadd.f32 0.0, %v4959
      %v4961 = vpop.f32.mrb[0].mxu0
      %4962 = vmatprep.mubr.bf16.mxu0 0
      %4963 = vmatmul.mubr.bf16.gmra.mrb[0].mxu0 %v4759
      %v4964 = vpop.f32.mrb[0].mxu0
      %v4965 = vadd.f32 0.0, %v4964
      %v4966 = vpop.f32.mrb[0].mxu0
      %v4967 = vpop.f32.mrb[0].mxu0
      %v4968 = vadd.f32 0.0, %v4967
      %v4969 = vpop.f32.mrb[0].mxu0
      %4970 = vmatprep.mubr.bf16.mxu0 0
      %4971 = vmatmul.mubr.bf16.gmra.mrb[0].mxu0 %v4760
      %v4972 = vpop.f32.mrb[0].mxu0
      %v4973 = vadd.f32 0.0, %v4972
      %v4974 = vpop.f32.mrb[0].mxu0
      %v4975 = vpop.f32.mrb[0].mxu0
      %v4976 = vadd.f32 0.0, %v4975
      %v4977 = vpop.f32.mrb[0].mxu0
      %4978 = vmatprep.mubr.bf16.mxu0 0
      %4979 = vmatmul.mubr.bf16.gmra.mrb[0].mxu0 %v4761
      %v4980 = vpop.f32.mrb[0].mxu0
      %v4981 = vadd.f32 0.0, %v4980
      %v4982 = vpop.f32.mrb[0].mxu0
      %v4983 = vpop.f32.mrb[0].mxu0
      %v4984 = vadd.f32 0.0, %v4983
      %v4985 = vpop.f32.mrb[0].mxu0
      %4986 = vdwg.mxu0
      %v4987 = vadd.f32 %v4489, %v4861
      %v4988 = vadd.f32 %v4490, %v4864
      %v4989 = vadd.f32 %v4491, %v4869
      %v4990 = vadd.f32 %v4492, %v4872
      %v4991 = vadd.f32 %v4493, %v4877
      %v4992 = vadd.f32 %v4494, %v4880
      %v4993 = vadd.f32 %v4495, %v4885
      %v4994 = vadd.f32 %v4496, %v4888
      %v4995 = vadd.f32 %v4497, %v4893
      %v4996 = vadd.f32 %v4498, %v4896
      %v4997 = vadd.f32 %v4499, %v4901
      %v4998 = vadd.f32 %v4500, %v4904
      %v4999 = vadd.f32 %v4501, %v4909
      %v5000 = vadd.f32 %v4502, %v4912
      %v5001 = vadd.f32 %v4503, %v4917
      %v5002 = vadd.f32 %v4504, %v4920
      %v5003 = vadd.f32 %v4505, %v4925
      %v5004 = vadd.f32 %v4506, %v4928
      %v5005 = vadd.f32 %v4507, %v4933
      %v5006 = vadd.f32 %v4508, %v4936
      %v5007 = vadd.f32 %v4509, %v4941
      %v5008 = vadd.f32 %v4510, %v4944
      %v5009 = vadd.f32 %v4511, %v4949
      %v5010 = vadd.f32 %v4512, %v4952
      %v5011 = vadd.f32 %v4513, %v4957
      %v5012 = vadd.f32 %v4514, %v4960
      %v5013 = vadd.f32 %v4515, %v4965
      %v5014 = vadd.f32 %v4516, %v4968
      %v5015 = vadd.f32 %v4517, %v4973
      %v5016 = vadd.f32 %v4518, %v4976
      %v5017 = vadd.f32 %v4519, %v4981
      %v5018 = vadd.f32 %v4520, %v4984
      %v5019 = vld [vmem:[%s2] sm:$0x1]
      %v5021 = vlaneseq
      %v5022 = vshrl.u32 %v5021, 7
      %v5023 = vsub.s32 0, %v5022
      %v5024 = vrot.slane %v5019, %v5023
      %v5026 = vadd.f32 %v4987, %v5024
      %v5027 = vadd.f32 %v4988, %v5024
      %v5028 = vadd.f32 %v4989, %v5024
      %v5029 = vadd.f32 %v4990, %v5024
      %v5030 = vadd.f32 %v4991, %v5024
      %v5031 = vadd.f32 %v4992, %v5024
      %v5032 = vadd.f32 %v4993, %v5024
      %v5033 = vadd.f32 %v4994, %v5024
      %v5034 = vadd.f32 %v4995, %v5024
      %v5035 = vadd.f32 %v4996, %v5024
      %v5036 = vadd.f32 %v4997, %v5024
      %v5037 = vadd.f32 %v4998, %v5024
      %v5038 = vadd.f32 %v4999, %v5024
      %v5039 = vadd.f32 %v5000, %v5024
      %v5040 = vadd.f32 %v5001, %v5024
      %v5041 = vadd.f32 %v5002, %v5024
      %v5042 = vadd.f32 %v5003, %v5024
      %v5043 = vadd.f32 %v5004, %v5024
      %v5044 = vadd.f32 %v5005, %v5024
      %v5045 = vadd.f32 %v5006, %v5024
      %v5046 = vadd.f32 %v5007, %v5024
      %v5047 = vadd.f32 %v5008, %v5024
      %v5048 = vadd.f32 %v5009, %v5024
      %v5049 = vadd.f32 %v5010, %v5024
      %v5050 = vadd.f32 %v5011, %v5024
      %v5051 = vadd.f32 %v5012, %v5024
      %v5052 = vadd.f32 %v5013, %v5024
      %v5053 = vadd.f32 %v5014, %v5024
      %v5054 = vadd.f32 %v5015, %v5024
      %v5055 = vadd.f32 %v5016, %v5024
      %v5056 = vadd.f32 %v5017, %v5024
      %v5057 = vadd.f32 %v5018, %v5024
      %v5058 = vpack.c.bf16 %v5027, %v5026
      %v5059 = vpack.c.bf16 %v5029, %v5028
      %v5060 = vpack.c.bf16 %v5031, %v5030
      %v5061 = vpack.c.bf16 %v5033, %v5032
      %v5062 = vpack.c.bf16 %v5035, %v5034
      %v5063 = vpack.c.bf16 %v5037, %v5036
      %v5064 = vpack.c.bf16 %v5039, %v5038
      %v5065 = vpack.c.bf16 %v5041, %v5040
      %v5066 = vpack.c.bf16 %v5043, %v5042
      %v5067 = vpack.c.bf16 %v5045, %v5044
      %v5068 = vpack.c.bf16 %v5047, %v5046
      %v5069 = vpack.c.bf16 %v5049, %v5048
      %v5070 = vpack.c.bf16 %v5051, %v5050
      %v5071 = vpack.c.bf16 %v5053, %v5052
      %v5072 = vpack.c.bf16 %v5055, %v5054
      %v5073 = vpack.c.bf16 %v5057, %v5056
      %v5090 = vunpack.c.l.b16 %v5058
      %v5091 = vunpack.c.h.b16 %v5058
      %v5092 = vunpack.c.l.b16 %v5059
      %v5093 = vunpack.c.h.b16 %v5059
      %v5094 = vunpack.c.l.b16 %v5060
      %v5095 = vunpack.c.h.b16 %v5060
      %v5096 = vunpack.c.l.b16 %v5061
      %v5097 = vunpack.c.h.b16 %v5061
      %v5098 = vunpack.c.l.b16 %v5062
      %v5099 = vunpack.c.h.b16 %v5062
      %v5100 = vunpack.c.l.b16 %v5063
      %v5101 = vunpack.c.h.b16 %v5063
      %v5102 = vunpack.c.l.b16 %v5064
      %v5103 = vunpack.c.h.b16 %v5064
      %v5104 = vunpack.c.l.b16 %v5065
      %v5105 = vunpack.c.h.b16 %v5065
      %v5106 = vunpack.c.l.b16 %v5066
      %v5107 = vunpack.c.h.b16 %v5066
      %v5108 = vunpack.c.l.b16 %v5067
      %v5109 = vunpack.c.h.b16 %v5067
      %v5110 = vunpack.c.l.b16 %v5068
      %v5111 = vunpack.c.h.b16 %v5068
      %v5112 = vunpack.c.l.b16 %v5069
      %v5113 = vunpack.c.h.b16 %v5069
      %v5114 = vunpack.c.l.b16 %v5070
      %v5115 = vunpack.c.h.b16 %v5070
      %v5116 = vunpack.c.l.b16 %v5071
      %v5117 = vunpack.c.h.b16 %v5071
      %v5118 = vunpack.c.l.b16 %v5072
      %v5119 = vunpack.c.h.b16 %v5072
      %v5120 = vunpack.c.l.b16 %v5073
      %v5121 = vunpack.c.h.b16 %v5073
      %v5122 = vpack.c.b16 %v5090, %v5090
      %v5123 = vpack.c.b16 %v5091, %v5091
      %v5124 = vpack.c.b16 %v5092, %v5092
      %v5125 = vpack.c.b16 %v5093, %v5093
      %v5126 = vpack.c.b16 %v5094, %v5094
      %v5127 = vpack.c.b16 %v5095, %v5095
      %v5128 = vpack.c.b16 %v5096, %v5096
      %v5129 = vpack.c.b16 %v5097, %v5097
      %v5130 = vpack.c.b16 %v5098, %v5098
      %v5131 = vpack.c.b16 %v5099, %v5099
      %v5132 = vpack.c.b16 %v5100, %v5100
      %v5133 = vpack.c.b16 %v5101, %v5101
      %v5134 = vpack.c.b16 %v5102, %v5102
      %v5135 = vpack.c.b16 %v5103, %v5103
      %v5136 = vpack.c.b16 %v5104, %v5104
      %v5137 = vpack.c.b16 %v5105, %v5105
      %v5138 = vpack.c.b16 %v5106, %v5106
      %v5139 = vpack.c.b16 %v5107, %v5107
      %v5140 = vpack.c.b16 %v5108, %v5108
      %v5141 = vpack.c.b16 %v5109, %v5109
      %v5142 = vpack.c.b16 %v5110, %v5110
      %v5143 = vpack.c.b16 %v5111, %v5111
      %v5144 = vpack.c.b16 %v5112, %v5112
      %v5145 = vpack.c.b16 %v5113, %v5113
      %v5146 = vpack.c.b16 %v5114, %v5114
      %v5147 = vpack.c.b16 %v5115, %v5115
      %v5148 = vpack.c.b16 %v5116, %v5116
      %v5149 = vpack.c.b16 %v5117, %v5117
      %v5150 = vpack.c.b16 %v5118, %v5118
      %v5151 = vpack.c.b16 %v5119, %v5119
      %v5152 = vpack.c.b16 %v5120, %v5120
      %v5153 = vpack.c.b16 %v5121, %v5121
      %5186 = vst [vmem:[%s204] sm:$0xf] %v5122
      %5187 = vst [vmem:[%s204 + $0x4] sm:$0xf] %v5123
      %5188 = vst [vmem:[%s204 + $0x8] sm:$0xf] %v5124
      %5189 = vst [vmem:[%s204 + $0xc] sm:$0xf] %v5125
      %5190 = vst [vmem:[%s204 + $0x10] sm:$0xf] %v5126
      %5191 = vst [vmem:[%s204 + $0x14] sm:$0xf] %v5127
      %5192 = vst [vmem:[%s204 + $0x18] sm:$0xf] %v5128
      %5193 = vst [vmem:[%s204 + $0x1c] sm:$0xf] %v5129
      %5194 = vst [vmem:[%s204 + $0x20] sm:$0xf] %v5130
      %5195 = vst [vmem:[%s204 + $0x24] sm:$0xf] %v5131
      %5196 = vst [vmem:[%s204 + $0x28] sm:$0xf] %v5132
      %5197 = vst [vmem:[%s204 + $0x2c] sm:$0xf] %v5133
      %5198 = vst [vmem:[%s204 + $0x30] sm:$0xf] %v5134
      %5199 = vst [vmem:[%s204 + $0x34] sm:$0xf] %v5135
      %5200 = vst [vmem:[%s204 + $0x38] sm:$0xf] %v5136
      %5201 = vst [vmem:[%s204 + $0x3c] sm:$0xf] %v5137
      %5202 = vst [vmem:[%s204 + $0x40] sm:$0xf] %v5138
      %5203 = vst [vmem:[%s204 + $0x44] sm:$0xf] %v5139
      %5204 = vst [vmem:[%s204 + $0x48] sm:$0xf] %v5140
      %5205 = vst [vmem:[%s204 + $0x4c] sm:$0xf] %v5141
      %5206 = vst [vmem:[%s204 + $0x50] sm:$0xf] %v5142
      %5207 = vst [vmem:[%s204 + $0x54] sm:$0xf] %v5143
      %5208 = vst [vmem:[%s204 + $0x58] sm:$0xf] %v5144
      %5209 = vst [vmem:[%s204 + $0x5c] sm:$0xf] %v5145
      %5210 = vst [vmem:[%s204 + $0x60] sm:$0xf] %v5146
      %5211 = vst [vmem:[%s204 + $0x64] sm:$0xf] %v5147
      %5212 = vst [vmem:[%s204 + $0x68] sm:$0xf] %v5148
      %5213 = vst [vmem:[%s204 + $0x6c] sm:$0xf] %v5149
      %5214 = vst [vmem:[%s204 + $0x70] sm:$0xf] %v5150
      %5215 = vst [vmem:[%s204 + $0x74] sm:$0xf] %v5151
      %5216 = vst [vmem:[%s204 + $0x78] sm:$0xf] %v5152
      %5217 = vst [vmem:[%s204 + $0x7c] sm:$0xf] %v5153
      %v5218 = vadd.f32 %v5026, %v5027
      %v5219 = vadd.f32 %v5218, %v5028
      %v5220 = vadd.f32 %v5219, %v5029
      %v5221 = vadd.f32 %v5220, %v5030
      %v5222 = vadd.f32 %v5221, %v5031
      %v5223 = vadd.f32 %v5222, %v5032
      %v5224 = vadd.f32 %v5223, %v5033
      %v5225 = vadd.f32 %v5224, %v5034
      %v5226 = vadd.f32 %v5225, %v5035
      %v5227 = vadd.f32 %v5226, %v5036
      %v5228 = vadd.f32 %v5227, %v5037
      %v5229 = vadd.f32 %v5228, %v5038
      %v5230 = vadd.f32 %v5229, %v5039
      %v5231 = vadd.f32 %v5230, %v5040
      %v5232 = vadd.f32 %v5231, %v5041
      %v5233 = vadd.f32 %v5232, %v5042
      %v5234 = vadd.f32 %v5233, %v5043
      %v5235 = vadd.f32 %v5234, %v5044
      %v5236 = vadd.f32 %v5235, %v5045
      %v5237 = vadd.f32 %v5236, %v5046
      %v5238 = vadd.f32 %v5237, %v5047
      %v5239 = vadd.f32 %v5238, %v5048
      %v5240 = vadd.f32 %v5239, %v5049
      %v5241 = vadd.f32 %v5240, %v5050
      %v5242 = vadd.f32 %v5241, %v5051
      %v5243 = vadd.f32 %v5242, %v5052
      %v5244 = vadd.f32 %v5243, %v5053
      %v5245 = vadd.f32 %v5244, %v5054
      %v5246 = vadd.f32 %v5245, %v5055
      %v5247 = vadd.f32 %v5246, %v5056
      %v5248 = vadd.f32 %v5247, %v5057
      %v5249 = vrot.slane %v5248, 4
      %v5250 = vadd.f32 %v5248, %v5249
      %v5251 = vrot.slane %v5250, 2
      %v5252 = vadd.f32 %v5250, %v5251
      %v5253 = vrot.slane %v5252, 1
      %v5254 = vadd.f32 %v5252, %v5253
      %v5255 = vrcp.pop 256.0
      %v5256 = vmul.f32 %v5254, %v5255
      %v5257 = vsub.f32 %v5026, %v5256
      %v5258 = vsub.f32 %v5027, %v5256
      %v5259 = vsub.f32 %v5028, %v5256
      %v5260 = vsub.f32 %v5029, %v5256
      %v5261 = vsub.f32 %v5030, %v5256
      %v5262 = vsub.f32 %v5031, %v5256
      %v5263 = vsub.f32 %v5032, %v5256
      %v5264 = vsub.f32 %v5033, %v5256
      %v5265 = vsub.f32 %v5034, %v5256
      %v5266 = vsub.f32 %v5035, %v5256
      %v5267 = vsub.f32 %v5036, %v5256
      %v5268 = vsub.f32 %v5037, %v5256
      %v5269 = vsub.f32 %v5038, %v5256
      %v5270 = vsub.f32 %v5039, %v5256
      %v5271 = vsub.f32 %v5040, %v5256
      %v5272 = vsub.f32 %v5041, %v5256
      %v5273 = vsub.f32 %v5042, %v5256
      %v5274 = vsub.f32 %v5043, %v5256
      %v5275 = vsub.f32 %v5044, %v5256
      %v5276 = vsub.f32 %v5045, %v5256
      %v5277 = vsub.f32 %v5046, %v5256
      %v5278 = vsub.f32 %v5047, %v5256
      %v5279 = vsub.f32 %v5048, %v5256
      %v5280 = vsub.f32 %v5049, %v5256
      %v5281 = vsub.f32 %v5050, %v5256
      %v5282 = vsub.f32 %v5051, %v5256
      %v5283 = vsub.f32 %v5052, %v5256
      %v5284 = vsub.f32 %v5053, %v5256
      %v5285 = vsub.f32 %v5054, %v5256
      %v5286 = vsub.f32 %v5055, %v5256
      %v5287 = vsub.f32 %v5056, %v5256
      %v5288 = vsub.f32 %v5057, %v5256
      %v5289 = vmul.f32 %v5257, %v5257
      %v5290 = vmul.f32 %v5258, %v5258
      %v5291 = vmul.f32 %v5259, %v5259
      %v5292 = vmul.f32 %v5260, %v5260
      %v5293 = vmul.f32 %v5261, %v5261
      %v5294 = vmul.f32 %v5262, %v5262
      %v5295 = vmul.f32 %v5263, %v5263
      %v5296 = vmul.f32 %v5264, %v5264
      %v5297 = vmul.f32 %v5265, %v5265
      %v5298 = vmul.f32 %v5266, %v5266
      %v5299 = vmul.f32 %v5267, %v5267
      %v5300 = vmul.f32 %v5268, %v5268
      %v5301 = vmul.f32 %v5269, %v5269
      %v5302 = vmul.f32 %v5270, %v5270
      %v5303 = vmul.f32 %v5271, %v5271
      %v5304 = vmul.f32 %v5272, %v5272
      %v5305 = vmul.f32 %v5273, %v5273
      %v5306 = vmul.f32 %v5274, %v5274
      %v5307 = vmul.f32 %v5275, %v5275
      %v5308 = vmul.f32 %v5276, %v5276
      %v5309 = vmul.f32 %v5277, %v5277
      %v5310 = vmul.f32 %v5278, %v5278
      %v5311 = vmul.f32 %v5279, %v5279
      %v5312 = vmul.f32 %v5280, %v5280
      %v5313 = vmul.f32 %v5281, %v5281
      %v5314 = vmul.f32 %v5282, %v5282
      %v5315 = vmul.f32 %v5283, %v5283
      %v5316 = vmul.f32 %v5284, %v5284
      %v5317 = vmul.f32 %v5285, %v5285
      %v5318 = vmul.f32 %v5286, %v5286
      %v5319 = vmul.f32 %v5287, %v5287
      %v5320 = vmul.f32 %v5288, %v5288
      %v5321 = vadd.f32 %v5289, %v5290
      %v5322 = vadd.f32 %v5321, %v5291
      %v5323 = vadd.f32 %v5322, %v5292
      %v5324 = vadd.f32 %v5323, %v5293
      %v5325 = vadd.f32 %v5324, %v5294
      %v5326 = vadd.f32 %v5325, %v5295
      %v5327 = vadd.f32 %v5326, %v5296
      %v5328 = vadd.f32 %v5327, %v5297
      %v5329 = vadd.f32 %v5328, %v5298
      %v5330 = vadd.f32 %v5329, %v5299
      %v5331 = vadd.f32 %v5330, %v5300
      %v5332 = vadd.f32 %v5331, %v5301
      %v5333 = vadd.f32 %v5332, %v5302
      %v5334 = vadd.f32 %v5333, %v5303
      %v5335 = vadd.f32 %v5334, %v5304
      %v5336 = vadd.f32 %v5335, %v5305
      %v5337 = vadd.f32 %v5336, %v5306
      %v5338 = vadd.f32 %v5337, %v5307
      %v5339 = vadd.f32 %v5338, %v5308
      %v5340 = vadd.f32 %v5339, %v5309
      %v5341 = vadd.f32 %v5340, %v5310
      %v5342 = vadd.f32 %v5341, %v5311
      %v5343 = vadd.f32 %v5342, %v5312
      %v5344 = vadd.f32 %v5343, %v5313
      %v5345 = vadd.f32 %v5344, %v5314
      %v5346 = vadd.f32 %v5345, %v5315
      %v5347 = vadd.f32 %v5346, %v5316
      %v5348 = vadd.f32 %v5347, %v5317
      %v5349 = vadd.f32 %v5348, %v5318
      %v5350 = vadd.f32 %v5349, %v5319
      %v5351 = vadd.f32 %v5350, %v5320
      %v5352 = vrot.slane %v5351, 4
      %v5353 = vadd.f32 %v5351, %v5352
      %v5354 = vrot.slane %v5353, 2
      %v5355 = vadd.f32 %v5353, %v5354
      %v5356 = vrot.slane %v5355, 1
      %v5357 = vadd.f32 %v5355, %v5356
      %5358 = vst [vmem:[%s208] sm:$0x1] %v5254
      %5359 = vst [vmem:[%s208 + $0x1] sm:$0x1] %v5357
      %p5360 = scmp.lt.s32.totalorder %s16, 1
      %s5361 = scalar_select %p5360, %s16, 1
      %s5362 = smul.addr %s5361, 32
      %s5363 = smul.addr %s5362, 4
      %s5364 = scalar_lea.vmem %s3, %s5363
      %p5365 = scmp.lt.s32.totalorder %s16, 1
      %s5366 = scalar_select %p5365, %s16, 1
      %s5367 = smul.addr %s5366, 2
      %s5368 = scalar_lea.vmem %s4, %s5367
      // Predicated region
      $region33: #{_lambda_.3} parent=31 // pred_check
        %p5369 = pneg %p102
      $region34: #{_lambda_.3} parent=31 // pred_check_branch
        %5371 = sbr.rel (%p5369) target = $region36
      $region35: #{_lambda_.3} parent=31 // pred_region
        _
      $region36: #{_lambda_.3} parent=31 // pred_fallthru
        _
      // Predicated region
      $region37: #{_lambda_.3} parent=31 // pred_check
        %p5372 = pneg %p128
      $region38: #{_lambda_.3} parent=31 // pred_check_branch
        %5374 = sbr.rel (%p5372) target = $region40
      $region39: #{_lambda_.3} parent=31 // pred_region
        _
      $region40: #{_lambda_.3} parent=31 // pred_fallthru
        _
    $region32: #{_lambda_.3} parent=5 // pred_fallthru
      _
    %p5375 = scmp.le.s32.totalorder 2, %s11
    // Predicated region
    $region41: #{_lambda_.3} parent=5 // pred_check
      %p5376 = pneg %p5375
    $region42: #{_lambda_.3} parent=5 // pred_check_branch
      %5378 = sbr.rel (%p5376) target = $region44
    $region43: #{_lambda_.3} parent=5 // pred_region
      %s5379 = ssub.s32 %s11, 2
      // Predicated region
      $region45: #{_lambda_.3} parent=43 // pred_check
        %p5380 = pneg %p108
      $region46: #{_lambda_.3} parent=43 // pred_check_branch
        %5382 = sbr.rel (%p5380) target = $region48
      $region47: #{_lambda_.3} parent=43 // pred_region
        %p5383 = scmp.lt.s32.totalorder %s17, 1
        %s5384 = scalar_select %p5383, %s17, 1
        %s5385 = smul.addr %s5384, 32
        %s5386 = smul.addr %s5385, 4
        %s5387 = scalar_lea.vmem %s3, %s5386
      $region48: #{_lambda_.3} parent=43 // pred_fallthru
        _
      // Predicated region
      $region49: #{_lambda_.3} parent=43 // pred_check
        %p5388 = pneg %p134
      $region50: #{_lambda_.3} parent=43 // pred_check_branch
        %5390 = sbr.rel (%p5388) target = $region52
      $region51: #{_lambda_.3} parent=43 // pred_region
        %p5391 = scmp.lt.s32.totalorder %s17, 1
        %s5392 = scalar_select %p5391, %s17, 1
        %s5393 = smul.addr %s5392, 2
        %s5394 = scalar_lea.vmem %s4, %s5393
      $region52: #{_lambda_.3} parent=43 // pred_fallthru
        _
    $region44: #{_lambda_.3} parent=5 // pred_fallthru
      _
  $region6: #{_lambda_.3} parent=0 // loop_footer
    %s15 = sadd.s32 1, %s11
  $region7: #{_lambda_.3} parent=0 // loop_footer_branch
    %10 = sbr.rel target = $region3
  $region8: #{_lambda_.3} parent=0 // loop_exit
    _

// kernel: _lambda_.4
$region0: #{_lambda_.4}
  #allocation0 [shape = 'u32[]', space=smem, size = 0x4, offset = 0x4, fixed_abs, tag = 'smem constant byte address 0x4 - core index']
  #allocation1 [shape = 'u32[144,128]{1,0:T(1,128)}', space=vmem, size = 0x12000, scoped, tag = 'internal scratch']
  #allocation2 [shape = 'bf16[18,18,128]{2,1,0:T(8,128)(2,1)}', space=vmem, size = 0x1b000, scoped, tag = 'scratch operand']
  %s0 = inlined_call_operand.vmem [shape: bf16[2,16,16,128], index: 0, kind: input, shape index: {}]
  %s1 = inlined_call_operand.vmem [shape: f32[1,128], index: 1, kind: input, shape index: {}]
  %s2 = inlined_call_operand.vmem [shape: f32[1,128], index: 2, kind: input, shape index: {}]
  %s3 = inlined_call_operand.vmem [shape: bf16[9,128,128], index: 3, kind: input, shape index: {}]
  %s4 = inlined_call_operand.vmem [shape: f32[1,128], index: 4, kind: input, shape index: {}]
  %s5 = inlined_call_operand.vmem [shape: bf16[2,16,16,128], index: 5, kind: output, shape index: {0}]
  %s6 = inlined_call_operand.vmem [shape: f32[2,2,128], index: 6, kind: output, shape index: {1}]
  %7 = xla_tuple %s5, %s6
  %s8 = sld [smem:[#allocation0]]
  $region61: #{_lambda_.4} parent=0
    _
  %s10 = ssub.s32 1, %s8
  %s11 = scalar_select 0, %s10, %s8
  loop: start=0, step=1, limit=4
  $region2: #{_lambda_.4} parent=0 // loop_pre_header
    _
  $region3: #{_lambda_.4} parent=0 // loop_header
    %s13 = sphi 0, %s17
    %p14 = scmp.ge.s32.totalorder %s13, 4
    %s23 = sphi 0, %s25
    %s26 = sphi 0, %s23
    %s27 = sphi 0, %s26
    %s43 = sphi 0, %s27
    %s47 = sphi 0, %s47
    %s49 = sphi 0, %s47
    %s50 = sphi 0, %s49
    %s64 = sphi 0, %s50
    %s68 = sphi 0, %s68
    %s70 = sphi 0, %s68
    %s71 = sphi 0, %s70
    %s85 = sphi 0, %s71
    %s89 = sphi 0, %s89
    %s91 = sphi 0, %s89
    %s92 = sphi 0, %s91
    %s106 = sphi 0, %s92
    %s110 = sphi 0, %s110
    %s112 = sphi 0, %s110
    %s113 = sphi 0, %s112
    %s127 = sphi 0, %s113
    %s133 = sphi 0, %s135
    %s136 = sphi 0, %s133
    %s137 = sphi 0, %s136
    %s153 = sphi 0, %s137
    %s159 = sphi 0, %s161
    %s162 = sphi 0, %s159
    %s163 = sphi 0, %s162
    %s179 = sphi 0, %s163
  $region4: #{_lambda_.4} parent=0 // loop_header_branch
    %16 = sbr.rel (%p14) target = $region8
  $region5: #{_lambda_.4} parent=0 // loop_body
    %s18 = ssub.s32 %s13, 1
    %s19 = ssub.s32 %s13, 2
    %s20 = sadd.s32 %s13, 1
    %s21 = ssub.s32 %s13, %s20
    %p22 = scmp.eq.s32.totalorder %s21, 0
    %s24 = sadd.s32 %s23, 1
    %s25 = scalar_select %p22, %s23, %s24
    %p28 = pneg %p22
    %p29 = scmp.eq.s32.totalorder %s13, 1
    %p30 = por %p28, %p29
    %p31 = scmp.ne.s32.totalorder %s23, %s26
    %p32 = scmp.eq.s32.totalorder %s13, 0
    %p33 = por %p31, %p32
    %p34 = scmp.ne.s32.totalorder %s23, %s26
    %p35 = scmp.eq.s32.totalorder %s18, 1
    %p36 = por %p34, %p35
    %p37 = scmp.ne.s32.totalorder %s26, %s27
    %p38 = scmp.eq.s32.totalorder %s18, 0
    %p39 = por %p37, %p38
    %p40 = scmp.ne.s32.totalorder %s26, %s27
    %p41 = scmp.eq.s32.totalorder %s19, 1
    %p42 = por %p40, %p41
    %p44 = scmp.ne.s32.totalorder %s27, %s43
    %p45 = scmp.eq.s32.totalorder %s19, 0
    %p46 = por %p44, %p45
    %s48 = sadd.s32 %s47, 1
    %p51 = scmp.eq.s32.totalorder %s13, 1
    %p52 = scmp.ne.s32.totalorder %s47, %s49
    %p53 = scmp.eq.s32.totalorder %s13, 0
    %p54 = por %p52, %p53
    %p55 = scmp.ne.s32.totalorder %s47, %s49
    %p56 = scmp.eq.s32.totalorder %s18, 1
    %p57 = por %p55, %p56
    %p58 = scmp.ne.s32.totalorder %s49, %s50
    %p59 = scmp.eq.s32.totalorder %s18, 0
    %p60 = por %p58, %p59
    %p61 = scmp.ne.s32.totalorder %s49, %s50
    %p62 = scmp.eq.s32.totalorder %s19, 1
    %p63 = por %p61, %p62
    %p65 = scmp.ne.s32.totalorder %s50, %s64
    %p66 = scmp.eq.s32.totalorder %s19, 0
    %p67 = por %p65, %p66
    %s69 = sadd.s32 %s68, 1
    %p72 = scmp.eq.s32.totalorder %s13, 1
    %p73 = scmp.ne.s32.totalorder %s68, %s70
    %p74 = scmp.eq.s32.totalorder %s13, 0
    %p75 = por %p73, %p74
    %p76 = scmp.ne.s32.totalorder %s68, %s70
    %p77 = scmp.eq.s32.totalorder %s18, 1
    %p78 = por %p76, %p77
    %p79 = scmp.ne.s32.totalorder %s70, %s71
    %p80 = scmp.eq.s32.totalorder %s18, 0
    %p81 = por %p79, %p80
    %p82 = scmp.ne.s32.totalorder %s70, %s71
    %p83 = scmp.eq.s32.totalorder %s19, 1
    %p84 = por %p82, %p83
    %p86 = scmp.ne.s32.totalorder %s71, %s85
    %p87 = scmp.eq.s32.totalorder %s19, 0
    %p88 = por %p86, %p87
    %s90 = sadd.s32 %s89, 1
    %p93 = scmp.eq.s32.totalorder %s13, 1
    %p94 = scmp.ne.s32.totalorder %s89, %s91
    %p95 = scmp.eq.s32.totalorder %s13, 0
    %p96 = por %p94, %p95
    %p97 = scmp.ne.s32.totalorder %s89, %s91
    %p98 = scmp.eq.s32.totalorder %s18, 1
    %p99 = por %p97, %p98
    %p100 = scmp.ne.s32.totalorder %s91, %s92
    %p101 = scmp.eq.s32.totalorder %s18, 0
    %p102 = por %p100, %p101
    %p103 = scmp.ne.s32.totalorder %s91, %s92
    %p104 = scmp.eq.s32.totalorder %s19, 1
    %p105 = por %p103, %p104
    %p107 = scmp.ne.s32.totalorder %s92, %s106
    %p108 = scmp.eq.s32.totalorder %s19, 0
    %p109 = por %p107, %p108
    %s111 = sadd.s32 %s110, 1
    %p114 = scmp.eq.s32.totalorder %s13, 1
    %p115 = scmp.ne.s32.totalorder %s110, %s112
    %p116 = scmp.eq.s32.totalorder %s13, 0
    %p117 = por %p115, %p116
    %p118 = scmp.ne.s32.totalorder %s110, %s112
    %p119 = scmp.eq.s32.totalorder %s18, 1
    %p120 = por %p118, %p119
    %p121 = scmp.ne.s32.totalorder %s112, %s113
    %p122 = scmp.eq.s32.totalorder %s18, 0
    %p123 = por %p121, %p122
    %p124 = scmp.ne.s32.totalorder %s112, %s113
    %p125 = scmp.eq.s32.totalorder %s19, 1
    %p126 = por %p124, %p125
    %p128 = scmp.ne.s32.totalorder %s113, %s127
    %p129 = scmp.eq.s32.totalorder %s19, 0
    %p130 = por %p128, %p129
    %s131 = ssub.s32 %s13, %s20
    %p132 = scmp.eq.s32.totalorder %s131, 0
    %s134 = sadd.s32 %s133, 1
    %s135 = scalar_select %p132, %s133, %s134
    %p138 = pneg %p132
    %p139 = scmp.eq.s32.totalorder %s13, 1
    %p140 = por %p138, %p139
    %p141 = scmp.ne.s32.totalorder %s133, %s136
    %p142 = scmp.eq.s32.totalorder %s13, 0
    %p143 = por %p141, %p142
    %p144 = scmp.ne.s32.totalorder %s133, %s136
    %p145 = scmp.eq.s32.totalorder %s18, 1
    %p146 = por %p144, %p145
    %p147 = scmp.ne.s32.totalorder %s136, %s137
    %p148 = scmp.eq.s32.totalorder %s18, 0
    %p149 = por %p147, %p148
    %p150 = scmp.ne.s32.totalorder %s136, %s137
    %p151 = scmp.eq.s32.totalorder %s19, 1
    %p152 = por %p150, %p151
    %p154 = scmp.ne.s32.totalorder %s137, %s153
    %p155 = scmp.eq.s32.totalorder %s19, 0
    %p156 = por %p154, %p155
    %s157 = ssub.s32 %s13, %s20
    %p158 = scmp.eq.s32.totalorder %s157, 0
    %s160 = sadd.s32 %s159, 1
    %s161 = scalar_select %p158, %s159, %s160
    %p164 = pneg %p158
    %p165 = scmp.eq.s32.totalorder %s13, 1
    %p166 = por %p164, %p165
    %p167 = scmp.ne.s32.totalorder %s159, %s162
    %p168 = scmp.eq.s32.totalorder %s13, 0
    %p169 = por %p167, %p168
    %p170 = scmp.ne.s32.totalorder %s159, %s162
    %p171 = scmp.eq.s32.totalorder %s18, 1
    %p172 = por %p170, %p171
    %p173 = scmp.ne.s32.totalorder %s162, %s163
    %p174 = scmp.eq.s32.totalorder %s18, 0
    %p175 = por %p173, %p174
    %p176 = scmp.ne.s32.totalorder %s162, %s163
    %p177 = scmp.eq.s32.totalorder %s19, 1
    %p178 = por %p176, %p177
    %p180 = scmp.ne.s32.totalorder %s163, %s179
    %p181 = scmp.eq.s32.totalorder %s19, 0
    %p182 = por %p180, %p181
    %p183 = scmp.le.s32.totalorder 1, %s13
    %p184 = scmp.lt.s32.totalorder %s13, 3
    %p185 = pnand %p183, %p184
    %p186 = pneg %p185
    // Predicated region
    $region9: #{_lambda_.4} parent=5 // pred_check
      _
    $region10: #{_lambda_.4} parent=5 // pred_check_branch
      %188 = sbr.rel (%p185) target = $region12
    $region11: #{_lambda_.4} parent=5 // pred_region
      %s189 = ssub.s32 %s13, 1
      // Predicated region
      $region13: #{_lambda_.4} parent=11 // pred_check
        %p190 = pneg %p60
      $region14: #{_lambda_.4} parent=11 // pred_check_branch
        %192 = sbr.rel (%p190) target = $region16
      $region15: #{_lambda_.4} parent=11 // pred_region
        _
      $region16: #{_lambda_.4} parent=11 // pred_fallthru
        _
      // Predicated region
      $region17: #{_lambda_.4} parent=11 // pred_check
        %p193 = pneg %p81
      $region18: #{_lambda_.4} parent=11 // pred_check_branch
        %195 = sbr.rel (%p193) target = $region20
      $region19: #{_lambda_.4} parent=11 // pred_region
        _
      $region20: #{_lambda_.4} parent=11 // pred_fallthru
        _
      // Predicated region
      $region21: #{_lambda_.4} parent=11 // pred_check
        %p196 = pneg %p102
      $region22: #{_lambda_.4} parent=11 // pred_check_branch
        %198 = sbr.rel (%p196) target = $region24
      $region23: #{_lambda_.4} parent=11 // pred_region
        _
      $region24: #{_lambda_.4} parent=11 // pred_fallthru
        _
      // Predicated region
      $region25: #{_lambda_.4} parent=11 // pred_check
        %p199 = pneg %p123
      $region26: #{_lambda_.4} parent=11 // pred_check_branch
        %201 = sbr.rel (%p199) target = $region28
      $region27: #{_lambda_.4} parent=11 // pred_region
        _
      $region28: #{_lambda_.4} parent=11 // pred_fallthru
        _
    $region12: #{_lambda_.4} parent=5 // pred_fallthru
      _
    %p202 = scmp.lt.s32.totalorder %s13, 2
    // Predicated region
    $region29: #{_lambda_.4} parent=5 // pred_check
      %p203 = pneg %p202
    $region30: #{_lambda_.4} parent=5 // pred_check_branch
      %205 = sbr.rel (%p203) target = $region32
    $region31: #{_lambda_.4} parent=5 // pred_region
      // Predicated region
      $region33: #{_lambda_.4} parent=31 // pred_check
        %p206 = pneg %p33
      $region34: #{_lambda_.4} parent=31 // pred_check_branch
        %208 = sbr.rel (%p206) target = $region36
      $region35: #{_lambda_.4} parent=31 // pred_region
        %p209 = scmp.lt.s32.totalorder %s13, 1
        %s210 = scalar_select %p209, %s13, 1
        %s211 = smul.addr %s210, 32
        %s212 = smul.addr %s211, 4
        %s213 = scalar_lea.vmem %s0, %s212
      $region36: #{_lambda_.4} parent=31 // pred_fallthru
        _
    $region32: #{_lambda_.4} parent=5 // pred_fallthru
      _
    %p214 = scmp.le.s32.totalorder 1, %s13
    %p215 = scmp.lt.s32.totalorder %s13, 3
    %p216 = pnand %p214, %p215
    %p217 = pneg %p216
    // Predicated region
    $region37: #{_lambda_.4} parent=5 // pred_check
      _
    $region38: #{_lambda_.4} parent=5 // pred_check_branch
      %219 = sbr.rel (%p216) target = $region40
    $region39: #{_lambda_.4} parent=5 // pred_region
      %s220 = ssub.s32 %s13, 1
      %p221 = scmp.lt.s32.totalorder %s18, 1
      %s222 = scalar_select %p221, %s18, 1
      %s223 = smul.addr %s222, 32
      %s224 = smul.addr %s223, 4
      %s225 = scalar_lea.vmem %s0, %s224
      %p226 = pneg %p39
      %p227 = pneg %p36
      %p228 = pneg %p60
      %p229 = pneg %p57
      %p230 = pneg %p81
      %p231 = pneg %p78
      %p232 = pneg %p102
      %p233 = pneg %p99
      %p234 = pneg %p123
      %p235 = pneg %p120
      %p236 = pneg %p149
      %p237 = pneg %p146
      %p238 = scmp.lt.s32.totalorder %s18, 1
      %s239 = scalar_select %p238, %s18, 1
      %s240 = smul.addr %s239, 32
      %s241 = smul.addr %s240, 4
      %s242 = scalar_lea.vmem %s5, %s241
      %p243 = pneg %p175
      %p244 = pneg %p172
      %p245 = scmp.lt.s32.totalorder %s18, 1
      %s246 = scalar_select %p245, %s18, 1
      %s247 = smul.addr %s246, 2
      %s248 = scalar_lea.vmem %s6, %s247
      %p249 = scmp.lt.s32.totalorder %s18, 1
      %s250 = scalar_select %p249, %s18, 1
      %s251 = smul.addr %s250, 32
      %s252 = smul.addr %s251, 4
      %s253 = scalar_lea.vmem %s0, %s252
      %p254 = scmp.lt.s32.totalorder %s18, 1
      %s255 = scalar_select %p254, %s18, 1
      %s256 = smul.addr %s255, 32
      %s257 = smul.addr %s256, 4
      %s258 = scalar_lea.vmem %s5, %s257
      %p259 = scmp.lt.s32.totalorder %s18, 1
      %s260 = scalar_select %p259, %s18, 1
      %s261 = smul.addr %s260, 2
      %s262 = scalar_lea.vmem %s6, %s261
      %v264 = vld [vmem:[%s1] sm:$0x1]
      %v265 = vld [vmem:[%s2] sm:$0x1]
      %v266 = vld [vmem:[%s253] sm:$0xf]
      %v267 = vld [vmem:[%s253 + $0x4] sm:$0xf]
      %v268 = vld [vmem:[%s253 + $0x8] sm:$0xf]
      %v269 = vld [vmem:[%s253 + $0xc] sm:$0xf]
      %v270 = vld [vmem:[%s253 + $0x10] sm:$0xf]
      %v271 = vld [vmem:[%s253 + $0x14] sm:$0xf]
      %v272 = vld [vmem:[%s253 + $0x18] sm:$0xf]
      %v273 = vld [vmem:[%s253 + $0x1c] sm:$0xf]
      %v274 = vld [vmem:[%s253 + $0x20] sm:$0xf]
      %v275 = vld [vmem:[%s253 + $0x24] sm:$0xf]
      %v276 = vld [vmem:[%s253 + $0x28] sm:$0xf]
      %v277 = vld [vmem:[%s253 + $0x2c] sm:$0xf]
      %v278 = vld [vmem:[%s253 + $0x30] sm:$0xf]
      %v279 = vld [vmem:[%s253 + $0x34] sm:$0xf]
      %v280 = vld [vmem:[%s253 + $0x38] sm:$0xf]
      %v281 = vld [vmem:[%s253 + $0x3c] sm:$0xf]
      %v282 = vld [vmem:[%s253 + $0x40] sm:$0xf]
      %v283 = vld [vmem:[%s253 + $0x44] sm:$0xf]
      %v284 = vld [vmem:[%s253 + $0x48] sm:$0xf]
      %v285 = vld [vmem:[%s253 + $0x4c] sm:$0xf]
      %v286 = vld [vmem:[%s253 + $0x50] sm:$0xf]
      %v287 = vld [vmem:[%s253 + $0x54] sm:$0xf]
      %v288 = vld [vmem:[%s253 + $0x58] sm:$0xf]
      %v289 = vld [vmem:[%s253 + $0x5c] sm:$0xf]
      %v290 = vld [vmem:[%s253 + $0x60] sm:$0xf]
      %v291 = vld [vmem:[%s253 + $0x64] sm:$0xf]
      %v292 = vld [vmem:[%s253 + $0x68] sm:$0xf]
      %v293 = vld [vmem:[%s253 + $0x6c] sm:$0xf]
      %v294 = vld [vmem:[%s253 + $0x70] sm:$0xf]
      %v295 = vld [vmem:[%s253 + $0x74] sm:$0xf]
      %v296 = vld [vmem:[%s253 + $0x78] sm:$0xf]
      %v297 = vld [vmem:[%s253 + $0x7c] sm:$0xf]
      %v298 = vunpack.c.l.bf16 %v266
      %v299 = vunpack.c.l.bf16 %v267
      %v300 = vunpack.c.l.bf16 %v268
      %v301 = vunpack.c.l.bf16 %v269
      %v302 = vunpack.c.l.bf16 %v270
      %v303 = vunpack.c.l.bf16 %v271
      %v304 = vunpack.c.l.bf16 %v272
      %v305 = vunpack.c.l.bf16 %v273
      %v306 = vunpack.c.l.bf16 %v274
      %v307 = vunpack.c.l.bf16 %v275
      %v308 = vunpack.c.l.bf16 %v276
      %v309 = vunpack.c.l.bf16 %v277
      %v310 = vunpack.c.l.bf16 %v278
      %v311 = vunpack.c.l.bf16 %v279
      %v312 = vunpack.c.l.bf16 %v280
      %v313 = vunpack.c.l.bf16 %v281
      %v314 = vunpack.c.l.bf16 %v282
      %v315 = vunpack.c.l.bf16 %v283
      %v316 = vunpack.c.l.bf16 %v284
      %v317 = vunpack.c.l.bf16 %v285
      %v318 = vunpack.c.l.bf16 %v286
      %v319 = vunpack.c.l.bf16 %v287
      %v320 = vunpack.c.l.bf16 %v288
      %v321 = vunpack.c.l.bf16 %v289
      %v322 = vunpack.c.l.bf16 %v290
      %v323 = vunpack.c.l.bf16 %v291
      %v324 = vunpack.c.l.bf16 %v292
      %v325 = vunpack.c.l.bf16 %v293
      %v326 = vunpack.c.l.bf16 %v294
      %v327 = vunpack.c.l.bf16 %v295
      %v328 = vunpack.c.l.bf16 %v296
      %v329 = vunpack.c.l.bf16 %v297
      %v331 = vlaneseq
      %v332 = vshrl.u32 %v331, 7
      %v333 = vsub.s32 0, %v332
      %v334 = vrot.slane %v264, %v333
      %v336 = vmul.f32 %v298, %v334
      %v337 = vmul.f32 %v299, %v334
      %v338 = vmul.f32 %v300, %v334
      %v339 = vmul.f32 %v301, %v334
      %v340 = vmul.f32 %v302, %v334
      %v341 = vmul.f32 %v303, %v334
      %v342 = vmul.f32 %v304, %v334
      %v343 = vmul.f32 %v305, %v334
      %v344 = vmul.f32 %v306, %v334
      %v345 = vmul.f32 %v307, %v334
      %v346 = vmul.f32 %v308, %v334
      %v347 = vmul.f32 %v309, %v334
      %v348 = vmul.f32 %v310, %v334
      %v349 = vmul.f32 %v311, %v334
      %v350 = vmul.f32 %v312, %v334
      %v351 = vmul.f32 %v313, %v334
      %v352 = vmul.f32 %v314, %v334
      %v353 = vmul.f32 %v315, %v334
      %v354 = vmul.f32 %v316, %v334
      %v355 = vmul.f32 %v317, %v334
      %v356 = vmul.f32 %v318, %v334
      %v357 = vmul.f32 %v319, %v334
      %v358 = vmul.f32 %v320, %v334
      %v359 = vmul.f32 %v321, %v334
      %v360 = vmul.f32 %v322, %v334
      %v361 = vmul.f32 %v323, %v334
      %v362 = vmul.f32 %v324, %v334
      %v363 = vmul.f32 %v325, %v334
      %v364 = vmul.f32 %v326, %v334
      %v365 = vmul.f32 %v327, %v334
      %v366 = vmul.f32 %v328, %v334
      %v367 = vmul.f32 %v329, %v334
      %v369 = vlaneseq
      %v370 = vshrl.u32 %v369, 7
      %v371 = vsub.s32 0, %v370
      %v372 = vrot.slane %v265, %v371
      %v374 = vadd.f32 %v336, %v372
      %v375 = vadd.f32 %v337, %v372
      %v376 = vadd.f32 %v338, %v372
      %v377 = vadd.f32 %v339, %v372
      %v378 = vadd.f32 %v340, %v372
      %v379 = vadd.f32 %v341, %v372
      %v380 = vadd.f32 %v342, %v372
      %v381 = vadd.f32 %v343, %v372
      %v382 = vadd.f32 %v344, %v372
      %v383 = vadd.f32 %v345, %v372
      %v384 = vadd.f32 %v346, %v372
      %v385 = vadd.f32 %v347, %v372
      %v386 = vadd.f32 %v348, %v372
      %v387 = vadd.f32 %v349, %v372
      %v388 = vadd.f32 %v350, %v372
      %v389 = vadd.f32 %v351, %v372
      %v390 = vadd.f32 %v352, %v372
      %v391 = vadd.f32 %v353, %v372
      %v392 = vadd.f32 %v354, %v372
      %v393 = vadd.f32 %v355, %v372
      %v394 = vadd.f32 %v356, %v372
      %v395 = vadd.f32 %v357, %v372
      %v396 = vadd.f32 %v358, %v372
      %v397 = vadd.f32 %v359, %v372
      %v398 = vadd.f32 %v360, %v372
      %v399 = vadd.f32 %v361, %v372
      %v400 = vadd.f32 %v362, %v372
      %v401 = vadd.f32 %v363, %v372
      %v402 = vadd.f32 %v364, %v372
      %v403 = vadd.f32 %v365, %v372
      %v404 = vadd.f32 %v366, %v372
      %v405 = vadd.f32 %v367, %v372
      %v406 = vmax.f32 %v374, 0.0
      %v407 = vmax.f32 %v375, 0.0
      %v408 = vmax.f32 %v376, 0.0
      %v409 = vmax.f32 %v377, 0.0
      %v410 = vmax.f32 %v378, 0.0
      %v411 = vmax.f32 %v379, 0.0
      %v412 = vmax.f32 %v380, 0.0
      %v413 = vmax.f32 %v381, 0.0
      %v414 = vmax.f32 %v382, 0.0
      %v415 = vmax.f32 %v383, 0.0
      %v416 = vmax.f32 %v384, 0.0
      %v417 = vmax.f32 %v385, 0.0
      %v418 = vmax.f32 %v386, 0.0
      %v419 = vmax.f32 %v387, 0.0
      %v420 = vmax.f32 %v388, 0.0
      %v421 = vmax.f32 %v389, 0.0
      %v422 = vmax.f32 %v390, 0.0
      %v423 = vmax.f32 %v391, 0.0
      %v424 = vmax.f32 %v392, 0.0
      %v425 = vmax.f32 %v393, 0.0
      %v426 = vmax.f32 %v394, 0.0
      %v427 = vmax.f32 %v395, 0.0
      %v428 = vmax.f32 %v396, 0.0
      %v429 = vmax.f32 %v397, 0.0
      %v430 = vmax.f32 %v398, 0.0
      %v431 = vmax.f32 %v399, 0.0
      %v432 = vmax.f32 %v400, 0.0
      %v433 = vmax.f32 %v401, 0.0
      %v434 = vmax.f32 %v402, 0.0
      %v435 = vmax.f32 %v403, 0.0
      %v436 = vmax.f32 %v404, 0.0
      %v437 = vmax.f32 %v405, 0.0
      %438 = vst [vmem:[#allocation2] sm:$0xf] 0
      %439 = vst [vmem:[#allocation2 + $0x4] sm:$0xf] 0
      %440 = vst [vmem:[#allocation2 + $0x8] sm:$0x1] 0
      %441 = vst [vmem:[#allocation2 + $0xc] sm:$0xf] 0
      %442 = vst [vmem:[#allocation2 + $0x10] sm:$0xf] 0
      %443 = vst [vmem:[#allocation2 + $0x14] sm:$0x1] 0
      %444 = vst [vmem:[#allocation2 + $0x18] sm:$0xf] 0
      %445 = vst [vmem:[#allocation2 + $0x1c] sm:$0xf] 0
      %446 = vst [vmem:[#allocation2 + $0x20] sm:$0x1] 0
      %447 = vst [vmem:[#allocation2 + $0x24] sm:$0xf] 0
      %448 = vst [vmem:[#allocation2 + $0x28] sm:$0xf] 0
      %449 = vst [vmem:[#allocation2 + $0x2c] sm:$0x1] 0
      %450 = vst [vmem:[#allocation2 + $0x30] sm:$0xf] 0
      %451 = vst [vmem:[#allocation2 + $0x34] sm:$0xf] 0
      %452 = vst [vmem:[#allocation2 + $0x38] sm:$0x1] 0
      %453 = vst [vmem:[#allocation2 + $0x3c] sm:$0xf] 0
      %454 = vst [vmem:[#allocation2 + $0x40] sm:$0xf] 0
      %455 = vst [vmem:[#allocation2 + $0x44] sm:$0x1] 0
      %456 = vst [vmem:[#allocation2 + $0x48] sm:$0xf] 0
      %457 = vst [vmem:[#allocation2 + $0x4c] sm:$0xf] 0
      %458 = vst [vmem:[#allocation2 + $0x50] sm:$0x1] 0
      %459 = vst [vmem:[#allocation2 + $0x54] sm:$0xf] 0
      %460 = vst [vmem:[#allocation2 + $0x58] sm:$0xf] 0
      %461 = vst [vmem:[#allocation2 + $0x5c] sm:$0x1] 0
      %462 = vst [vmem:[#allocation2 + $0x60] sm:$0xf] 0
      %463 = vst [vmem:[#allocation2 + $0x64] sm:$0xf] 0
      %464 = vst [vmem:[#allocation2 + $0x68] sm:$0x1] 0
      %465 = vst [vmem:[#allocation2 + $0x6c] sm:$0xf] 0
      %466 = vst [vmem:[#allocation2 + $0x70] sm:$0xf] 0
      %467 = vst [vmem:[#allocation2 + $0x74] sm:$0x1] 0
      %468 = vst [vmem:[#allocation2 + $0x78] sm:$0xf] 0
      %469 = vst [vmem:[#allocation2 + $0x7c] sm:$0xf] 0
      %470 = vst [vmem:[#allocation2 + $0x80] sm:$0x1] 0
      %471 = vst [vmem:[#allocation2 + $0x84] sm:$0xf] 0
      %472 = vst [vmem:[#allocation2 + $0x88] sm:$0xf] 0
      %473 = vst [vmem:[#allocation2 + $0x8c] sm:$0x1] 0
      %474 = vst [vmem:[#allocation2 + $0x90] sm:$0xf] 0
      %475 = vst [vmem:[#allocation2 + $0x94] sm:$0xf] 0
      %476 = vst [vmem:[#allocation2 + $0x98] sm:$0x1] 0
      %477 = vst [vmem:[#allocation2 + $0x9c] sm:$0xf] 0
      %478 = vst [vmem:[#allocation2 + $0xa0] sm:$0xf] 0
      %479 = vst [vmem:[#allocation2 + $0xa4] sm:$0x1] 0
      %480 = vst [vmem:[#allocation2 + $0xa8] sm:$0xf] 0
      %481 = vst [vmem:[#allocation2 + $0xac] sm:$0xf] 0
      %482 = vst [vmem:[#allocation2 + $0xb0] sm:$0x1] 0
      %483 = vst [vmem:[#allocation2 + $0xb4] sm:$0xf] 0
      %484 = vst [vmem:[#allocation2 + $0xb8] sm:$0xf] 0
      %485 = vst [vmem:[#allocation2 + $0xbc] sm:$0x1] 0
      %486 = vst [vmem:[#allocation2 + $0xc0] sm:$0xf] 0
      %487 = vst [vmem:[#allocation2 + $0xc4] sm:$0xf] 0
      %488 = vst [vmem:[#allocation2 + $0xc8] sm:$0x1] 0
      %489 = vst [vmem:[#allocation2 + $0xcc] sm:$0xf] 0
      %490 = vst [vmem:[#allocation2 + $0xd0] sm:$0xf] 0
      %491 = vst [vmem:[#allocation2 + $0xd4] sm:$0x1] 0
      %v492 = vpack.c.bf16 %v407, %v406
      %v493 = vpack.c.bf16 %v409, %v408
      %v494 = vpack.c.bf16 %v411, %v410
      %v495 = vpack.c.bf16 %v413, %v412
      %v496 = vpack.c.bf16 %v415, %v414
      %v497 = vpack.c.bf16 %v417, %v416
      %v498 = vpack.c.bf16 %v419, %v418
      %v499 = vpack.c.bf16 %v421, %v420
      %v500 = vpack.c.bf16 %v423, %v422
      %v501 = vpack.c.bf16 %v425, %v424
      %v502 = vpack.c.bf16 %v427, %v426
      %v503 = vpack.c.bf16 %v429, %v428
      %v504 = vpack.c.bf16 %v431, %v430
      %v505 = vpack.c.bf16 %v433, %v432
      %v506 = vpack.c.bf16 %v435, %v434
      %v507 = vpack.c.bf16 %v437, %v436
      %v524 = vunpack.c.l.b16 %v492
      %v525 = vunpack.c.h.b16 %v492
      %v526 = vunpack.c.l.b16 %v493
      %v527 = vunpack.c.h.b16 %v493
      %v528 = vunpack.c.l.b16 %v494
      %v529 = vunpack.c.h.b16 %v494
      %v530 = vunpack.c.l.b16 %v495
      %v531 = vunpack.c.h.b16 %v495
      %v532 = vunpack.c.l.b16 %v496
      %v533 = vunpack.c.h.b16 %v496
      %v534 = vunpack.c.l.b16 %v497
      %v535 = vunpack.c.h.b16 %v497
      %v536 = vunpack.c.l.b16 %v498
      %v537 = vunpack.c.h.b16 %v498
      %v538 = vunpack.c.l.b16 %v499
      %v539 = vunpack.c.h.b16 %v499
      %v540 = vunpack.c.l.b16 %v500
      %v541 = vunpack.c.h.b16 %v500
      %v542 = vunpack.c.l.b16 %v501
      %v543 = vunpack.c.h.b16 %v501
      %v544 = vunpack.c.l.b16 %v502
      %v545 = vunpack.c.h.b16 %v502
      %v546 = vunpack.c.l.b16 %v503
      %v547 = vunpack.c.h.b16 %v503
      %v548 = vunpack.c.l.b16 %v504
      %v549 = vunpack.c.h.b16 %v504
      %v550 = vunpack.c.l.b16 %v505
      %v551 = vunpack.c.h.b16 %v505
      %v552 = vunpack.c.l.b16 %v506
      %v553 = vunpack.c.h.b16 %v506
      %v554 = vunpack.c.l.b16 %v507
      %v555 = vunpack.c.h.b16 %v507
      %v556 = vpack.c.b16 %v524, %v524
      %v557 = vpack.c.b16 %v525, %v525
      %v558 = vpack.c.b16 %v526, %v526
      %v559 = vpack.c.b16 %v527, %v527
      %v560 = vpack.c.b16 %v528, %v528
      %v561 = vpack.c.b16 %v529, %v529
      %v562 = vpack.c.b16 %v530, %v530
      %v563 = vpack.c.b16 %v531, %v531
      %v564 = vpack.c.b16 %v532, %v532
      %v565 = vpack.c.b16 %v533, %v533
      %v566 = vpack.c.b16 %v534, %v534
      %v567 = vpack.c.b16 %v535, %v535
      %v568 = vpack.c.b16 %v536, %v536
      %v569 = vpack.c.b16 %v537, %v537
      %v570 = vpack.c.b16 %v538, %v538
      %v571 = vpack.c.b16 %v539, %v539
      %v572 = vpack.c.b16 %v540, %v540
      %v573 = vpack.c.b16 %v541, %v541
      %v574 = vpack.c.b16 %v542, %v542
      %v575 = vpack.c.b16 %v543, %v543
      %v576 = vpack.c.b16 %v544, %v544
      %v577 = vpack.c.b16 %v545, %v545
      %v578 = vpack.c.b16 %v546, %v546
      %v579 = vpack.c.b16 %v547, %v547
      %v580 = vpack.c.b16 %v548, %v548
      %v581 = vpack.c.b16 %v549, %v549
      %v582 = vpack.c.b16 %v550, %v550
      %v583 = vpack.c.b16 %v551, %v551
      %v584 = vpack.c.b16 %v552, %v552
      %v585 = vpack.c.b16 %v553, %v553
      %v586 = vpack.c.b16 %v554, %v554
      %v587 = vpack.c.b16 %v555, %v555
      %vm588 = vsmask.f32 256
      %vm589 = vsmask.f32 4368
      %vm590 = vmor %vm588, %vm589
      %v592 = vshrl.u32 %v556, 16
      %v594 = vrot.slane %v592, 7
      %v595 = vshll.u32 %v556, 16
      %v597 = vor.u32 %v594, %v595
      %v598 = vrot.slane %v594, 4
      %v600 = vshrl.u32 %v557, 16
      %v602 = vrot.slane %v600, 7
      %v603 = vshll.u32 %v557, 16
      %v605 = vor.u32 %v602, %v603
      %v606 = vsel %vm590, %v598, %v605
      %v607 = vrot.slane %v602, 4
      %v609 = vshrl.u32 %v558, 16
      %v611 = vrot.slane %v609, 7
      %v612 = vshll.u32 %v558, 16
      %v614 = vor.u32 %v611, %v612
      %v615 = vrot.slane %v611, 4
      %v617 = vshrl.u32 %v559, 16
      %v619 = vrot.slane %v617, 7
      %v620 = vshll.u32 %v559, 16
      %v622 = vor.u32 %v619, %v620
      %v623 = vsel %vm590, %v615, %v622
      %v624 = vrot.slane %v619, 4
      %v626 = vshrl.u32 %v560, 16
      %v628 = vrot.slane %v626, 7
      %v629 = vshll.u32 %v560, 16
      %v631 = vor.u32 %v628, %v629
      %v632 = vrot.slane %v628, 4
      %v634 = vshrl.u32 %v561, 16
      %v636 = vrot.slane %v634, 7
      %v637 = vshll.u32 %v561, 16
      %v639 = vor.u32 %v636, %v637
      %v640 = vsel %vm590, %v632, %v639
      %v641 = vrot.slane %v636, 4
      %v643 = vshrl.u32 %v562, 16
      %v645 = vrot.slane %v643, 7
      %v646 = vshll.u32 %v562, 16
      %v648 = vor.u32 %v645, %v646
      %v649 = vrot.slane %v645, 4
      %v651 = vshrl.u32 %v563, 16
      %v653 = vrot.slane %v651, 7
      %v654 = vshll.u32 %v563, 16
      %v656 = vor.u32 %v653, %v654
      %v657 = vsel %vm590, %v649, %v656
      %v658 = vrot.slane %v653, 4
      %v660 = vshrl.u32 %v564, 16
      %v662 = vrot.slane %v660, 7
      %v663 = vshll.u32 %v564, 16
      %v665 = vor.u32 %v662, %v663
      %v666 = vrot.slane %v662, 4
      %v668 = vshrl.u32 %v565, 16
      %v670 = vrot.slane %v668, 7
      %v671 = vshll.u32 %v565, 16
      %v673 = vor.u32 %v670, %v671
      %v674 = vsel %vm590, %v666, %v673
      %v675 = vrot.slane %v670, 4
      %v677 = vshrl.u32 %v566, 16
      %v679 = vrot.slane %v677, 7
      %v680 = vshll.u32 %v566, 16
      %v682 = vor.u32 %v679, %v680
      %v683 = vrot.slane %v679, 4
      %v685 = vshrl.u32 %v567, 16
      %v687 = vrot.slane %v685, 7
      %v688 = vshll.u32 %v567, 16
      %v690 = vor.u32 %v687, %v688
      %v691 = vsel %vm590, %v683, %v690
      %v692 = vrot.slane %v687, 4
      %v694 = vshrl.u32 %v568, 16
      %v696 = vrot.slane %v694, 7
      %v697 = vshll.u32 %v568, 16
      %v699 = vor.u32 %v696, %v697
      %v700 = vrot.slane %v696, 4
      %v702 = vshrl.u32 %v569, 16
      %v704 = vrot.slane %v702, 7
      %v705 = vshll.u32 %v569, 16
      %v707 = vor.u32 %v704, %v705
      %v708 = vsel %vm590, %v700, %v707
      %v709 = vrot.slane %v704, 4
      %v711 = vshrl.u32 %v570, 16
      %v713 = vrot.slane %v711, 7
      %v714 = vshll.u32 %v570, 16
      %v716 = vor.u32 %v713, %v714
      %v717 = vrot.slane %v713, 4
      %v719 = vshrl.u32 %v571, 16
      %v721 = vrot.slane %v719, 7
      %v722 = vshll.u32 %v571, 16
      %v724 = vor.u32 %v721, %v722
      %v725 = vsel %vm590, %v717, %v724
      %v726 = vrot.slane %v721, 4
      %v728 = vshrl.u32 %v572, 16
      %v730 = vrot.slane %v728, 7
      %v731 = vshll.u32 %v572, 16
      %v733 = vor.u32 %v730, %v731
      %v734 = vrot.slane %v730, 4
      %v736 = vshrl.u32 %v573, 16
      %v738 = vrot.slane %v736, 7
      %v739 = vshll.u32 %v573, 16
      %v741 = vor.u32 %v738, %v739
      %v742 = vsel %vm590, %v734, %v741
      %v743 = vrot.slane %v738, 4
      %v745 = vshrl.u32 %v574, 16
      %v747 = vrot.slane %v745, 7
      %v748 = vshll.u32 %v574, 16
      %v750 = vor.u32 %v747, %v748
      %v751 = vrot.slane %v747, 4
      %v753 = vshrl.u32 %v575, 16
      %v755 = vrot.slane %v753, 7
      %v756 = vshll.u32 %v575, 16
      %v758 = vor.u32 %v755, %v756
      %v759 = vsel %vm590, %v751, %v758
      %v760 = vrot.slane %v755, 4
      %v762 = vshrl.u32 %v576, 16
      %v764 = vrot.slane %v762, 7
      %v765 = vshll.u32 %v576, 16
      %v767 = vor.u32 %v764, %v765
      %v768 = vrot.slane %v764, 4
      %v770 = vshrl.u32 %v577, 16
      %v772 = vrot.slane %v770, 7
      %v773 = vshll.u32 %v577, 16
      %v775 = vor.u32 %v772, %v773
      %v776 = vsel %vm590, %v768, %v775
      %v777 = vrot.slane %v772, 4
      %v779 = vshrl.u32 %v578, 16
      %v781 = vrot.slane %v779, 7
      %v782 = vshll.u32 %v578, 16
      %v784 = vor.u32 %v781, %v782
      %v785 = vrot.slane %v781, 4
      %v787 = vshrl.u32 %v579, 16
      %v789 = vrot.slane %v787, 7
      %v790 = vshll.u32 %v579, 16
      %v792 = vor.u32 %v789, %v790
      %v793 = vsel %vm590, %v785, %v792
      %v794 = vrot.slane %v789, 4
      %v796 = vshrl.u32 %v580, 16
      %v798 = vrot.slane %v796, 7
      %v799 = vshll.u32 %v580, 16
      %v801 = vor.u32 %v798, %v799
      %v802 = vrot.slane %v798, 4
      %v804 = vshrl.u32 %v581, 16
      %v806 = vrot.slane %v804, 7
      %v807 = vshll.u32 %v581, 16
      %v809 = vor.u32 %v806, %v807
      %v810 = vsel %vm590, %v802, %v809
      %v811 = vrot.slane %v806, 4
      %v813 = vshrl.u32 %v582, 16
      %v815 = vrot.slane %v813, 7
      %v816 = vshll.u32 %v582, 16
      %v818 = vor.u32 %v815, %v816
      %v819 = vrot.slane %v815, 4
      %v821 = vshrl.u32 %v583, 16
      %v823 = vrot.slane %v821, 7
      %v824 = vshll.u32 %v583, 16
      %v826 = vor.u32 %v823, %v824
      %v827 = vsel %vm590, %v819, %v826
      %v828 = vrot.slane %v823, 4
      %v830 = vshrl.u32 %v584, 16
      %v832 = vrot.slane %v830, 7
      %v833 = vshll.u32 %v584, 16
      %v835 = vor.u32 %v832, %v833
      %v836 = vrot.slane %v832, 4
      %v838 = vshrl.u32 %v585, 16
      %v840 = vrot.slane %v838, 7
      %v841 = vshll.u32 %v585, 16
      %v843 = vor.u32 %v840, %v841
      %v844 = vsel %vm590, %v836, %v843
      %v845 = vrot.slane %v840, 4
      %v847 = vshrl.u32 %v586, 16
      %v849 = vrot.slane %v847, 7
      %v850 = vshll.u32 %v586, 16
      %v852 = vor.u32 %v849, %v850
      %v853 = vrot.slane %v849, 4
      %v855 = vshrl.u32 %v587, 16
      %v857 = vrot.slane %v855, 7
      %v858 = vshll.u32 %v587, 16
      %v860 = vor.u32 %v857, %v858
      %v861 = vsel %vm590, %v853, %v860
      %v862 = vrot.slane %v857, 4
      %s911 = scalar_lea.vmem [#allocation2], 12
      %vm912 = vcmask 1043456
      %vm913 = vsmask.f32 7938
      %vm914 = vmand %vm912, %vm913
      %v915 = vld [vmem:[%s911] sm:$0xf]
      %v916 = vsel %vm914, %v597, %v915
      %917 = vst [vmem:[%s911] sm:$0xf] %v916
      %918 = vst [vmem:[%s911 + $0x4] sm:$0xf] %v606
      %vm919 = vcmask 1040384
      %vm920 = vmand %vm919, %vm588
      %v921 = vld [vmem:[%s911 + $0x8] sm:$0x1]
      %v922 = vsel %vm920, %v607, %v921
      %923 = vst [vmem:[%s911 + $0x8] sm:$0x1] %v922
      %v924 = vld [vmem:[%s911 + $0xc] sm:$0xf]
      %v925 = vsel %vm914, %v614, %v924
      %926 = vst [vmem:[%s911 + $0xc] sm:$0xf] %v925
      %927 = vst [vmem:[%s911 + $0x10] sm:$0xf] %v623
      %v928 = vld [vmem:[%s911 + $0x14] sm:$0x1]
      %v929 = vsel %vm920, %v624, %v928
      %930 = vst [vmem:[%s911 + $0x14] sm:$0x1] %v929
      %v931 = vld [vmem:[%s911 + $0x18] sm:$0xf]
      %v932 = vsel %vm914, %v631, %v931
      %933 = vst [vmem:[%s911 + $0x18] sm:$0xf] %v932
      %934 = vst [vmem:[%s911 + $0x1c] sm:$0xf] %v640
      %v935 = vld [vmem:[%s911 + $0x20] sm:$0x1]
      %v936 = vsel %vm920, %v641, %v935
      %937 = vst [vmem:[%s911 + $0x20] sm:$0x1] %v936
      %v938 = vld [vmem:[%s911 + $0x24] sm:$0xf]
      %v939 = vsel %vm914, %v648, %v938
      %940 = vst [vmem:[%s911 + $0x24] sm:$0xf] %v939
      %941 = vst [vmem:[%s911 + $0x28] sm:$0xf] %v657
      %v942 = vld [vmem:[%s911 + $0x2c] sm:$0x1]
      %v943 = vsel %vm920, %v658, %v942
      %944 = vst [vmem:[%s911 + $0x2c] sm:$0x1] %v943
      %v945 = vld [vmem:[%s911 + $0x30] sm:$0xf]
      %v946 = vsel %vm914, %v665, %v945
      %947 = vst [vmem:[%s911 + $0x30] sm:$0xf] %v946
      %948 = vst [vmem:[%s911 + $0x34] sm:$0xf] %v674
      %v949 = vld [vmem:[%s911 + $0x38] sm:$0x1]
      %v950 = vsel %vm920, %v675, %v949
      %951 = vst [vmem:[%s911 + $0x38] sm:$0x1] %v950
      %v952 = vld [vmem:[%s911 + $0x3c] sm:$0xf]
      %v953 = vsel %vm914, %v682, %v952
      %954 = vst [vmem:[%s911 + $0x3c] sm:$0xf] %v953
      %955 = vst [vmem:[%s911 + $0x40] sm:$0xf] %v691
      %v956 = vld [vmem:[%s911 + $0x44] sm:$0x1]
      %v957 = vsel %vm920, %v692, %v956
      %958 = vst [vmem:[%s911 + $0x44] sm:$0x1] %v957
      %v959 = vld [vmem:[%s911 + $0x48] sm:$0xf]
      %v960 = vsel %vm914, %v699, %v959
      %961 = vst [vmem:[%s911 + $0x48] sm:$0xf] %v960
      %962 = vst [vmem:[%s911 + $0x4c] sm:$0xf] %v708
      %v963 = vld [vmem:[%s911 + $0x50] sm:$0x1]
      %v964 = vsel %vm920, %v709, %v963
      %965 = vst [vmem:[%s911 + $0x50] sm:$0x1] %v964
      %v966 = vld [vmem:[%s911 + $0x54] sm:$0xf]
      %v967 = vsel %vm914, %v716, %v966
      %968 = vst [vmem:[%s911 + $0x54] sm:$0xf] %v967
      %969 = vst [vmem:[%s911 + $0x58] sm:$0xf] %v725
      %v970 = vld [vmem:[%s911 + $0x5c] sm:$0x1]
      %v971 = vsel %vm920, %v726, %v970
      %972 = vst [vmem:[%s911 + $0x5c] sm:$0x1] %v971
      %v973 = vld [vmem:[%s911 + $0x60] sm:$0xf]
      %v974 = vsel %vm914, %v733, %v973
      %975 = vst [vmem:[%s911 + $0x60] sm:$0xf] %v974
      %976 = vst [vmem:[%s911 + $0x64] sm:$0xf] %v742
      %v977 = vld [vmem:[%s911 + $0x68] sm:$0x1]
      %v978 = vsel %vm920, %v743, %v977
      %979 = vst [vmem:[%s911 + $0x68] sm:$0x1] %v978
      %v980 = vld [vmem:[%s911 + $0x6c] sm:$0xf]
      %v981 = vsel %vm914, %v750, %v980
      %982 = vst [vmem:[%s911 + $0x6c] sm:$0xf] %v981
      %983 = vst [vmem:[%s911 + $0x70] sm:$0xf] %v759
      %v984 = vld [vmem:[%s911 + $0x74] sm:$0x1]
      %v985 = vsel %vm920, %v760, %v984
      %986 = vst [vmem:[%s911 + $0x74] sm:$0x1] %v985
      %v987 = vld [vmem:[%s911 + $0x78] sm:$0xf]
      %v988 = vsel %vm914, %v767, %v987
      %989 = vst [vmem:[%s911 + $0x78] sm:$0xf] %v988
      %990 = vst [vmem:[%s911 + $0x7c] sm:$0xf] %v776
      %v991 = vld [vmem:[%s911 + $0x80] sm:$0x1]
      %v992 = vsel %vm920, %v777, %v991
      %993 = vst [vmem:[%s911 + $0x80] sm:$0x1] %v992
      %v994 = vld [vmem:[%s911 + $0x84] sm:$0xf]
      %v995 = vsel %vm914, %v784, %v994
      %996 = vst [vmem:[%s911 + $0x84] sm:$0xf] %v995
      %997 = vst [vmem:[%s911 + $0x88] sm:$0xf] %v793
      %v998 = vld [vmem:[%s911 + $0x8c] sm:$0x1]
      %v999 = vsel %vm920, %v794, %v998
      %1000 = vst [vmem:[%s911 + $0x8c] sm:$0x1] %v999
      %v1001 = vld [vmem:[%s911 + $0x90] sm:$0xf]
      %v1002 = vsel %vm914, %v801, %v1001
      %1003 = vst [vmem:[%s911 + $0x90] sm:$0xf] %v1002
      %1004 = vst [vmem:[%s911 + $0x94] sm:$0xf] %v810
      %v1005 = vld [vmem:[%s911 + $0x98] sm:$0x1]
      %v1006 = vsel %vm920, %v811, %v1005
      %1007 = vst [vmem:[%s911 + $0x98] sm:$0x1] %v1006
      %v1008 = vld [vmem:[%s911 + $0x9c] sm:$0xf]
      %v1009 = vsel %vm914, %v818, %v1008
      %1010 = vst [vmem:[%s911 + $0x9c] sm:$0xf] %v1009
      %1011 = vst [vmem:[%s911 + $0xa0] sm:$0xf] %v827
      %v1012 = vld [vmem:[%s911 + $0xa4] sm:$0x1]
      %v1013 = vsel %vm920, %v828, %v1012
      %1014 = vst [vmem:[%s911 + $0xa4] sm:$0x1] %v1013
      %v1015 = vld [vmem:[%s911 + $0xa8] sm:$0xf]
      %v1016 = vsel %vm914, %v835, %v1015
      %1017 = vst [vmem:[%s911 + $0xa8] sm:$0xf] %v1016
      %1018 = vst [vmem:[%s911 + $0xac] sm:$0xf] %v844
      %v1019 = vld [vmem:[%s911 + $0xb0] sm:$0x1]
      %v1020 = vsel %vm920, %v845, %v1019
      %1021 = vst [vmem:[%s911 + $0xb0] sm:$0x1] %v1020
      %v1022 = vld [vmem:[%s911 + $0xb4] sm:$0xf]
      %v1023 = vsel %vm914, %v852, %v1022
      %1024 = vst [vmem:[%s911 + $0xb4] sm:$0xf] %v1023
      %1025 = vst [vmem:[%s911 + $0xb8] sm:$0xf] %v861
      %v1026 = vld [vmem:[%s911 + $0xbc] sm:$0x1]
      %v1027 = vsel %vm920, %v862, %v1026
      %1028 = vst [vmem:[%s911 + $0xbc] sm:$0x1] %v1027
      %v1029 = vld [vmem:[#allocation2] sm:$0xf]
      %v1030 = vld [vmem:[#allocation2 + $0x4] sm:$0xf]
      %v1031 = vld [vmem:[#allocation2 + $0xc] sm:$0xf]
      %v1032 = vld [vmem:[#allocation2 + $0x10] sm:$0xf]
      %v1033 = vld [vmem:[#allocation2 + $0x18] sm:$0xf]
      %v1034 = vld [vmem:[#allocation2 + $0x1c] sm:$0xf]
      %v1035 = vld [vmem:[#allocation2 + $0x24] sm:$0xf]
      %v1036 = vld [vmem:[#allocation2 + $0x28] sm:$0xf]
      %v1037 = vld [vmem:[#allocation2 + $0x30] sm:$0xf]
      %v1038 = vld [vmem:[#allocation2 + $0x34] sm:$0xf]
      %v1039 = vld [vmem:[#allocation2 + $0x3c] sm:$0xf]
      %v1040 = vld [vmem:[#allocation2 + $0x40] sm:$0xf]
      %v1041 = vld [vmem:[#allocation2 + $0x48] sm:$0xf]
      %v1042 = vld [vmem:[#allocation2 + $0x4c] sm:$0xf]
      %v1043 = vld [vmem:[#allocation2 + $0x54] sm:$0xf]
      %v1044 = vld [vmem:[#allocation2 + $0x58] sm:$0xf]
      %v1045 = vld [vmem:[#allocation2 + $0x60] sm:$0xf]
      %v1046 = vld [vmem:[#allocation2 + $0x64] sm:$0xf]
      %v1047 = vld [vmem:[#allocation2 + $0x6c] sm:$0xf]
      %v1048 = vld [vmem:[#allocation2 + $0x70] sm:$0xf]
      %v1049 = vld [vmem:[#allocation2 + $0x78] sm:$0xf]
      %v1050 = vld [vmem:[#allocation2 + $0x7c] sm:$0xf]
      %v1051 = vld [vmem:[#allocation2 + $0x84] sm:$0xf]
      %v1052 = vld [vmem:[#allocation2 + $0x88] sm:$0xf]
      %v1053 = vld [vmem:[#allocation2 + $0x90] sm:$0xf]
      %v1054 = vld [vmem:[#allocation2 + $0x94] sm:$0xf]
      %v1055 = vld [vmem:[#allocation2 + $0x9c] sm:$0xf]
      %v1056 = vld [vmem:[#allocation2 + $0xa0] sm:$0xf]
      %v1057 = vld [vmem:[#allocation2 + $0xa8] sm:$0xf]
      %v1058 = vld [vmem:[#allocation2 + $0xac] sm:$0xf]
      %v1059 = vld [vmem:[#allocation2 + $0xb4] sm:$0xf]
      %v1060 = vld [vmem:[#allocation2 + $0xb8] sm:$0xf]
      %v1061 = vld [vmem:[%s3] sm:$0xf]
      %v1062 = vld [vmem:[%s3 + $0x4] sm:$0xf]
      %v1063 = vld [vmem:[%s3 + $0x8] sm:$0xf]
      %v1064 = vld [vmem:[%s3 + $0xc] sm:$0xf]
      %v1065 = vld [vmem:[%s3 + $0x10] sm:$0xf]
      %v1066 = vld [vmem:[%s3 + $0x14] sm:$0xf]
      %v1067 = vld [vmem:[%s3 + $0x18] sm:$0xf]
      %v1068 = vld [vmem:[%s3 + $0x1c] sm:$0xf]
      %v1069 = vld [vmem:[%s3 + $0x20] sm:$0xf]
      %v1070 = vld [vmem:[%s3 + $0x24] sm:$0xf]
      %v1071 = vld [vmem:[%s3 + $0x28] sm:$0xf]
      %v1072 = vld [vmem:[%s3 + $0x2c] sm:$0xf]
      %v1073 = vld [vmem:[%s3 + $0x30] sm:$0xf]
      %v1074 = vld [vmem:[%s3 + $0x34] sm:$0xf]
      %v1075 = vld [vmem:[%s3 + $0x38] sm:$0xf]
      %v1076 = vld [vmem:[%s3 + $0x3c] sm:$0xf]
      %v1077 = vld [vmem:[#allocation2 + $0x8] sm:$0x1]
      %v1078 = vld [vmem:[#allocation2 + $0x14] sm:$0x1]
      %v1079 = vld [vmem:[#allocation2 + $0x20] sm:$0x1]
      %v1080 = vld [vmem:[#allocation2 + $0x2c] sm:$0x1]
      %v1081 = vld [vmem:[#allocation2 + $0x38] sm:$0x1]
      %v1082 = vld [vmem:[#allocation2 + $0x44] sm:$0x1]
      %v1083 = vld [vmem:[#allocation2 + $0x50] sm:$0x1]
      %v1084 = vld [vmem:[#allocation2 + $0x5c] sm:$0x1]
      %v1085 = vld [vmem:[#allocation2 + $0x68] sm:$0x1]
      %v1086 = vld [vmem:[#allocation2 + $0x74] sm:$0x1]
      %v1087 = vld [vmem:[#allocation2 + $0x80] sm:$0x1]
      %v1088 = vld [vmem:[#allocation2 + $0x8c] sm:$0x1]
      %v1089 = vld [vmem:[#allocation2 + $0x98] sm:$0x1]
      %v1090 = vld [vmem:[#allocation2 + $0xa4] sm:$0x1]
      %v1091 = vld [vmem:[#allocation2 + $0xb0] sm:$0x1]
      %v1092 = vld [vmem:[#allocation2 + $0xbc] sm:$0x1]
      %vm1093 = vsmask.f32 3328
      %vm1094 = vsmask.f32 7440
      %vm1095 = vmor %vm1093, %vm1094
      %v1097 = vshrl.u32 %v1029, 16
      %v1099 = vrot.slane %v1097, 4
      %v1100 = vshll.u32 %v1029, 16
      %v1102 = vrot.slane %v1100, 5
      %v1103 = vor.u32 %v1099, %v1102
      %v1104 = vrot.slane %v1103, 4
      %v1106 = vshll.u32 %v1030, 16
      %v1108 = vrot.slane %v1106, 5
      %v1109 = vsel %vm1095, %v1104, %v1108
      %v1110 = vshrl.u32 %v1030, 16
      %v1112 = vrot.slane %v1110, 4
      %v1113 = vor.u32 %v1112, %v1108
      %v1114 = vrot.slane %v1113, 4
      %v1116 = vshll.u32 %v1077, 16
      %v1118 = vrot.slane %v1116, 5
      %v1119 = vsel %vm1095, %v1114, %v1118
      %v1121 = vshrl.u32 %v1031, 16
      %v1123 = vrot.slane %v1121, 4
      %v1124 = vshll.u32 %v1031, 16
      %v1126 = vrot.slane %v1124, 5
      %v1127 = vor.u32 %v1123, %v1126
      %v1128 = vrot.slane %v1127, 4
      %v1130 = vshll.u32 %v1032, 16
      %v1132 = vrot.slane %v1130, 5
      %v1133 = vsel %vm1095, %v1128, %v1132
      %v1134 = vshrl.u32 %v1032, 16
      %v1136 = vrot.slane %v1134, 4
      %v1137 = vor.u32 %v1136, %v1132
      %v1138 = vrot.slane %v1137, 4
      %v1140 = vshll.u32 %v1078, 16
      %v1142 = vrot.slane %v1140, 5
      %v1143 = vsel %vm1095, %v1138, %v1142
      %v1145 = vshrl.u32 %v1033, 16
      %v1147 = vrot.slane %v1145, 4
      %v1148 = vshll.u32 %v1033, 16
      %v1150 = vrot.slane %v1148, 5
      %v1151 = vor.u32 %v1147, %v1150
      %v1152 = vrot.slane %v1151, 4
      %v1154 = vshll.u32 %v1034, 16
      %v1156 = vrot.slane %v1154, 5
      %v1157 = vsel %vm1095, %v1152, %v1156
      %v1158 = vshrl.u32 %v1034, 16
      %v1160 = vrot.slane %v1158, 4
      %v1161 = vor.u32 %v1160, %v1156
      %v1162 = vrot.slane %v1161, 4
      %v1164 = vshll.u32 %v1079, 16
      %v1166 = vrot.slane %v1164, 5
      %v1167 = vsel %vm1095, %v1162, %v1166
      %v1169 = vshrl.u32 %v1035, 16
      %v1171 = vrot.slane %v1169, 4
      %v1172 = vshll.u32 %v1035, 16
      %v1174 = vrot.slane %v1172, 5
      %v1175 = vor.u32 %v1171, %v1174
      %v1176 = vrot.slane %v1175, 4
      %v1178 = vshll.u32 %v1036, 16
      %v1180 = vrot.slane %v1178, 5
      %v1181 = vsel %vm1095, %v1176, %v1180
      %v1182 = vshrl.u32 %v1036, 16
      %v1184 = vrot.slane %v1182, 4
      %v1185 = vor.u32 %v1184, %v1180
      %v1186 = vrot.slane %v1185, 4
      %v1188 = vshll.u32 %v1080, 16
      %v1190 = vrot.slane %v1188, 5
      %v1191 = vsel %vm1095, %v1186, %v1190
      %v1193 = vshrl.u32 %v1037, 16
      %v1195 = vrot.slane %v1193, 4
      %v1196 = vshll.u32 %v1037, 16
      %v1198 = vrot.slane %v1196, 5
      %v1199 = vor.u32 %v1195, %v1198
      %v1200 = vrot.slane %v1199, 4
      %v1202 = vshll.u32 %v1038, 16
      %v1204 = vrot.slane %v1202, 5
      %v1205 = vsel %vm1095, %v1200, %v1204
      %v1206 = vshrl.u32 %v1038, 16
      %v1208 = vrot.slane %v1206, 4
      %v1209 = vor.u32 %v1208, %v1204
      %v1210 = vrot.slane %v1209, 4
      %v1212 = vshll.u32 %v1081, 16
      %v1214 = vrot.slane %v1212, 5
      %v1215 = vsel %vm1095, %v1210, %v1214
      %v1217 = vshrl.u32 %v1039, 16
      %v1219 = vrot.slane %v1217, 4
      %v1220 = vshll.u32 %v1039, 16
      %v1222 = vrot.slane %v1220, 5
      %v1223 = vor.u32 %v1219, %v1222
      %v1224 = vrot.slane %v1223, 4
      %v1226 = vshll.u32 %v1040, 16
      %v1228 = vrot.slane %v1226, 5
      %v1229 = vsel %vm1095, %v1224, %v1228
      %v1230 = vshrl.u32 %v1040, 16
      %v1232 = vrot.slane %v1230, 4
      %v1233 = vor.u32 %v1232, %v1228
      %v1234 = vrot.slane %v1233, 4
      %v1236 = vshll.u32 %v1082, 16
      %v1238 = vrot.slane %v1236, 5
      %v1239 = vsel %vm1095, %v1234, %v1238
      %v1241 = vshrl.u32 %v1041, 16
      %v1243 = vrot.slane %v1241, 4
      %v1244 = vshll.u32 %v1041, 16
      %v1246 = vrot.slane %v1244, 5
      %v1247 = vor.u32 %v1243, %v1246
      %v1248 = vrot.slane %v1247, 4
      %v1250 = vshll.u32 %v1042, 16
      %v1252 = vrot.slane %v1250, 5
      %v1253 = vsel %vm1095, %v1248, %v1252
      %v1254 = vshrl.u32 %v1042, 16
      %v1256 = vrot.slane %v1254, 4
      %v1257 = vor.u32 %v1256, %v1252
      %v1258 = vrot.slane %v1257, 4
      %v1260 = vshll.u32 %v1083, 16
      %v1262 = vrot.slane %v1260, 5
      %v1263 = vsel %vm1095, %v1258, %v1262
      %v1265 = vshrl.u32 %v1043, 16
      %v1267 = vrot.slane %v1265, 4
      %v1268 = vshll.u32 %v1043, 16
      %v1270 = vrot.slane %v1268, 5
      %v1271 = vor.u32 %v1267, %v1270
      %v1272 = vrot.slane %v1271, 4
      %v1274 = vshll.u32 %v1044, 16
      %v1276 = vrot.slane %v1274, 5
      %v1277 = vsel %vm1095, %v1272, %v1276
      %v1278 = vshrl.u32 %v1044, 16
      %v1280 = vrot.slane %v1278, 4
      %v1281 = vor.u32 %v1280, %v1276
      %v1282 = vrot.slane %v1281, 4
      %v1284 = vshll.u32 %v1084, 16
      %v1286 = vrot.slane %v1284, 5
      %v1287 = vsel %vm1095, %v1282, %v1286
      %v1289 = vshrl.u32 %v1045, 16
      %v1291 = vrot.slane %v1289, 4
      %v1292 = vshll.u32 %v1045, 16
      %v1294 = vrot.slane %v1292, 5
      %v1295 = vor.u32 %v1291, %v1294
      %v1296 = vrot.slane %v1295, 4
      %v1298 = vshll.u32 %v1046, 16
      %v1300 = vrot.slane %v1298, 5
      %v1301 = vsel %vm1095, %v1296, %v1300
      %v1302 = vshrl.u32 %v1046, 16
      %v1304 = vrot.slane %v1302, 4
      %v1305 = vor.u32 %v1304, %v1300
      %v1306 = vrot.slane %v1305, 4
      %v1308 = vshll.u32 %v1085, 16
      %v1310 = vrot.slane %v1308, 5
      %v1311 = vsel %vm1095, %v1306, %v1310
      %v1313 = vshrl.u32 %v1047, 16
      %v1315 = vrot.slane %v1313, 4
      %v1316 = vshll.u32 %v1047, 16
      %v1318 = vrot.slane %v1316, 5
      %v1319 = vor.u32 %v1315, %v1318
      %v1320 = vrot.slane %v1319, 4
      %v1322 = vshll.u32 %v1048, 16
      %v1324 = vrot.slane %v1322, 5
      %v1325 = vsel %vm1095, %v1320, %v1324
      %v1326 = vshrl.u32 %v1048, 16
      %v1328 = vrot.slane %v1326, 4
      %v1329 = vor.u32 %v1328, %v1324
      %v1330 = vrot.slane %v1329, 4
      %v1332 = vshll.u32 %v1086, 16
      %v1334 = vrot.slane %v1332, 5
      %v1335 = vsel %vm1095, %v1330, %v1334
      %v1337 = vshrl.u32 %v1049, 16
      %v1339 = vrot.slane %v1337, 4
      %v1340 = vshll.u32 %v1049, 16
      %v1342 = vrot.slane %v1340, 5
      %v1343 = vor.u32 %v1339, %v1342
      %v1344 = vrot.slane %v1343, 4
      %v1346 = vshll.u32 %v1050, 16
      %v1348 = vrot.slane %v1346, 5
      %v1349 = vsel %vm1095, %v1344, %v1348
      %v1350 = vshrl.u32 %v1050, 16
      %v1352 = vrot.slane %v1350, 4
      %v1353 = vor.u32 %v1352, %v1348
      %v1354 = vrot.slane %v1353, 4
      %v1356 = vshll.u32 %v1087, 16
      %v1358 = vrot.slane %v1356, 5
      %v1359 = vsel %vm1095, %v1354, %v1358
      %v1361 = vshrl.u32 %v1051, 16
      %v1363 = vrot.slane %v1361, 4
      %v1364 = vshll.u32 %v1051, 16
      %v1366 = vrot.slane %v1364, 5
      %v1367 = vor.u32 %v1363, %v1366
      %v1368 = vrot.slane %v1367, 4
      %v1370 = vshll.u32 %v1052, 16
      %v1372 = vrot.slane %v1370, 5
      %v1373 = vsel %vm1095, %v1368, %v1372
      %v1374 = vshrl.u32 %v1052, 16
      %v1376 = vrot.slane %v1374, 4
      %v1377 = vor.u32 %v1376, %v1372
      %v1378 = vrot.slane %v1377, 4
      %v1380 = vshll.u32 %v1088, 16
      %v1382 = vrot.slane %v1380, 5
      %v1383 = vsel %vm1095, %v1378, %v1382
      %v1385 = vshrl.u32 %v1053, 16
      %v1387 = vrot.slane %v1385, 4
      %v1388 = vshll.u32 %v1053, 16
      %v1390 = vrot.slane %v1388, 5
      %v1391 = vor.u32 %v1387, %v1390
      %v1392 = vrot.slane %v1391, 4
      %v1394 = vshll.u32 %v1054, 16
      %v1396 = vrot.slane %v1394, 5
      %v1397 = vsel %vm1095, %v1392, %v1396
      %v1398 = vshrl.u32 %v1054, 16
      %v1400 = vrot.slane %v1398, 4
      %v1401 = vor.u32 %v1400, %v1396
      %v1402 = vrot.slane %v1401, 4
      %v1404 = vshll.u32 %v1089, 16
      %v1406 = vrot.slane %v1404, 5
      %v1407 = vsel %vm1095, %v1402, %v1406
      %v1409 = vshrl.u32 %v1055, 16
      %v1411 = vrot.slane %v1409, 4
      %v1412 = vshll.u32 %v1055, 16
      %v1414 = vrot.slane %v1412, 5
      %v1415 = vor.u32 %v1411, %v1414
      %v1416 = vrot.slane %v1415, 4
      %v1418 = vshll.u32 %v1056, 16
      %v1420 = vrot.slane %v1418, 5
      %v1421 = vsel %vm1095, %v1416, %v1420
      %v1422 = vshrl.u32 %v1056, 16
      %v1424 = vrot.slane %v1422, 4
      %v1425 = vor.u32 %v1424, %v1420
      %v1426 = vrot.slane %v1425, 4
      %v1428 = vshll.u32 %v1090, 16
      %v1430 = vrot.slane %v1428, 5
      %v1431 = vsel %vm1095, %v1426, %v1430
      %v1433 = vshrl.u32 %v1057, 16
      %v1435 = vrot.slane %v1433, 4
      %v1436 = vshll.u32 %v1057, 16
      %v1438 = vrot.slane %v1436, 5
      %v1439 = vor.u32 %v1435, %v1438
      %v1440 = vrot.slane %v1439, 4
      %v1442 = vshll.u32 %v1058, 16
      %v1444 = vrot.slane %v1442, 5
      %v1445 = vsel %vm1095, %v1440, %v1444
      %v1446 = vshrl.u32 %v1058, 16
      %v1448 = vrot.slane %v1446, 4
      %v1449 = vor.u32 %v1448, %v1444
      %v1450 = vrot.slane %v1449, 4
      %v1452 = vshll.u32 %v1091, 16
      %v1454 = vrot.slane %v1452, 5
      %v1455 = vsel %vm1095, %v1450, %v1454
      %v1457 = vshrl.u32 %v1059, 16
      %v1459 = vrot.slane %v1457, 4
      %v1460 = vshll.u32 %v1059, 16
      %v1462 = vrot.slane %v1460, 5
      %v1463 = vor.u32 %v1459, %v1462
      %v1464 = vrot.slane %v1463, 4
      %v1466 = vshll.u32 %v1060, 16
      %v1468 = vrot.slane %v1466, 5
      %v1469 = vsel %vm1095, %v1464, %v1468
      %v1470 = vshrl.u32 %v1060, 16
      %v1472 = vrot.slane %v1470, 4
      %v1473 = vor.u32 %v1472, %v1468
      %v1474 = vrot.slane %v1473, 4
      %v1476 = vshll.u32 %v1092, 16
      %v1478 = vrot.slane %v1476, 5
      %v1479 = vsel %vm1095, %v1474, %v1478
      %s1480 = scalar_lea.vmem %s3, 64
      %v1481 = vld [vmem:[%s1480] sm:$0xf]
      %v1482 = vld [vmem:[%s1480 + $0x4] sm:$0xf]
      %v1483 = vld [vmem:[%s1480 + $0x8] sm:$0xf]
      %v1484 = vld [vmem:[%s1480 + $0xc] sm:$0xf]
      %v1485 = vld [vmem:[%s1480 + $0x10] sm:$0xf]
      %v1486 = vld [vmem:[%s1480 + $0x14] sm:$0xf]
      %v1487 = vld [vmem:[%s1480 + $0x18] sm:$0xf]
      %v1488 = vld [vmem:[%s1480 + $0x1c] sm:$0xf]
      %v1489 = vld [vmem:[%s1480 + $0x20] sm:$0xf]
      %v1490 = vld [vmem:[%s1480 + $0x24] sm:$0xf]
      %v1491 = vld [vmem:[%s1480 + $0x28] sm:$0xf]
      %v1492 = vld [vmem:[%s1480 + $0x2c] sm:$0xf]
      %v1493 = vld [vmem:[%s1480 + $0x30] sm:$0xf]
      %v1494 = vld [vmem:[%s1480 + $0x34] sm:$0xf]
      %v1495 = vld [vmem:[%s1480 + $0x38] sm:$0xf]
      %v1496 = vld [vmem:[%s1480 + $0x3c] sm:$0xf]
      %v1497 = vunpack.c.l.b16 %v1109
      %v1498 = vunpack.c.l.b16 %v1119
      %v1499 = vunpack.c.l.b16 %v1133
      %v1500 = vunpack.c.l.b16 %v1143
      %v1501 = vunpack.c.l.b16 %v1157
      %v1502 = vunpack.c.l.b16 %v1167
      %v1503 = vunpack.c.l.b16 %v1181
      %v1504 = vunpack.c.l.b16 %v1191
      %v1505 = vunpack.c.l.b16 %v1205
      %v1506 = vunpack.c.l.b16 %v1215
      %v1507 = vunpack.c.l.b16 %v1229
      %v1508 = vunpack.c.l.b16 %v1239
      %v1509 = vunpack.c.l.b16 %v1253
      %v1510 = vunpack.c.l.b16 %v1263
      %v1511 = vunpack.c.l.b16 %v1277
      %v1512 = vunpack.c.l.b16 %v1287
      %v1513 = vunpack.c.l.b16 %v1301
      %v1514 = vunpack.c.l.b16 %v1311
      %v1515 = vunpack.c.l.b16 %v1325
      %v1516 = vunpack.c.l.b16 %v1335
      %v1517 = vunpack.c.l.b16 %v1349
      %v1518 = vunpack.c.l.b16 %v1359
      %v1519 = vunpack.c.l.b16 %v1373
      %v1520 = vunpack.c.l.b16 %v1383
      %v1521 = vunpack.c.l.b16 %v1397
      %v1522 = vunpack.c.l.b16 %v1407
      %v1523 = vunpack.c.l.b16 %v1421
      %v1524 = vunpack.c.l.b16 %v1431
      %v1525 = vunpack.c.l.b16 %v1445
      %v1526 = vunpack.c.l.b16 %v1455
      %v1527 = vunpack.c.l.b16 %v1469
      %v1528 = vunpack.c.l.b16 %v1479
      %v1529 = vpack.c.b16 %v1498, %v1497
      %v1530 = vpack.c.b16 %v1500, %v1499
      %v1531 = vpack.c.b16 %v1502, %v1501
      %v1532 = vpack.c.b16 %v1504, %v1503
      %v1533 = vpack.c.b16 %v1506, %v1505
      %v1534 = vpack.c.b16 %v1508, %v1507
      %v1535 = vpack.c.b16 %v1510, %v1509
      %v1536 = vpack.c.b16 %v1512, %v1511
      %v1537 = vpack.c.b16 %v1514, %v1513
      %v1538 = vpack.c.b16 %v1516, %v1515
      %v1539 = vpack.c.b16 %v1518, %v1517
      %v1540 = vpack.c.b16 %v1520, %v1519
      %v1541 = vpack.c.b16 %v1522, %v1521
      %v1542 = vpack.c.b16 %v1524, %v1523
      %v1543 = vpack.c.b16 %v1526, %v1525
      %v1544 = vpack.c.b16 %v1528, %v1527
      %v1577 = vunpack.c.l.b16 %v1481
      %v1578 = vunpack.c.l.b16 %v1482
      %v1579 = vunpack.c.l.b16 %v1483
      %v1580 = vunpack.c.l.b16 %v1484
      %v1581 = vunpack.c.l.b16 %v1485
      %v1582 = vunpack.c.l.b16 %v1486
      %v1583 = vunpack.c.l.b16 %v1487
      %v1584 = vunpack.c.l.b16 %v1488
      %v1585 = vunpack.c.l.b16 %v1489
      %v1586 = vunpack.c.l.b16 %v1490
      %v1587 = vunpack.c.l.b16 %v1491
      %v1588 = vunpack.c.l.b16 %v1492
      %v1589 = vunpack.c.l.b16 %v1493
      %v1590 = vunpack.c.l.b16 %v1494
      %v1591 = vunpack.c.l.b16 %v1495
      %v1592 = vunpack.c.l.b16 %v1496
      %v1593 = vpack.c.b16 %v1578, %v1577
      %v1594 = vpack.c.b16 %v1580, %v1579
      %v1595 = vpack.c.b16 %v1582, %v1581
      %v1596 = vpack.c.b16 %v1584, %v1583
      %v1597 = vpack.c.b16 %v1586, %v1585
      %v1598 = vpack.c.b16 %v1588, %v1587
      %v1599 = vpack.c.b16 %v1590, %v1589
      %v1600 = vpack.c.b16 %v1592, %v1591
      %1609 = vmatprep.subr.bf16.mxu0 0
      %1610 = vmatpush1.bf16.msra.mxu0 %v1593
      %1611 = vmatprep.subr.bf16.mxu0 0
      %1612 = vmatpush1.bf16.msra.mxu0 %v1594
      %1613 = vmatprep.subr.bf16.mxu0 0
      %1614 = vmatpush1.bf16.msra.mxu0 %v1595
      %1615 = vmatprep.subr.bf16.mxu0 0
      %1616 = vmatpush1.bf16.msra.mxu0 %v1596
      %1617 = vmatprep.subr.bf16.mxu0 0
      %1618 = vmatpush1.bf16.msra.mxu0 %v1597
      %1619 = vmatprep.subr.bf16.mxu0 0
      %1620 = vmatpush1.bf16.msra.mxu0 %v1598
      %1621 = vmatprep.subr.bf16.mxu0 0
      %1622 = vmatpush1.bf16.msra.mxu0 %v1599
      %1623 = vmatprep.subr.bf16.mxu0 0
      %1624 = vmatpush1.bf16.msra.mxu0 %v1600
      %1625 = vmatprep.subr.bf16.mxu0 0
      %1626 = vmatpush1.bf16.msra.mxu0 0
      %1627 = vmatprep.subr.bf16.mxu0 0
      %1628 = vmatpush1.bf16.msra.mxu0 0
      %1629 = vmatprep.subr.bf16.mxu0 0
      %1630 = vmatpush1.bf16.msra.mxu0 0
      %1631 = vmatprep.subr.bf16.mxu0 0
      %1632 = vmatpush1.bf16.msra.mxu0 0
      %1633 = vmatprep.subr.bf16.mxu0 0
      %1634 = vmatpush1.bf16.msra.mxu0 0
      %1635 = vmatprep.subr.bf16.mxu0 0
      %1636 = vmatpush1.bf16.msra.mxu0 0
      %1637 = vmatprep.subr.bf16.mxu0 0
      %1638 = vmatpush1.bf16.msra.mxu0 0
      %1639 = vmatprep.subr.bf16.mxu0 0
      %1640 = vmatpush1.bf16.msra.mxu0 0
      %1641 = vmatprep.mubr.bf16.mxu0 0
      %1642 = vmatmul.mubr.bf16.gmra.mrb[0].mxu0 %v1529
      %v1643 = vpop.f32.mrb[0].mxu0
      %v1644 = vadd.f32 0.0, %v1643
      %v1645 = vpop.f32.mrb[0].mxu0
      %v1646 = vpop.f32.mrb[0].mxu0
      %v1647 = vadd.f32 0.0, %v1646
      %v1648 = vpop.f32.mrb[0].mxu0
      %1649 = vmatprep.mubr.bf16.mxu0 0
      %1650 = vmatmul.mubr.bf16.gmra.mrb[0].mxu0 %v1530
      %v1651 = vpop.f32.mrb[0].mxu0
      %v1652 = vadd.f32 0.0, %v1651
      %v1653 = vpop.f32.mrb[0].mxu0
      %v1654 = vpop.f32.mrb[0].mxu0
      %v1655 = vadd.f32 0.0, %v1654
      %v1656 = vpop.f32.mrb[0].mxu0
      %1657 = vmatprep.mubr.bf16.mxu0 0
      %1658 = vmatmul.mubr.bf16.gmra.mrb[0].mxu0 %v1531
      %v1659 = vpop.f32.mrb[0].mxu0
      %v1660 = vadd.f32 0.0, %v1659
      %v1661 = vpop.f32.mrb[0].mxu0
      %v1662 = vpop.f32.mrb[0].mxu0
      %v1663 = vadd.f32 0.0, %v1662
      %v1664 = vpop.f32.mrb[0].mxu0
      %1665 = vmatprep.mubr.bf16.mxu0 0
      %1666 = vmatmul.mubr.bf16.gmra.mrb[0].mxu0 %v1532
      %v1667 = vpop.f32.mrb[0].mxu0
      %v1668 = vadd.f32 0.0, %v1667
      %v1669 = vpop.f32.mrb[0].mxu0
      %v1670 = vpop.f32.mrb[0].mxu0
      %v1671 = vadd.f32 0.0, %v1670
      %v1672 = vpop.f32.mrb[0].mxu0
      %1673 = vmatprep.mubr.bf16.mxu0 0
      %1674 = vmatmul.mubr.bf16.gmra.mrb[0].mxu0 %v1533
      %v1675 = vpop.f32.mrb[0].mxu0
      %v1676 = vadd.f32 0.0, %v1675
      %v1677 = vpop.f32.mrb[0].mxu0
      %v1678 = vpop.f32.mrb[0].mxu0
      %v1679 = vadd.f32 0.0, %v1678
      %v1680 = vpop.f32.mrb[0].mxu0
      %1681 = vmatprep.mubr.bf16.mxu0 0
      %1682 = vmatmul.mubr.bf16.gmra.mrb[0].mxu0 %v1534
      %v1683 = vpop.f32.mrb[0].mxu0
      %v1684 = vadd.f32 0.0, %v1683
      %v1685 = vpop.f32.mrb[0].mxu0
      %v1686 = vpop.f32.mrb[0].mxu0
      %v1687 = vadd.f32 0.0, %v1686
      %v1688 = vpop.f32.mrb[0].mxu0
      %1689 = vmatprep.mubr.bf16.mxu0 0
      %1690 = vmatmul.mubr.bf16.gmra.mrb[0].mxu0 %v1535
      %v1691 = vpop.f32.mrb[0].mxu0
      %v1692 = vadd.f32 0.0, %v1691
      %v1693 = vpop.f32.mrb[0].mxu0
      %v1694 = vpop.f32.mrb[0].mxu0
      %v1695 = vadd.f32 0.0, %v1694
      %v1696 = vpop.f32.mrb[0].mxu0
      %1697 = vmatprep.mubr.bf16.mxu0 0
      %1698 = vmatmul.mubr.bf16.gmra.mrb[0].mxu0 %v1536
      %v1699 = vpop.f32.mrb[0].mxu0
      %v1700 = vadd.f32 0.0, %v1699
      %v1701 = vpop.f32.mrb[0].mxu0
      %v1702 = vpop.f32.mrb[0].mxu0
      %v1703 = vadd.f32 0.0, %v1702
      %v1704 = vpop.f32.mrb[0].mxu0
      %1705 = vmatprep.mubr.bf16.mxu0 0
      %1706 = vmatmul.mubr.bf16.gmra.mrb[0].mxu0 %v1537
      %v1707 = vpop.f32.mrb[0].mxu0
      %v1708 = vadd.f32 0.0, %v1707
      %v1709 = vpop.f32.mrb[0].mxu0
      %v1710 = vpop.f32.mrb[0].mxu0
      %v1711 = vadd.f32 0.0, %v1710
      %v1712 = vpop.f32.mrb[0].mxu0
      %1713 = vmatprep.mubr.bf16.mxu0 0
      %1714 = vmatmul.mubr.bf16.gmra.mrb[0].mxu0 %v1538
      %v1715 = vpop.f32.mrb[0].mxu0
      %v1716 = vadd.f32 0.0, %v1715
      %v1717 = vpop.f32.mrb[0].mxu0
      %v1718 = vpop.f32.mrb[0].mxu0
      %v1719 = vadd.f32 0.0, %v1718
      %v1720 = vpop.f32.mrb[0].mxu0
      %1721 = vmatprep.mubr.bf16.mxu0 0
      %1722 = vmatmul.mubr.bf16.gmra.mrb[0].mxu0 %v1539
      %v1723 = vpop.f32.mrb[0].mxu0
      %v1724 = vadd.f32 0.0, %v1723
      %v1725 = vpop.f32.mrb[0].mxu0
      %v1726 = vpop.f32.mrb[0].mxu0
      %v1727 = vadd.f32 0.0, %v1726
      %v1728 = vpop.f32.mrb[0].mxu0
      %1729 = vmatprep.mubr.bf16.mxu0 0
      %1730 = vmatmul.mubr.bf16.gmra.mrb[0].mxu0 %v1540
      %v1731 = vpop.f32.mrb[0].mxu0
      %v1732 = vadd.f32 0.0, %v1731
      %v1733 = vpop.f32.mrb[0].mxu0
      %v1734 = vpop.f32.mrb[0].mxu0
      %v1735 = vadd.f32 0.0, %v1734
      %v1736 = vpop.f32.mrb[0].mxu0
      %1737 = vmatprep.mubr.bf16.mxu0 0
      %1738 = vmatmul.mubr.bf16.gmra.mrb[0].mxu0 %v1541
      %v1739 = vpop.f32.mrb[0].mxu0
      %v1740 = vadd.f32 0.0, %v1739
      %v1741 = vpop.f32.mrb[0].mxu0
      %v1742 = vpop.f32.mrb[0].mxu0
      %v1743 = vadd.f32 0.0, %v1742
      %v1744 = vpop.f32.mrb[0].mxu0
      %1745 = vmatprep.mubr.bf16.mxu0 0
      %1746 = vmatmul.mubr.bf16.gmra.mrb[0].mxu0 %v1542
      %v1747 = vpop.f32.mrb[0].mxu0
      %v1748 = vadd.f32 0.0, %v1747
      %v1749 = vpop.f32.mrb[0].mxu0
      %v1750 = vpop.f32.mrb[0].mxu0
      %v1751 = vadd.f32 0.0, %v1750
      %v1752 = vpop.f32.mrb[0].mxu0
      %1753 = vmatprep.mubr.bf16.mxu0 0
      %1754 = vmatmul.mubr.bf16.gmra.mrb[0].mxu0 %v1543
      %v1755 = vpop.f32.mrb[0].mxu0
      %v1756 = vadd.f32 0.0, %v1755
      %v1757 = vpop.f32.mrb[0].mxu0
      %v1758 = vpop.f32.mrb[0].mxu0
      %v1759 = vadd.f32 0.0, %v1758
      %v1760 = vpop.f32.mrb[0].mxu0
      %1761 = vmatprep.mubr.bf16.mxu0 0
      %1762 = vmatmul.mubr.bf16.gmra.mrb[0].mxu0 %v1544
      %v1763 = vpop.f32.mrb[0].mxu0
      %v1764 = vadd.f32 0.0, %v1763
      %v1765 = vpop.f32.mrb[0].mxu0
      %v1766 = vpop.f32.mrb[0].mxu0
      %v1767 = vadd.f32 0.0, %v1766
      %v1768 = vpop.f32.mrb[0].mxu0
      %1769 = vdwg.mxu0
      %v1802 = vunpack.c.l.b16 %v1029
      %v1803 = vunpack.c.l.b16 %v1030
      %v1804 = vunpack.c.l.b16 %v1031
      %v1805 = vunpack.c.l.b16 %v1032
      %v1806 = vunpack.c.l.b16 %v1033
      %v1807 = vunpack.c.l.b16 %v1034
      %v1808 = vunpack.c.l.b16 %v1035
      %v1809 = vunpack.c.l.b16 %v1036
      %v1810 = vunpack.c.l.b16 %v1037
      %v1811 = vunpack.c.l.b16 %v1038
      %v1812 = vunpack.c.l.b16 %v1039
      %v1813 = vunpack.c.l.b16 %v1040
      %v1814 = vunpack.c.l.b16 %v1041
      %v1815 = vunpack.c.l.b16 %v1042
      %v1816 = vunpack.c.l.b16 %v1043
      %v1817 = vunpack.c.l.b16 %v1044
      %v1818 = vunpack.c.l.b16 %v1045
      %v1819 = vunpack.c.l.b16 %v1046
      %v1820 = vunpack.c.l.b16 %v1047
      %v1821 = vunpack.c.l.b16 %v1048
      %v1822 = vunpack.c.l.b16 %v1049
      %v1823 = vunpack.c.l.b16 %v1050
      %v1824 = vunpack.c.l.b16 %v1051
      %v1825 = vunpack.c.l.b16 %v1052
      %v1826 = vunpack.c.l.b16 %v1053
      %v1827 = vunpack.c.l.b16 %v1054
      %v1828 = vunpack.c.l.b16 %v1055
      %v1829 = vunpack.c.l.b16 %v1056
      %v1830 = vunpack.c.l.b16 %v1057
      %v1831 = vunpack.c.l.b16 %v1058
      %v1832 = vunpack.c.l.b16 %v1059
      %v1833 = vunpack.c.l.b16 %v1060
      %v1834 = vpack.c.b16 %v1803, %v1802
      %v1835 = vpack.c.b16 %v1805, %v1804
      %v1836 = vpack.c.b16 %v1807, %v1806
      %v1837 = vpack.c.b16 %v1809, %v1808
      %v1838 = vpack.c.b16 %v1811, %v1810
      %v1839 = vpack.c.b16 %v1813, %v1812
      %v1840 = vpack.c.b16 %v1815, %v1814
      %v1841 = vpack.c.b16 %v1817, %v1816
      %v1842 = vpack.c.b16 %v1819, %v1818
      %v1843 = vpack.c.b16 %v1821, %v1820
      %v1844 = vpack.c.b16 %v1823, %v1822
      %v1845 = vpack.c.b16 %v1825, %v1824
      %v1846 = vpack.c.b16 %v1827, %v1826
      %v1847 = vpack.c.b16 %v1829, %v1828
      %v1848 = vpack.c.b16 %v1831, %v1830
      %v1849 = vpack.c.b16 %v1833, %v1832
      %v1882 = vunpack.c.l.b16 %v1061
      %v1883 = vunpack.c.l.b16 %v1062
      %v1884 = vunpack.c.l.b16 %v1063
      %v1885 = vunpack.c.l.b16 %v1064
      %v1886 = vunpack.c.l.b16 %v1065
      %v1887 = vunpack.c.l.b16 %v1066
      %v1888 = vunpack.c.l.b16 %v1067
      %v1889 = vunpack.c.l.b16 %v1068
      %v1890 = vunpack.c.l.b16 %v1069
      %v1891 = vunpack.c.l.b16 %v1070
      %v1892 = vunpack.c.l.b16 %v1071
      %v1893 = vunpack.c.l.b16 %v1072
      %v1894 = vunpack.c.l.b16 %v1073
      %v1895 = vunpack.c.l.b16 %v1074
      %v1896 = vunpack.c.l.b16 %v1075
      %v1897 = vunpack.c.l.b16 %v1076
      %v1898 = vpack.c.b16 %v1883, %v1882
      %v1899 = vpack.c.b16 %v1885, %v1884
      %v1900 = vpack.c.b16 %v1887, %v1886
      %v1901 = vpack.c.b16 %v1889, %v1888
      %v1902 = vpack.c.b16 %v1891, %v1890
      %v1903 = vpack.c.b16 %v1893, %v1892
      %v1904 = vpack.c.b16 %v1895, %v1894
      %v1905 = vpack.c.b16 %v1897, %v1896
      %1914 = vmatprep.subr.bf16.mxu0 0
      %1915 = vmatpush1.bf16.msra.mxu0 %v1898
      %1916 = vmatprep.subr.bf16.mxu0 0
      %1917 = vmatpush1.bf16.msra.mxu0 %v1899
      %1918 = vmatprep.subr.bf16.mxu0 0
      %1919 = vmatpush1.bf16.msra.mxu0 %v1900
      %1920 = vmatprep.subr.bf16.mxu0 0
      %1921 = vmatpush1.bf16.msra.mxu0 %v1901
      %1922 = vmatprep.subr.bf16.mxu0 0
      %1923 = vmatpush1.bf16.msra.mxu0 %v1902
      %1924 = vmatprep.subr.bf16.mxu0 0
      %1925 = vmatpush1.bf16.msra.mxu0 %v1903
      %1926 = vmatprep.subr.bf16.mxu0 0
      %1927 = vmatpush1.bf16.msra.mxu0 %v1904
      %1928 = vmatprep.subr.bf16.mxu0 0
      %1929 = vmatpush1.bf16.msra.mxu0 %v1905
      %1930 = vmatprep.subr.bf16.mxu0 0
      %1931 = vmatpush1.bf16.msra.mxu0 0
      %1932 = vmatprep.subr.bf16.mxu0 0
      %1933 = vmatpush1.bf16.msra.mxu0 0
      %1934 = vmatprep.subr.bf16.mxu0 0
      %1935 = vmatpush1.bf16.msra.mxu0 0
      %1936 = vmatprep.subr.bf16.mxu0 0
      %1937 = vmatpush1.bf16.msra.mxu0 0
      %1938 = vmatprep.subr.bf16.mxu0 0
      %1939 = vmatpush1.bf16.msra.mxu0 0
      %1940 = vmatprep.subr.bf16.mxu0 0
      %1941 = vmatpush1.bf16.msra.mxu0 0
      %1942 = vmatprep.subr.bf16.mxu0 0
      %1943 = vmatpush1.bf16.msra.mxu0 0
      %1944 = vmatprep.subr.bf16.mxu0 0
      %1945 = vmatpush1.bf16.msra.mxu0 0
      %1946 = vmatprep.mubr.bf16.mxu0 0
      %1947 = vmatmul.mubr.bf16.gmra.mrb[0].mxu0 %v1834
      %v1948 = vpop.f32.mrb[0].mxu0
      %v1949 = vadd.f32 %v1644, %v1948
      %v1950 = vpop.f32.mrb[0].mxu0
      %v1951 = vpop.f32.mrb[0].mxu0
      %v1952 = vadd.f32 %v1647, %v1951
      %v1953 = vpop.f32.mrb[0].mxu0
      %1954 = vmatprep.mubr.bf16.mxu0 0
      %1955 = vmatmul.mubr.bf16.gmra.mrb[0].mxu0 %v1835
      %v1956 = vpop.f32.mrb[0].mxu0
      %v1957 = vadd.f32 %v1652, %v1956
      %v1958 = vpop.f32.mrb[0].mxu0
      %v1959 = vpop.f32.mrb[0].mxu0
      %v1960 = vadd.f32 %v1655, %v1959
      %v1961 = vpop.f32.mrb[0].mxu0
      %1962 = vmatprep.mubr.bf16.mxu0 0
      %1963 = vmatmul.mubr.bf16.gmra.mrb[0].mxu0 %v1836
      %v1964 = vpop.f32.mrb[0].mxu0
      %v1965 = vadd.f32 %v1660, %v1964
      %v1966 = vpop.f32.mrb[0].mxu0
      %v1967 = vpop.f32.mrb[0].mxu0
      %v1968 = vadd.f32 %v1663, %v1967
      %v1969 = vpop.f32.mrb[0].mxu0
      %1970 = vmatprep.mubr.bf16.mxu0 0
      %1971 = vmatmul.mubr.bf16.gmra.mrb[0].mxu0 %v1837
      %v1972 = vpop.f32.mrb[0].mxu0
      %v1973 = vadd.f32 %v1668, %v1972
      %v1974 = vpop.f32.mrb[0].mxu0
      %v1975 = vpop.f32.mrb[0].mxu0
      %v1976 = vadd.f32 %v1671, %v1975
      %v1977 = vpop.f32.mrb[0].mxu0
      %1978 = vmatprep.mubr.bf16.mxu0 0
      %1979 = vmatmul.mubr.bf16.gmra.mrb[0].mxu0 %v1838
      %v1980 = vpop.f32.mrb[0].mxu0
      %v1981 = vadd.f32 %v1676, %v1980
      %v1982 = vpop.f32.mrb[0].mxu0
      %v1983 = vpop.f32.mrb[0].mxu0
      %v1984 = vadd.f32 %v1679, %v1983
      %v1985 = vpop.f32.mrb[0].mxu0
      %1986 = vmatprep.mubr.bf16.mxu0 0
      %1987 = vmatmul.mubr.bf16.gmra.mrb[0].mxu0 %v1839
      %v1988 = vpop.f32.mrb[0].mxu0
      %v1989 = vadd.f32 %v1684, %v1988
      %v1990 = vpop.f32.mrb[0].mxu0
      %v1991 = vpop.f32.mrb[0].mxu0
      %v1992 = vadd.f32 %v1687, %v1991
      %v1993 = vpop.f32.mrb[0].mxu0
      %1994 = vmatprep.mubr.bf16.mxu0 0
      %1995 = vmatmul.mubr.bf16.gmra.mrb[0].mxu0 %v1840
      %v1996 = vpop.f32.mrb[0].mxu0
      %v1997 = vadd.f32 %v1692, %v1996
      %v1998 = vpop.f32.mrb[0].mxu0
      %v1999 = vpop.f32.mrb[0].mxu0
      %v2000 = vadd.f32 %v1695, %v1999
      %v2001 = vpop.f32.mrb[0].mxu0
      %2002 = vmatprep.mubr.bf16.mxu0 0
      %2003 = vmatmul.mubr.bf16.gmra.mrb[0].mxu0 %v1841
      %v2004 = vpop.f32.mrb[0].mxu0
      %v2005 = vadd.f32 %v1700, %v2004
      %v2006 = vpop.f32.mrb[0].mxu0
      %v2007 = vpop.f32.mrb[0].mxu0
      %v2008 = vadd.f32 %v1703, %v2007
      %v2009 = vpop.f32.mrb[0].mxu0
      %2010 = vmatprep.mubr.bf16.mxu0 0
      %2011 = vmatmul.mubr.bf16.gmra.mrb[0].mxu0 %v1842
      %v2012 = vpop.f32.mrb[0].mxu0
      %v2013 = vadd.f32 %v1708, %v2012
      %v2014 = vpop.f32.mrb[0].mxu0
      %v2015 = vpop.f32.mrb[0].mxu0
      %v2016 = vadd.f32 %v1711, %v2015
      %v2017 = vpop.f32.mrb[0].mxu0
      %2018 = vmatprep.mubr.bf16.mxu0 0
      %2019 = vmatmul.mubr.bf16.gmra.mrb[0].mxu0 %v1843
      %v2020 = vpop.f32.mrb[0].mxu0
      %v2021 = vadd.f32 %v1716, %v2020
      %v2022 = vpop.f32.mrb[0].mxu0
      %v2023 = vpop.f32.mrb[0].mxu0
      %v2024 = vadd.f32 %v1719, %v2023
      %v2025 = vpop.f32.mrb[0].mxu0
      %2026 = vmatprep.mubr.bf16.mxu0 0
      %2027 = vmatmul.mubr.bf16.gmra.mrb[0].mxu0 %v1844
      %v2028 = vpop.f32.mrb[0].mxu0
      %v2029 = vadd.f32 %v1724, %v2028
      %v2030 = vpop.f32.mrb[0].mxu0
      %v2031 = vpop.f32.mrb[0].mxu0
      %v2032 = vadd.f32 %v1727, %v2031
      %v2033 = vpop.f32.mrb[0].mxu0
      %2034 = vmatprep.mubr.bf16.mxu0 0
      %2035 = vmatmul.mubr.bf16.gmra.mrb[0].mxu0 %v1845
      %v2036 = vpop.f32.mrb[0].mxu0
      %v2037 = vadd.f32 %v1732, %v2036
      %v2038 = vpop.f32.mrb[0].mxu0
      %v2039 = vpop.f32.mrb[0].mxu0
      %v2040 = vadd.f32 %v1735, %v2039
      %v2041 = vpop.f32.mrb[0].mxu0
      %2042 = vmatprep.mubr.bf16.mxu0 0
      %2043 = vmatmul.mubr.bf16.gmra.mrb[0].mxu0 %v1846
      %v2044 = vpop.f32.mrb[0].mxu0
      %v2045 = vadd.f32 %v1740, %v2044
      %v2046 = vpop.f32.mrb[0].mxu0
      %v2047 = vpop.f32.mrb[0].mxu0
      %v2048 = vadd.f32 %v1743, %v2047
      %v2049 = vpop.f32.mrb[0].mxu0
      %2050 = vmatprep.mubr.bf16.mxu0 0
      %2051 = vmatmul.mubr.bf16.gmra.mrb[0].mxu0 %v1847
      %v2052 = vpop.f32.mrb[0].mxu0
      %v2053 = vadd.f32 %v1748, %v2052
      %v2054 = vpop.f32.mrb[0].mxu0
      %v2055 = vpop.f32.mrb[0].mxu0
      %v2056 = vadd.f32 %v1751, %v2055
      %v2057 = vpop.f32.mrb[0].mxu0
      %2058 = vmatprep.mubr.bf16.mxu0 0
      %2059 = vmatmul.mubr.bf16.gmra.mrb[0].mxu0 %v1848
      %v2060 = vpop.f32.mrb[0].mxu0
      %v2061 = vadd.f32 %v1756, %v2060
      %v2062 = vpop.f32.mrb[0].mxu0
      %v2063 = vpop.f32.mrb[0].mxu0
      %v2064 = vadd.f32 %v1759, %v2063
      %v2065 = vpop.f32.mrb[0].mxu0
      %2066 = vmatprep.mubr.bf16.mxu0 0
      %2067 = vmatmul.mubr.bf16.gmra.mrb[0].mxu0 %v1849
      %v2068 = vpop.f32.mrb[0].mxu0
      %v2069 = vadd.f32 %v1764, %v2068
      %v2070 = vpop.f32.mrb[0].mxu0
      %v2071 = vpop.f32.mrb[0].mxu0
      %v2072 = vadd.f32 %v1767, %v2071
      %v2073 = vpop.f32.mrb[0].mxu0
      %2074 = vdwg.mxu0
      %v2075 = vld [vmem:[#allocation2] sm:$0xe]
      %v2076 = vld [vmem:[#allocation2 + $0xc] sm:$0xe]
      %v2077 = vld [vmem:[#allocation2 + $0x18] sm:$0xe]
      %v2078 = vld [vmem:[#allocation2 + $0x24] sm:$0xe]
      %v2079 = vld [vmem:[#allocation2 + $0x30] sm:$0xe]
      %v2080 = vld [vmem:[#allocation2 + $0x3c] sm:$0xe]
      %v2081 = vld [vmem:[#allocation2 + $0x48] sm:$0xe]
      %v2082 = vld [vmem:[#allocation2 + $0x54] sm:$0xe]
      %v2083 = vld [vmem:[#allocation2 + $0x60] sm:$0xe]
      %v2084 = vld [vmem:[#allocation2 + $0x6c] sm:$0xe]
      %v2085 = vld [vmem:[#allocation2 + $0x78] sm:$0xe]
      %v2086 = vld [vmem:[#allocation2 + $0x84] sm:$0xe]
      %v2087 = vld [vmem:[#allocation2 + $0x90] sm:$0xe]
      %v2088 = vld [vmem:[#allocation2 + $0x9c] sm:$0xe]
      %v2089 = vld [vmem:[#allocation2 + $0xa8] sm:$0xe]
      %v2090 = vld [vmem:[#allocation2 + $0xb4] sm:$0xe]
      %vm2123 = vcmask 1042432
      %vm2124 = vcmask 1046532
      %vm2125 = vmor %vm2123, %vm2124
      %v2126 = vrot.slane %v2075, 5
      %v2127 = vrot.slane %v2126, 4
      %v2128 = vrot.slane %v1030, 5
      %v2129 = vsel %vm2125, %v2127, %v2128
      %v2130 = vrot.slane %v2128, 4
      %v2131 = vrot.slane %v1077, 5
      %v2132 = vsel %vm2125, %v2130, %v2131
      %v2133 = vrot.slane %v2076, 5
      %v2134 = vrot.slane %v2133, 4
      %v2135 = vrot.slane %v1032, 5
      %v2136 = vsel %vm2125, %v2134, %v2135
      %v2137 = vrot.slane %v2135, 4
      %v2138 = vrot.slane %v1078, 5
      %v2139 = vsel %vm2125, %v2137, %v2138
      %v2140 = vrot.slane %v2077, 5
      %v2141 = vrot.slane %v2140, 4
      %v2142 = vrot.slane %v1034, 5
      %v2143 = vsel %vm2125, %v2141, %v2142
      %v2144 = vrot.slane %v2142, 4
      %v2145 = vrot.slane %v1079, 5
      %v2146 = vsel %vm2125, %v2144, %v2145
      %v2147 = vrot.slane %v2078, 5
      %v2148 = vrot.slane %v2147, 4
      %v2149 = vrot.slane %v1036, 5
      %v2150 = vsel %vm2125, %v2148, %v2149
      %v2151 = vrot.slane %v2149, 4
      %v2152 = vrot.slane %v1080, 5
      %v2153 = vsel %vm2125, %v2151, %v2152
      %v2154 = vrot.slane %v2079, 5
      %v2155 = vrot.slane %v2154, 4
      %v2156 = vrot.slane %v1038, 5
      %v2157 = vsel %vm2125, %v2155, %v2156
      %v2158 = vrot.slane %v2156, 4
      %v2159 = vrot.slane %v1081, 5
      %v2160 = vsel %vm2125, %v2158, %v2159
      %v2161 = vrot.slane %v2080, 5
      %v2162 = vrot.slane %v2161, 4
      %v2163 = vrot.slane %v1040, 5
      %v2164 = vsel %vm2125, %v2162, %v2163
      %v2165 = vrot.slane %v2163, 4
      %v2166 = vrot.slane %v1082, 5
      %v2167 = vsel %vm2125, %v2165, %v2166
      %v2168 = vrot.slane %v2081, 5
      %v2169 = vrot.slane %v2168, 4
      %v2170 = vrot.slane %v1042, 5
      %v2171 = vsel %vm2125, %v2169, %v2170
      %v2172 = vrot.slane %v2170, 4
      %v2173 = vrot.slane %v1083, 5
      %v2174 = vsel %vm2125, %v2172, %v2173
      %v2175 = vrot.slane %v2082, 5
      %v2176 = vrot.slane %v2175, 4
      %v2177 = vrot.slane %v1044, 5
      %v2178 = vsel %vm2125, %v2176, %v2177
      %v2179 = vrot.slane %v2177, 4
      %v2180 = vrot.slane %v1084, 5
      %v2181 = vsel %vm2125, %v2179, %v2180
      %v2182 = vrot.slane %v2083, 5
      %v2183 = vrot.slane %v2182, 4
      %v2184 = vrot.slane %v1046, 5
      %v2185 = vsel %vm2125, %v2183, %v2184
      %v2186 = vrot.slane %v2184, 4
      %v2187 = vrot.slane %v1085, 5
      %v2188 = vsel %vm2125, %v2186, %v2187
      %v2189 = vrot.slane %v2084, 5
      %v2190 = vrot.slane %v2189, 4
      %v2191 = vrot.slane %v1048, 5
      %v2192 = vsel %vm2125, %v2190, %v2191
      %v2193 = vrot.slane %v2191, 4
      %v2194 = vrot.slane %v1086, 5
      %v2195 = vsel %vm2125, %v2193, %v2194
      %v2196 = vrot.slane %v2085, 5
      %v2197 = vrot.slane %v2196, 4
      %v2198 = vrot.slane %v1050, 5
      %v2199 = vsel %vm2125, %v2197, %v2198
      %v2200 = vrot.slane %v2198, 4
      %v2201 = vrot.slane %v1087, 5
      %v2202 = vsel %vm2125, %v2200, %v2201
      %v2203 = vrot.slane %v2086, 5
      %v2204 = vrot.slane %v2203, 4
      %v2205 = vrot.slane %v1052, 5
      %v2206 = vsel %vm2125, %v2204, %v2205
      %v2207 = vrot.slane %v2205, 4
      %v2208 = vrot.slane %v1088, 5
      %v2209 = vsel %vm2125, %v2207, %v2208
      %v2210 = vrot.slane %v2087, 5
      %v2211 = vrot.slane %v2210, 4
      %v2212 = vrot.slane %v1054, 5
      %v2213 = vsel %vm2125, %v2211, %v2212
      %v2214 = vrot.slane %v2212, 4
      %v2215 = vrot.slane %v1089, 5
      %v2216 = vsel %vm2125, %v2214, %v2215
      %v2217 = vrot.slane %v2088, 5
      %v2218 = vrot.slane %v2217, 4
      %v2219 = vrot.slane %v1056, 5
      %v2220 = vsel %vm2125, %v2218, %v2219
      %v2221 = vrot.slane %v2219, 4
      %v2222 = vrot.slane %v1090, 5
      %v2223 = vsel %vm2125, %v2221, %v2222
      %v2224 = vrot.slane %v2089, 5
      %v2225 = vrot.slane %v2224, 4
      %v2226 = vrot.slane %v1058, 5
      %v2227 = vsel %vm2125, %v2225, %v2226
      %v2228 = vrot.slane %v2226, 4
      %v2229 = vrot.slane %v1091, 5
      %v2230 = vsel %vm2125, %v2228, %v2229
      %v2231 = vrot.slane %v2090, 5
      %v2232 = vrot.slane %v2231, 4
      %v2233 = vrot.slane %v1060, 5
      %v2234 = vsel %vm2125, %v2232, %v2233
      %v2235 = vrot.slane %v2233, 4
      %v2236 = vrot.slane %v1092, 5
      %v2237 = vsel %vm2125, %v2235, %v2236
      %s2238 = scalar_lea.vmem %s3, 128
      %v2239 = vld [vmem:[%s2238] sm:$0xf]
      %v2240 = vld [vmem:[%s2238 + $0x4] sm:$0xf]
      %v2241 = vld [vmem:[%s2238 + $0x8] sm:$0xf]
      %v2242 = vld [vmem:[%s2238 + $0xc] sm:$0xf]
      %v2243 = vld [vmem:[%s2238 + $0x10] sm:$0xf]
      %v2244 = vld [vmem:[%s2238 + $0x14] sm:$0xf]
      %v2245 = vld [vmem:[%s2238 + $0x18] sm:$0xf]
      %v2246 = vld [vmem:[%s2238 + $0x1c] sm:$0xf]
      %v2247 = vld [vmem:[%s2238 + $0x20] sm:$0xf]
      %v2248 = vld [vmem:[%s2238 + $0x24] sm:$0xf]
      %v2249 = vld [vmem:[%s2238 + $0x28] sm:$0xf]
      %v2250 = vld [vmem:[%s2238 + $0x2c] sm:$0xf]
      %v2251 = vld [vmem:[%s2238 + $0x30] sm:$0xf]
      %v2252 = vld [vmem:[%s2238 + $0x34] sm:$0xf]
      %v2253 = vld [vmem:[%s2238 + $0x38] sm:$0xf]
      %v2254 = vld [vmem:[%s2238 + $0x3c] sm:$0xf]
      %v2255 = vunpack.c.l.b16 %v2129
      %v2256 = vunpack.c.l.b16 %v2132
      %v2257 = vunpack.c.l.b16 %v2136
      %v2258 = vunpack.c.l.b16 %v2139
      %v2259 = vunpack.c.l.b16 %v2143
      %v2260 = vunpack.c.l.b16 %v2146
      %v2261 = vunpack.c.l.b16 %v2150
      %v2262 = vunpack.c.l.b16 %v2153
      %v2263 = vunpack.c.l.b16 %v2157
      %v2264 = vunpack.c.l.b16 %v2160
      %v2265 = vunpack.c.l.b16 %v2164
      %v2266 = vunpack.c.l.b16 %v2167
      %v2267 = vunpack.c.l.b16 %v2171
      %v2268 = vunpack.c.l.b16 %v2174
      %v2269 = vunpack.c.l.b16 %v2178
      %v2270 = vunpack.c.l.b16 %v2181
      %v2271 = vunpack.c.l.b16 %v2185
      %v2272 = vunpack.c.l.b16 %v2188
      %v2273 = vunpack.c.l.b16 %v2192
      %v2274 = vunpack.c.l.b16 %v2195
      %v2275 = vunpack.c.l.b16 %v2199
      %v2276 = vunpack.c.l.b16 %v2202
      %v2277 = vunpack.c.l.b16 %v2206
      %v2278 = vunpack.c.l.b16 %v2209
      %v2279 = vunpack.c.l.b16 %v2213
      %v2280 = vunpack.c.l.b16 %v2216
      %v2281 = vunpack.c.l.b16 %v2220
      %v2282 = vunpack.c.l.b16 %v2223
      %v2283 = vunpack.c.l.b16 %v2227
      %v2284 = vunpack.c.l.b16 %v2230
      %v2285 = vunpack.c.l.b16 %v2234
      %v2286 = vunpack.c.l.b16 %v2237
      %v2287 = vpack.c.b16 %v2256, %v2255
      %v2288 = vpack.c.b16 %v2258, %v2257
      %v2289 = vpack.c.b16 %v2260, %v2259
      %v2290 = vpack.c.b16 %v2262, %v2261
      %v2291 = vpack.c.b16 %v2264, %v2263
      %v2292 = vpack.c.b16 %v2266, %v2265
      %v2293 = vpack.c.b16 %v2268, %v2267
      %v2294 = vpack.c.b16 %v2270, %v2269
      %v2295 = vpack.c.b16 %v2272, %v2271
      %v2296 = vpack.c.b16 %v2274, %v2273
      %v2297 = vpack.c.b16 %v2276, %v2275
      %v2298 = vpack.c.b16 %v2278, %v2277
      %v2299 = vpack.c.b16 %v2280, %v2279
      %v2300 = vpack.c.b16 %v2282, %v2281
      %v2301 = vpack.c.b16 %v2284, %v2283
      %v2302 = vpack.c.b16 %v2286, %v2285
      %v2335 = vunpack.c.l.b16 %v2239
      %v2336 = vunpack.c.l.b16 %v2240
      %v2337 = vunpack.c.l.b16 %v2241
      %v2338 = vunpack.c.l.b16 %v2242
      %v2339 = vunpack.c.l.b16 %v2243
      %v2340 = vunpack.c.l.b16 %v2244
      %v2341 = vunpack.c.l.b16 %v2245
      %v2342 = vunpack.c.l.b16 %v2246
      %v2343 = vunpack.c.l.b16 %v2247
      %v2344 = vunpack.c.l.b16 %v2248
      %v2345 = vunpack.c.l.b16 %v2249
      %v2346 = vunpack.c.l.b16 %v2250
      %v2347 = vunpack.c.l.b16 %v2251
      %v2348 = vunpack.c.l.b16 %v2252
      %v2349 = vunpack.c.l.b16 %v2253
      %v2350 = vunpack.c.l.b16 %v2254
      %v2351 = vpack.c.b16 %v2336, %v2335
      %v2352 = vpack.c.b16 %v2338, %v2337
      %v2353 = vpack.c.b16 %v2340, %v2339
      %v2354 = vpack.c.b16 %v2342, %v2341
      %v2355 = vpack.c.b16 %v2344, %v2343
      %v2356 = vpack.c.b16 %v2346, %v2345
      %v2357 = vpack.c.b16 %v2348, %v2347
      %v2358 = vpack.c.b16 %v2350, %v2349
      %2367 = vmatprep.subr.bf16.mxu0 0
      %2368 = vmatpush1.bf16.msra.mxu0 %v2351
      %2369 = vmatprep.subr.bf16.mxu0 0
      %2370 = vmatpush1.bf16.msra.mxu0 %v2352
      %2371 = vmatprep.subr.bf16.mxu0 0
      %2372 = vmatpush1.bf16.msra.mxu0 %v2353
      %2373 = vmatprep.subr.bf16.mxu0 0
      %2374 = vmatpush1.bf16.msra.mxu0 %v2354
      %2375 = vmatprep.subr.bf16.mxu0 0
      %2376 = vmatpush1.bf16.msra.mxu0 %v2355
      %2377 = vmatprep.subr.bf16.mxu0 0
      %2378 = vmatpush1.bf16.msra.mxu0 %v2356
      %2379 = vmatprep.subr.bf16.mxu0 0
      %2380 = vmatpush1.bf16.msra.mxu0 %v2357
      %2381 = vmatprep.subr.bf16.mxu0 0
      %2382 = vmatpush1.bf16.msra.mxu0 %v2358
      %2383 = vmatprep.subr.bf16.mxu0 0
      %2384 = vmatpush1.bf16.msra.mxu0 0
      %2385 = vmatprep.subr.bf16.mxu0 0
      %2386 = vmatpush1.bf16.msra.mxu0 0
      %2387 = vmatprep.subr.bf16.mxu0 0
      %2388 = vmatpush1.bf16.msra.mxu0 0
      %2389 = vmatprep.subr.bf16.mxu0 0
      %2390 = vmatpush1.bf16.msra.mxu0 0
      %2391 = vmatprep.subr.bf16.mxu0 0
      %2392 = vmatpush1.bf16.msra.mxu0 0
      %2393 = vmatprep.subr.bf16.mxu0 0
      %2394 = vmatpush1.bf16.msra.mxu0 0
      %2395 = vmatprep.subr.bf16.mxu0 0
      %2396 = vmatpush1.bf16.msra.mxu0 0
      %2397 = vmatprep.subr.bf16.mxu0 0
      %2398 = vmatpush1.bf16.msra.mxu0 0
      %2399 = vmatprep.mubr.bf16.mxu0 0
      %2400 = vmatmul.mubr.bf16.gmra.mrb[0].mxu0 %v2287
      %v2401 = vpop.f32.mrb[0].mxu0
      %v2402 = vadd.f32 0.0, %v2401
      %v2403 = vpop.f32.mrb[0].mxu0
      %v2404 = vpop.f32.mrb[0].mxu0
      %v2405 = vadd.f32 0.0, %v2404
      %v2406 = vpop.f32.mrb[0].mxu0
      %2407 = vmatprep.mubr.bf16.mxu0 0
      %2408 = vmatmul.mubr.bf16.gmra.mrb[0].mxu0 %v2288
      %v2409 = vpop.f32.mrb[0].mxu0
      %v2410 = vadd.f32 0.0, %v2409
      %v2411 = vpop.f32.mrb[0].mxu0
      %v2412 = vpop.f32.mrb[0].mxu0
      %v2413 = vadd.f32 0.0, %v2412
      %v2414 = vpop.f32.mrb[0].mxu0
      %2415 = vmatprep.mubr.bf16.mxu0 0
      %2416 = vmatmul.mubr.bf16.gmra.mrb[0].mxu0 %v2289
      %v2417 = vpop.f32.mrb[0].mxu0
      %v2418 = vadd.f32 0.0, %v2417
      %v2419 = vpop.f32.mrb[0].mxu0
      %v2420 = vpop.f32.mrb[0].mxu0
      %v2421 = vadd.f32 0.0, %v2420
      %v2422 = vpop.f32.mrb[0].mxu0
      %2423 = vmatprep.mubr.bf16.mxu0 0
      %2424 = vmatmul.mubr.bf16.gmra.mrb[0].mxu0 %v2290
      %v2425 = vpop.f32.mrb[0].mxu0
      %v2426 = vadd.f32 0.0, %v2425
      %v2427 = vpop.f32.mrb[0].mxu0
      %v2428 = vpop.f32.mrb[0].mxu0
      %v2429 = vadd.f32 0.0, %v2428
      %v2430 = vpop.f32.mrb[0].mxu0
      %2431 = vmatprep.mubr.bf16.mxu0 0
      %2432 = vmatmul.mubr.bf16.gmra.mrb[0].mxu0 %v2291
      %v2433 = vpop.f32.mrb[0].mxu0
      %v2434 = vadd.f32 0.0, %v2433
      %v2435 = vpop.f32.mrb[0].mxu0
      %v2436 = vpop.f32.mrb[0].mxu0
      %v2437 = vadd.f32 0.0, %v2436
      %v2438 = vpop.f32.mrb[0].mxu0
      %2439 = vmatprep.mubr.bf16.mxu0 0
      %2440 = vmatmul.mubr.bf16.gmra.mrb[0].mxu0 %v2292
      %v2441 = vpop.f32.mrb[0].mxu0
      %v2442 = vadd.f32 0.0, %v2441
      %v2443 = vpop.f32.mrb[0].mxu0
      %v2444 = vpop.f32.mrb[0].mxu0
      %v2445 = vadd.f32 0.0, %v2444
      %v2446 = vpop.f32.mrb[0].mxu0
      %2447 = vmatprep.mubr.bf16.mxu0 0
      %2448 = vmatmul.mubr.bf16.gmra.mrb[0].mxu0 %v2293
      %v2449 = vpop.f32.mrb[0].mxu0
      %v2450 = vadd.f32 0.0, %v2449
      %v2451 = vpop.f32.mrb[0].mxu0
      %v2452 = vpop.f32.mrb[0].mxu0
      %v2453 = vadd.f32 0.0, %v2452
      %v2454 = vpop.f32.mrb[0].mxu0
      %2455 = vmatprep.mubr.bf16.mxu0 0
      %2456 = vmatmul.mubr.bf16.gmra.mrb[0].mxu0 %v2294
      %v2457 = vpop.f32.mrb[0].mxu0
      %v2458 = vadd.f32 0.0, %v2457
      %v2459 = vpop.f32.mrb[0].mxu0
      %v2460 = vpop.f32.mrb[0].mxu0
      %v2461 = vadd.f32 0.0, %v2460
      %v2462 = vpop.f32.mrb[0].mxu0
      %2463 = vmatprep.mubr.bf16.mxu0 0
      %2464 = vmatmul.mubr.bf16.gmra.mrb[0].mxu0 %v2295
      %v2465 = vpop.f32.mrb[0].mxu0
      %v2466 = vadd.f32 0.0, %v2465
      %v2467 = vpop.f32.mrb[0].mxu0
      %v2468 = vpop.f32.mrb[0].mxu0
      %v2469 = vadd.f32 0.0, %v2468
      %v2470 = vpop.f32.mrb[0].mxu0
      %2471 = vmatprep.mubr.bf16.mxu0 0
      %2472 = vmatmul.mubr.bf16.gmra.mrb[0].mxu0 %v2296
      %v2473 = vpop.f32.mrb[0].mxu0
      %v2474 = vadd.f32 0.0, %v2473
      %v2475 = vpop.f32.mrb[0].mxu0
      %v2476 = vpop.f32.mrb[0].mxu0
      %v2477 = vadd.f32 0.0, %v2476
      %v2478 = vpop.f32.mrb[0].mxu0
      %2479 = vmatprep.mubr.bf16.mxu0 0
      %2480 = vmatmul.mubr.bf16.gmra.mrb[0].mxu0 %v2297
      %v2481 = vpop.f32.mrb[0].mxu0
      %v2482 = vadd.f32 0.0, %v2481
      %v2483 = vpop.f32.mrb[0].mxu0
      %v2484 = vpop.f32.mrb[0].mxu0
      %v2485 = vadd.f32 0.0, %v2484
      %v2486 = vpop.f32.mrb[0].mxu0
      %2487 = vmatprep.mubr.bf16.mxu0 0
      %2488 = vmatmul.mubr.bf16.gmra.mrb[0].mxu0 %v2298
      %v2489 = vpop.f32.mrb[0].mxu0
      %v2490 = vadd.f32 0.0, %v2489
      %v2491 = vpop.f32.mrb[0].mxu0
      %v2492 = vpop.f32.mrb[0].mxu0
      %v2493 = vadd.f32 0.0, %v2492
      %v2494 = vpop.f32.mrb[0].mxu0
      %2495 = vmatprep.mubr.bf16.mxu0 0
      %2496 = vmatmul.mubr.bf16.gmra.mrb[0].mxu0 %v2299
      %v2497 = vpop.f32.mrb[0].mxu0
      %v2498 = vadd.f32 0.0, %v2497
      %v2499 = vpop.f32.mrb[0].mxu0
      %v2500 = vpop.f32.mrb[0].mxu0
      %v2501 = vadd.f32 0.0, %v2500
      %v2502 = vpop.f32.mrb[0].mxu0
      %2503 = vmatprep.mubr.bf16.mxu0 0
      %2504 = vmatmul.mubr.bf16.gmra.mrb[0].mxu0 %v2300
      %v2505 = vpop.f32.mrb[0].mxu0
      %v2506 = vadd.f32 0.0, %v2505
      %v2507 = vpop.f32.mrb[0].mxu0
      %v2508 = vpop.f32.mrb[0].mxu0
      %v2509 = vadd.f32 0.0, %v2508
      %v2510 = vpop.f32.mrb[0].mxu0
      %2511 = vmatprep.mubr.bf16.mxu0 0
      %2512 = vmatmul.mubr.bf16.gmra.mrb[0].mxu0 %v2301
      %v2513 = vpop.f32.mrb[0].mxu0
      %v2514 = vadd.f32 0.0, %v2513
      %v2515 = vpop.f32.mrb[0].mxu0
      %v2516 = vpop.f32.mrb[0].mxu0
      %v2517 = vadd.f32 0.0, %v2516
      %v2518 = vpop.f32.mrb[0].mxu0
      %2519 = vmatprep.mubr.bf16.mxu0 0
      %2520 = vmatmul.mubr.bf16.gmra.mrb[0].mxu0 %v2302
      %v2521 = vpop.f32.mrb[0].mxu0
      %v2522 = vadd.f32 0.0, %v2521
      %v2523 = vpop.f32.mrb[0].mxu0
      %v2524 = vpop.f32.mrb[0].mxu0
      %v2525 = vadd.f32 0.0, %v2524
      %v2526 = vpop.f32.mrb[0].mxu0
      %2527 = vdwg.mxu0
      %v2528 = vadd.f32 %v1949, %v2402
      %v2529 = vadd.f32 %v1952, %v2405
      %v2530 = vadd.f32 %v1957, %v2410
      %v2531 = vadd.f32 %v1960, %v2413
      %v2532 = vadd.f32 %v1965, %v2418
      %v2533 = vadd.f32 %v1968, %v2421
      %v2534 = vadd.f32 %v1973, %v2426
      %v2535 = vadd.f32 %v1976, %v2429
      %v2536 = vadd.f32 %v1981, %v2434
      %v2537 = vadd.f32 %v1984, %v2437
      %v2538 = vadd.f32 %v1989, %v2442
      %v2539 = vadd.f32 %v1992, %v2445
      %v2540 = vadd.f32 %v1997, %v2450
      %v2541 = vadd.f32 %v2000, %v2453
      %v2542 = vadd.f32 %v2005, %v2458
      %v2543 = vadd.f32 %v2008, %v2461
      %v2544 = vadd.f32 %v2013, %v2466
      %v2545 = vadd.f32 %v2016, %v2469
      %v2546 = vadd.f32 %v2021, %v2474
      %v2547 = vadd.f32 %v2024, %v2477
      %v2548 = vadd.f32 %v2029, %v2482
      %v2549 = vadd.f32 %v2032, %v2485
      %v2550 = vadd.f32 %v2037, %v2490
      %v2551 = vadd.f32 %v2040, %v2493
      %v2552 = vadd.f32 %v2045, %v2498
      %v2553 = vadd.f32 %v2048, %v2501
      %v2554 = vadd.f32 %v2053, %v2506
      %v2555 = vadd.f32 %v2056, %v2509
      %v2556 = vadd.f32 %v2061, %v2514
      %v2557 = vadd.f32 %v2064, %v2517
      %v2558 = vadd.f32 %v2069, %v2522
      %v2559 = vadd.f32 %v2072, %v2525
      %v2560 = vld [vmem:[%s911] sm:$0xf]
      %v2561 = vld [vmem:[%s911 + $0x4] sm:$0xf]
      %v2562 = vld [vmem:[%s911 + $0xc] sm:$0xf]
      %v2563 = vld [vmem:[%s911 + $0x10] sm:$0xf]
      %v2564 = vld [vmem:[%s911 + $0x18] sm:$0xf]
      %v2565 = vld [vmem:[%s911 + $0x1c] sm:$0xf]
      %v2566 = vld [vmem:[%s911 + $0x24] sm:$0xf]
      %v2567 = vld [vmem:[%s911 + $0x28] sm:$0xf]
      %v2568 = vld [vmem:[%s911 + $0x30] sm:$0xf]
      %v2569 = vld [vmem:[%s911 + $0x34] sm:$0xf]
      %v2570 = vld [vmem:[%s911 + $0x3c] sm:$0xf]
      %v2571 = vld [vmem:[%s911 + $0x40] sm:$0xf]
      %v2572 = vld [vmem:[%s911 + $0x48] sm:$0xf]
      %v2573 = vld [vmem:[%s911 + $0x4c] sm:$0xf]
      %v2574 = vld [vmem:[%s911 + $0x54] sm:$0xf]
      %v2575 = vld [vmem:[%s911 + $0x58] sm:$0xf]
      %v2576 = vld [vmem:[%s911 + $0x60] sm:$0xf]
      %v2577 = vld [vmem:[%s911 + $0x64] sm:$0xf]
      %v2578 = vld [vmem:[%s911 + $0x6c] sm:$0xf]
      %v2579 = vld [vmem:[%s911 + $0x70] sm:$0xf]
      %v2580 = vld [vmem:[%s911 + $0x78] sm:$0xf]
      %v2581 = vld [vmem:[%s911 + $0x7c] sm:$0xf]
      %v2582 = vld [vmem:[%s911 + $0x84] sm:$0xf]
      %v2583 = vld [vmem:[%s911 + $0x88] sm:$0xf]
      %v2584 = vld [vmem:[%s911 + $0x90] sm:$0xf]
      %v2585 = vld [vmem:[%s911 + $0x94] sm:$0xf]
      %v2586 = vld [vmem:[%s911 + $0x9c] sm:$0xf]
      %v2587 = vld [vmem:[%s911 + $0xa0] sm:$0xf]
      %v2588 = vld [vmem:[%s911 + $0xa8] sm:$0xf]
      %v2589 = vld [vmem:[%s911 + $0xac] sm:$0xf]
      %v2590 = vld [vmem:[%s911 + $0xb4] sm:$0xf]
      %v2591 = vld [vmem:[%s911 + $0xb8] sm:$0xf]
      %s2592 = scalar_lea.vmem %s3, 192
      %v2593 = vld [vmem:[%s2592] sm:$0xf]
      %v2594 = vld [vmem:[%s2592 + $0x4] sm:$0xf]
      %v2595 = vld [vmem:[%s2592 + $0x8] sm:$0xf]
      %v2596 = vld [vmem:[%s2592 + $0xc] sm:$0xf]
      %v2597 = vld [vmem:[%s2592 + $0x10] sm:$0xf]
      %v2598 = vld [vmem:[%s2592 + $0x14] sm:$0xf]
      %v2599 = vld [vmem:[%s2592 + $0x18] sm:$0xf]
      %v2600 = vld [vmem:[%s2592 + $0x1c] sm:$0xf]
      %v2601 = vld [vmem:[%s2592 + $0x20] sm:$0xf]
      %v2602 = vld [vmem:[%s2592 + $0x24] sm:$0xf]
      %v2603 = vld [vmem:[%s2592 + $0x28] sm:$0xf]
      %v2604 = vld [vmem:[%s2592 + $0x2c] sm:$0xf]
      %v2605 = vld [vmem:[%s2592 + $0x30] sm:$0xf]
      %v2606 = vld [vmem:[%s2592 + $0x34] sm:$0xf]
      %v2607 = vld [vmem:[%s2592 + $0x38] sm:$0xf]
      %v2608 = vld [vmem:[%s2592 + $0x3c] sm:$0xf]
      %v2641 = vunpack.c.l.b16 %v2560
      %v2642 = vunpack.c.l.b16 %v2561
      %v2643 = vunpack.c.l.b16 %v2562
      %v2644 = vunpack.c.l.b16 %v2563
      %v2645 = vunpack.c.l.b16 %v2564
      %v2646 = vunpack.c.l.b16 %v2565
      %v2647 = vunpack.c.l.b16 %v2566
      %v2648 = vunpack.c.l.b16 %v2567
      %v2649 = vunpack.c.l.b16 %v2568
      %v2650 = vunpack.c.l.b16 %v2569
      %v2651 = vunpack.c.l.b16 %v2570
      %v2652 = vunpack.c.l.b16 %v2571
      %v2653 = vunpack.c.l.b16 %v2572
      %v2654 = vunpack.c.l.b16 %v2573
      %v2655 = vunpack.c.l.b16 %v2574
      %v2656 = vunpack.c.l.b16 %v2575
      %v2657 = vunpack.c.l.b16 %v2576
      %v2658 = vunpack.c.l.b16 %v2577
      %v2659 = vunpack.c.l.b16 %v2578
      %v2660 = vunpack.c.l.b16 %v2579
      %v2661 = vunpack.c.l.b16 %v2580
      %v2662 = vunpack.c.l.b16 %v2581
      %v2663 = vunpack.c.l.b16 %v2582
      %v2664 = vunpack.c.l.b16 %v2583
      %v2665 = vunpack.c.l.b16 %v2584
      %v2666 = vunpack.c.l.b16 %v2585
      %v2667 = vunpack.c.l.b16 %v2586
      %v2668 = vunpack.c.l.b16 %v2587
      %v2669 = vunpack.c.l.b16 %v2588
      %v2670 = vunpack.c.l.b16 %v2589
      %v2671 = vunpack.c.l.b16 %v2590
      %v2672 = vunpack.c.l.b16 %v2591
      %v2673 = vpack.c.b16 %v2642, %v2641
      %v2674 = vpack.c.b16 %v2644, %v2643
      %v2675 = vpack.c.b16 %v2646, %v2645
      %v2676 = vpack.c.b16 %v2648, %v2647
      %v2677 = vpack.c.b16 %v2650, %v2649
      %v2678 = vpack.c.b16 %v2652, %v2651
      %v2679 = vpack.c.b16 %v2654, %v2653
      %v2680 = vpack.c.b16 %v2656, %v2655
      %v2681 = vpack.c.b16 %v2658, %v2657
      %v2682 = vpack.c.b16 %v2660, %v2659
      %v2683 = vpack.c.b16 %v2662, %v2661
      %v2684 = vpack.c.b16 %v2664, %v2663
      %v2685 = vpack.c.b16 %v2666, %v2665
      %v2686 = vpack.c.b16 %v2668, %v2667
      %v2687 = vpack.c.b16 %v2670, %v2669
      %v2688 = vpack.c.b16 %v2672, %v2671
      %v2721 = vunpack.c.l.b16 %v2593
      %v2722 = vunpack.c.l.b16 %v2594
      %v2723 = vunpack.c.l.b16 %v2595
      %v2724 = vunpack.c.l.b16 %v2596
      %v2725 = vunpack.c.l.b16 %v2597
      %v2726 = vunpack.c.l.b16 %v2598
      %v2727 = vunpack.c.l.b16 %v2599
      %v2728 = vunpack.c.l.b16 %v2600
      %v2729 = vunpack.c.l.b16 %v2601
      %v2730 = vunpack.c.l.b16 %v2602
      %v2731 = vunpack.c.l.b16 %v2603
      %v2732 = vunpack.c.l.b16 %v2604
      %v2733 = vunpack.c.l.b16 %v2605
      %v2734 = vunpack.c.l.b16 %v2606
      %v2735 = vunpack.c.l.b16 %v2607
      %v2736 = vunpack.c.l.b16 %v2608
      %v2737 = vpack.c.b16 %v2722, %v2721
      %v2738 = vpack.c.b16 %v2724, %v2723
      %v2739 = vpack.c.b16 %v2726, %v2725
      %v2740 = vpack.c.b16 %v2728, %v2727
      %v2741 = vpack.c.b16 %v2730, %v2729
      %v2742 = vpack.c.b16 %v2732, %v2731
      %v2743 = vpack.c.b16 %v2734, %v2733
      %v2744 = vpack.c.b16 %v2736, %v2735
      %2753 = vmatprep.subr.bf16.mxu0 0
      %2754 = vmatpush1.bf16.msra.mxu0 %v2737
      %2755 = vmatprep.subr.bf16.mxu0 0
      %2756 = vmatpush1.bf16.msra.mxu0 %v2738
      %2757 = vmatprep.subr.bf16.mxu0 0
      %2758 = vmatpush1.bf16.msra.mxu0 %v2739
      %2759 = vmatprep.subr.bf16.mxu0 0
      %2760 = vmatpush1.bf16.msra.mxu0 %v2740
      %2761 = vmatprep.subr.bf16.mxu0 0
      %2762 = vmatpush1.bf16.msra.mxu0 %v2741
      %2763 = vmatprep.subr.bf16.mxu0 0
      %2764 = vmatpush1.bf16.msra.mxu0 %v2742
      %2765 = vmatprep.subr.bf16.mxu0 0
      %2766 = vmatpush1.bf16.msra.mxu0 %v2743
      %2767 = vmatprep.subr.bf16.mxu0 0
      %2768 = vmatpush1.bf16.msra.mxu0 %v2744
      %2769 = vmatprep.subr.bf16.mxu0 0
      %2770 = vmatpush1.bf16.msra.mxu0 0
      %2771 = vmatprep.subr.bf16.mxu0 0
      %2772 = vmatpush1.bf16.msra.mxu0 0
      %2773 = vmatprep.subr.bf16.mxu0 0
      %2774 = vmatpush1.bf16.msra.mxu0 0
      %2775 = vmatprep.subr.bf16.mxu0 0
      %2776 = vmatpush1.bf16.msra.mxu0 0
      %2777 = vmatprep.subr.bf16.mxu0 0
      %2778 = vmatpush1.bf16.msra.mxu0 0
      %2779 = vmatprep.subr.bf16.mxu0 0
      %2780 = vmatpush1.bf16.msra.mxu0 0
      %2781 = vmatprep.subr.bf16.mxu0 0
      %2782 = vmatpush1.bf16.msra.mxu0 0
      %2783 = vmatprep.subr.bf16.mxu0 0
      %2784 = vmatpush1.bf16.msra.mxu0 0
      %2785 = vmatprep.mubr.bf16.mxu0 0
      %2786 = vmatmul.mubr.bf16.gmra.mrb[0].mxu0 %v2673
      %v2787 = vpop.f32.mrb[0].mxu0
      %v2788 = vadd.f32 0.0, %v2787
      %v2789 = vpop.f32.mrb[0].mxu0
      %v2790 = vpop.f32.mrb[0].mxu0
      %v2791 = vadd.f32 0.0, %v2790
      %v2792 = vpop.f32.mrb[0].mxu0
      %2793 = vmatprep.mubr.bf16.mxu0 0
      %2794 = vmatmul.mubr.bf16.gmra.mrb[0].mxu0 %v2674
      %v2795 = vpop.f32.mrb[0].mxu0
      %v2796 = vadd.f32 0.0, %v2795
      %v2797 = vpop.f32.mrb[0].mxu0
      %v2798 = vpop.f32.mrb[0].mxu0
      %v2799 = vadd.f32 0.0, %v2798
      %v2800 = vpop.f32.mrb[0].mxu0
      %2801 = vmatprep.mubr.bf16.mxu0 0
      %2802 = vmatmul.mubr.bf16.gmra.mrb[0].mxu0 %v2675
      %v2803 = vpop.f32.mrb[0].mxu0
      %v2804 = vadd.f32 0.0, %v2803
      %v2805 = vpop.f32.mrb[0].mxu0
      %v2806 = vpop.f32.mrb[0].mxu0
      %v2807 = vadd.f32 0.0, %v2806
      %v2808 = vpop.f32.mrb[0].mxu0
      %2809 = vmatprep.mubr.bf16.mxu0 0
      %2810 = vmatmul.mubr.bf16.gmra.mrb[0].mxu0 %v2676
      %v2811 = vpop.f32.mrb[0].mxu0
      %v2812 = vadd.f32 0.0, %v2811
      %v2813 = vpop.f32.mrb[0].mxu0
      %v2814 = vpop.f32.mrb[0].mxu0
      %v2815 = vadd.f32 0.0, %v2814
      %v2816 = vpop.f32.mrb[0].mxu0
      %2817 = vmatprep.mubr.bf16.mxu0 0
      %2818 = vmatmul.mubr.bf16.gmra.mrb[0].mxu0 %v2677
      %v2819 = vpop.f32.mrb[0].mxu0
      %v2820 = vadd.f32 0.0, %v2819
      %v2821 = vpop.f32.mrb[0].mxu0
      %v2822 = vpop.f32.mrb[0].mxu0
      %v2823 = vadd.f32 0.0, %v2822
      %v2824 = vpop.f32.mrb[0].mxu0
      %2825 = vmatprep.mubr.bf16.mxu0 0
      %2826 = vmatmul.mubr.bf16.gmra.mrb[0].mxu0 %v2678
      %v2827 = vpop.f32.mrb[0].mxu0
      %v2828 = vadd.f32 0.0, %v2827
      %v2829 = vpop.f32.mrb[0].mxu0
      %v2830 = vpop.f32.mrb[0].mxu0
      %v2831 = vadd.f32 0.0, %v2830
      %v2832 = vpop.f32.mrb[0].mxu0
      %2833 = vmatprep.mubr.bf16.mxu0 0
      %2834 = vmatmul.mubr.bf16.gmra.mrb[0].mxu0 %v2679
      %v2835 = vpop.f32.mrb[0].mxu0
      %v2836 = vadd.f32 0.0, %v2835
      %v2837 = vpop.f32.mrb[0].mxu0
      %v2838 = vpop.f32.mrb[0].mxu0
      %v2839 = vadd.f32 0.0, %v2838
      %v2840 = vpop.f32.mrb[0].mxu0
      %2841 = vmatprep.mubr.bf16.mxu0 0
      %2842 = vmatmul.mubr.bf16.gmra.mrb[0].mxu0 %v2680
      %v2843 = vpop.f32.mrb[0].mxu0
      %v2844 = vadd.f32 0.0, %v2843
      %v2845 = vpop.f32.mrb[0].mxu0
      %v2846 = vpop.f32.mrb[0].mxu0
      %v2847 = vadd.f32 0.0, %v2846
      %v2848 = vpop.f32.mrb[0].mxu0
      %2849 = vmatprep.mubr.bf16.mxu0 0
      %2850 = vmatmul.mubr.bf16.gmra.mrb[0].mxu0 %v2681
      %v2851 = vpop.f32.mrb[0].mxu0
      %v2852 = vadd.f32 0.0, %v2851
      %v2853 = vpop.f32.mrb[0].mxu0
      %v2854 = vpop.f32.mrb[0].mxu0
      %v2855 = vadd.f32 0.0, %v2854
      %v2856 = vpop.f32.mrb[0].mxu0
      %2857 = vmatprep.mubr.bf16.mxu0 0
      %2858 = vmatmul.mubr.bf16.gmra.mrb[0].mxu0 %v2682
      %v2859 = vpop.f32.mrb[0].mxu0
      %v2860 = vadd.f32 0.0, %v2859
      %v2861 = vpop.f32.mrb[0].mxu0
      %v2862 = vpop.f32.mrb[0].mxu0
      %v2863 = vadd.f32 0.0, %v2862
      %v2864 = vpop.f32.mrb[0].mxu0
      %2865 = vmatprep.mubr.bf16.mxu0 0
      %2866 = vmatmul.mubr.bf16.gmra.mrb[0].mxu0 %v2683
      %v2867 = vpop.f32.mrb[0].mxu0
      %v2868 = vadd.f32 0.0, %v2867
      %v2869 = vpop.f32.mrb[0].mxu0
      %v2870 = vpop.f32.mrb[0].mxu0
      %v2871 = vadd.f32 0.0, %v2870
      %v2872 = vpop.f32.mrb[0].mxu0
      %2873 = vmatprep.mubr.bf16.mxu0 0
      %2874 = vmatmul.mubr.bf16.gmra.mrb[0].mxu0 %v2684
      %v2875 = vpop.f32.mrb[0].mxu0
      %v2876 = vadd.f32 0.0, %v2875
      %v2877 = vpop.f32.mrb[0].mxu0
      %v2878 = vpop.f32.mrb[0].mxu0
      %v2879 = vadd.f32 0.0, %v2878
      %v2880 = vpop.f32.mrb[0].mxu0
      %2881 = vmatprep.mubr.bf16.mxu0 0
      %2882 = vmatmul.mubr.bf16.gmra.mrb[0].mxu0 %v2685
      %v2883 = vpop.f32.mrb[0].mxu0
      %v2884 = vadd.f32 0.0, %v2883
      %v2885 = vpop.f32.mrb[0].mxu0
      %v2886 = vpop.f32.mrb[0].mxu0
      %v2887 = vadd.f32 0.0, %v2886
      %v2888 = vpop.f32.mrb[0].mxu0
      %2889 = vmatprep.mubr.bf16.mxu0 0
      %2890 = vmatmul.mubr.bf16.gmra.mrb[0].mxu0 %v2686
      %v2891 = vpop.f32.mrb[0].mxu0
      %v2892 = vadd.f32 0.0, %v2891
      %v2893 = vpop.f32.mrb[0].mxu0
      %v2894 = vpop.f32.mrb[0].mxu0
      %v2895 = vadd.f32 0.0, %v2894
      %v2896 = vpop.f32.mrb[0].mxu0
      %2897 = vmatprep.mubr.bf16.mxu0 0
      %2898 = vmatmul.mubr.bf16.gmra.mrb[0].mxu0 %v2687
      %v2899 = vpop.f32.mrb[0].mxu0
      %v2900 = vadd.f32 0.0, %v2899
      %v2901 = vpop.f32.mrb[0].mxu0
      %v2902 = vpop.f32.mrb[0].mxu0
      %v2903 = vadd.f32 0.0, %v2902
      %v2904 = vpop.f32.mrb[0].mxu0
      %2905 = vmatprep.mubr.bf16.mxu0 0
      %2906 = vmatmul.mubr.bf16.gmra.mrb[0].mxu0 %v2688
      %v2907 = vpop.f32.mrb[0].mxu0
      %v2908 = vadd.f32 0.0, %v2907
      %v2909 = vpop.f32.mrb[0].mxu0
      %v2910 = vpop.f32.mrb[0].mxu0
      %v2911 = vadd.f32 0.0, %v2910
      %v2912 = vpop.f32.mrb[0].mxu0
      %2913 = vdwg.mxu0
      %v2914 = vadd.f32 %v2528, %v2788
      %v2915 = vadd.f32 %v2529, %v2791
      %v2916 = vadd.f32 %v2530, %v2796
      %v2917 = vadd.f32 %v2531, %v2799
      %v2918 = vadd.f32 %v2532, %v2804
      %v2919 = vadd.f32 %v2533, %v2807
      %v2920 = vadd.f32 %v2534, %v2812
      %v2921 = vadd.f32 %v2535, %v2815
      %v2922 = vadd.f32 %v2536, %v2820
      %v2923 = vadd.f32 %v2537, %v2823
      %v2924 = vadd.f32 %v2538, %v2828
      %v2925 = vadd.f32 %v2539, %v2831
      %v2926 = vadd.f32 %v2540, %v2836
      %v2927 = vadd.f32 %v2541, %v2839
      %v2928 = vadd.f32 %v2542, %v2844
      %v2929 = vadd.f32 %v2543, %v2847
      %v2930 = vadd.f32 %v2544, %v2852
      %v2931 = vadd.f32 %v2545, %v2855
      %v2932 = vadd.f32 %v2546, %v2860
      %v2933 = vadd.f32 %v2547, %v2863
      %v2934 = vadd.f32 %v2548, %v2868
      %v2935 = vadd.f32 %v2549, %v2871
      %v2936 = vadd.f32 %v2550, %v2876
      %v2937 = vadd.f32 %v2551, %v2879
      %v2938 = vadd.f32 %v2552, %v2884
      %v2939 = vadd.f32 %v2553, %v2887
      %v2940 = vadd.f32 %v2554, %v2892
      %v2941 = vadd.f32 %v2555, %v2895
      %v2942 = vadd.f32 %v2556, %v2900
      %v2943 = vadd.f32 %v2557, %v2903
      %v2944 = vadd.f32 %v2558, %v2908
      %v2945 = vadd.f32 %v2559, %v2911
      %v2946 = vld [vmem:[%s911] sm:$0xf]
      %v2947 = vld [vmem:[%s911 + $0x4] sm:$0xf]
      %v2948 = vld [vmem:[%s911 + $0x8] sm:$0x1]
      %v2949 = vld [vmem:[%s911 + $0xc] sm:$0xf]
      %v2950 = vld [vmem:[%s911 + $0x10] sm:$0xf]
      %v2951 = vld [vmem:[%s911 + $0x14] sm:$0x1]
      %v2952 = vld [vmem:[%s911 + $0x18] sm:$0xf]
      %v2953 = vld [vmem:[%s911 + $0x1c] sm:$0xf]
      %v2954 = vld [vmem:[%s911 + $0x20] sm:$0x1]
      %v2955 = vld [vmem:[%s911 + $0x24] sm:$0xf]
      %v2956 = vld [vmem:[%s911 + $0x28] sm:$0xf]
      %v2957 = vld [vmem:[%s911 + $0x2c] sm:$0x1]
      %v2958 = vld [vmem:[%s911 + $0x30] sm:$0xf]
      %v2959 = vld [vmem:[%s911 + $0x34] sm:$0xf]
      %v2960 = vld [vmem:[%s911 + $0x38] sm:$0x1]
      %v2961 = vld [vmem:[%s911 + $0x3c] sm:$0xf]
      %v2962 = vld [vmem:[%s911 + $0x40] sm:$0xf]
      %v2963 = vld [vmem:[%s911 + $0x44] sm:$0x1]
      %v2964 = vld [vmem:[%s911 + $0x48] sm:$0xf]
      %v2965 = vld [vmem:[%s911 + $0x4c] sm:$0xf]
      %v2966 = vld [vmem:[%s911 + $0x50] sm:$0x1]
      %v2967 = vld [vmem:[%s911 + $0x54] sm:$0xf]
      %v2968 = vld [vmem:[%s911 + $0x58] sm:$0xf]
      %v2969 = vld [vmem:[%s911 + $0x5c] sm:$0x1]
      %v2970 = vld [vmem:[%s911 + $0x60] sm:$0xf]
      %v2971 = vld [vmem:[%s911 + $0x64] sm:$0xf]
      %v2972 = vld [vmem:[%s911 + $0x68] sm:$0x1]
      %v2973 = vld [vmem:[%s911 + $0x6c] sm:$0xf]
      %v2974 = vld [vmem:[%s911 + $0x70] sm:$0xf]
      %v2975 = vld [vmem:[%s911 + $0x74] sm:$0x1]
      %v2976 = vld [vmem:[%s911 + $0x78] sm:$0xf]
      %v2977 = vld [vmem:[%s911 + $0x7c] sm:$0xf]
      %v2978 = vld [vmem:[%s911 + $0x80] sm:$0x1]
      %v2979 = vld [vmem:[%s911 + $0x84] sm:$0xf]
      %v2980 = vld [vmem:[%s911 + $0x88] sm:$0xf]
      %v2981 = vld [vmem:[%s911 + $0x8c] sm:$0x1]
      %v2982 = vld [vmem:[%s911 + $0x90] sm:$0xf]
      %v2983 = vld [vmem:[%s911 + $0x94] sm:$0xf]
      %v2984 = vld [vmem:[%s911 + $0x98] sm:$0x1]
      %v2985 = vld [vmem:[%s911 + $0x9c] sm:$0xf]
      %v2986 = vld [vmem:[%s911 + $0xa0] sm:$0xf]
      %v2987 = vld [vmem:[%s911 + $0xa4] sm:$0x1]
      %v2988 = vld [vmem:[%s911 + $0xa8] sm:$0xf]
      %v2989 = vld [vmem:[%s911 + $0xac] sm:$0xf]
      %v2990 = vld [vmem:[%s911 + $0xb0] sm:$0x1]
      %v2991 = vld [vmem:[%s911 + $0xb4] sm:$0xf]
      %v2992 = vld [vmem:[%s911 + $0xb8] sm:$0xf]
      %v2993 = vld [vmem:[%s911 + $0xbc] sm:$0x1]
      %v2995 = vshrl.u32 %v2946, 16
      %v2997 = vrot.slane %v2995, 4
      %v2998 = vshll.u32 %v2946, 16
      %v3000 = vrot.slane %v2998, 5
      %v3001 = vor.u32 %v2997, %v3000
      %v3002 = vrot.slane %v3001, 4
      %v3004 = vshll.u32 %v2947, 16
      %v3006 = vrot.slane %v3004, 5
      %v3007 = vsel %vm1095, %v3002, %v3006
      %v3008 = vshrl.u32 %v2947, 16
      %v3010 = vrot.slane %v3008, 4
      %v3011 = vor.u32 %v3010, %v3006
      %v3012 = vrot.slane %v3011, 4
      %v3014 = vshll.u32 %v2948, 16
      %v3016 = vrot.slane %v3014, 5
      %v3017 = vsel %vm1095, %v3012, %v3016
      %v3019 = vshrl.u32 %v2949, 16
      %v3021 = vrot.slane %v3019, 4
      %v3022 = vshll.u32 %v2949, 16
      %v3024 = vrot.slane %v3022, 5
      %v3025 = vor.u32 %v3021, %v3024
      %v3026 = vrot.slane %v3025, 4
      %v3028 = vshll.u32 %v2950, 16
      %v3030 = vrot.slane %v3028, 5
      %v3031 = vsel %vm1095, %v3026, %v3030
      %v3032 = vshrl.u32 %v2950, 16
      %v3034 = vrot.slane %v3032, 4
      %v3035 = vor.u32 %v3034, %v3030
      %v3036 = vrot.slane %v3035, 4
      %v3038 = vshll.u32 %v2951, 16
      %v3040 = vrot.slane %v3038, 5
      %v3041 = vsel %vm1095, %v3036, %v3040
      %v3043 = vshrl.u32 %v2952, 16
      %v3045 = vrot.slane %v3043, 4
      %v3046 = vshll.u32 %v2952, 16
      %v3048 = vrot.slane %v3046, 5
      %v3049 = vor.u32 %v3045, %v3048
      %v3050 = vrot.slane %v3049, 4
      %v3052 = vshll.u32 %v2953, 16
      %v3054 = vrot.slane %v3052, 5
      %v3055 = vsel %vm1095, %v3050, %v3054
      %v3056 = vshrl.u32 %v2953, 16
      %v3058 = vrot.slane %v3056, 4
      %v3059 = vor.u32 %v3058, %v3054
      %v3060 = vrot.slane %v3059, 4
      %v3062 = vshll.u32 %v2954, 16
      %v3064 = vrot.slane %v3062, 5
      %v3065 = vsel %vm1095, %v3060, %v3064
      %v3067 = vshrl.u32 %v2955, 16
      %v3069 = vrot.slane %v3067, 4
      %v3070 = vshll.u32 %v2955, 16
      %v3072 = vrot.slane %v3070, 5
      %v3073 = vor.u32 %v3069, %v3072
      %v3074 = vrot.slane %v3073, 4
      %v3076 = vshll.u32 %v2956, 16
      %v3078 = vrot.slane %v3076, 5
      %v3079 = vsel %vm1095, %v3074, %v3078
      %v3080 = vshrl.u32 %v2956, 16
      %v3082 = vrot.slane %v3080, 4
      %v3083 = vor.u32 %v3082, %v3078
      %v3084 = vrot.slane %v3083, 4
      %v3086 = vshll.u32 %v2957, 16
      %v3088 = vrot.slane %v3086, 5
      %v3089 = vsel %vm1095, %v3084, %v3088
      %v3091 = vshrl.u32 %v2958, 16
      %v3093 = vrot.slane %v3091, 4
      %v3094 = vshll.u32 %v2958, 16
      %v3096 = vrot.slane %v3094, 5
      %v3097 = vor.u32 %v3093, %v3096
      %v3098 = vrot.slane %v3097, 4
      %v3100 = vshll.u32 %v2959, 16
      %v3102 = vrot.slane %v3100, 5
      %v3103 = vsel %vm1095, %v3098, %v3102
      %v3104 = vshrl.u32 %v2959, 16
      %v3106 = vrot.slane %v3104, 4
      %v3107 = vor.u32 %v3106, %v3102
      %v3108 = vrot.slane %v3107, 4
      %v3110 = vshll.u32 %v2960, 16
      %v3112 = vrot.slane %v3110, 5
      %v3113 = vsel %vm1095, %v3108, %v3112
      %v3115 = vshrl.u32 %v2961, 16
      %v3117 = vrot.slane %v3115, 4
      %v3118 = vshll.u32 %v2961, 16
      %v3120 = vrot.slane %v3118, 5
      %v3121 = vor.u32 %v3117, %v3120
      %v3122 = vrot.slane %v3121, 4
      %v3124 = vshll.u32 %v2962, 16
      %v3126 = vrot.slane %v3124, 5
      %v3127 = vsel %vm1095, %v3122, %v3126
      %v3128 = vshrl.u32 %v2962, 16
      %v3130 = vrot.slane %v3128, 4
      %v3131 = vor.u32 %v3130, %v3126
      %v3132 = vrot.slane %v3131, 4
      %v3134 = vshll.u32 %v2963, 16
      %v3136 = vrot.slane %v3134, 5
      %v3137 = vsel %vm1095, %v3132, %v3136
      %v3139 = vshrl.u32 %v2964, 16
      %v3141 = vrot.slane %v3139, 4
      %v3142 = vshll.u32 %v2964, 16
      %v3144 = vrot.slane %v3142, 5
      %v3145 = vor.u32 %v3141, %v3144
      %v3146 = vrot.slane %v3145, 4
      %v3148 = vshll.u32 %v2965, 16
      %v3150 = vrot.slane %v3148, 5
      %v3151 = vsel %vm1095, %v3146, %v3150
      %v3152 = vshrl.u32 %v2965, 16
      %v3154 = vrot.slane %v3152, 4
      %v3155 = vor.u32 %v3154, %v3150
      %v3156 = vrot.slane %v3155, 4
      %v3158 = vshll.u32 %v2966, 16
      %v3160 = vrot.slane %v3158, 5
      %v3161 = vsel %vm1095, %v3156, %v3160
      %v3163 = vshrl.u32 %v2967, 16
      %v3165 = vrot.slane %v3163, 4
      %v3166 = vshll.u32 %v2967, 16
      %v3168 = vrot.slane %v3166, 5
      %v3169 = vor.u32 %v3165, %v3168
      %v3170 = vrot.slane %v3169, 4
      %v3172 = vshll.u32 %v2968, 16
      %v3174 = vrot.slane %v3172, 5
      %v3175 = vsel %vm1095, %v3170, %v3174
      %v3176 = vshrl.u32 %v2968, 16
      %v3178 = vrot.slane %v3176, 4
      %v3179 = vor.u32 %v3178, %v3174
      %v3180 = vrot.slane %v3179, 4
      %v3182 = vshll.u32 %v2969, 16
      %v3184 = vrot.slane %v3182, 5
      %v3185 = vsel %vm1095, %v3180, %v3184
      %v3187 = vshrl.u32 %v2970, 16
      %v3189 = vrot.slane %v3187, 4
      %v3190 = vshll.u32 %v2970, 16
      %v3192 = vrot.slane %v3190, 5
      %v3193 = vor.u32 %v3189, %v3192
      %v3194 = vrot.slane %v3193, 4
      %v3196 = vshll.u32 %v2971, 16
      %v3198 = vrot.slane %v3196, 5
      %v3199 = vsel %vm1095, %v3194, %v3198
      %v3200 = vshrl.u32 %v2971, 16
      %v3202 = vrot.slane %v3200, 4
      %v3203 = vor.u32 %v3202, %v3198
      %v3204 = vrot.slane %v3203, 4
      %v3206 = vshll.u32 %v2972, 16
      %v3208 = vrot.slane %v3206, 5
      %v3209 = vsel %vm1095, %v3204, %v3208
      %v3211 = vshrl.u32 %v2973, 16
      %v3213 = vrot.slane %v3211, 4
      %v3214 = vshll.u32 %v2973, 16
      %v3216 = vrot.slane %v3214, 5
      %v3217 = vor.u32 %v3213, %v3216
      %v3218 = vrot.slane %v3217, 4
      %v3220 = vshll.u32 %v2974, 16
      %v3222 = vrot.slane %v3220, 5
      %v3223 = vsel %vm1095, %v3218, %v3222
      %v3224 = vshrl.u32 %v2974, 16
      %v3226 = vrot.slane %v3224, 4
      %v3227 = vor.u32 %v3226, %v3222
      %v3228 = vrot.slane %v3227, 4
      %v3230 = vshll.u32 %v2975, 16
      %v3232 = vrot.slane %v3230, 5
      %v3233 = vsel %vm1095, %v3228, %v3232
      %v3235 = vshrl.u32 %v2976, 16
      %v3237 = vrot.slane %v3235, 4
      %v3238 = vshll.u32 %v2976, 16
      %v3240 = vrot.slane %v3238, 5
      %v3241 = vor.u32 %v3237, %v3240
      %v3242 = vrot.slane %v3241, 4
      %v3244 = vshll.u32 %v2977, 16
      %v3246 = vrot.slane %v3244, 5
      %v3247 = vsel %vm1095, %v3242, %v3246
      %v3248 = vshrl.u32 %v2977, 16
      %v3250 = vrot.slane %v3248, 4
      %v3251 = vor.u32 %v3250, %v3246
      %v3252 = vrot.slane %v3251, 4
      %v3254 = vshll.u32 %v2978, 16
      %v3256 = vrot.slane %v3254, 5
      %v3257 = vsel %vm1095, %v3252, %v3256
      %v3259 = vshrl.u32 %v2979, 16
      %v3261 = vrot.slane %v3259, 4
      %v3262 = vshll.u32 %v2979, 16
      %v3264 = vrot.slane %v3262, 5
      %v3265 = vor.u32 %v3261, %v3264
      %v3266 = vrot.slane %v3265, 4
      %v3268 = vshll.u32 %v2980, 16
      %v3270 = vrot.slane %v3268, 5
      %v3271 = vsel %vm1095, %v3266, %v3270
      %v3272 = vshrl.u32 %v2980, 16
      %v3274 = vrot.slane %v3272, 4
      %v3275 = vor.u32 %v3274, %v3270
      %v3276 = vrot.slane %v3275, 4
      %v3278 = vshll.u32 %v2981, 16
      %v3280 = vrot.slane %v3278, 5
      %v3281 = vsel %vm1095, %v3276, %v3280
      %v3283 = vshrl.u32 %v2982, 16
      %v3285 = vrot.slane %v3283, 4
      %v3286 = vshll.u32 %v2982, 16
      %v3288 = vrot.slane %v3286, 5
      %v3289 = vor.u32 %v3285, %v3288
      %v3290 = vrot.slane %v3289, 4
      %v3292 = vshll.u32 %v2983, 16
      %v3294 = vrot.slane %v3292, 5
      %v3295 = vsel %vm1095, %v3290, %v3294
      %v3296 = vshrl.u32 %v2983, 16
      %v3298 = vrot.slane %v3296, 4
      %v3299 = vor.u32 %v3298, %v3294
      %v3300 = vrot.slane %v3299, 4
      %v3302 = vshll.u32 %v2984, 16
      %v3304 = vrot.slane %v3302, 5
      %v3305 = vsel %vm1095, %v3300, %v3304
      %v3307 = vshrl.u32 %v2985, 16
      %v3309 = vrot.slane %v3307, 4
      %v3310 = vshll.u32 %v2985, 16
      %v3312 = vrot.slane %v3310, 5
      %v3313 = vor.u32 %v3309, %v3312
      %v3314 = vrot.slane %v3313, 4
      %v3316 = vshll.u32 %v2986, 16
      %v3318 = vrot.slane %v3316, 5
      %v3319 = vsel %vm1095, %v3314, %v3318
      %v3320 = vshrl.u32 %v2986, 16
      %v3322 = vrot.slane %v3320, 4
      %v3323 = vor.u32 %v3322, %v3318
      %v3324 = vrot.slane %v3323, 4
      %v3326 = vshll.u32 %v2987, 16
      %v3328 = vrot.slane %v3326, 5
      %v3329 = vsel %vm1095, %v3324, %v3328
      %v3331 = vshrl.u32 %v2988, 16
      %v3333 = vrot.slane %v3331, 4
      %v3334 = vshll.u32 %v2988, 16
      %v3336 = vrot.slane %v3334, 5
      %v3337 = vor.u32 %v3333, %v3336
      %v3338 = vrot.slane %v3337, 4
      %v3340 = vshll.u32 %v2989, 16
      %v3342 = vrot.slane %v3340, 5
      %v3343 = vsel %vm1095, %v3338, %v3342
      %v3344 = vshrl.u32 %v2989, 16
      %v3346 = vrot.slane %v3344, 4
      %v3347 = vor.u32 %v3346, %v3342
      %v3348 = vrot.slane %v3347, 4
      %v3350 = vshll.u32 %v2990, 16
      %v3352 = vrot.slane %v3350, 5
      %v3353 = vsel %vm1095, %v3348, %v3352
      %v3355 = vshrl.u32 %v2991, 16
      %v3357 = vrot.slane %v3355, 4
      %v3358 = vshll.u32 %v2991, 16
      %v3360 = vrot.slane %v3358, 5
      %v3361 = vor.u32 %v3357, %v3360
      %v3362 = vrot.slane %v3361, 4
      %v3364 = vshll.u32 %v2992, 16
      %v3366 = vrot.slane %v3364, 5
      %v3367 = vsel %vm1095, %v3362, %v3366
      %v3368 = vshrl.u32 %v2992, 16
      %v3370 = vrot.slane %v3368, 4
      %v3371 = vor.u32 %v3370, %v3366
      %v3372 = vrot.slane %v3371, 4
      %v3374 = vshll.u32 %v2993, 16
      %v3376 = vrot.slane %v3374, 5
      %v3377 = vsel %vm1095, %v3372, %v3376
      %s3378 = scalar_lea.vmem %s3, 256
      %v3379 = vld [vmem:[%s3378] sm:$0xf]
      %v3380 = vld [vmem:[%s3378 + $0x4] sm:$0xf]
      %v3381 = vld [vmem:[%s3378 + $0x8] sm:$0xf]
      %v3382 = vld [vmem:[%s3378 + $0xc] sm:$0xf]
      %v3383 = vld [vmem:[%s3378 + $0x10] sm:$0xf]
      %v3384 = vld [vmem:[%s3378 + $0x14] sm:$0xf]
      %v3385 = vld [vmem:[%s3378 + $0x18] sm:$0xf]
      %v3386 = vld [vmem:[%s3378 + $0x1c] sm:$0xf]
      %v3387 = vld [vmem:[%s3378 + $0x20] sm:$0xf]
      %v3388 = vld [vmem:[%s3378 + $0x24] sm:$0xf]
      %v3389 = vld [vmem:[%s3378 + $0x28] sm:$0xf]
      %v3390 = vld [vmem:[%s3378 + $0x2c] sm:$0xf]
      %v3391 = vld [vmem:[%s3378 + $0x30] sm:$0xf]
      %v3392 = vld [vmem:[%s3378 + $0x34] sm:$0xf]
      %v3393 = vld [vmem:[%s3378 + $0x38] sm:$0xf]
      %v3394 = vld [vmem:[%s3378 + $0x3c] sm:$0xf]
      %v3395 = vunpack.c.l.b16 %v3007
      %v3396 = vunpack.c.l.b16 %v3017
      %v3397 = vunpack.c.l.b16 %v3031
      %v3398 = vunpack.c.l.b16 %v3041
      %v3399 = vunpack.c.l.b16 %v3055
      %v3400 = vunpack.c.l.b16 %v3065
      %v3401 = vunpack.c.l.b16 %v3079
      %v3402 = vunpack.c.l.b16 %v3089
      %v3403 = vunpack.c.l.b16 %v3103
      %v3404 = vunpack.c.l.b16 %v3113
      %v3405 = vunpack.c.l.b16 %v3127
      %v3406 = vunpack.c.l.b16 %v3137
      %v3407 = vunpack.c.l.b16 %v3151
      %v3408 = vunpack.c.l.b16 %v3161
      %v3409 = vunpack.c.l.b16 %v3175
      %v3410 = vunpack.c.l.b16 %v3185
      %v3411 = vunpack.c.l.b16 %v3199
      %v3412 = vunpack.c.l.b16 %v3209
      %v3413 = vunpack.c.l.b16 %v3223
      %v3414 = vunpack.c.l.b16 %v3233
      %v3415 = vunpack.c.l.b16 %v3247
      %v3416 = vunpack.c.l.b16 %v3257
      %v3417 = vunpack.c.l.b16 %v3271
      %v3418 = vunpack.c.l.b16 %v3281
      %v3419 = vunpack.c.l.b16 %v3295
      %v3420 = vunpack.c.l.b16 %v3305
      %v3421 = vunpack.c.l.b16 %v3319
      %v3422 = vunpack.c.l.b16 %v3329
      %v3423 = vunpack.c.l.b16 %v3343
      %v3424 = vunpack.c.l.b16 %v3353
      %v3425 = vunpack.c.l.b16 %v3367
      %v3426 = vunpack.c.l.b16 %v3377
      %v3427 = vpack.c.b16 %v3396, %v3395
      %v3428 = vpack.c.b16 %v3398, %v3397
      %v3429 = vpack.c.b16 %v3400, %v3399
      %v3430 = vpack.c.b16 %v3402, %v3401
      %v3431 = vpack.c.b16 %v3404, %v3403
      %v3432 = vpack.c.b16 %v3406, %v3405
      %v3433 = vpack.c.b16 %v3408, %v3407
      %v3434 = vpack.c.b16 %v3410, %v3409
      %v3435 = vpack.c.b16 %v3412, %v3411
      %v3436 = vpack.c.b16 %v3414, %v3413
      %v3437 = vpack.c.b16 %v3416, %v3415
      %v3438 = vpack.c.b16 %v3418, %v3417
      %v3439 = vpack.c.b16 %v3420, %v3419
      %v3440 = vpack.c.b16 %v3422, %v3421
      %v3441 = vpack.c.b16 %v3424, %v3423
      %v3442 = vpack.c.b16 %v3426, %v3425
      %v3475 = vunpack.c.l.b16 %v3379
      %v3476 = vunpack.c.l.b16 %v3380
      %v3477 = vunpack.c.l.b16 %v3381
      %v3478 = vunpack.c.l.b16 %v3382
      %v3479 = vunpack.c.l.b16 %v3383
      %v3480 = vunpack.c.l.b16 %v3384
      %v3481 = vunpack.c.l.b16 %v3385
      %v3482 = vunpack.c.l.b16 %v3386
      %v3483 = vunpack.c.l.b16 %v3387
      %v3484 = vunpack.c.l.b16 %v3388
      %v3485 = vunpack.c.l.b16 %v3389
      %v3486 = vunpack.c.l.b16 %v3390
      %v3487 = vunpack.c.l.b16 %v3391
      %v3488 = vunpack.c.l.b16 %v3392
      %v3489 = vunpack.c.l.b16 %v3393
      %v3490 = vunpack.c.l.b16 %v3394
      %v3491 = vpack.c.b16 %v3476, %v3475
      %v3492 = vpack.c.b16 %v3478, %v3477
      %v3493 = vpack.c.b16 %v3480, %v3479
      %v3494 = vpack.c.b16 %v3482, %v3481
      %v3495 = vpack.c.b16 %v3484, %v3483
      %v3496 = vpack.c.b16 %v3486, %v3485
      %v3497 = vpack.c.b16 %v3488, %v3487
      %v3498 = vpack.c.b16 %v3490, %v3489
      %3507 = vmatprep.subr.bf16.mxu0 0
      %3508 = vmatpush1.bf16.msra.mxu0 %v3491
      %3509 = vmatprep.subr.bf16.mxu0 0
      %3510 = vmatpush1.bf16.msra.mxu0 %v3492
      %3511 = vmatprep.subr.bf16.mxu0 0
      %3512 = vmatpush1.bf16.msra.mxu0 %v3493
      %3513 = vmatprep.subr.bf16.mxu0 0
      %3514 = vmatpush1.bf16.msra.mxu0 %v3494
      %3515 = vmatprep.subr.bf16.mxu0 0
      %3516 = vmatpush1.bf16.msra.mxu0 %v3495
      %3517 = vmatprep.subr.bf16.mxu0 0
      %3518 = vmatpush1.bf16.msra.mxu0 %v3496
      %3519 = vmatprep.subr.bf16.mxu0 0
      %3520 = vmatpush1.bf16.msra.mxu0 %v3497
      %3521 = vmatprep.subr.bf16.mxu0 0
      %3522 = vmatpush1.bf16.msra.mxu0 %v3498
      %3523 = vmatprep.subr.bf16.mxu0 0
      %3524 = vmatpush1.bf16.msra.mxu0 0
      %3525 = vmatprep.subr.bf16.mxu0 0
      %3526 = vmatpush1.bf16.msra.mxu0 0
      %3527 = vmatprep.subr.bf16.mxu0 0
      %3528 = vmatpush1.bf16.msra.mxu0 0
      %3529 = vmatprep.subr.bf16.mxu0 0
      %3530 = vmatpush1.bf16.msra.mxu0 0
      %3531 = vmatprep.subr.bf16.mxu0 0
      %3532 = vmatpush1.bf16.msra.mxu0 0
      %3533 = vmatprep.subr.bf16.mxu0 0
      %3534 = vmatpush1.bf16.msra.mxu0 0
      %3535 = vmatprep.subr.bf16.mxu0 0
      %3536 = vmatpush1.bf16.msra.mxu0 0
      %3537 = vmatprep.subr.bf16.mxu0 0
      %3538 = vmatpush1.bf16.msra.mxu0 0
      %3539 = vmatprep.mubr.bf16.mxu0 0
      %3540 = vmatmul.mubr.bf16.gmra.mrb[0].mxu0 %v3427
      %v3541 = vpop.f32.mrb[0].mxu0
      %v3542 = vadd.f32 0.0, %v3541
      %v3543 = vpop.f32.mrb[0].mxu0
      %v3544 = vpop.f32.mrb[0].mxu0
      %v3545 = vadd.f32 0.0, %v3544
      %v3546 = vpop.f32.mrb[0].mxu0
      %3547 = vmatprep.mubr.bf16.mxu0 0
      %3548 = vmatmul.mubr.bf16.gmra.mrb[0].mxu0 %v3428
      %v3549 = vpop.f32.mrb[0].mxu0
      %v3550 = vadd.f32 0.0, %v3549
      %v3551 = vpop.f32.mrb[0].mxu0
      %v3552 = vpop.f32.mrb[0].mxu0
      %v3553 = vadd.f32 0.0, %v3552
      %v3554 = vpop.f32.mrb[0].mxu0
      %3555 = vmatprep.mubr.bf16.mxu0 0
      %3556 = vmatmul.mubr.bf16.gmra.mrb[0].mxu0 %v3429
      %v3557 = vpop.f32.mrb[0].mxu0
      %v3558 = vadd.f32 0.0, %v3557
      %v3559 = vpop.f32.mrb[0].mxu0
      %v3560 = vpop.f32.mrb[0].mxu0
      %v3561 = vadd.f32 0.0, %v3560
      %v3562 = vpop.f32.mrb[0].mxu0
      %3563 = vmatprep.mubr.bf16.mxu0 0
      %3564 = vmatmul.mubr.bf16.gmra.mrb[0].mxu0 %v3430
      %v3565 = vpop.f32.mrb[0].mxu0
      %v3566 = vadd.f32 0.0, %v3565
      %v3567 = vpop.f32.mrb[0].mxu0
      %v3568 = vpop.f32.mrb[0].mxu0
      %v3569 = vadd.f32 0.0, %v3568
      %v3570 = vpop.f32.mrb[0].mxu0
      %3571 = vmatprep.mubr.bf16.mxu0 0
      %3572 = vmatmul.mubr.bf16.gmra.mrb[0].mxu0 %v3431
      %v3573 = vpop.f32.mrb[0].mxu0
      %v3574 = vadd.f32 0.0, %v3573
      %v3575 = vpop.f32.mrb[0].mxu0
      %v3576 = vpop.f32.mrb[0].mxu0
      %v3577 = vadd.f32 0.0, %v3576
      %v3578 = vpop.f32.mrb[0].mxu0
      %3579 = vmatprep.mubr.bf16.mxu0 0
      %3580 = vmatmul.mubr.bf16.gmra.mrb[0].mxu0 %v3432
      %v3581 = vpop.f32.mrb[0].mxu0
      %v3582 = vadd.f32 0.0, %v3581
      %v3583 = vpop.f32.mrb[0].mxu0
      %v3584 = vpop.f32.mrb[0].mxu0
      %v3585 = vadd.f32 0.0, %v3584
      %v3586 = vpop.f32.mrb[0].mxu0
      %3587 = vmatprep.mubr.bf16.mxu0 0
      %3588 = vmatmul.mubr.bf16.gmra.mrb[0].mxu0 %v3433
      %v3589 = vpop.f32.mrb[0].mxu0
      %v3590 = vadd.f32 0.0, %v3589
      %v3591 = vpop.f32.mrb[0].mxu0
      %v3592 = vpop.f32.mrb[0].mxu0
      %v3593 = vadd.f32 0.0, %v3592
      %v3594 = vpop.f32.mrb[0].mxu0
      %3595 = vmatprep.mubr.bf16.mxu0 0
      %3596 = vmatmul.mubr.bf16.gmra.mrb[0].mxu0 %v3434
      %v3597 = vpop.f32.mrb[0].mxu0
      %v3598 = vadd.f32 0.0, %v3597
      %v3599 = vpop.f32.mrb[0].mxu0
      %v3600 = vpop.f32.mrb[0].mxu0
      %v3601 = vadd.f32 0.0, %v3600
      %v3602 = vpop.f32.mrb[0].mxu0
      %3603 = vmatprep.mubr.bf16.mxu0 0
      %3604 = vmatmul.mubr.bf16.gmra.mrb[0].mxu0 %v3435
      %v3605 = vpop.f32.mrb[0].mxu0
      %v3606 = vadd.f32 0.0, %v3605
      %v3607 = vpop.f32.mrb[0].mxu0
      %v3608 = vpop.f32.mrb[0].mxu0
      %v3609 = vadd.f32 0.0, %v3608
      %v3610 = vpop.f32.mrb[0].mxu0
      %3611 = vmatprep.mubr.bf16.mxu0 0
      %3612 = vmatmul.mubr.bf16.gmra.mrb[0].mxu0 %v3436
      %v3613 = vpop.f32.mrb[0].mxu0
      %v3614 = vadd.f32 0.0, %v3613
      %v3615 = vpop.f32.mrb[0].mxu0
      %v3616 = vpop.f32.mrb[0].mxu0
      %v3617 = vadd.f32 0.0, %v3616
      %v3618 = vpop.f32.mrb[0].mxu0
      %3619 = vmatprep.mubr.bf16.mxu0 0
      %3620 = vmatmul.mubr.bf16.gmra.mrb[0].mxu0 %v3437
      %v3621 = vpop.f32.mrb[0].mxu0
      %v3622 = vadd.f32 0.0, %v3621
      %v3623 = vpop.f32.mrb[0].mxu0
      %v3624 = vpop.f32.mrb[0].mxu0
      %v3625 = vadd.f32 0.0, %v3624
      %v3626 = vpop.f32.mrb[0].mxu0
      %3627 = vmatprep.mubr.bf16.mxu0 0
      %3628 = vmatmul.mubr.bf16.gmra.mrb[0].mxu0 %v3438
      %v3629 = vpop.f32.mrb[0].mxu0
      %v3630 = vadd.f32 0.0, %v3629
      %v3631 = vpop.f32.mrb[0].mxu0
      %v3632 = vpop.f32.mrb[0].mxu0
      %v3633 = vadd.f32 0.0, %v3632
      %v3634 = vpop.f32.mrb[0].mxu0
      %3635 = vmatprep.mubr.bf16.mxu0 0
      %3636 = vmatmul.mubr.bf16.gmra.mrb[0].mxu0 %v3439
      %v3637 = vpop.f32.mrb[0].mxu0
      %v3638 = vadd.f32 0.0, %v3637
      %v3639 = vpop.f32.mrb[0].mxu0
      %v3640 = vpop.f32.mrb[0].mxu0
      %v3641 = vadd.f32 0.0, %v3640
      %v3642 = vpop.f32.mrb[0].mxu0
      %3643 = vmatprep.mubr.bf16.mxu0 0
      %3644 = vmatmul.mubr.bf16.gmra.mrb[0].mxu0 %v3440
      %v3645 = vpop.f32.mrb[0].mxu0
      %v3646 = vadd.f32 0.0, %v3645
      %v3647 = vpop.f32.mrb[0].mxu0
      %v3648 = vpop.f32.mrb[0].mxu0
      %v3649 = vadd.f32 0.0, %v3648
      %v3650 = vpop.f32.mrb[0].mxu0
      %3651 = vmatprep.mubr.bf16.mxu0 0
      %3652 = vmatmul.mubr.bf16.gmra.mrb[0].mxu0 %v3441
      %v3653 = vpop.f32.mrb[0].mxu0
      %v3654 = vadd.f32 0.0, %v3653
      %v3655 = vpop.f32.mrb[0].mxu0
      %v3656 = vpop.f32.mrb[0].mxu0
      %v3657 = vadd.f32 0.0, %v3656
      %v3658 = vpop.f32.mrb[0].mxu0
      %3659 = vmatprep.mubr.bf16.mxu0 0
      %3660 = vmatmul.mubr.bf16.gmra.mrb[0].mxu0 %v3442
      %v3661 = vpop.f32.mrb[0].mxu0
      %v3662 = vadd.f32 0.0, %v3661
      %v3663 = vpop.f32.mrb[0].mxu0
      %v3664 = vpop.f32.mrb[0].mxu0
      %v3665 = vadd.f32 0.0, %v3664
      %v3666 = vpop.f32.mrb[0].mxu0
      %3667 = vdwg.mxu0
      %v3668 = vadd.f32 %v2914, %v3542
      %v3669 = vadd.f32 %v2915, %v3545
      %v3670 = vadd.f32 %v2916, %v3550
      %v3671 = vadd.f32 %v2917, %v3553
      %v3672 = vadd.f32 %v2918, %v3558
      %v3673 = vadd.f32 %v2919, %v3561
      %v3674 = vadd.f32 %v2920, %v3566
      %v3675 = vadd.f32 %v2921, %v3569
      %v3676 = vadd.f32 %v2922, %v3574
      %v3677 = vadd.f32 %v2923, %v3577
      %v3678 = vadd.f32 %v2924, %v3582
      %v3679 = vadd.f32 %v2925, %v3585
      %v3680 = vadd.f32 %v2926, %v3590
      %v3681 = vadd.f32 %v2927, %v3593
      %v3682 = vadd.f32 %v2928, %v3598
      %v3683 = vadd.f32 %v2929, %v3601
      %v3684 = vadd.f32 %v2930, %v3606
      %v3685 = vadd.f32 %v2931, %v3609
      %v3686 = vadd.f32 %v2932, %v3614
      %v3687 = vadd.f32 %v2933, %v3617
      %v3688 = vadd.f32 %v2934, %v3622
      %v3689 = vadd.f32 %v2935, %v3625
      %v3690 = vadd.f32 %v2936, %v3630
      %v3691 = vadd.f32 %v2937, %v3633
      %v3692 = vadd.f32 %v2938, %v3638
      %v3693 = vadd.f32 %v2939, %v3641
      %v3694 = vadd.f32 %v2940, %v3646
      %v3695 = vadd.f32 %v2941, %v3649
      %v3696 = vadd.f32 %v2942, %v3654
      %v3697 = vadd.f32 %v2943, %v3657
      %v3698 = vadd.f32 %v2944, %v3662
      %v3699 = vadd.f32 %v2945, %v3665
      %v3700 = vld [vmem:[%s911] sm:$0xe]
      %v3701 = vld [vmem:[%s911 + $0xc] sm:$0xe]
      %v3702 = vld [vmem:[%s911 + $0x18] sm:$0xe]
      %v3703 = vld [vmem:[%s911 + $0x24] sm:$0xe]
      %v3704 = vld [vmem:[%s911 + $0x30] sm:$0xe]
      %v3705 = vld [vmem:[%s911 + $0x3c] sm:$0xe]
      %v3706 = vld [vmem:[%s911 + $0x48] sm:$0xe]
      %v3707 = vld [vmem:[%s911 + $0x54] sm:$0xe]
      %v3708 = vld [vmem:[%s911 + $0x60] sm:$0xe]
      %v3709 = vld [vmem:[%s911 + $0x6c] sm:$0xe]
      %v3710 = vld [vmem:[%s911 + $0x78] sm:$0xe]
      %v3711 = vld [vmem:[%s911 + $0x84] sm:$0xe]
      %v3712 = vld [vmem:[%s911 + $0x90] sm:$0xe]
      %v3713 = vld [vmem:[%s911 + $0x9c] sm:$0xe]
      %v3714 = vld [vmem:[%s911 + $0xa8] sm:$0xe]
      %v3715 = vld [vmem:[%s911 + $0xb4] sm:$0xe]
      %v3764 = vrot.slane %v3700, 5
      %v3765 = vrot.slane %v3764, 4
      %v3766 = vrot.slane %v2947, 5
      %v3767 = vsel %vm2125, %v3765, %v3766
      %v3768 = vrot.slane %v3766, 4
      %v3769 = vrot.slane %v2948, 5
      %v3770 = vsel %vm2125, %v3768, %v3769
      %v3771 = vrot.slane %v3701, 5
      %v3772 = vrot.slane %v3771, 4
      %v3773 = vrot.slane %v2950, 5
      %v3774 = vsel %vm2125, %v3772, %v3773
      %v3775 = vrot.slane %v3773, 4
      %v3776 = vrot.slane %v2951, 5
      %v3777 = vsel %vm2125, %v3775, %v3776
      %v3778 = vrot.slane %v3702, 5
      %v3779 = vrot.slane %v3778, 4
      %v3780 = vrot.slane %v2953, 5
      %v3781 = vsel %vm2125, %v3779, %v3780
      %v3782 = vrot.slane %v3780, 4
      %v3783 = vrot.slane %v2954, 5
      %v3784 = vsel %vm2125, %v3782, %v3783
      %v3785 = vrot.slane %v3703, 5
      %v3786 = vrot.slane %v3785, 4
      %v3787 = vrot.slane %v2956, 5
      %v3788 = vsel %vm2125, %v3786, %v3787
      %v3789 = vrot.slane %v3787, 4
      %v3790 = vrot.slane %v2957, 5
      %v3791 = vsel %vm2125, %v3789, %v3790
      %v3792 = vrot.slane %v3704, 5
      %v3793 = vrot.slane %v3792, 4
      %v3794 = vrot.slane %v2959, 5
      %v3795 = vsel %vm2125, %v3793, %v3794
      %v3796 = vrot.slane %v3794, 4
      %v3797 = vrot.slane %v2960, 5
      %v3798 = vsel %vm2125, %v3796, %v3797
      %v3799 = vrot.slane %v3705, 5
      %v3800 = vrot.slane %v3799, 4
      %v3801 = vrot.slane %v2962, 5
      %v3802 = vsel %vm2125, %v3800, %v3801
      %v3803 = vrot.slane %v3801, 4
      %v3804 = vrot.slane %v2963, 5
      %v3805 = vsel %vm2125, %v3803, %v3804
      %v3806 = vrot.slane %v3706, 5
      %v3807 = vrot.slane %v3806, 4
      %v3808 = vrot.slane %v2965, 5
      %v3809 = vsel %vm2125, %v3807, %v3808
      %v3810 = vrot.slane %v3808, 4
      %v3811 = vrot.slane %v2966, 5
      %v3812 = vsel %vm2125, %v3810, %v3811
      %v3813 = vrot.slane %v3707, 5
      %v3814 = vrot.slane %v3813, 4
      %v3815 = vrot.slane %v2968, 5
      %v3816 = vsel %vm2125, %v3814, %v3815
      %v3817 = vrot.slane %v3815, 4
      %v3818 = vrot.slane %v2969, 5
      %v3819 = vsel %vm2125, %v3817, %v3818
      %v3820 = vrot.slane %v3708, 5
      %v3821 = vrot.slane %v3820, 4
      %v3822 = vrot.slane %v2971, 5
      %v3823 = vsel %vm2125, %v3821, %v3822
      %v3824 = vrot.slane %v3822, 4
      %v3825 = vrot.slane %v2972, 5
      %v3826 = vsel %vm2125, %v3824, %v3825
      %v3827 = vrot.slane %v3709, 5
      %v3828 = vrot.slane %v3827, 4
      %v3829 = vrot.slane %v2974, 5
      %v3830 = vsel %vm2125, %v3828, %v3829
      %v3831 = vrot.slane %v3829, 4
      %v3832 = vrot.slane %v2975, 5
      %v3833 = vsel %vm2125, %v3831, %v3832
      %v3834 = vrot.slane %v3710, 5
      %v3835 = vrot.slane %v3834, 4
      %v3836 = vrot.slane %v2977, 5
      %v3837 = vsel %vm2125, %v3835, %v3836
      %v3838 = vrot.slane %v3836, 4
      %v3839 = vrot.slane %v2978, 5
      %v3840 = vsel %vm2125, %v3838, %v3839
      %v3841 = vrot.slane %v3711, 5
      %v3842 = vrot.slane %v3841, 4
      %v3843 = vrot.slane %v2980, 5
      %v3844 = vsel %vm2125, %v3842, %v3843
      %v3845 = vrot.slane %v3843, 4
      %v3846 = vrot.slane %v2981, 5
      %v3847 = vsel %vm2125, %v3845, %v3846
      %v3848 = vrot.slane %v3712, 5
      %v3849 = vrot.slane %v3848, 4
      %v3850 = vrot.slane %v2983, 5
      %v3851 = vsel %vm2125, %v3849, %v3850
      %v3852 = vrot.slane %v3850, 4
      %v3853 = vrot.slane %v2984, 5
      %v3854 = vsel %vm2125, %v3852, %v3853
      %v3855 = vrot.slane %v3713, 5
      %v3856 = vrot.slane %v3855, 4
      %v3857 = vrot.slane %v2986, 5
      %v3858 = vsel %vm2125, %v3856, %v3857
      %v3859 = vrot.slane %v3857, 4
      %v3860 = vrot.slane %v2987, 5
      %v3861 = vsel %vm2125, %v3859, %v3860
      %v3862 = vrot.slane %v3714, 5
      %v3863 = vrot.slane %v3862, 4
      %v3864 = vrot.slane %v2989, 5
      %v3865 = vsel %vm2125, %v3863, %v3864
      %v3866 = vrot.slane %v3864, 4
      %v3867 = vrot.slane %v2990, 5
      %v3868 = vsel %vm2125, %v3866, %v3867
      %v3869 = vrot.slane %v3715, 5
      %v3870 = vrot.slane %v3869, 4
      %v3871 = vrot.slane %v2992, 5
      %v3872 = vsel %vm2125, %v3870, %v3871
      %v3873 = vrot.slane %v3871, 4
      %v3874 = vrot.slane %v2993, 5
      %v3875 = vsel %vm2125, %v3873, %v3874
      %s3876 = scalar_lea.vmem %s3, 320
      %v3877 = vld [vmem:[%s3876] sm:$0xf]
      %v3878 = vld [vmem:[%s3876 + $0x4] sm:$0xf]
      %v3879 = vld [vmem:[%s3876 + $0x8] sm:$0xf]
      %v3880 = vld [vmem:[%s3876 + $0xc] sm:$0xf]
      %v3881 = vld [vmem:[%s3876 + $0x10] sm:$0xf]
      %v3882 = vld [vmem:[%s3876 + $0x14] sm:$0xf]
      %v3883 = vld [vmem:[%s3876 + $0x18] sm:$0xf]
      %v3884 = vld [vmem:[%s3876 + $0x1c] sm:$0xf]
      %v3885 = vld [vmem:[%s3876 + $0x20] sm:$0xf]
      %v3886 = vld [vmem:[%s3876 + $0x24] sm:$0xf]
      %v3887 = vld [vmem:[%s3876 + $0x28] sm:$0xf]
      %v3888 = vld [vmem:[%s3876 + $0x2c] sm:$0xf]
      %v3889 = vld [vmem:[%s3876 + $0x30] sm:$0xf]
      %v3890 = vld [vmem:[%s3876 + $0x34] sm:$0xf]
      %v3891 = vld [vmem:[%s3876 + $0x38] sm:$0xf]
      %v3892 = vld [vmem:[%s3876 + $0x3c] sm:$0xf]
      %v3893 = vunpack.c.l.b16 %v3767
      %v3894 = vunpack.c.l.b16 %v3770
      %v3895 = vunpack.c.l.b16 %v3774
      %v3896 = vunpack.c.l.b16 %v3777
      %v3897 = vunpack.c.l.b16 %v3781
      %v3898 = vunpack.c.l.b16 %v3784
      %v3899 = vunpack.c.l.b16 %v3788
      %v3900 = vunpack.c.l.b16 %v3791
      %v3901 = vunpack.c.l.b16 %v3795
      %v3902 = vunpack.c.l.b16 %v3798
      %v3903 = vunpack.c.l.b16 %v3802
      %v3904 = vunpack.c.l.b16 %v3805
      %v3905 = vunpack.c.l.b16 %v3809
      %v3906 = vunpack.c.l.b16 %v3812
      %v3907 = vunpack.c.l.b16 %v3816
      %v3908 = vunpack.c.l.b16 %v3819
      %v3909 = vunpack.c.l.b16 %v3823
      %v3910 = vunpack.c.l.b16 %v3826
      %v3911 = vunpack.c.l.b16 %v3830
      %v3912 = vunpack.c.l.b16 %v3833
      %v3913 = vunpack.c.l.b16 %v3837
      %v3914 = vunpack.c.l.b16 %v3840
      %v3915 = vunpack.c.l.b16 %v3844
      %v3916 = vunpack.c.l.b16 %v3847
      %v3917 = vunpack.c.l.b16 %v3851
      %v3918 = vunpack.c.l.b16 %v3854
      %v3919 = vunpack.c.l.b16 %v3858
      %v3920 = vunpack.c.l.b16 %v3861
      %v3921 = vunpack.c.l.b16 %v3865
      %v3922 = vunpack.c.l.b16 %v3868
      %v3923 = vunpack.c.l.b16 %v3872
      %v3924 = vunpack.c.l.b16 %v3875
      %v3925 = vpack.c.b16 %v3894, %v3893
      %v3926 = vpack.c.b16 %v3896, %v3895
      %v3927 = vpack.c.b16 %v3898, %v3897
      %v3928 = vpack.c.b16 %v3900, %v3899
      %v3929 = vpack.c.b16 %v3902, %v3901
      %v3930 = vpack.c.b16 %v3904, %v3903
      %v3931 = vpack.c.b16 %v3906, %v3905
      %v3932 = vpack.c.b16 %v3908, %v3907
      %v3933 = vpack.c.b16 %v3910, %v3909
      %v3934 = vpack.c.b16 %v3912, %v3911
      %v3935 = vpack.c.b16 %v3914, %v3913
      %v3936 = vpack.c.b16 %v3916, %v3915
      %v3937 = vpack.c.b16 %v3918, %v3917
      %v3938 = vpack.c.b16 %v3920, %v3919
      %v3939 = vpack.c.b16 %v3922, %v3921
      %v3940 = vpack.c.b16 %v3924, %v3923
      %v3973 = vunpack.c.l.b16 %v3877
      %v3974 = vunpack.c.l.b16 %v3878
      %v3975 = vunpack.c.l.b16 %v3879
      %v3976 = vunpack.c.l.b16 %v3880
      %v3977 = vunpack.c.l.b16 %v3881
      %v3978 = vunpack.c.l.b16 %v3882
      %v3979 = vunpack.c.l.b16 %v3883
      %v3980 = vunpack.c.l.b16 %v3884
      %v3981 = vunpack.c.l.b16 %v3885
      %v3982 = vunpack.c.l.b16 %v3886
      %v3983 = vunpack.c.l.b16 %v3887
      %v3984 = vunpack.c.l.b16 %v3888
      %v3985 = vunpack.c.l.b16 %v3889
      %v3986 = vunpack.c.l.b16 %v3890
      %v3987 = vunpack.c.l.b16 %v3891
      %v3988 = vunpack.c.l.b16 %v3892
      %v3989 = vpack.c.b16 %v3974, %v3973
      %v3990 = vpack.c.b16 %v3976, %v3975
      %v3991 = vpack.c.b16 %v3978, %v3977
      %v3992 = vpack.c.b16 %v3980, %v3979
      %v3993 = vpack.c.b16 %v3982, %v3981
      %v3994 = vpack.c.b16 %v3984, %v3983
      %v3995 = vpack.c.b16 %v3986, %v3985
      %v3996 = vpack.c.b16 %v3988, %v3987
      %4005 = vmatprep.subr.bf16.mxu0 0
      %4006 = vmatpush1.bf16.msra.mxu0 %v3989
      %4007 = vmatprep.subr.bf16.mxu0 0
      %4008 = vmatpush1.bf16.msra.mxu0 %v3990
      %4009 = vmatprep.subr.bf16.mxu0 0
      %4010 = vmatpush1.bf16.msra.mxu0 %v3991
      %4011 = vmatprep.subr.bf16.mxu0 0
      %4012 = vmatpush1.bf16.msra.mxu0 %v3992
      %4013 = vmatprep.subr.bf16.mxu0 0
      %4014 = vmatpush1.bf16.msra.mxu0 %v3993
      %4015 = vmatprep.subr.bf16.mxu0 0
      %4016 = vmatpush1.bf16.msra.mxu0 %v3994
      %4017 = vmatprep.subr.bf16.mxu0 0
      %4018 = vmatpush1.bf16.msra.mxu0 %v3995
      %4019 = vmatprep.subr.bf16.mxu0 0
      %4020 = vmatpush1.bf16.msra.mxu0 %v3996
      %4021 = vmatprep.subr.bf16.mxu0 0
      %4022 = vmatpush1.bf16.msra.mxu0 0
      %4023 = vmatprep.subr.bf16.mxu0 0
      %4024 = vmatpush1.bf16.msra.mxu0 0
      %4025 = vmatprep.subr.bf16.mxu0 0
      %4026 = vmatpush1.bf16.msra.mxu0 0
      %4027 = vmatprep.subr.bf16.mxu0 0
      %4028 = vmatpush1.bf16.msra.mxu0 0
      %4029 = vmatprep.subr.bf16.mxu0 0
      %4030 = vmatpush1.bf16.msra.mxu0 0
      %4031 = vmatprep.subr.bf16.mxu0 0
      %4032 = vmatpush1.bf16.msra.mxu0 0
      %4033 = vmatprep.subr.bf16.mxu0 0
      %4034 = vmatpush1.bf16.msra.mxu0 0
      %4035 = vmatprep.subr.bf16.mxu0 0
      %4036 = vmatpush1.bf16.msra.mxu0 0
      %4037 = vmatprep.mubr.bf16.mxu0 0
      %4038 = vmatmul.mubr.bf16.gmra.mrb[0].mxu0 %v3925
      %v4039 = vpop.f32.mrb[0].mxu0
      %v4040 = vadd.f32 0.0, %v4039
      %v4041 = vpop.f32.mrb[0].mxu0
      %v4042 = vpop.f32.mrb[0].mxu0
      %v4043 = vadd.f32 0.0, %v4042
      %v4044 = vpop.f32.mrb[0].mxu0
      %4045 = vmatprep.mubr.bf16.mxu0 0
      %4046 = vmatmul.mubr.bf16.gmra.mrb[0].mxu0 %v3926
      %v4047 = vpop.f32.mrb[0].mxu0
      %v4048 = vadd.f32 0.0, %v4047
      %v4049 = vpop.f32.mrb[0].mxu0
      %v4050 = vpop.f32.mrb[0].mxu0
      %v4051 = vadd.f32 0.0, %v4050
      %v4052 = vpop.f32.mrb[0].mxu0
      %4053 = vmatprep.mubr.bf16.mxu0 0
      %4054 = vmatmul.mubr.bf16.gmra.mrb[0].mxu0 %v3927
      %v4055 = vpop.f32.mrb[0].mxu0
      %v4056 = vadd.f32 0.0, %v4055
      %v4057 = vpop.f32.mrb[0].mxu0
      %v4058 = vpop.f32.mrb[0].mxu0
      %v4059 = vadd.f32 0.0, %v4058
      %v4060 = vpop.f32.mrb[0].mxu0
      %4061 = vmatprep.mubr.bf16.mxu0 0
      %4062 = vmatmul.mubr.bf16.gmra.mrb[0].mxu0 %v3928
      %v4063 = vpop.f32.mrb[0].mxu0
      %v4064 = vadd.f32 0.0, %v4063
      %v4065 = vpop.f32.mrb[0].mxu0
      %v4066 = vpop.f32.mrb[0].mxu0
      %v4067 = vadd.f32 0.0, %v4066
      %v4068 = vpop.f32.mrb[0].mxu0
      %4069 = vmatprep.mubr.bf16.mxu0 0
      %4070 = vmatmul.mubr.bf16.gmra.mrb[0].mxu0 %v3929
      %v4071 = vpop.f32.mrb[0].mxu0
      %v4072 = vadd.f32 0.0, %v4071
      %v4073 = vpop.f32.mrb[0].mxu0
      %v4074 = vpop.f32.mrb[0].mxu0
      %v4075 = vadd.f32 0.0, %v4074
      %v4076 = vpop.f32.mrb[0].mxu0
      %4077 = vmatprep.mubr.bf16.mxu0 0
      %4078 = vmatmul.mubr.bf16.gmra.mrb[0].mxu0 %v3930
      %v4079 = vpop.f32.mrb[0].mxu0
      %v4080 = vadd.f32 0.0, %v4079
      %v4081 = vpop.f32.mrb[0].mxu0
      %v4082 = vpop.f32.mrb[0].mxu0
      %v4083 = vadd.f32 0.0, %v4082
      %v4084 = vpop.f32.mrb[0].mxu0
      %4085 = vmatprep.mubr.bf16.mxu0 0
      %4086 = vmatmul.mubr.bf16.gmra.mrb[0].mxu0 %v3931
      %v4087 = vpop.f32.mrb[0].mxu0
      %v4088 = vadd.f32 0.0, %v4087
      %v4089 = vpop.f32.mrb[0].mxu0
      %v4090 = vpop.f32.mrb[0].mxu0
      %v4091 = vadd.f32 0.0, %v4090
      %v4092 = vpop.f32.mrb[0].mxu0
      %4093 = vmatprep.mubr.bf16.mxu0 0
      %4094 = vmatmul.mubr.bf16.gmra.mrb[0].mxu0 %v3932
      %v4095 = vpop.f32.mrb[0].mxu0
      %v4096 = vadd.f32 0.0, %v4095
      %v4097 = vpop.f32.mrb[0].mxu0
      %v4098 = vpop.f32.mrb[0].mxu0
      %v4099 = vadd.f32 0.0, %v4098
      %v4100 = vpop.f32.mrb[0].mxu0
      %4101 = vmatprep.mubr.bf16.mxu0 0
      %4102 = vmatmul.mubr.bf16.gmra.mrb[0].mxu0 %v3933
      %v4103 = vpop.f32.mrb[0].mxu0
      %v4104 = vadd.f32 0.0, %v4103
      %v4105 = vpop.f32.mrb[0].mxu0
      %v4106 = vpop.f32.mrb[0].mxu0
      %v4107 = vadd.f32 0.0, %v4106
      %v4108 = vpop.f32.mrb[0].mxu0
      %4109 = vmatprep.mubr.bf16.mxu0 0
      %4110 = vmatmul.mubr.bf16.gmra.mrb[0].mxu0 %v3934
      %v4111 = vpop.f32.mrb[0].mxu0
      %v4112 = vadd.f32 0.0, %v4111
      %v4113 = vpop.f32.mrb[0].mxu0
      %v4114 = vpop.f32.mrb[0].mxu0
      %v4115 = vadd.f32 0.0, %v4114
      %v4116 = vpop.f32.mrb[0].mxu0
      %4117 = vmatprep.mubr.bf16.mxu0 0
      %4118 = vmatmul.mubr.bf16.gmra.mrb[0].mxu0 %v3935
      %v4119 = vpop.f32.mrb[0].mxu0
      %v4120 = vadd.f32 0.0, %v4119
      %v4121 = vpop.f32.mrb[0].mxu0
      %v4122 = vpop.f32.mrb[0].mxu0
      %v4123 = vadd.f32 0.0, %v4122
      %v4124 = vpop.f32.mrb[0].mxu0
      %4125 = vmatprep.mubr.bf16.mxu0 0
      %4126 = vmatmul.mubr.bf16.gmra.mrb[0].mxu0 %v3936
      %v4127 = vpop.f32.mrb[0].mxu0
      %v4128 = vadd.f32 0.0, %v4127
      %v4129 = vpop.f32.mrb[0].mxu0
      %v4130 = vpop.f32.mrb[0].mxu0
      %v4131 = vadd.f32 0.0, %v4130
      %v4132 = vpop.f32.mrb[0].mxu0
      %4133 = vmatprep.mubr.bf16.mxu0 0
      %4134 = vmatmul.mubr.bf16.gmra.mrb[0].mxu0 %v3937
      %v4135 = vpop.f32.mrb[0].mxu0
      %v4136 = vadd.f32 0.0, %v4135
      %v4137 = vpop.f32.mrb[0].mxu0
      %v4138 = vpop.f32.mrb[0].mxu0
      %v4139 = vadd.f32 0.0, %v4138
      %v4140 = vpop.f32.mrb[0].mxu0
      %4141 = vmatprep.mubr.bf16.mxu0 0
      %4142 = vmatmul.mubr.bf16.gmra.mrb[0].mxu0 %v3938
      %v4143 = vpop.f32.mrb[0].mxu0
      %v4144 = vadd.f32 0.0, %v4143
      %v4145 = vpop.f32.mrb[0].mxu0
      %v4146 = vpop.f32.mrb[0].mxu0
      %v4147 = vadd.f32 0.0, %v4146
      %v4148 = vpop.f32.mrb[0].mxu0
      %4149 = vmatprep.mubr.bf16.mxu0 0
      %4150 = vmatmul.mubr.bf16.gmra.mrb[0].mxu0 %v3939
      %v4151 = vpop.f32.mrb[0].mxu0
      %v4152 = vadd.f32 0.0, %v4151
      %v4153 = vpop.f32.mrb[0].mxu0
      %v4154 = vpop.f32.mrb[0].mxu0
      %v4155 = vadd.f32 0.0, %v4154
      %v4156 = vpop.f32.mrb[0].mxu0
      %4157 = vmatprep.mubr.bf16.mxu0 0
      %4158 = vmatmul.mubr.bf16.gmra.mrb[0].mxu0 %v3940
      %v4159 = vpop.f32.mrb[0].mxu0
      %v4160 = vadd.f32 0.0, %v4159
      %v4161 = vpop.f32.mrb[0].mxu0
      %v4162 = vpop.f32.mrb[0].mxu0
      %v4163 = vadd.f32 0.0, %v4162
      %v4164 = vpop.f32.mrb[0].mxu0
      %4165 = vdwg.mxu0
      %v4166 = vadd.f32 %v3668, %v4040
      %v4167 = vadd.f32 %v3669, %v4043
      %v4168 = vadd.f32 %v3670, %v4048
      %v4169 = vadd.f32 %v3671, %v4051
      %v4170 = vadd.f32 %v3672, %v4056
      %v4171 = vadd.f32 %v3673, %v4059
      %v4172 = vadd.f32 %v3674, %v4064
      %v4173 = vadd.f32 %v3675, %v4067
      %v4174 = vadd.f32 %v3676, %v4072
      %v4175 = vadd.f32 %v3677, %v4075
      %v4176 = vadd.f32 %v3678, %v4080
      %v4177 = vadd.f32 %v3679, %v4083
      %v4178 = vadd.f32 %v3680, %v4088
      %v4179 = vadd.f32 %v3681, %v4091
      %v4180 = vadd.f32 %v3682, %v4096
      %v4181 = vadd.f32 %v3683, %v4099
      %v4182 = vadd.f32 %v3684, %v4104
      %v4183 = vadd.f32 %v3685, %v4107
      %v4184 = vadd.f32 %v3686, %v4112
      %v4185 = vadd.f32 %v3687, %v4115
      %v4186 = vadd.f32 %v3688, %v4120
      %v4187 = vadd.f32 %v3689, %v4123
      %v4188 = vadd.f32 %v3690, %v4128
      %v4189 = vadd.f32 %v3691, %v4131
      %v4190 = vadd.f32 %v3692, %v4136
      %v4191 = vadd.f32 %v3693, %v4139
      %v4192 = vadd.f32 %v3694, %v4144
      %v4193 = vadd.f32 %v3695, %v4147
      %v4194 = vadd.f32 %v3696, %v4152
      %v4195 = vadd.f32 %v3697, %v4155
      %v4196 = vadd.f32 %v3698, %v4160
      %v4197 = vadd.f32 %v3699, %v4163
      %s4198 = scalar_lea.vmem [#allocation2], 24
      %v4199 = vld [vmem:[%s4198] sm:$0xf]
      %v4200 = vld [vmem:[%s4198 + $0x4] sm:$0xf]
      %v4201 = vld [vmem:[%s4198 + $0xc] sm:$0xf]
      %v4202 = vld [vmem:[%s4198 + $0x10] sm:$0xf]
      %v4203 = vld [vmem:[%s4198 + $0x18] sm:$0xf]
      %v4204 = vld [vmem:[%s4198 + $0x1c] sm:$0xf]
      %v4205 = vld [vmem:[%s4198 + $0x24] sm:$0xf]
      %v4206 = vld [vmem:[%s4198 + $0x28] sm:$0xf]
      %v4207 = vld [vmem:[%s4198 + $0x30] sm:$0xf]
      %v4208 = vld [vmem:[%s4198 + $0x34] sm:$0xf]
      %v4209 = vld [vmem:[%s4198 + $0x3c] sm:$0xf]
      %v4210 = vld [vmem:[%s4198 + $0x40] sm:$0xf]
      %v4211 = vld [vmem:[%s4198 + $0x48] sm:$0xf]
      %v4212 = vld [vmem:[%s4198 + $0x4c] sm:$0xf]
      %v4213 = vld [vmem:[%s4198 + $0x54] sm:$0xf]
      %v4214 = vld [vmem:[%s4198 + $0x58] sm:$0xf]
      %v4215 = vld [vmem:[%s4198 + $0x60] sm:$0xf]
      %v4216 = vld [vmem:[%s4198 + $0x64] sm:$0xf]
      %v4217 = vld [vmem:[%s4198 + $0x6c] sm:$0xf]
      %v4218 = vld [vmem:[%s4198 + $0x70] sm:$0xf]
      %v4219 = vld [vmem:[%s4198 + $0x78] sm:$0xf]
      %v4220 = vld [vmem:[%s4198 + $0x7c] sm:$0xf]
      %v4221 = vld [vmem:[%s4198 + $0x84] sm:$0xf]
      %v4222 = vld [vmem:[%s4198 + $0x88] sm:$0xf]
      %v4223 = vld [vmem:[%s4198 + $0x90] sm:$0xf]
      %v4224 = vld [vmem:[%s4198 + $0x94] sm:$0xf]
      %v4225 = vld [vmem:[%s4198 + $0x9c] sm:$0xf]
      %v4226 = vld [vmem:[%s4198 + $0xa0] sm:$0xf]
      %v4227 = vld [vmem:[%s4198 + $0xa8] sm:$0xf]
      %v4228 = vld [vmem:[%s4198 + $0xac] sm:$0xf]
      %v4229 = vld [vmem:[%s4198 + $0xb4] sm:$0xf]
      %v4230 = vld [vmem:[%s4198 + $0xb8] sm:$0xf]
      %s4231 = scalar_lea.vmem %s3, 384
      %v4232 = vld [vmem:[%s4231] sm:$0xf]
      %v4233 = vld [vmem:[%s4231 + $0x4] sm:$0xf]
      %v4234 = vld [vmem:[%s4231 + $0x8] sm:$0xf]
      %v4235 = vld [vmem:[%s4231 + $0xc] sm:$0xf]
      %v4236 = vld [vmem:[%s4231 + $0x10] sm:$0xf]
      %v4237 = vld [vmem:[%s4231 + $0x14] sm:$0xf]
      %v4238 = vld [vmem:[%s4231 + $0x18] sm:$0xf]
      %v4239 = vld [vmem:[%s4231 + $0x1c] sm:$0xf]
      %v4240 = vld [vmem:[%s4231 + $0x20] sm:$0xf]
      %v4241 = vld [vmem:[%s4231 + $0x24] sm:$0xf]
      %v4242 = vld [vmem:[%s4231 + $0x28] sm:$0xf]
      %v4243 = vld [vmem:[%s4231 + $0x2c] sm:$0xf]
      %v4244 = vld [vmem:[%s4231 + $0x30] sm:$0xf]
      %v4245 = vld [vmem:[%s4231 + $0x34] sm:$0xf]
      %v4246 = vld [vmem:[%s4231 + $0x38] sm:$0xf]
      %v4247 = vld [vmem:[%s4231 + $0x3c] sm:$0xf]
      %v4280 = vunpack.c.l.b16 %v4199
      %v4281 = vunpack.c.l.b16 %v4200
      %v4282 = vunpack.c.l.b16 %v4201
      %v4283 = vunpack.c.l.b16 %v4202
      %v4284 = vunpack.c.l.b16 %v4203
      %v4285 = vunpack.c.l.b16 %v4204
      %v4286 = vunpack.c.l.b16 %v4205
      %v4287 = vunpack.c.l.b16 %v4206
      %v4288 = vunpack.c.l.b16 %v4207
      %v4289 = vunpack.c.l.b16 %v4208
      %v4290 = vunpack.c.l.b16 %v4209
      %v4291 = vunpack.c.l.b16 %v4210
      %v4292 = vunpack.c.l.b16 %v4211
      %v4293 = vunpack.c.l.b16 %v4212
      %v4294 = vunpack.c.l.b16 %v4213
      %v4295 = vunpack.c.l.b16 %v4214
      %v4296 = vunpack.c.l.b16 %v4215
      %v4297 = vunpack.c.l.b16 %v4216
      %v4298 = vunpack.c.l.b16 %v4217
      %v4299 = vunpack.c.l.b16 %v4218
      %v4300 = vunpack.c.l.b16 %v4219
      %v4301 = vunpack.c.l.b16 %v4220
      %v4302 = vunpack.c.l.b16 %v4221
      %v4303 = vunpack.c.l.b16 %v4222
      %v4304 = vunpack.c.l.b16 %v4223
      %v4305 = vunpack.c.l.b16 %v4224
      %v4306 = vunpack.c.l.b16 %v4225
      %v4307 = vunpack.c.l.b16 %v4226
      %v4308 = vunpack.c.l.b16 %v4227
      %v4309 = vunpack.c.l.b16 %v4228
      %v4310 = vunpack.c.l.b16 %v4229
      %v4311 = vunpack.c.l.b16 %v4230
      %v4312 = vpack.c.b16 %v4281, %v4280
      %v4313 = vpack.c.b16 %v4283, %v4282
      %v4314 = vpack.c.b16 %v4285, %v4284
      %v4315 = vpack.c.b16 %v4287, %v4286
      %v4316 = vpack.c.b16 %v4289, %v4288
      %v4317 = vpack.c.b16 %v4291, %v4290
      %v4318 = vpack.c.b16 %v4293, %v4292
      %v4319 = vpack.c.b16 %v4295, %v4294
      %v4320 = vpack.c.b16 %v4297, %v4296
      %v4321 = vpack.c.b16 %v4299, %v4298
      %v4322 = vpack.c.b16 %v4301, %v4300
      %v4323 = vpack.c.b16 %v4303, %v4302
      %v4324 = vpack.c.b16 %v4305, %v4304
      %v4325 = vpack.c.b16 %v4307, %v4306
      %v4326 = vpack.c.b16 %v4309, %v4308
      %v4327 = vpack.c.b16 %v4311, %v4310
      %v4360 = vunpack.c.l.b16 %v4232
      %v4361 = vunpack.c.l.b16 %v4233
      %v4362 = vunpack.c.l.b16 %v4234
      %v4363 = vunpack.c.l.b16 %v4235
      %v4364 = vunpack.c.l.b16 %v4236
      %v4365 = vunpack.c.l.b16 %v4237
      %v4366 = vunpack.c.l.b16 %v4238
      %v4367 = vunpack.c.l.b16 %v4239
      %v4368 = vunpack.c.l.b16 %v4240
      %v4369 = vunpack.c.l.b16 %v4241
      %v4370 = vunpack.c.l.b16 %v4242
      %v4371 = vunpack.c.l.b16 %v4243
      %v4372 = vunpack.c.l.b16 %v4244
      %v4373 = vunpack.c.l.b16 %v4245
      %v4374 = vunpack.c.l.b16 %v4246
      %v4375 = vunpack.c.l.b16 %v4247
      %v4376 = vpack.c.b16 %v4361, %v4360
      %v4377 = vpack.c.b16 %v4363, %v4362
      %v4378 = vpack.c.b16 %v4365, %v4364
      %v4379 = vpack.c.b16 %v4367, %v4366
      %v4380 = vpack.c.b16 %v4369, %v4368
      %v4381 = vpack.c.b16 %v4371, %v4370
      %v4382 = vpack.c.b16 %v4373, %v4372
      %v4383 = vpack.c.b16 %v4375, %v4374
      %4392 = vmatprep.subr.bf16.mxu0 0
      %4393 = vmatpush1.bf16.msra.mxu0 %v4376
      %4394 = vmatprep.subr.bf16.mxu0 0
      %4395 = vmatpush1.bf16.msra.mxu0 %v4377
      %4396 = vmatprep.subr.bf16.mxu0 0
      %4397 = vmatpush1.bf16.msra.mxu0 %v4378
      %4398 = vmatprep.subr.bf16.mxu0 0
      %4399 = vmatpush1.bf16.msra.mxu0 %v4379
      %4400 = vmatprep.subr.bf16.mxu0 0
      %4401 = vmatpush1.bf16.msra.mxu0 %v4380
      %4402 = vmatprep.subr.bf16.mxu0 0
      %4403 = vmatpush1.bf16.msra.mxu0 %v4381
      %4404 = vmatprep.subr.bf16.mxu0 0
      %4405 = vmatpush1.bf16.msra.mxu0 %v4382
      %4406 = vmatprep.subr.bf16.mxu0 0
      %4407 = vmatpush1.bf16.msra.mxu0 %v4383
      %4408 = vmatprep.subr.bf16.mxu0 0
      %4409 = vmatpush1.bf16.msra.mxu0 0
      %4410 = vmatprep.subr.bf16.mxu0 0
      %4411 = vmatpush1.bf16.msra.mxu0 0
      %4412 = vmatprep.subr.bf16.mxu0 0
      %4413 = vmatpush1.bf16.msra.mxu0 0
      %4414 = vmatprep.subr.bf16.mxu0 0
      %4415 = vmatpush1.bf16.msra.mxu0 0
      %4416 = vmatprep.subr.bf16.mxu0 0
      %4417 = vmatpush1.bf16.msra.mxu0 0
      %4418 = vmatprep.subr.bf16.mxu0 0
      %4419 = vmatpush1.bf16.msra.mxu0 0
      %4420 = vmatprep.subr.bf16.mxu0 0
      %4421 = vmatpush1.bf16.msra.mxu0 0
      %4422 = vmatprep.subr.bf16.mxu0 0
      %4423 = vmatpush1.bf16.msra.mxu0 0
      %4424 = vmatprep.mubr.bf16.mxu0 0
      %4425 = vmatmul.mubr.bf16.gmra.mrb[0].mxu0 %v4312
      %v4426 = vpop.f32.mrb[0].mxu0
      %v4427 = vadd.f32 0.0, %v4426
      %v4428 = vpop.f32.mrb[0].mxu0
      %v4429 = vpop.f32.mrb[0].mxu0
      %v4430 = vadd.f32 0.0, %v4429
      %v4431 = vpop.f32.mrb[0].mxu0
      %4432 = vmatprep.mubr.bf16.mxu0 0
      %4433 = vmatmul.mubr.bf16.gmra.mrb[0].mxu0 %v4313
      %v4434 = vpop.f32.mrb[0].mxu0
      %v4435 = vadd.f32 0.0, %v4434
      %v4436 = vpop.f32.mrb[0].mxu0
      %v4437 = vpop.f32.mrb[0].mxu0
      %v4438 = vadd.f32 0.0, %v4437
      %v4439 = vpop.f32.mrb[0].mxu0
      %4440 = vmatprep.mubr.bf16.mxu0 0
      %4441 = vmatmul.mubr.bf16.gmra.mrb[0].mxu0 %v4314
      %v4442 = vpop.f32.mrb[0].mxu0
      %v4443 = vadd.f32 0.0, %v4442
      %v4444 = vpop.f32.mrb[0].mxu0
      %v4445 = vpop.f32.mrb[0].mxu0
      %v4446 = vadd.f32 0.0, %v4445
      %v4447 = vpop.f32.mrb[0].mxu0
      %4448 = vmatprep.mubr.bf16.mxu0 0
      %4449 = vmatmul.mubr.bf16.gmra.mrb[0].mxu0 %v4315
      %v4450 = vpop.f32.mrb[0].mxu0
      %v4451 = vadd.f32 0.0, %v4450
      %v4452 = vpop.f32.mrb[0].mxu0
      %v4453 = vpop.f32.mrb[0].mxu0
      %v4454 = vadd.f32 0.0, %v4453
      %v4455 = vpop.f32.mrb[0].mxu0
      %4456 = vmatprep.mubr.bf16.mxu0 0
      %4457 = vmatmul.mubr.bf16.gmra.mrb[0].mxu0 %v4316
      %v4458 = vpop.f32.mrb[0].mxu0
      %v4459 = vadd.f32 0.0, %v4458
      %v4460 = vpop.f32.mrb[0].mxu0
      %v4461 = vpop.f32.mrb[0].mxu0
      %v4462 = vadd.f32 0.0, %v4461
      %v4463 = vpop.f32.mrb[0].mxu0
      %4464 = vmatprep.mubr.bf16.mxu0 0
      %4465 = vmatmul.mubr.bf16.gmra.mrb[0].mxu0 %v4317
      %v4466 = vpop.f32.mrb[0].mxu0
      %v4467 = vadd.f32 0.0, %v4466
      %v4468 = vpop.f32.mrb[0].mxu0
      %v4469 = vpop.f32.mrb[0].mxu0
      %v4470 = vadd.f32 0.0, %v4469
      %v4471 = vpop.f32.mrb[0].mxu0
      %4472 = vmatprep.mubr.bf16.mxu0 0
      %4473 = vmatmul.mubr.bf16.gmra.mrb[0].mxu0 %v4318
      %v4474 = vpop.f32.mrb[0].mxu0
      %v4475 = vadd.f32 0.0, %v4474
      %v4476 = vpop.f32.mrb[0].mxu0
      %v4477 = vpop.f32.mrb[0].mxu0
      %v4478 = vadd.f32 0.0, %v4477
      %v4479 = vpop.f32.mrb[0].mxu0
      %4480 = vmatprep.mubr.bf16.mxu0 0
      %4481 = vmatmul.mubr.bf16.gmra.mrb[0].mxu0 %v4319
      %v4482 = vpop.f32.mrb[0].mxu0
      %v4483 = vadd.f32 0.0, %v4482
      %v4484 = vpop.f32.mrb[0].mxu0
      %v4485 = vpop.f32.mrb[0].mxu0
      %v4486 = vadd.f32 0.0, %v4485
      %v4487 = vpop.f32.mrb[0].mxu0
      %4488 = vmatprep.mubr.bf16.mxu0 0
      %4489 = vmatmul.mubr.bf16.gmra.mrb[0].mxu0 %v4320
      %v4490 = vpop.f32.mrb[0].mxu0
      %v4491 = vadd.f32 0.0, %v4490
      %v4492 = vpop.f32.mrb[0].mxu0
      %v4493 = vpop.f32.mrb[0].mxu0
      %v4494 = vadd.f32 0.0, %v4493
      %v4495 = vpop.f32.mrb[0].mxu0
      %4496 = vmatprep.mubr.bf16.mxu0 0
      %4497 = vmatmul.mubr.bf16.gmra.mrb[0].mxu0 %v4321
      %v4498 = vpop.f32.mrb[0].mxu0
      %v4499 = vadd.f32 0.0, %v4498
      %v4500 = vpop.f32.mrb[0].mxu0
      %v4501 = vpop.f32.mrb[0].mxu0
      %v4502 = vadd.f32 0.0, %v4501
      %v4503 = vpop.f32.mrb[0].mxu0
      %4504 = vmatprep.mubr.bf16.mxu0 0
      %4505 = vmatmul.mubr.bf16.gmra.mrb[0].mxu0 %v4322
      %v4506 = vpop.f32.mrb[0].mxu0
      %v4507 = vadd.f32 0.0, %v4506
      %v4508 = vpop.f32.mrb[0].mxu0
      %v4509 = vpop.f32.mrb[0].mxu0
      %v4510 = vadd.f32 0.0, %v4509
      %v4511 = vpop.f32.mrb[0].mxu0
      %4512 = vmatprep.mubr.bf16.mxu0 0
      %4513 = vmatmul.mubr.bf16.gmra.mrb[0].mxu0 %v4323
      %v4514 = vpop.f32.mrb[0].mxu0
      %v4515 = vadd.f32 0.0, %v4514
      %v4516 = vpop.f32.mrb[0].mxu0
      %v4517 = vpop.f32.mrb[0].mxu0
      %v4518 = vadd.f32 0.0, %v4517
      %v4519 = vpop.f32.mrb[0].mxu0
      %4520 = vmatprep.mubr.bf16.mxu0 0
      %4521 = vmatmul.mubr.bf16.gmra.mrb[0].mxu0 %v4324
      %v4522 = vpop.f32.mrb[0].mxu0
      %v4523 = vadd.f32 0.0, %v4522
      %v4524 = vpop.f32.mrb[0].mxu0
      %v4525 = vpop.f32.mrb[0].mxu0
      %v4526 = vadd.f32 0.0, %v4525
      %v4527 = vpop.f32.mrb[0].mxu0
      %4528 = vmatprep.mubr.bf16.mxu0 0
      %4529 = vmatmul.mubr.bf16.gmra.mrb[0].mxu0 %v4325
      %v4530 = vpop.f32.mrb[0].mxu0
      %v4531 = vadd.f32 0.0, %v4530
      %v4532 = vpop.f32.mrb[0].mxu0
      %v4533 = vpop.f32.mrb[0].mxu0
      %v4534 = vadd.f32 0.0, %v4533
      %v4535 = vpop.f32.mrb[0].mxu0
      %4536 = vmatprep.mubr.bf16.mxu0 0
      %4537 = vmatmul.mubr.bf16.gmra.mrb[0].mxu0 %v4326
      %v4538 = vpop.f32.mrb[0].mxu0
      %v4539 = vadd.f32 0.0, %v4538
      %v4540 = vpop.f32.mrb[0].mxu0
      %v4541 = vpop.f32.mrb[0].mxu0
      %v4542 = vadd.f32 0.0, %v4541
      %v4543 = vpop.f32.mrb[0].mxu0
      %4544 = vmatprep.mubr.bf16.mxu0 0
      %4545 = vmatmul.mubr.bf16.gmra.mrb[0].mxu0 %v4327
      %v4546 = vpop.f32.mrb[0].mxu0
      %v4547 = vadd.f32 0.0, %v4546
      %v4548 = vpop.f32.mrb[0].mxu0
      %v4549 = vpop.f32.mrb[0].mxu0
      %v4550 = vadd.f32 0.0, %v4549
      %v4551 = vpop.f32.mrb[0].mxu0
      %4552 = vdwg.mxu0
      %v4553 = vadd.f32 %v4166, %v4427
      %v4554 = vadd.f32 %v4167, %v4430
      %v4555 = vadd.f32 %v4168, %v4435
      %v4556 = vadd.f32 %v4169, %v4438
      %v4557 = vadd.f32 %v4170, %v4443
      %v4558 = vadd.f32 %v4171, %v4446
      %v4559 = vadd.f32 %v4172, %v4451
      %v4560 = vadd.f32 %v4173, %v4454
      %v4561 = vadd.f32 %v4174, %v4459
      %v4562 = vadd.f32 %v4175, %v4462
      %v4563 = vadd.f32 %v4176, %v4467
      %v4564 = vadd.f32 %v4177, %v4470
      %v4565 = vadd.f32 %v4178, %v4475
      %v4566 = vadd.f32 %v4179, %v4478
      %v4567 = vadd.f32 %v4180, %v4483
      %v4568 = vadd.f32 %v4181, %v4486
      %v4569 = vadd.f32 %v4182, %v4491
      %v4570 = vadd.f32 %v4183, %v4494
      %v4571 = vadd.f32 %v4184, %v4499
      %v4572 = vadd.f32 %v4185, %v4502
      %v4573 = vadd.f32 %v4186, %v4507
      %v4574 = vadd.f32 %v4187, %v4510
      %v4575 = vadd.f32 %v4188, %v4515
      %v4576 = vadd.f32 %v4189, %v4518
      %v4577 = vadd.f32 %v4190, %v4523
      %v4578 = vadd.f32 %v4191, %v4526
      %v4579 = vadd.f32 %v4192, %v4531
      %v4580 = vadd.f32 %v4193, %v4534
      %v4581 = vadd.f32 %v4194, %v4539
      %v4582 = vadd.f32 %v4195, %v4542
      %v4583 = vadd.f32 %v4196, %v4547
      %v4584 = vadd.f32 %v4197, %v4550
      %v4585 = vld [vmem:[%s4198] sm:$0xf]
      %v4586 = vld [vmem:[%s4198 + $0x4] sm:$0xf]
      %v4587 = vld [vmem:[%s4198 + $0x8] sm:$0x1]
      %v4588 = vld [vmem:[%s4198 + $0xc] sm:$0xf]
      %v4589 = vld [vmem:[%s4198 + $0x10] sm:$0xf]
      %v4590 = vld [vmem:[%s4198 + $0x14] sm:$0x1]
      %v4591 = vld [vmem:[%s4198 + $0x18] sm:$0xf]
      %v4592 = vld [vmem:[%s4198 + $0x1c] sm:$0xf]
      %v4593 = vld [vmem:[%s4198 + $0x20] sm:$0x1]
      %v4594 = vld [vmem:[%s4198 + $0x24] sm:$0xf]
      %v4595 = vld [vmem:[%s4198 + $0x28] sm:$0xf]
      %v4596 = vld [vmem:[%s4198 + $0x2c] sm:$0x1]
      %v4597 = vld [vmem:[%s4198 + $0x30] sm:$0xf]
      %v4598 = vld [vmem:[%s4198 + $0x34] sm:$0xf]
      %v4599 = vld [vmem:[%s4198 + $0x38] sm:$0x1]
      %v4600 = vld [vmem:[%s4198 + $0x3c] sm:$0xf]
      %v4601 = vld [vmem:[%s4198 + $0x40] sm:$0xf]
      %v4602 = vld [vmem:[%s4198 + $0x44] sm:$0x1]
      %v4603 = vld [vmem:[%s4198 + $0x48] sm:$0xf]
      %v4604 = vld [vmem:[%s4198 + $0x4c] sm:$0xf]
      %v4605 = vld [vmem:[%s4198 + $0x50] sm:$0x1]
      %v4606 = vld [vmem:[%s4198 + $0x54] sm:$0xf]
      %v4607 = vld [vmem:[%s4198 + $0x58] sm:$0xf]
      %v4608 = vld [vmem:[%s4198 + $0x5c] sm:$0x1]
      %v4609 = vld [vmem:[%s4198 + $0x60] sm:$0xf]
      %v4610 = vld [vmem:[%s4198 + $0x64] sm:$0xf]
      %v4611 = vld [vmem:[%s4198 + $0x68] sm:$0x1]
      %v4612 = vld [vmem:[%s4198 + $0x6c] sm:$0xf]
      %v4613 = vld [vmem:[%s4198 + $0x70] sm:$0xf]
      %v4614 = vld [vmem:[%s4198 + $0x74] sm:$0x1]
      %v4615 = vld [vmem:[%s4198 + $0x78] sm:$0xf]
      %v4616 = vld [vmem:[%s4198 + $0x7c] sm:$0xf]
      %v4617 = vld [vmem:[%s4198 + $0x80] sm:$0x1]
      %v4618 = vld [vmem:[%s4198 + $0x84] sm:$0xf]
      %v4619 = vld [vmem:[%s4198 + $0x88] sm:$0xf]
      %v4620 = vld [vmem:[%s4198 + $0x8c] sm:$0x1]
      %v4621 = vld [vmem:[%s4198 + $0x90] sm:$0xf]
      %v4622 = vld [vmem:[%s4198 + $0x94] sm:$0xf]
      %v4623 = vld [vmem:[%s4198 + $0x98] sm:$0x1]
      %v4624 = vld [vmem:[%s4198 + $0x9c] sm:$0xf]
      %v4625 = vld [vmem:[%s4198 + $0xa0] sm:$0xf]
      %v4626 = vld [vmem:[%s4198 + $0xa4] sm:$0x1]
      %v4627 = vld [vmem:[%s4198 + $0xa8] sm:$0xf]
      %v4628 = vld [vmem:[%s4198 + $0xac] sm:$0xf]
      %v4629 = vld [vmem:[%s4198 + $0xb0] sm:$0x1]
      %v4630 = vld [vmem:[%s4198 + $0xb4] sm:$0xf]
      %v4631 = vld [vmem:[%s4198 + $0xb8] sm:$0xf]
      %v4632 = vld [vmem:[%s4198 + $0xbc] sm:$0x1]
      %v4634 = vshrl.u32 %v4585, 16
      %v4636 = vrot.slane %v4634, 4
      %v4637 = vshll.u32 %v4585, 16
      %v4639 = vrot.slane %v4637, 5
      %v4640 = vor.u32 %v4636, %v4639
      %v4641 = vrot.slane %v4640, 4
      %v4643 = vshll.u32 %v4586, 16
      %v4645 = vrot.slane %v4643, 5
      %v4646 = vsel %vm1095, %v4641, %v4645
      %v4647 = vshrl.u32 %v4586, 16
      %v4649 = vrot.slane %v4647, 4
      %v4650 = vor.u32 %v4649, %v4645
      %v4651 = vrot.slane %v4650, 4
      %v4653 = vshll.u32 %v4587, 16
      %v4655 = vrot.slane %v4653, 5
      %v4656 = vsel %vm1095, %v4651, %v4655
      %v4658 = vshrl.u32 %v4588, 16
      %v4660 = vrot.slane %v4658, 4
      %v4661 = vshll.u32 %v4588, 16
      %v4663 = vrot.slane %v4661, 5
      %v4664 = vor.u32 %v4660, %v4663
      %v4665 = vrot.slane %v4664, 4
      %v4667 = vshll.u32 %v4589, 16
      %v4669 = vrot.slane %v4667, 5
      %v4670 = vsel %vm1095, %v4665, %v4669
      %v4671 = vshrl.u32 %v4589, 16
      %v4673 = vrot.slane %v4671, 4
      %v4674 = vor.u32 %v4673, %v4669
      %v4675 = vrot.slane %v4674, 4
      %v4677 = vshll.u32 %v4590, 16
      %v4679 = vrot.slane %v4677, 5
      %v4680 = vsel %vm1095, %v4675, %v4679
      %v4682 = vshrl.u32 %v4591, 16
      %v4684 = vrot.slane %v4682, 4
      %v4685 = vshll.u32 %v4591, 16
      %v4687 = vrot.slane %v4685, 5
      %v4688 = vor.u32 %v4684, %v4687
      %v4689 = vrot.slane %v4688, 4
      %v4691 = vshll.u32 %v4592, 16
      %v4693 = vrot.slane %v4691, 5
      %v4694 = vsel %vm1095, %v4689, %v4693
      %v4695 = vshrl.u32 %v4592, 16
      %v4697 = vrot.slane %v4695, 4
      %v4698 = vor.u32 %v4697, %v4693
      %v4699 = vrot.slane %v4698, 4
      %v4701 = vshll.u32 %v4593, 16
      %v4703 = vrot.slane %v4701, 5
      %v4704 = vsel %vm1095, %v4699, %v4703
      %v4706 = vshrl.u32 %v4594, 16
      %v4708 = vrot.slane %v4706, 4
      %v4709 = vshll.u32 %v4594, 16
      %v4711 = vrot.slane %v4709, 5
      %v4712 = vor.u32 %v4708, %v4711
      %v4713 = vrot.slane %v4712, 4
      %v4715 = vshll.u32 %v4595, 16
      %v4717 = vrot.slane %v4715, 5
      %v4718 = vsel %vm1095, %v4713, %v4717
      %v4719 = vshrl.u32 %v4595, 16
      %v4721 = vrot.slane %v4719, 4
      %v4722 = vor.u32 %v4721, %v4717
      %v4723 = vrot.slane %v4722, 4
      %v4725 = vshll.u32 %v4596, 16
      %v4727 = vrot.slane %v4725, 5
      %v4728 = vsel %vm1095, %v4723, %v4727
      %v4730 = vshrl.u32 %v4597, 16
      %v4732 = vrot.slane %v4730, 4
      %v4733 = vshll.u32 %v4597, 16
      %v4735 = vrot.slane %v4733, 5
      %v4736 = vor.u32 %v4732, %v4735
      %v4737 = vrot.slane %v4736, 4
      %v4739 = vshll.u32 %v4598, 16
      %v4741 = vrot.slane %v4739, 5
      %v4742 = vsel %vm1095, %v4737, %v4741
      %v4743 = vshrl.u32 %v4598, 16
      %v4745 = vrot.slane %v4743, 4
      %v4746 = vor.u32 %v4745, %v4741
      %v4747 = vrot.slane %v4746, 4
      %v4749 = vshll.u32 %v4599, 16
      %v4751 = vrot.slane %v4749, 5
      %v4752 = vsel %vm1095, %v4747, %v4751
      %v4754 = vshrl.u32 %v4600, 16
      %v4756 = vrot.slane %v4754, 4
      %v4757 = vshll.u32 %v4600, 16
      %v4759 = vrot.slane %v4757, 5
      %v4760 = vor.u32 %v4756, %v4759
      %v4761 = vrot.slane %v4760, 4
      %v4763 = vshll.u32 %v4601, 16
      %v4765 = vrot.slane %v4763, 5
      %v4766 = vsel %vm1095, %v4761, %v4765
      %v4767 = vshrl.u32 %v4601, 16
      %v4769 = vrot.slane %v4767, 4
      %v4770 = vor.u32 %v4769, %v4765
      %v4771 = vrot.slane %v4770, 4
      %v4773 = vshll.u32 %v4602, 16
      %v4775 = vrot.slane %v4773, 5
      %v4776 = vsel %vm1095, %v4771, %v4775
      %v4778 = vshrl.u32 %v4603, 16
      %v4780 = vrot.slane %v4778, 4
      %v4781 = vshll.u32 %v4603, 16
      %v4783 = vrot.slane %v4781, 5
      %v4784 = vor.u32 %v4780, %v4783
      %v4785 = vrot.slane %v4784, 4
      %v4787 = vshll.u32 %v4604, 16
      %v4789 = vrot.slane %v4787, 5
      %v4790 = vsel %vm1095, %v4785, %v4789
      %v4791 = vshrl.u32 %v4604, 16
      %v4793 = vrot.slane %v4791, 4
      %v4794 = vor.u32 %v4793, %v4789
      %v4795 = vrot.slane %v4794, 4
      %v4797 = vshll.u32 %v4605, 16
      %v4799 = vrot.slane %v4797, 5
      %v4800 = vsel %vm1095, %v4795, %v4799
      %v4802 = vshrl.u32 %v4606, 16
      %v4804 = vrot.slane %v4802, 4
      %v4805 = vshll.u32 %v4606, 16
      %v4807 = vrot.slane %v4805, 5
      %v4808 = vor.u32 %v4804, %v4807
      %v4809 = vrot.slane %v4808, 4
      %v4811 = vshll.u32 %v4607, 16
      %v4813 = vrot.slane %v4811, 5
      %v4814 = vsel %vm1095, %v4809, %v4813
      %v4815 = vshrl.u32 %v4607, 16
      %v4817 = vrot.slane %v4815, 4
      %v4818 = vor.u32 %v4817, %v4813
      %v4819 = vrot.slane %v4818, 4
      %v4821 = vshll.u32 %v4608, 16
      %v4823 = vrot.slane %v4821, 5
      %v4824 = vsel %vm1095, %v4819, %v4823
      %v4826 = vshrl.u32 %v4609, 16
      %v4828 = vrot.slane %v4826, 4
      %v4829 = vshll.u32 %v4609, 16
      %v4831 = vrot.slane %v4829, 5
      %v4832 = vor.u32 %v4828, %v4831
      %v4833 = vrot.slane %v4832, 4
      %v4835 = vshll.u32 %v4610, 16
      %v4837 = vrot.slane %v4835, 5
      %v4838 = vsel %vm1095, %v4833, %v4837
      %v4839 = vshrl.u32 %v4610, 16
      %v4841 = vrot.slane %v4839, 4
      %v4842 = vor.u32 %v4841, %v4837
      %v4843 = vrot.slane %v4842, 4
      %v4845 = vshll.u32 %v4611, 16
      %v4847 = vrot.slane %v4845, 5
      %v4848 = vsel %vm1095, %v4843, %v4847
      %v4850 = vshrl.u32 %v4612, 16
      %v4852 = vrot.slane %v4850, 4
      %v4853 = vshll.u32 %v4612, 16
      %v4855 = vrot.slane %v4853, 5
      %v4856 = vor.u32 %v4852, %v4855
      %v4857 = vrot.slane %v4856, 4
      %v4859 = vshll.u32 %v4613, 16
      %v4861 = vrot.slane %v4859, 5
      %v4862 = vsel %vm1095, %v4857, %v4861
      %v4863 = vshrl.u32 %v4613, 16
      %v4865 = vrot.slane %v4863, 4
      %v4866 = vor.u32 %v4865, %v4861
      %v4867 = vrot.slane %v4866, 4
      %v4869 = vshll.u32 %v4614, 16
      %v4871 = vrot.slane %v4869, 5
      %v4872 = vsel %vm1095, %v4867, %v4871
      %v4874 = vshrl.u32 %v4615, 16
      %v4876 = vrot.slane %v4874, 4
      %v4877 = vshll.u32 %v4615, 16
      %v4879 = vrot.slane %v4877, 5
      %v4880 = vor.u32 %v4876, %v4879
      %v4881 = vrot.slane %v4880, 4
      %v4883 = vshll.u32 %v4616, 16
      %v4885 = vrot.slane %v4883, 5
      %v4886 = vsel %vm1095, %v4881, %v4885
      %v4887 = vshrl.u32 %v4616, 16
      %v4889 = vrot.slane %v4887, 4
      %v4890 = vor.u32 %v4889, %v4885
      %v4891 = vrot.slane %v4890, 4
      %v4893 = vshll.u32 %v4617, 16
      %v4895 = vrot.slane %v4893, 5
      %v4896 = vsel %vm1095, %v4891, %v4895
      %v4898 = vshrl.u32 %v4618, 16
      %v4900 = vrot.slane %v4898, 4
      %v4901 = vshll.u32 %v4618, 16
      %v4903 = vrot.slane %v4901, 5
      %v4904 = vor.u32 %v4900, %v4903
      %v4905 = vrot.slane %v4904, 4
      %v4907 = vshll.u32 %v4619, 16
      %v4909 = vrot.slane %v4907, 5
      %v4910 = vsel %vm1095, %v4905, %v4909
      %v4911 = vshrl.u32 %v4619, 16
      %v4913 = vrot.slane %v4911, 4
      %v4914 = vor.u32 %v4913, %v4909
      %v4915 = vrot.slane %v4914, 4
      %v4917 = vshll.u32 %v4620, 16
      %v4919 = vrot.slane %v4917, 5
      %v4920 = vsel %vm1095, %v4915, %v4919
      %v4922 = vshrl.u32 %v4621, 16
      %v4924 = vrot.slane %v4922, 4
      %v4925 = vshll.u32 %v4621, 16
      %v4927 = vrot.slane %v4925, 5
      %v4928 = vor.u32 %v4924, %v4927
      %v4929 = vrot.slane %v4928, 4
      %v4931 = vshll.u32 %v4622, 16
      %v4933 = vrot.slane %v4931, 5
      %v4934 = vsel %vm1095, %v4929, %v4933
      %v4935 = vshrl.u32 %v4622, 16
      %v4937 = vrot.slane %v4935, 4
      %v4938 = vor.u32 %v4937, %v4933
      %v4939 = vrot.slane %v4938, 4
      %v4941 = vshll.u32 %v4623, 16
      %v4943 = vrot.slane %v4941, 5
      %v4944 = vsel %vm1095, %v4939, %v4943
      %v4946 = vshrl.u32 %v4624, 16
      %v4948 = vrot.slane %v4946, 4
      %v4949 = vshll.u32 %v4624, 16
      %v4951 = vrot.slane %v4949, 5
      %v4952 = vor.u32 %v4948, %v4951
      %v4953 = vrot.slane %v4952, 4
      %v4955 = vshll.u32 %v4625, 16
      %v4957 = vrot.slane %v4955, 5
      %v4958 = vsel %vm1095, %v4953, %v4957
      %v4959 = vshrl.u32 %v4625, 16
      %v4961 = vrot.slane %v4959, 4
      %v4962 = vor.u32 %v4961, %v4957
      %v4963 = vrot.slane %v4962, 4
      %v4965 = vshll.u32 %v4626, 16
      %v4967 = vrot.slane %v4965, 5
      %v4968 = vsel %vm1095, %v4963, %v4967
      %v4970 = vshrl.u32 %v4627, 16
      %v4972 = vrot.slane %v4970, 4
      %v4973 = vshll.u32 %v4627, 16
      %v4975 = vrot.slane %v4973, 5
      %v4976 = vor.u32 %v4972, %v4975
      %v4977 = vrot.slane %v4976, 4
      %v4979 = vshll.u32 %v4628, 16
      %v4981 = vrot.slane %v4979, 5
      %v4982 = vsel %vm1095, %v4977, %v4981
      %v4983 = vshrl.u32 %v4628, 16
      %v4985 = vrot.slane %v4983, 4
      %v4986 = vor.u32 %v4985, %v4981
      %v4987 = vrot.slane %v4986, 4
      %v4989 = vshll.u32 %v4629, 16
      %v4991 = vrot.slane %v4989, 5
      %v4992 = vsel %vm1095, %v4987, %v4991
      %v4994 = vshrl.u32 %v4630, 16
      %v4996 = vrot.slane %v4994, 4
      %v4997 = vshll.u32 %v4630, 16
      %v4999 = vrot.slane %v4997, 5
      %v5000 = vor.u32 %v4996, %v4999
      %v5001 = vrot.slane %v5000, 4
      %v5003 = vshll.u32 %v4631, 16
      %v5005 = vrot.slane %v5003, 5
      %v5006 = vsel %vm1095, %v5001, %v5005
      %v5007 = vshrl.u32 %v4631, 16
      %v5009 = vrot.slane %v5007, 4
      %v5010 = vor.u32 %v5009, %v5005
      %v5011 = vrot.slane %v5010, 4
      %v5013 = vshll.u32 %v4632, 16
      %v5015 = vrot.slane %v5013, 5
      %v5016 = vsel %vm1095, %v5011, %v5015
      %s5017 = scalar_lea.vmem %s3, 448
      %v5018 = vld [vmem:[%s5017] sm:$0xf]
      %v5019 = vld [vmem:[%s5017 + $0x4] sm:$0xf]
      %v5020 = vld [vmem:[%s5017 + $0x8] sm:$0xf]
      %v5021 = vld [vmem:[%s5017 + $0xc] sm:$0xf]
      %v5022 = vld [vmem:[%s5017 + $0x10] sm:$0xf]
      %v5023 = vld [vmem:[%s5017 + $0x14] sm:$0xf]
      %v5024 = vld [vmem:[%s5017 + $0x18] sm:$0xf]
      %v5025 = vld [vmem:[%s5017 + $0x1c] sm:$0xf]
      %v5026 = vld [vmem:[%s5017 + $0x20] sm:$0xf]
      %v5027 = vld [vmem:[%s5017 + $0x24] sm:$0xf]
      %v5028 = vld [vmem:[%s5017 + $0x28] sm:$0xf]
      %v5029 = vld [vmem:[%s5017 + $0x2c] sm:$0xf]
      %v5030 = vld [vmem:[%s5017 + $0x30] sm:$0xf]
      %v5031 = vld [vmem:[%s5017 + $0x34] sm:$0xf]
      %v5032 = vld [vmem:[%s5017 + $0x38] sm:$0xf]
      %v5033 = vld [vmem:[%s5017 + $0x3c] sm:$0xf]
      %v5034 = vunpack.c.l.b16 %v4646
      %v5035 = vunpack.c.l.b16 %v4656
      %v5036 = vunpack.c.l.b16 %v4670
      %v5037 = vunpack.c.l.b16 %v4680
      %v5038 = vunpack.c.l.b16 %v4694
      %v5039 = vunpack.c.l.b16 %v4704
      %v5040 = vunpack.c.l.b16 %v4718
      %v5041 = vunpack.c.l.b16 %v4728
      %v5042 = vunpack.c.l.b16 %v4742
      %v5043 = vunpack.c.l.b16 %v4752
      %v5044 = vunpack.c.l.b16 %v4766
      %v5045 = vunpack.c.l.b16 %v4776
      %v5046 = vunpack.c.l.b16 %v4790
      %v5047 = vunpack.c.l.b16 %v4800
      %v5048 = vunpack.c.l.b16 %v4814
      %v5049 = vunpack.c.l.b16 %v4824
      %v5050 = vunpack.c.l.b16 %v4838
      %v5051 = vunpack.c.l.b16 %v4848
      %v5052 = vunpack.c.l.b16 %v4862
      %v5053 = vunpack.c.l.b16 %v4872
      %v5054 = vunpack.c.l.b16 %v4886
      %v5055 = vunpack.c.l.b16 %v4896
      %v5056 = vunpack.c.l.b16 %v4910
      %v5057 = vunpack.c.l.b16 %v4920
      %v5058 = vunpack.c.l.b16 %v4934
      %v5059 = vunpack.c.l.b16 %v4944
      %v5060 = vunpack.c.l.b16 %v4958
      %v5061 = vunpack.c.l.b16 %v4968
      %v5062 = vunpack.c.l.b16 %v4982
      %v5063 = vunpack.c.l.b16 %v4992
      %v5064 = vunpack.c.l.b16 %v5006
      %v5065 = vunpack.c.l.b16 %v5016
      %v5066 = vpack.c.b16 %v5035, %v5034
      %v5067 = vpack.c.b16 %v5037, %v5036
      %v5068 = vpack.c.b16 %v5039, %v5038
      %v5069 = vpack.c.b16 %v5041, %v5040
      %v5070 = vpack.c.b16 %v5043, %v5042
      %v5071 = vpack.c.b16 %v5045, %v5044
      %v5072 = vpack.c.b16 %v5047, %v5046
      %v5073 = vpack.c.b16 %v5049, %v5048
      %v5074 = vpack.c.b16 %v5051, %v5050
      %v5075 = vpack.c.b16 %v5053, %v5052
      %v5076 = vpack.c.b16 %v5055, %v5054
      %v5077 = vpack.c.b16 %v5057, %v5056
      %v5078 = vpack.c.b16 %v5059, %v5058
      %v5079 = vpack.c.b16 %v5061, %v5060
      %v5080 = vpack.c.b16 %v5063, %v5062
      %v5081 = vpack.c.b16 %v5065, %v5064
      %v5114 = vunpack.c.l.b16 %v5018
      %v5115 = vunpack.c.l.b16 %v5019
      %v5116 = vunpack.c.l.b16 %v5020
      %v5117 = vunpack.c.l.b16 %v5021
      %v5118 = vunpack.c.l.b16 %v5022
      %v5119 = vunpack.c.l.b16 %v5023
      %v5120 = vunpack.c.l.b16 %v5024
      %v5121 = vunpack.c.l.b16 %v5025
      %v5122 = vunpack.c.l.b16 %v5026
      %v5123 = vunpack.c.l.b16 %v5027
      %v5124 = vunpack.c.l.b16 %v5028
      %v5125 = vunpack.c.l.b16 %v5029
      %v5126 = vunpack.c.l.b16 %v5030
      %v5127 = vunpack.c.l.b16 %v5031
      %v5128 = vunpack.c.l.b16 %v5032
      %v5129 = vunpack.c.l.b16 %v5033
      %v5130 = vpack.c.b16 %v5115, %v5114
      %v5131 = vpack.c.b16 %v5117, %v5116
      %v5132 = vpack.c.b16 %v5119, %v5118
      %v5133 = vpack.c.b16 %v5121, %v5120
      %v5134 = vpack.c.b16 %v5123, %v5122
      %v5135 = vpack.c.b16 %v5125, %v5124
      %v5136 = vpack.c.b16 %v5127, %v5126
      %v5137 = vpack.c.b16 %v5129, %v5128
      %5146 = vmatprep.subr.bf16.mxu0 0
      %5147 = vmatpush1.bf16.msra.mxu0 %v5130
      %5148 = vmatprep.subr.bf16.mxu0 0
      %5149 = vmatpush1.bf16.msra.mxu0 %v5131
      %5150 = vmatprep.subr.bf16.mxu0 0
      %5151 = vmatpush1.bf16.msra.mxu0 %v5132
      %5152 = vmatprep.subr.bf16.mxu0 0
      %5153 = vmatpush1.bf16.msra.mxu0 %v5133
      %5154 = vmatprep.subr.bf16.mxu0 0
      %5155 = vmatpush1.bf16.msra.mxu0 %v5134
      %5156 = vmatprep.subr.bf16.mxu0 0
      %5157 = vmatpush1.bf16.msra.mxu0 %v5135
      %5158 = vmatprep.subr.bf16.mxu0 0
      %5159 = vmatpush1.bf16.msra.mxu0 %v5136
      %5160 = vmatprep.subr.bf16.mxu0 0
      %5161 = vmatpush1.bf16.msra.mxu0 %v5137
      %5162 = vmatprep.subr.bf16.mxu0 0
      %5163 = vmatpush1.bf16.msra.mxu0 0
      %5164 = vmatprep.subr.bf16.mxu0 0
      %5165 = vmatpush1.bf16.msra.mxu0 0
      %5166 = vmatprep.subr.bf16.mxu0 0
      %5167 = vmatpush1.bf16.msra.mxu0 0
      %5168 = vmatprep.subr.bf16.mxu0 0
      %5169 = vmatpush1.bf16.msra.mxu0 0
      %5170 = vmatprep.subr.bf16.mxu0 0
      %5171 = vmatpush1.bf16.msra.mxu0 0
      %5172 = vmatprep.subr.bf16.mxu0 0
      %5173 = vmatpush1.bf16.msra.mxu0 0
      %5174 = vmatprep.subr.bf16.mxu0 0
      %5175 = vmatpush1.bf16.msra.mxu0 0
      %5176 = vmatprep.subr.bf16.mxu0 0
      %5177 = vmatpush1.bf16.msra.mxu0 0
      %5178 = vmatprep.mubr.bf16.mxu0 0
      %5179 = vmatmul.mubr.bf16.gmra.mrb[0].mxu0 %v5066
      %v5180 = vpop.f32.mrb[0].mxu0
      %v5181 = vadd.f32 0.0, %v5180
      %v5182 = vpop.f32.mrb[0].mxu0
      %v5183 = vpop.f32.mrb[0].mxu0
      %v5184 = vadd.f32 0.0, %v5183
      %v5185 = vpop.f32.mrb[0].mxu0
      %5186 = vmatprep.mubr.bf16.mxu0 0
      %5187 = vmatmul.mubr.bf16.gmra.mrb[0].mxu0 %v5067
      %v5188 = vpop.f32.mrb[0].mxu0
      %v5189 = vadd.f32 0.0, %v5188
      %v5190 = vpop.f32.mrb[0].mxu0
      %v5191 = vpop.f32.mrb[0].mxu0
      %v5192 = vadd.f32 0.0, %v5191
      %v5193 = vpop.f32.mrb[0].mxu0
      %5194 = vmatprep.mubr.bf16.mxu0 0
      %5195 = vmatmul.mubr.bf16.gmra.mrb[0].mxu0 %v5068
      %v5196 = vpop.f32.mrb[0].mxu0
      %v5197 = vadd.f32 0.0, %v5196
      %v5198 = vpop.f32.mrb[0].mxu0
      %v5199 = vpop.f32.mrb[0].mxu0
      %v5200 = vadd.f32 0.0, %v5199
      %v5201 = vpop.f32.mrb[0].mxu0
      %5202 = vmatprep.mubr.bf16.mxu0 0
      %5203 = vmatmul.mubr.bf16.gmra.mrb[0].mxu0 %v5069
      %v5204 = vpop.f32.mrb[0].mxu0
      %v5205 = vadd.f32 0.0, %v5204
      %v5206 = vpop.f32.mrb[0].mxu0
      %v5207 = vpop.f32.mrb[0].mxu0
      %v5208 = vadd.f32 0.0, %v5207
      %v5209 = vpop.f32.mrb[0].mxu0
      %5210 = vmatprep.mubr.bf16.mxu0 0
      %5211 = vmatmul.mubr.bf16.gmra.mrb[0].mxu0 %v5070
      %v5212 = vpop.f32.mrb[0].mxu0
      %v5213 = vadd.f32 0.0, %v5212
      %v5214 = vpop.f32.mrb[0].mxu0
      %v5215 = vpop.f32.mrb[0].mxu0
      %v5216 = vadd.f32 0.0, %v5215
      %v5217 = vpop.f32.mrb[0].mxu0
      %5218 = vmatprep.mubr.bf16.mxu0 0
      %5219 = vmatmul.mubr.bf16.gmra.mrb[0].mxu0 %v5071
      %v5220 = vpop.f32.mrb[0].mxu0
      %v5221 = vadd.f32 0.0, %v5220
      %v5222 = vpop.f32.mrb[0].mxu0
      %v5223 = vpop.f32.mrb[0].mxu0
      %v5224 = vadd.f32 0.0, %v5223
      %v5225 = vpop.f32.mrb[0].mxu0
      %5226 = vmatprep.mubr.bf16.mxu0 0
      %5227 = vmatmul.mubr.bf16.gmra.mrb[0].mxu0 %v5072
      %v5228 = vpop.f32.mrb[0].mxu0
      %v5229 = vadd.f32 0.0, %v5228
      %v5230 = vpop.f32.mrb[0].mxu0
      %v5231 = vpop.f32.mrb[0].mxu0
      %v5232 = vadd.f32 0.0, %v5231
      %v5233 = vpop.f32.mrb[0].mxu0
      %5234 = vmatprep.mubr.bf16.mxu0 0
      %5235 = vmatmul.mubr.bf16.gmra.mrb[0].mxu0 %v5073
      %v5236 = vpop.f32.mrb[0].mxu0
      %v5237 = vadd.f32 0.0, %v5236
      %v5238 = vpop.f32.mrb[0].mxu0
      %v5239 = vpop.f32.mrb[0].mxu0
      %v5240 = vadd.f32 0.0, %v5239
      %v5241 = vpop.f32.mrb[0].mxu0
      %5242 = vmatprep.mubr.bf16.mxu0 0
      %5243 = vmatmul.mubr.bf16.gmra.mrb[0].mxu0 %v5074
      %v5244 = vpop.f32.mrb[0].mxu0
      %v5245 = vadd.f32 0.0, %v5244
      %v5246 = vpop.f32.mrb[0].mxu0
      %v5247 = vpop.f32.mrb[0].mxu0
      %v5248 = vadd.f32 0.0, %v5247
      %v5249 = vpop.f32.mrb[0].mxu0
      %5250 = vmatprep.mubr.bf16.mxu0 0
      %5251 = vmatmul.mubr.bf16.gmra.mrb[0].mxu0 %v5075
      %v5252 = vpop.f32.mrb[0].mxu0
      %v5253 = vadd.f32 0.0, %v5252
      %v5254 = vpop.f32.mrb[0].mxu0
      %v5255 = vpop.f32.mrb[0].mxu0
      %v5256 = vadd.f32 0.0, %v5255
      %v5257 = vpop.f32.mrb[0].mxu0
      %5258 = vmatprep.mubr.bf16.mxu0 0
      %5259 = vmatmul.mubr.bf16.gmra.mrb[0].mxu0 %v5076
      %v5260 = vpop.f32.mrb[0].mxu0
      %v5261 = vadd.f32 0.0, %v5260
      %v5262 = vpop.f32.mrb[0].mxu0
      %v5263 = vpop.f32.mrb[0].mxu0
      %v5264 = vadd.f32 0.0, %v5263
      %v5265 = vpop.f32.mrb[0].mxu0
      %5266 = vmatprep.mubr.bf16.mxu0 0
      %5267 = vmatmul.mubr.bf16.gmra.mrb[0].mxu0 %v5077
      %v5268 = vpop.f32.mrb[0].mxu0
      %v5269 = vadd.f32 0.0, %v5268
      %v5270 = vpop.f32.mrb[0].mxu0
      %v5271 = vpop.f32.mrb[0].mxu0
      %v5272 = vadd.f32 0.0, %v5271
      %v5273 = vpop.f32.mrb[0].mxu0
      %5274 = vmatprep.mubr.bf16.mxu0 0
      %5275 = vmatmul.mubr.bf16.gmra.mrb[0].mxu0 %v5078
      %v5276 = vpop.f32.mrb[0].mxu0
      %v5277 = vadd.f32 0.0, %v5276
      %v5278 = vpop.f32.mrb[0].mxu0
      %v5279 = vpop.f32.mrb[0].mxu0
      %v5280 = vadd.f32 0.0, %v5279
      %v5281 = vpop.f32.mrb[0].mxu0
      %5282 = vmatprep.mubr.bf16.mxu0 0
      %5283 = vmatmul.mubr.bf16.gmra.mrb[0].mxu0 %v5079
      %v5284 = vpop.f32.mrb[0].mxu0
      %v5285 = vadd.f32 0.0, %v5284
      %v5286 = vpop.f32.mrb[0].mxu0
      %v5287 = vpop.f32.mrb[0].mxu0
      %v5288 = vadd.f32 0.0, %v5287
      %v5289 = vpop.f32.mrb[0].mxu0
      %5290 = vmatprep.mubr.bf16.mxu0 0
      %5291 = vmatmul.mubr.bf16.gmra.mrb[0].mxu0 %v5080
      %v5292 = vpop.f32.mrb[0].mxu0
      %v5293 = vadd.f32 0.0, %v5292
      %v5294 = vpop.f32.mrb[0].mxu0
      %v5295 = vpop.f32.mrb[0].mxu0
      %v5296 = vadd.f32 0.0, %v5295
      %v5297 = vpop.f32.mrb[0].mxu0
      %5298 = vmatprep.mubr.bf16.mxu0 0
      %5299 = vmatmul.mubr.bf16.gmra.mrb[0].mxu0 %v5081
      %v5300 = vpop.f32.mrb[0].mxu0
      %v5301 = vadd.f32 0.0, %v5300
      %v5302 = vpop.f32.mrb[0].mxu0
      %v5303 = vpop.f32.mrb[0].mxu0
      %v5304 = vadd.f32 0.0, %v5303
      %v5305 = vpop.f32.mrb[0].mxu0
      %5306 = vdwg.mxu0
      %v5307 = vadd.f32 %v4553, %v5181
      %v5308 = vadd.f32 %v4554, %v5184
      %v5309 = vadd.f32 %v4555, %v5189
      %v5310 = vadd.f32 %v4556, %v5192
      %v5311 = vadd.f32 %v4557, %v5197
      %v5312 = vadd.f32 %v4558, %v5200
      %v5313 = vadd.f32 %v4559, %v5205
      %v5314 = vadd.f32 %v4560, %v5208
      %v5315 = vadd.f32 %v4561, %v5213
      %v5316 = vadd.f32 %v4562, %v5216
      %v5317 = vadd.f32 %v4563, %v5221
      %v5318 = vadd.f32 %v4564, %v5224
      %v5319 = vadd.f32 %v4565, %v5229
      %v5320 = vadd.f32 %v4566, %v5232
      %v5321 = vadd.f32 %v4567, %v5237
      %v5322 = vadd.f32 %v4568, %v5240
      %v5323 = vadd.f32 %v4569, %v5245
      %v5324 = vadd.f32 %v4570, %v5248
      %v5325 = vadd.f32 %v4571, %v5253
      %v5326 = vadd.f32 %v4572, %v5256
      %v5327 = vadd.f32 %v4573, %v5261
      %v5328 = vadd.f32 %v4574, %v5264
      %v5329 = vadd.f32 %v4575, %v5269
      %v5330 = vadd.f32 %v4576, %v5272
      %v5331 = vadd.f32 %v4577, %v5277
      %v5332 = vadd.f32 %v4578, %v5280
      %v5333 = vadd.f32 %v4579, %v5285
      %v5334 = vadd.f32 %v4580, %v5288
      %v5335 = vadd.f32 %v4581, %v5293
      %v5336 = vadd.f32 %v4582, %v5296
      %v5337 = vadd.f32 %v4583, %v5301
      %v5338 = vadd.f32 %v4584, %v5304
      %v5339 = vld [vmem:[%s4198] sm:$0xe]
      %v5340 = vld [vmem:[%s4198 + $0xc] sm:$0xe]
      %v5341 = vld [vmem:[%s4198 + $0x18] sm:$0xe]
      %v5342 = vld [vmem:[%s4198 + $0x24] sm:$0xe]
      %v5343 = vld [vmem:[%s4198 + $0x30] sm:$0xe]
      %v5344 = vld [vmem:[%s4198 + $0x3c] sm:$0xe]
      %v5345 = vld [vmem:[%s4198 + $0x48] sm:$0xe]
      %v5346 = vld [vmem:[%s4198 + $0x54] sm:$0xe]
      %v5347 = vld [vmem:[%s4198 + $0x60] sm:$0xe]
      %v5348 = vld [vmem:[%s4198 + $0x6c] sm:$0xe]
      %v5349 = vld [vmem:[%s4198 + $0x78] sm:$0xe]
      %v5350 = vld [vmem:[%s4198 + $0x84] sm:$0xe]
      %v5351 = vld [vmem:[%s4198 + $0x90] sm:$0xe]
      %v5352 = vld [vmem:[%s4198 + $0x9c] sm:$0xe]
      %v5353 = vld [vmem:[%s4198 + $0xa8] sm:$0xe]
      %v5354 = vld [vmem:[%s4198 + $0xb4] sm:$0xe]
      %v5403 = vrot.slane %v5339, 5
      %v5404 = vrot.slane %v5403, 4
      %v5405 = vrot.slane %v4586, 5
      %v5406 = vsel %vm2125, %v5404, %v5405
      %v5407 = vrot.slane %v5405, 4
      %v5408 = vrot.slane %v4587, 5
      %v5409 = vsel %vm2125, %v5407, %v5408
      %v5410 = vrot.slane %v5340, 5
      %v5411 = vrot.slane %v5410, 4
      %v5412 = vrot.slane %v4589, 5
      %v5413 = vsel %vm2125, %v5411, %v5412
      %v5414 = vrot.slane %v5412, 4
      %v5415 = vrot.slane %v4590, 5
      %v5416 = vsel %vm2125, %v5414, %v5415
      %v5417 = vrot.slane %v5341, 5
      %v5418 = vrot.slane %v5417, 4
      %v5419 = vrot.slane %v4592, 5
      %v5420 = vsel %vm2125, %v5418, %v5419
      %v5421 = vrot.slane %v5419, 4
      %v5422 = vrot.slane %v4593, 5
      %v5423 = vsel %vm2125, %v5421, %v5422
      %v5424 = vrot.slane %v5342, 5
      %v5425 = vrot.slane %v5424, 4
      %v5426 = vrot.slane %v4595, 5
      %v5427 = vsel %vm2125, %v5425, %v5426
      %v5428 = vrot.slane %v5426, 4
      %v5429 = vrot.slane %v4596, 5
      %v5430 = vsel %vm2125, %v5428, %v5429
      %v5431 = vrot.slane %v5343, 5
      %v5432 = vrot.slane %v5431, 4
      %v5433 = vrot.slane %v4598, 5
      %v5434 = vsel %vm2125, %v5432, %v5433
      %v5435 = vrot.slane %v5433, 4
      %v5436 = vrot.slane %v4599, 5
      %v5437 = vsel %vm2125, %v5435, %v5436
      %v5438 = vrot.slane %v5344, 5
      %v5439 = vrot.slane %v5438, 4
      %v5440 = vrot.slane %v4601, 5
      %v5441 = vsel %vm2125, %v5439, %v5440
      %v5442 = vrot.slane %v5440, 4
      %v5443 = vrot.slane %v4602, 5
      %v5444 = vsel %vm2125, %v5442, %v5443
      %v5445 = vrot.slane %v5345, 5
      %v5446 = vrot.slane %v5445, 4
      %v5447 = vrot.slane %v4604, 5
      %v5448 = vsel %vm2125, %v5446, %v5447
      %v5449 = vrot.slane %v5447, 4
      %v5450 = vrot.slane %v4605, 5
      %v5451 = vsel %vm2125, %v5449, %v5450
      %v5452 = vrot.slane %v5346, 5
      %v5453 = vrot.slane %v5452, 4
      %v5454 = vrot.slane %v4607, 5
      %v5455 = vsel %vm2125, %v5453, %v5454
      %v5456 = vrot.slane %v5454, 4
      %v5457 = vrot.slane %v4608, 5
      %v5458 = vsel %vm2125, %v5456, %v5457
      %v5459 = vrot.slane %v5347, 5
      %v5460 = vrot.slane %v5459, 4
      %v5461 = vrot.slane %v4610, 5
      %v5462 = vsel %vm2125, %v5460, %v5461
      %v5463 = vrot.slane %v5461, 4
      %v5464 = vrot.slane %v4611, 5
      %v5465 = vsel %vm2125, %v5463, %v5464
      %v5466 = vrot.slane %v5348, 5
      %v5467 = vrot.slane %v5466, 4
      %v5468 = vrot.slane %v4613, 5
      %v5469 = vsel %vm2125, %v5467, %v5468
      %v5470 = vrot.slane %v5468, 4
      %v5471 = vrot.slane %v4614, 5
      %v5472 = vsel %vm2125, %v5470, %v5471
      %v5473 = vrot.slane %v5349, 5
      %v5474 = vrot.slane %v5473, 4
      %v5475 = vrot.slane %v4616, 5
      %v5476 = vsel %vm2125, %v5474, %v5475
      %v5477 = vrot.slane %v5475, 4
      %v5478 = vrot.slane %v4617, 5
      %v5479 = vsel %vm2125, %v5477, %v5478
      %v5480 = vrot.slane %v5350, 5
      %v5481 = vrot.slane %v5480, 4
      %v5482 = vrot.slane %v4619, 5
      %v5483 = vsel %vm2125, %v5481, %v5482
      %v5484 = vrot.slane %v5482, 4
      %v5485 = vrot.slane %v4620, 5
      %v5486 = vsel %vm2125, %v5484, %v5485
      %v5487 = vrot.slane %v5351, 5
      %v5488 = vrot.slane %v5487, 4
      %v5489 = vrot.slane %v4622, 5
      %v5490 = vsel %vm2125, %v5488, %v5489
      %v5491 = vrot.slane %v5489, 4
      %v5492 = vrot.slane %v4623, 5
      %v5493 = vsel %vm2125, %v5491, %v5492
      %v5494 = vrot.slane %v5352, 5
      %v5495 = vrot.slane %v5494, 4
      %v5496 = vrot.slane %v4625, 5
      %v5497 = vsel %vm2125, %v5495, %v5496
      %v5498 = vrot.slane %v5496, 4
      %v5499 = vrot.slane %v4626, 5
      %v5500 = vsel %vm2125, %v5498, %v5499
      %v5501 = vrot.slane %v5353, 5
      %v5502 = vrot.slane %v5501, 4
      %v5503 = vrot.slane %v4628, 5
      %v5504 = vsel %vm2125, %v5502, %v5503
      %v5505 = vrot.slane %v5503, 4
      %v5506 = vrot.slane %v4629, 5
      %v5507 = vsel %vm2125, %v5505, %v5506
      %v5508 = vrot.slane %v5354, 5
      %v5509 = vrot.slane %v5508, 4
      %v5510 = vrot.slane %v4631, 5
      %v5511 = vsel %vm2125, %v5509, %v5510
      %v5512 = vrot.slane %v5510, 4
      %v5513 = vrot.slane %v4632, 5
      %v5514 = vsel %vm2125, %v5512, %v5513
      %s5515 = scalar_lea.vmem %s3, 512
      %v5516 = vld [vmem:[%s5515] sm:$0xf]
      %v5517 = vld [vmem:[%s5515 + $0x4] sm:$0xf]
      %v5518 = vld [vmem:[%s5515 + $0x8] sm:$0xf]
      %v5519 = vld [vmem:[%s5515 + $0xc] sm:$0xf]
      %v5520 = vld [vmem:[%s5515 + $0x10] sm:$0xf]
      %v5521 = vld [vmem:[%s5515 + $0x14] sm:$0xf]
      %v5522 = vld [vmem:[%s5515 + $0x18] sm:$0xf]
      %v5523 = vld [vmem:[%s5515 + $0x1c] sm:$0xf]
      %v5524 = vld [vmem:[%s5515 + $0x20] sm:$0xf]
      %v5525 = vld [vmem:[%s5515 + $0x24] sm:$0xf]
      %v5526 = vld [vmem:[%s5515 + $0x28] sm:$0xf]
      %v5527 = vld [vmem:[%s5515 + $0x2c] sm:$0xf]
      %v5528 = vld [vmem:[%s5515 + $0x30] sm:$0xf]
      %v5529 = vld [vmem:[%s5515 + $0x34] sm:$0xf]
      %v5530 = vld [vmem:[%s5515 + $0x38] sm:$0xf]
      %v5531 = vld [vmem:[%s5515 + $0x3c] sm:$0xf]
      %v5532 = vunpack.c.l.b16 %v5406
      %v5533 = vunpack.c.l.b16 %v5409
      %v5534 = vunpack.c.l.b16 %v5413
      %v5535 = vunpack.c.l.b16 %v5416
      %v5536 = vunpack.c.l.b16 %v5420
      %v5537 = vunpack.c.l.b16 %v5423
      %v5538 = vunpack.c.l.b16 %v5427
      %v5539 = vunpack.c.l.b16 %v5430
      %v5540 = vunpack.c.l.b16 %v5434
      %v5541 = vunpack.c.l.b16 %v5437
      %v5542 = vunpack.c.l.b16 %v5441
      %v5543 = vunpack.c.l.b16 %v5444
      %v5544 = vunpack.c.l.b16 %v5448
      %v5545 = vunpack.c.l.b16 %v5451
      %v5546 = vunpack.c.l.b16 %v5455
      %v5547 = vunpack.c.l.b16 %v5458
      %v5548 = vunpack.c.l.b16 %v5462
      %v5549 = vunpack.c.l.b16 %v5465
      %v5550 = vunpack.c.l.b16 %v5469
      %v5551 = vunpack.c.l.b16 %v5472
      %v5552 = vunpack.c.l.b16 %v5476
      %v5553 = vunpack.c.l.b16 %v5479
      %v5554 = vunpack.c.l.b16 %v5483
      %v5555 = vunpack.c.l.b16 %v5486
      %v5556 = vunpack.c.l.b16 %v5490
      %v5557 = vunpack.c.l.b16 %v5493
      %v5558 = vunpack.c.l.b16 %v5497
      %v5559 = vunpack.c.l.b16 %v5500
      %v5560 = vunpack.c.l.b16 %v5504
      %v5561 = vunpack.c.l.b16 %v5507
      %v5562 = vunpack.c.l.b16 %v5511
      %v5563 = vunpack.c.l.b16 %v5514
      %v5564 = vpack.c.b16 %v5533, %v5532
      %v5565 = vpack.c.b16 %v5535, %v5534
      %v5566 = vpack.c.b16 %v5537, %v5536
      %v5567 = vpack.c.b16 %v5539, %v5538
      %v5568 = vpack.c.b16 %v5541, %v5540
      %v5569 = vpack.c.b16 %v5543, %v5542
      %v5570 = vpack.c.b16 %v5545, %v5544
      %v5571 = vpack.c.b16 %v5547, %v5546
      %v5572 = vpack.c.b16 %v5549, %v5548
      %v5573 = vpack.c.b16 %v5551, %v5550
      %v5574 = vpack.c.b16 %v5553, %v5552
      %v5575 = vpack.c.b16 %v5555, %v5554
      %v5576 = vpack.c.b16 %v5557, %v5556
      %v5577 = vpack.c.b16 %v5559, %v5558
      %v5578 = vpack.c.b16 %v5561, %v5560
      %v5579 = vpack.c.b16 %v5563, %v5562
      %v5612 = vunpack.c.l.b16 %v5516
      %v5613 = vunpack.c.l.b16 %v5517
      %v5614 = vunpack.c.l.b16 %v5518
      %v5615 = vunpack.c.l.b16 %v5519
      %v5616 = vunpack.c.l.b16 %v5520
      %v5617 = vunpack.c.l.b16 %v5521
      %v5618 = vunpack.c.l.b16 %v5522
      %v5619 = vunpack.c.l.b16 %v5523
      %v5620 = vunpack.c.l.b16 %v5524
      %v5621 = vunpack.c.l.b16 %v5525
      %v5622 = vunpack.c.l.b16 %v5526
      %v5623 = vunpack.c.l.b16 %v5527
      %v5624 = vunpack.c.l.b16 %v5528
      %v5625 = vunpack.c.l.b16 %v5529
      %v5626 = vunpack.c.l.b16 %v5530
      %v5627 = vunpack.c.l.b16 %v5531
      %v5628 = vpack.c.b16 %v5613, %v5612
      %v5629 = vpack.c.b16 %v5615, %v5614
      %v5630 = vpack.c.b16 %v5617, %v5616
      %v5631 = vpack.c.b16 %v5619, %v5618
      %v5632 = vpack.c.b16 %v5621, %v5620
      %v5633 = vpack.c.b16 %v5623, %v5622
      %v5634 = vpack.c.b16 %v5625, %v5624
      %v5635 = vpack.c.b16 %v5627, %v5626
      %5644 = vmatprep.subr.bf16.mxu0 0
      %5645 = vmatpush1.bf16.msra.mxu0 %v5628
      %5646 = vmatprep.subr.bf16.mxu0 0
      %5647 = vmatpush1.bf16.msra.mxu0 %v5629
      %5648 = vmatprep.subr.bf16.mxu0 0
      %5649 = vmatpush1.bf16.msra.mxu0 %v5630
      %5650 = vmatprep.subr.bf16.mxu0 0
      %5651 = vmatpush1.bf16.msra.mxu0 %v5631
      %5652 = vmatprep.subr.bf16.mxu0 0
      %5653 = vmatpush1.bf16.msra.mxu0 %v5632
      %5654 = vmatprep.subr.bf16.mxu0 0
      %5655 = vmatpush1.bf16.msra.mxu0 %v5633
      %5656 = vmatprep.subr.bf16.mxu0 0
      %5657 = vmatpush1.bf16.msra.mxu0 %v5634
      %5658 = vmatprep.subr.bf16.mxu0 0
      %5659 = vmatpush1.bf16.msra.mxu0 %v5635
      %5660 = vmatprep.subr.bf16.mxu0 0
      %5661 = vmatpush1.bf16.msra.mxu0 0
      %5662 = vmatprep.subr.bf16.mxu0 0
      %5663 = vmatpush1.bf16.msra.mxu0 0
      %5664 = vmatprep.subr.bf16.mxu0 0
      %5665 = vmatpush1.bf16.msra.mxu0 0
      %5666 = vmatprep.subr.bf16.mxu0 0
      %5667 = vmatpush1.bf16.msra.mxu0 0
      %5668 = vmatprep.subr.bf16.mxu0 0
      %5669 = vmatpush1.bf16.msra.mxu0 0
      %5670 = vmatprep.subr.bf16.mxu0 0
      %5671 = vmatpush1.bf16.msra.mxu0 0
      %5672 = vmatprep.subr.bf16.mxu0 0
      %5673 = vmatpush1.bf16.msra.mxu0 0
      %5674 = vmatprep.subr.bf16.mxu0 0
      %5675 = vmatpush1.bf16.msra.mxu0 0
      %5676 = vmatprep.mubr.bf16.mxu0 0
      %5677 = vmatmul.mubr.bf16.gmra.mrb[0].mxu0 %v5564
      %v5678 = vpop.f32.mrb[0].mxu0
      %v5679 = vadd.f32 0.0, %v5678
      %v5680 = vpop.f32.mrb[0].mxu0
      %v5681 = vpop.f32.mrb[0].mxu0
      %v5682 = vadd.f32 0.0, %v5681
      %v5683 = vpop.f32.mrb[0].mxu0
      %5684 = vmatprep.mubr.bf16.mxu0 0
      %5685 = vmatmul.mubr.bf16.gmra.mrb[0].mxu0 %v5565
      %v5686 = vpop.f32.mrb[0].mxu0
      %v5687 = vadd.f32 0.0, %v5686
      %v5688 = vpop.f32.mrb[0].mxu0
      %v5689 = vpop.f32.mrb[0].mxu0
      %v5690 = vadd.f32 0.0, %v5689
      %v5691 = vpop.f32.mrb[0].mxu0
      %5692 = vmatprep.mubr.bf16.mxu0 0
      %5693 = vmatmul.mubr.bf16.gmra.mrb[0].mxu0 %v5566
      %v5694 = vpop.f32.mrb[0].mxu0
      %v5695 = vadd.f32 0.0, %v5694
      %v5696 = vpop.f32.mrb[0].mxu0
      %v5697 = vpop.f32.mrb[0].mxu0
      %v5698 = vadd.f32 0.0, %v5697
      %v5699 = vpop.f32.mrb[0].mxu0
      %5700 = vmatprep.mubr.bf16.mxu0 0
      %5701 = vmatmul.mubr.bf16.gmra.mrb[0].mxu0 %v5567
      %v5702 = vpop.f32.mrb[0].mxu0
      %v5703 = vadd.f32 0.0, %v5702
      %v5704 = vpop.f32.mrb[0].mxu0
      %v5705 = vpop.f32.mrb[0].mxu0
      %v5706 = vadd.f32 0.0, %v5705
      %v5707 = vpop.f32.mrb[0].mxu0
      %5708 = vmatprep.mubr.bf16.mxu0 0
      %5709 = vmatmul.mubr.bf16.gmra.mrb[0].mxu0 %v5568
      %v5710 = vpop.f32.mrb[0].mxu0
      %v5711 = vadd.f32 0.0, %v5710
      %v5712 = vpop.f32.mrb[0].mxu0
      %v5713 = vpop.f32.mrb[0].mxu0
      %v5714 = vadd.f32 0.0, %v5713
      %v5715 = vpop.f32.mrb[0].mxu0
      %5716 = vmatprep.mubr.bf16.mxu0 0
      %5717 = vmatmul.mubr.bf16.gmra.mrb[0].mxu0 %v5569
      %v5718 = vpop.f32.mrb[0].mxu0
      %v5719 = vadd.f32 0.0, %v5718
      %v5720 = vpop.f32.mrb[0].mxu0
      %v5721 = vpop.f32.mrb[0].mxu0
      %v5722 = vadd.f32 0.0, %v5721
      %v5723 = vpop.f32.mrb[0].mxu0
      %5724 = vmatprep.mubr.bf16.mxu0 0
      %5725 = vmatmul.mubr.bf16.gmra.mrb[0].mxu0 %v5570
      %v5726 = vpop.f32.mrb[0].mxu0
      %v5727 = vadd.f32 0.0, %v5726
      %v5728 = vpop.f32.mrb[0].mxu0
      %v5729 = vpop.f32.mrb[0].mxu0
      %v5730 = vadd.f32 0.0, %v5729
      %v5731 = vpop.f32.mrb[0].mxu0
      %5732 = vmatprep.mubr.bf16.mxu0 0
      %5733 = vmatmul.mubr.bf16.gmra.mrb[0].mxu0 %v5571
      %v5734 = vpop.f32.mrb[0].mxu0
      %v5735 = vadd.f32 0.0, %v5734
      %v5736 = vpop.f32.mrb[0].mxu0
      %v5737 = vpop.f32.mrb[0].mxu0
      %v5738 = vadd.f32 0.0, %v5737
      %v5739 = vpop.f32.mrb[0].mxu0
      %5740 = vmatprep.mubr.bf16.mxu0 0
      %5741 = vmatmul.mubr.bf16.gmra.mrb[0].mxu0 %v5572
      %v5742 = vpop.f32.mrb[0].mxu0
      %v5743 = vadd.f32 0.0, %v5742
      %v5744 = vpop.f32.mrb[0].mxu0
      %v5745 = vpop.f32.mrb[0].mxu0
      %v5746 = vadd.f32 0.0, %v5745
      %v5747 = vpop.f32.mrb[0].mxu0
      %5748 = vmatprep.mubr.bf16.mxu0 0
      %5749 = vmatmul.mubr.bf16.gmra.mrb[0].mxu0 %v5573
      %v5750 = vpop.f32.mrb[0].mxu0
      %v5751 = vadd.f32 0.0, %v5750
      %v5752 = vpop.f32.mrb[0].mxu0
      %v5753 = vpop.f32.mrb[0].mxu0
      %v5754 = vadd.f32 0.0, %v5753
      %v5755 = vpop.f32.mrb[0].mxu0
      %5756 = vmatprep.mubr.bf16.mxu0 0
      %5757 = vmatmul.mubr.bf16.gmra.mrb[0].mxu0 %v5574
      %v5758 = vpop.f32.mrb[0].mxu0
      %v5759 = vadd.f32 0.0, %v5758
      %v5760 = vpop.f32.mrb[0].mxu0
      %v5761 = vpop.f32.mrb[0].mxu0
      %v5762 = vadd.f32 0.0, %v5761
      %v5763 = vpop.f32.mrb[0].mxu0
      %5764 = vmatprep.mubr.bf16.mxu0 0
      %5765 = vmatmul.mubr.bf16.gmra.mrb[0].mxu0 %v5575
      %v5766 = vpop.f32.mrb[0].mxu0
      %v5767 = vadd.f32 0.0, %v5766
      %v5768 = vpop.f32.mrb[0].mxu0
      %v5769 = vpop.f32.mrb[0].mxu0
      %v5770 = vadd.f32 0.0, %v5769
      %v5771 = vpop.f32.mrb[0].mxu0
      %5772 = vmatprep.mubr.bf16.mxu0 0
      %5773 = vmatmul.mubr.bf16.gmra.mrb[0].mxu0 %v5576
      %v5774 = vpop.f32.mrb[0].mxu0
      %v5775 = vadd.f32 0.0, %v5774
      %v5776 = vpop.f32.mrb[0].mxu0
      %v5777 = vpop.f32.mrb[0].mxu0
      %v5778 = vadd.f32 0.0, %v5777
      %v5779 = vpop.f32.mrb[0].mxu0
      %5780 = vmatprep.mubr.bf16.mxu0 0
      %5781 = vmatmul.mubr.bf16.gmra.mrb[0].mxu0 %v5577
      %v5782 = vpop.f32.mrb[0].mxu0
      %v5783 = vadd.f32 0.0, %v5782
      %v5784 = vpop.f32.mrb[0].mxu0
      %v5785 = vpop.f32.mrb[0].mxu0
      %v5786 = vadd.f32 0.0, %v5785
      %v5787 = vpop.f32.mrb[0].mxu0
      %5788 = vmatprep.mubr.bf16.mxu0 0
      %5789 = vmatmul.mubr.bf16.gmra.mrb[0].mxu0 %v5578
      %v5790 = vpop.f32.mrb[0].mxu0
      %v5791 = vadd.f32 0.0, %v5790
      %v5792 = vpop.f32.mrb[0].mxu0
      %v5793 = vpop.f32.mrb[0].mxu0
      %v5794 = vadd.f32 0.0, %v5793
      %v5795 = vpop.f32.mrb[0].mxu0
      %5796 = vmatprep.mubr.bf16.mxu0 0
      %5797 = vmatmul.mubr.bf16.gmra.mrb[0].mxu0 %v5579
      %v5798 = vpop.f32.mrb[0].mxu0
      %v5799 = vadd.f32 0.0, %v5798
      %v5800 = vpop.f32.mrb[0].mxu0
      %v5801 = vpop.f32.mrb[0].mxu0
      %v5802 = vadd.f32 0.0, %v5801
      %v5803 = vpop.f32.mrb[0].mxu0
      %5804 = vdwg.mxu0
      %v5805 = vadd.f32 %v5307, %v5679
      %v5806 = vadd.f32 %v5308, %v5682
      %v5807 = vadd.f32 %v5309, %v5687
      %v5808 = vadd.f32 %v5310, %v5690
      %v5809 = vadd.f32 %v5311, %v5695
      %v5810 = vadd.f32 %v5312, %v5698
      %v5811 = vadd.f32 %v5313, %v5703
      %v5812 = vadd.f32 %v5314, %v5706
      %v5813 = vadd.f32 %v5315, %v5711
      %v5814 = vadd.f32 %v5316, %v5714
      %v5815 = vadd.f32 %v5317, %v5719
      %v5816 = vadd.f32 %v5318, %v5722
      %v5817 = vadd.f32 %v5319, %v5727
      %v5818 = vadd.f32 %v5320, %v5730
      %v5819 = vadd.f32 %v5321, %v5735
      %v5820 = vadd.f32 %v5322, %v5738
      %v5821 = vadd.f32 %v5323, %v5743
      %v5822 = vadd.f32 %v5324, %v5746
      %v5823 = vadd.f32 %v5325, %v5751
      %v5824 = vadd.f32 %v5326, %v5754
      %v5825 = vadd.f32 %v5327, %v5759
      %v5826 = vadd.f32 %v5328, %v5762
      %v5827 = vadd.f32 %v5329, %v5767
      %v5828 = vadd.f32 %v5330, %v5770
      %v5829 = vadd.f32 %v5331, %v5775
      %v5830 = vadd.f32 %v5332, %v5778
      %v5831 = vadd.f32 %v5333, %v5783
      %v5832 = vadd.f32 %v5334, %v5786
      %v5833 = vadd.f32 %v5335, %v5791
      %v5834 = vadd.f32 %v5336, %v5794
      %v5835 = vadd.f32 %v5337, %v5799
      %v5836 = vadd.f32 %v5338, %v5802
      %v5837 = vld [vmem:[%s4] sm:$0x1]
      %v5839 = vlaneseq
      %v5840 = vshrl.u32 %v5839, 7
      %v5841 = vsub.s32 0, %v5840
      %v5842 = vrot.slane %v5837, %v5841
      %v5844 = vadd.f32 %v5805, %v5842
      %v5845 = vadd.f32 %v5806, %v5842
      %v5846 = vadd.f32 %v5807, %v5842
      %v5847 = vadd.f32 %v5808, %v5842
      %v5848 = vadd.f32 %v5809, %v5842
      %v5849 = vadd.f32 %v5810, %v5842
      %v5850 = vadd.f32 %v5811, %v5842
      %v5851 = vadd.f32 %v5812, %v5842
      %v5852 = vadd.f32 %v5813, %v5842
      %v5853 = vadd.f32 %v5814, %v5842
      %v5854 = vadd.f32 %v5815, %v5842
      %v5855 = vadd.f32 %v5816, %v5842
      %v5856 = vadd.f32 %v5817, %v5842
      %v5857 = vadd.f32 %v5818, %v5842
      %v5858 = vadd.f32 %v5819, %v5842
      %v5859 = vadd.f32 %v5820, %v5842
      %v5860 = vadd.f32 %v5821, %v5842
      %v5861 = vadd.f32 %v5822, %v5842
      %v5862 = vadd.f32 %v5823, %v5842
      %v5863 = vadd.f32 %v5824, %v5842
      %v5864 = vadd.f32 %v5825, %v5842
      %v5865 = vadd.f32 %v5826, %v5842
      %v5866 = vadd.f32 %v5827, %v5842
      %v5867 = vadd.f32 %v5828, %v5842
      %v5868 = vadd.f32 %v5829, %v5842
      %v5869 = vadd.f32 %v5830, %v5842
      %v5870 = vadd.f32 %v5831, %v5842
      %v5871 = vadd.f32 %v5832, %v5842
      %v5872 = vadd.f32 %v5833, %v5842
      %v5873 = vadd.f32 %v5834, %v5842
      %v5874 = vadd.f32 %v5835, %v5842
      %v5875 = vadd.f32 %v5836, %v5842
      %v5876 = vpack.c.bf16 %v5845, %v5844
      %v5877 = vpack.c.bf16 %v5847, %v5846
      %v5878 = vpack.c.bf16 %v5849, %v5848
      %v5879 = vpack.c.bf16 %v5851, %v5850
      %v5880 = vpack.c.bf16 %v5853, %v5852
      %v5881 = vpack.c.bf16 %v5855, %v5854
      %v5882 = vpack.c.bf16 %v5857, %v5856
      %v5883 = vpack.c.bf16 %v5859, %v5858
      %v5884 = vpack.c.bf16 %v5861, %v5860
      %v5885 = vpack.c.bf16 %v5863, %v5862
      %v5886 = vpack.c.bf16 %v5865, %v5864
      %v5887 = vpack.c.bf16 %v5867, %v5866
      %v5888 = vpack.c.bf16 %v5869, %v5868
      %v5889 = vpack.c.bf16 %v5871, %v5870
      %v5890 = vpack.c.bf16 %v5873, %v5872
      %v5891 = vpack.c.bf16 %v5875, %v5874
      %v5908 = vunpack.c.l.b16 %v5876
      %v5909 = vunpack.c.h.b16 %v5876
      %v5910 = vunpack.c.l.b16 %v5877
      %v5911 = vunpack.c.h.b16 %v5877
      %v5912 = vunpack.c.l.b16 %v5878
      %v5913 = vunpack.c.h.b16 %v5878
      %v5914 = vunpack.c.l.b16 %v5879
      %v5915 = vunpack.c.h.b16 %v5879
      %v5916 = vunpack.c.l.b16 %v5880
      %v5917 = vunpack.c.h.b16 %v5880
      %v5918 = vunpack.c.l.b16 %v5881
      %v5919 = vunpack.c.h.b16 %v5881
      %v5920 = vunpack.c.l.b16 %v5882
      %v5921 = vunpack.c.h.b16 %v5882
      %v5922 = vunpack.c.l.b16 %v5883
      %v5923 = vunpack.c.h.b16 %v5883
      %v5924 = vunpack.c.l.b16 %v5884
      %v5925 = vunpack.c.h.b16 %v5884
      %v5926 = vunpack.c.l.b16 %v5885
      %v5927 = vunpack.c.h.b16 %v5885
      %v5928 = vunpack.c.l.b16 %v5886
      %v5929 = vunpack.c.h.b16 %v5886
      %v5930 = vunpack.c.l.b16 %v5887
      %v5931 = vunpack.c.h.b16 %v5887
      %v5932 = vunpack.c.l.b16 %v5888
      %v5933 = vunpack.c.h.b16 %v5888
      %v5934 = vunpack.c.l.b16 %v5889
      %v5935 = vunpack.c.h.b16 %v5889
      %v5936 = vunpack.c.l.b16 %v5890
      %v5937 = vunpack.c.h.b16 %v5890
      %v5938 = vunpack.c.l.b16 %v5891
      %v5939 = vunpack.c.h.b16 %v5891
      %v5940 = vpack.c.b16 %v5908, %v5908
      %v5941 = vpack.c.b16 %v5909, %v5909
      %v5942 = vpack.c.b16 %v5910, %v5910
      %v5943 = vpack.c.b16 %v5911, %v5911
      %v5944 = vpack.c.b16 %v5912, %v5912
      %v5945 = vpack.c.b16 %v5913, %v5913
      %v5946 = vpack.c.b16 %v5914, %v5914
      %v5947 = vpack.c.b16 %v5915, %v5915
      %v5948 = vpack.c.b16 %v5916, %v5916
      %v5949 = vpack.c.b16 %v5917, %v5917
      %v5950 = vpack.c.b16 %v5918, %v5918
      %v5951 = vpack.c.b16 %v5919, %v5919
      %v5952 = vpack.c.b16 %v5920, %v5920
      %v5953 = vpack.c.b16 %v5921, %v5921
      %v5954 = vpack.c.b16 %v5922, %v5922
      %v5955 = vpack.c.b16 %v5923, %v5923
      %v5956 = vpack.c.b16 %v5924, %v5924
      %v5957 = vpack.c.b16 %v5925, %v5925
      %v5958 = vpack.c.b16 %v5926, %v5926
      %v5959 = vpack.c.b16 %v5927, %v5927
      %v5960 = vpack.c.b16 %v5928, %v5928
      %v5961 = vpack.c.b16 %v5929, %v5929
      %v5962 = vpack.c.b16 %v5930, %v5930
      %v5963 = vpack.c.b16 %v5931, %v5931
      %v5964 = vpack.c.b16 %v5932, %v5932
      %v5965 = vpack.c.b16 %v5933, %v5933
      %v5966 = vpack.c.b16 %v5934, %v5934
      %v5967 = vpack.c.b16 %v5935, %v5935
      %v5968 = vpack.c.b16 %v5936, %v5936
      %v5969 = vpack.c.b16 %v5937, %v5937
      %v5970 = vpack.c.b16 %v5938, %v5938
      %v5971 = vpack.c.b16 %v5939, %v5939
      %6004 = vst [vmem:[%s258] sm:$0xf] %v5940
      %6005 = vst [vmem:[%s258 + $0x4] sm:$0xf] %v5941
      %6006 = vst [vmem:[%s258 + $0x8] sm:$0xf] %v5942
      %6007 = vst [vmem:[%s258 + $0xc] sm:$0xf] %v5943
      %6008 = vst [vmem:[%s258 + $0x10] sm:$0xf] %v5944
      %6009 = vst [vmem:[%s258 + $0x14] sm:$0xf] %v5945
      %6010 = vst [vmem:[%s258 + $0x18] sm:$0xf] %v5946
      %6011 = vst [vmem:[%s258 + $0x1c] sm:$0xf] %v5947
      %6012 = vst [vmem:[%s258 + $0x20] sm:$0xf] %v5948
      %6013 = vst [vmem:[%s258 + $0x24] sm:$0xf] %v5949
      %6014 = vst [vmem:[%s258 + $0x28] sm:$0xf] %v5950
      %6015 = vst [vmem:[%s258 + $0x2c] sm:$0xf] %v5951
      %6016 = vst [vmem:[%s258 + $0x30] sm:$0xf] %v5952
      %6017 = vst [vmem:[%s258 + $0x34] sm:$0xf] %v5953
      %6018 = vst [vmem:[%s258 + $0x38] sm:$0xf] %v5954
      %6019 = vst [vmem:[%s258 + $0x3c] sm:$0xf] %v5955
      %6020 = vst [vmem:[%s258 + $0x40] sm:$0xf] %v5956
      %6021 = vst [vmem:[%s258 + $0x44] sm:$0xf] %v5957
      %6022 = vst [vmem:[%s258 + $0x48] sm:$0xf] %v5958
      %6023 = vst [vmem:[%s258 + $0x4c] sm:$0xf] %v5959
      %6024 = vst [vmem:[%s258 + $0x50] sm:$0xf] %v5960
      %6025 = vst [vmem:[%s258 + $0x54] sm:$0xf] %v5961
      %6026 = vst [vmem:[%s258 + $0x58] sm:$0xf] %v5962
      %6027 = vst [vmem:[%s258 + $0x5c] sm:$0xf] %v5963
      %6028 = vst [vmem:[%s258 + $0x60] sm:$0xf] %v5964
      %6029 = vst [vmem:[%s258 + $0x64] sm:$0xf] %v5965
      %6030 = vst [vmem:[%s258 + $0x68] sm:$0xf] %v5966
      %6031 = vst [vmem:[%s258 + $0x6c] sm:$0xf] %v5967
      %6032 = vst [vmem:[%s258 + $0x70] sm:$0xf] %v5968
      %6033 = vst [vmem:[%s258 + $0x74] sm:$0xf] %v5969
      %6034 = vst [vmem:[%s258 + $0x78] sm:$0xf] %v5970
      %6035 = vst [vmem:[%s258 + $0x7c] sm:$0xf] %v5971
      %v6036 = vadd.f32 %v5844, %v5845
      %v6037 = vadd.f32 %v6036, %v5846
      %v6038 = vadd.f32 %v6037, %v5847
      %v6039 = vadd.f32 %v6038, %v5848
      %v6040 = vadd.f32 %v6039, %v5849
      %v6041 = vadd.f32 %v6040, %v5850
      %v6042 = vadd.f32 %v6041, %v5851
      %v6043 = vadd.f32 %v6042, %v5852
      %v6044 = vadd.f32 %v6043, %v5853
      %v6045 = vadd.f32 %v6044, %v5854
      %v6046 = vadd.f32 %v6045, %v5855
      %v6047 = vadd.f32 %v6046, %v5856
      %v6048 = vadd.f32 %v6047, %v5857
      %v6049 = vadd.f32 %v6048, %v5858
      %v6050 = vadd.f32 %v6049, %v5859
      %v6051 = vadd.f32 %v6050, %v5860
      %v6052 = vadd.f32 %v6051, %v5861
      %v6053 = vadd.f32 %v6052, %v5862
      %v6054 = vadd.f32 %v6053, %v5863
      %v6055 = vadd.f32 %v6054, %v5864
      %v6056 = vadd.f32 %v6055, %v5865
      %v6057 = vadd.f32 %v6056, %v5866
      %v6058 = vadd.f32 %v6057, %v5867
      %v6059 = vadd.f32 %v6058, %v5868
      %v6060 = vadd.f32 %v6059, %v5869
      %v6061 = vadd.f32 %v6060, %v5870
      %v6062 = vadd.f32 %v6061, %v5871
      %v6063 = vadd.f32 %v6062, %v5872
      %v6064 = vadd.f32 %v6063, %v5873
      %v6065 = vadd.f32 %v6064, %v5874
      %v6066 = vadd.f32 %v6065, %v5875
      %v6067 = vrot.slane %v6066, 4
      %v6068 = vadd.f32 %v6066, %v6067
      %v6069 = vrot.slane %v6068, 2
      %v6070 = vadd.f32 %v6068, %v6069
      %v6071 = vrot.slane %v6070, 1
      %v6072 = vadd.f32 %v6070, %v6071
      %v6073 = vrcp.pop 256.0
      %v6074 = vmul.f32 %v6072, %v6073
      %v6075 = vsub.f32 %v5844, %v6074
      %v6076 = vsub.f32 %v5845, %v6074
      %v6077 = vsub.f32 %v5846, %v6074
      %v6078 = vsub.f32 %v5847, %v6074
      %v6079 = vsub.f32 %v5848, %v6074
      %v6080 = vsub.f32 %v5849, %v6074
      %v6081 = vsub.f32 %v5850, %v6074
      %v6082 = vsub.f32 %v5851, %v6074
      %v6083 = vsub.f32 %v5852, %v6074
      %v6084 = vsub.f32 %v5853, %v6074
      %v6085 = vsub.f32 %v5854, %v6074
      %v6086 = vsub.f32 %v5855, %v6074
      %v6087 = vsub.f32 %v5856, %v6074
      %v6088 = vsub.f32 %v5857, %v6074
      %v6089 = vsub.f32 %v5858, %v6074
      %v6090 = vsub.f32 %v5859, %v6074
      %v6091 = vsub.f32 %v5860, %v6074
      %v6092 = vsub.f32 %v5861, %v6074
      %v6093 = vsub.f32 %v5862, %v6074
      %v6094 = vsub.f32 %v5863, %v6074
      %v6095 = vsub.f32 %v5864, %v6074
      %v6096 = vsub.f32 %v5865, %v6074
      %v6097 = vsub.f32 %v5866, %v6074
      %v6098 = vsub.f32 %v5867, %v6074
      %v6099 = vsub.f32 %v5868, %v6074
      %v6100 = vsub.f32 %v5869, %v6074
      %v6101 = vsub.f32 %v5870, %v6074
      %v6102 = vsub.f32 %v5871, %v6074
      %v6103 = vsub.f32 %v5872, %v6074
      %v6104 = vsub.f32 %v5873, %v6074
      %v6105 = vsub.f32 %v5874, %v6074
      %v6106 = vsub.f32 %v5875, %v6074
      %v6107 = vmul.f32 %v6075, %v6075
      %v6108 = vmul.f32 %v6076, %v6076
      %v6109 = vmul.f32 %v6077, %v6077
      %v6110 = vmul.f32 %v6078, %v6078
      %v6111 = vmul.f32 %v6079, %v6079
      %v6112 = vmul.f32 %v6080, %v6080
      %v6113 = vmul.f32 %v6081, %v6081
      %v6114 = vmul.f32 %v6082, %v6082
      %v6115 = vmul.f32 %v6083, %v6083
      %v6116 = vmul.f32 %v6084, %v6084
      %v6117 = vmul.f32 %v6085, %v6085
      %v6118 = vmul.f32 %v6086, %v6086
      %v6119 = vmul.f32 %v6087, %v6087
      %v6120 = vmul.f32 %v6088, %v6088
      %v6121 = vmul.f32 %v6089, %v6089
      %v6122 = vmul.f32 %v6090, %v6090
      %v6123 = vmul.f32 %v6091, %v6091
      %v6124 = vmul.f32 %v6092, %v6092
      %v6125 = vmul.f32 %v6093, %v6093
      %v6126 = vmul.f32 %v6094, %v6094
      %v6127 = vmul.f32 %v6095, %v6095
      %v6128 = vmul.f32 %v6096, %v6096
      %v6129 = vmul.f32 %v6097, %v6097
      %v6130 = vmul.f32 %v6098, %v6098
      %v6131 = vmul.f32 %v6099, %v6099
      %v6132 = vmul.f32 %v6100, %v6100
      %v6133 = vmul.f32 %v6101, %v6101
      %v6134 = vmul.f32 %v6102, %v6102
      %v6135 = vmul.f32 %v6103, %v6103
      %v6136 = vmul.f32 %v6104, %v6104
      %v6137 = vmul.f32 %v6105, %v6105
      %v6138 = vmul.f32 %v6106, %v6106
      %v6139 = vadd.f32 %v6107, %v6108
      %v6140 = vadd.f32 %v6139, %v6109
      %v6141 = vadd.f32 %v6140, %v6110
      %v6142 = vadd.f32 %v6141, %v6111
      %v6143 = vadd.f32 %v6142, %v6112
      %v6144 = vadd.f32 %v6143, %v6113
      %v6145 = vadd.f32 %v6144, %v6114
      %v6146 = vadd.f32 %v6145, %v6115
      %v6147 = vadd.f32 %v6146, %v6116
      %v6148 = vadd.f32 %v6147, %v6117
      %v6149 = vadd.f32 %v6148, %v6118
      %v6150 = vadd.f32 %v6149, %v6119
      %v6151 = vadd.f32 %v6150, %v6120
      %v6152 = vadd.f32 %v6151, %v6121
      %v6153 = vadd.f32 %v6152, %v6122
      %v6154 = vadd.f32 %v6153, %v6123
      %v6155 = vadd.f32 %v6154, %v6124
      %v6156 = vadd.f32 %v6155, %v6125
      %v6157 = vadd.f32 %v6156, %v6126
      %v6158 = vadd.f32 %v6157, %v6127
      %v6159 = vadd.f32 %v6158, %v6128
      %v6160 = vadd.f32 %v6159, %v6129
      %v6161 = vadd.f32 %v6160, %v6130
      %v6162 = vadd.f32 %v6161, %v6131
      %v6163 = vadd.f32 %v6162, %v6132
      %v6164 = vadd.f32 %v6163, %v6133
      %v6165 = vadd.f32 %v6164, %v6134
      %v6166 = vadd.f32 %v6165, %v6135
      %v6167 = vadd.f32 %v6166, %v6136
      %v6168 = vadd.f32 %v6167, %v6137
      %v6169 = vadd.f32 %v6168, %v6138
      %v6170 = vrot.slane %v6169, 4
      %v6171 = vadd.f32 %v6169, %v6170
      %v6172 = vrot.slane %v6171, 2
      %v6173 = vadd.f32 %v6171, %v6172
      %v6174 = vrot.slane %v6173, 1
      %v6175 = vadd.f32 %v6173, %v6174
      %6176 = vst [vmem:[%s262] sm:$0x1] %v6072
      %6177 = vst [vmem:[%s262 + $0x1] sm:$0x1] %v6175
      %p6178 = scmp.lt.s32.totalorder %s18, 1
      %s6179 = scalar_select %p6178, %s18, 1
      %s6180 = smul.addr %s6179, 32
      %s6181 = smul.addr %s6180, 4
      %s6182 = scalar_lea.vmem %s5, %s6181
      %p6183 = scmp.lt.s32.totalorder %s18, 1
      %s6184 = scalar_select %p6183, %s18, 1
      %s6185 = smul.addr %s6184, 2
      %s6186 = scalar_lea.vmem %s6, %s6185
      // Predicated region
      $region41: #{_lambda_.4} parent=39 // pred_check
        %p6187 = pneg %p146
      $region42: #{_lambda_.4} parent=39 // pred_check_branch
        %6189 = sbr.rel (%p6187) target = $region44
      $region43: #{_lambda_.4} parent=39 // pred_region
        _
      $region44: #{_lambda_.4} parent=39 // pred_fallthru
        _
      // Predicated region
      $region45: #{_lambda_.4} parent=39 // pred_check
        %p6190 = pneg %p172
      $region46: #{_lambda_.4} parent=39 // pred_check_branch
        %6192 = sbr.rel (%p6190) target = $region48
      $region47: #{_lambda_.4} parent=39 // pred_region
        _
      $region48: #{_lambda_.4} parent=39 // pred_fallthru
        _
    $region40: #{_lambda_.4} parent=5 // pred_fallthru
      _
    %p6193 = scmp.le.s32.totalorder 2, %s13
    // Predicated region
    $region49: #{_lambda_.4} parent=5 // pred_check
      %p6194 = pneg %p6193
    $region50: #{_lambda_.4} parent=5 // pred_check_branch
      %6196 = sbr.rel (%p6194) target = $region52
    $region51: #{_lambda_.4} parent=5 // pred_region
      %s6197 = ssub.s32 %s13, 2
      // Predicated region
      $region53: #{_lambda_.4} parent=51 // pred_check
        %p6198 = pneg %p152
      $region54: #{_lambda_.4} parent=51 // pred_check_branch
        %6200 = sbr.rel (%p6198) target = $region56
      $region55: #{_lambda_.4} parent=51 // pred_region
        %p6201 = scmp.lt.s32.totalorder %s19, 1
        %s6202 = scalar_select %p6201, %s19, 1
        %s6203 = smul.addr %s6202, 32
        %s6204 = smul.addr %s6203, 4
        %s6205 = scalar_lea.vmem %s5, %s6204
      $region56: #{_lambda_.4} parent=51 // pred_fallthru
        _
      // Predicated region
      $region57: #{_lambda_.4} parent=51 // pred_check
        %p6206 = pneg %p178
      $region58: #{_lambda_.4} parent=51 // pred_check_branch
        %6208 = sbr.rel (%p6206) target = $region60
      $region59: #{_lambda_.4} parent=51 // pred_region
        %p6209 = scmp.lt.s32.totalorder %s19, 1
        %s6210 = scalar_select %p6209, %s19, 1
        %s6211 = smul.addr %s6210, 2
        %s6212 = scalar_lea.vmem %s6, %s6211
      $region60: #{_lambda_.4} parent=51 // pred_fallthru
        _
    $region52: #{_lambda_.4} parent=5 // pred_fallthru
      _
  $region6: #{_lambda_.4} parent=0 // loop_footer
    %s17 = sadd.s32 1, %s13
  $region7: #{_lambda_.4} parent=0 // loop_footer_branch
    %12 = sbr.rel target = $region3
  $region8: #{_lambda_.4} parent=0 // loop_exit
    _

</llo_original>
